<compile_context>
chip_gen: v7x
topology: tpu7x:2x2x1
jax: 0.10.0
libtpu: 0.0.40
codegen_flags: <defaults>
</compile_context>

<pallas_src>
import jax
import jax.numpy as jnp
from jax.experimental import pallas as pl
from jax.experimental.pallas import tpu as pltpu


NUM_CLASSES = 10
FC4_PAD = 128  # lane-dense padded output width of fc4


# ----------------------------------------------------------------------------
# Pallas kernels
# ----------------------------------------------------------------------------
def _conv_gemm_pool_kernel(a_ref, w_ref, b_ref, o_ref):
    """Fused conv3x3 (as im2col GEMM) + bias + ReLU + 2x2 max-pool.

    a_ref: (4*Mp, K) bf16 im2col patches whose rows are ordered
           (q, b, ho, wo) with q in {0..3} indexing the 2x2 pool-window
           position, so the pool is a max over 4 contiguous, sublane-aligned
           row groups (pure VPU work).
    w_ref: (K, Cout) bf16;  b_ref: (1, Cout) f32;  o_ref: (Mp, Cout) bf16.
    Single grid step: the whole GEMM working set (~1 MiB) fits VMEM, there is
    no cross-k accumulation, and the bf16 cast happens in the epilogue.
    """
    y = jnp.dot(a_ref[...], w_ref[...], preferred_element_type=jnp.float32)
    mp = o_ref.shape[0]
    # max over the 4 pool-window groups (bias/ReLU commute with the max).
    p = jnp.maximum(jnp.maximum(y[0 * mp:1 * mp], y[1 * mp:2 * mp]),
                    jnp.maximum(y[2 * mp:3 * mp], y[3 * mp:4 * mp]))
    o_ref[...] = jnp.maximum(p + b_ref[...], 0.0).astype(o_ref.dtype)


def _fc_stack_kernel(a_ref, w1_ref, b1_ref, w2_ref, b2_ref, w3_ref, b3_ref,
                     w4_ref, b4_ref, o_ref, h1_ref):
    """Fused fc1..fc4.  Grid axis = fc1 K-chunks (streamed w1); fc2/3/4
    weights are VMEM-resident (constant index_map).  All intermediate
    activations live in VMEM; dropout layers are identity at inference."""
    k = pl.program_id(0)

    @pl.when(k == 0)
    def _():
        h1_ref[...] = jnp.broadcast_to(b1_ref[...], h1_ref.shape)

    h1_ref[...] += jnp.dot(a_ref[...], w1_ref[...],
                           preferred_element_type=jnp.float32)

    @pl.when(k == pl.num_programs(0) - 1)
    def _():
        h1 = jnp.maximum(h1_ref[...], 0.0).astype(w2_ref.dtype)      # relu(fc1)
        h2 = jnp.dot(h1, w2_ref[...], preferred_element_type=jnp.float32)
        h2 = jnp.maximum(h2 + b2_ref[...], 0.0).astype(w3_ref.dtype)  # relu(fc2)
        h3 = jnp.dot(h2, w3_ref[...], preferred_element_type=jnp.float32)
        h3 = jnp.maximum(h3 + b3_ref[...], 0.0).astype(w4_ref.dtype)  # relu(fc3)
        h4 = jnp.dot(h3, w4_ref[...], preferred_element_type=jnp.float32)
        o_ref[...] = (h4 + b4_ref[...]).astype(o_ref.dtype)           # fc4


# ----------------------------------------------------------------------------
# Wrappers
# ----------------------------------------------------------------------------
def conv3x3_relu_pool(x_nhwc, w, b):
    """3x3 conv (stride 1, padding 1) + ReLU + 2x2 max-pool, fused.

    x_nhwc: (B, H, W, Cin) float32/bf16; w: (3, 3, Cin, Cout) HWIO bf16;
    b: (Cout,) f32.  Returns (B, H//2, W//2, Cout) bf16.

    im2col is kept as JAX glue (negligible at this size; the bf16 cast is
    fused into the patch construction).  The hot GEMM + pool run in Pallas as
    one single-grid-step kernel with bf16 operands and f32 accumulation.
    """
    B, H, W, Cin = x_nhwc.shape
    Cout = w.shape[-1]
    Ho, Wo = H // 2, W // 2
    Mp = B * Ho * Wo
    K = 9 * Cin

    xb = x_nhwc.astype(jnp.bfloat16)                       # cast before patches
    xp = jnp.pad(xb, ((0, 0), (1, 1), (1, 1), (0, 0)))
    patches = jnp.concatenate(
        [xp[:, i:i + H, j:j + W, :] for i in range(3) for j in range(3)],
        axis=-1)                                 # (B, H, W, 9*Cin), K=(ki,kj,cin)
    # Reorder rows so the 2x2 pool-window index q=(hq,wq) is the slowest axis:
    # row = q*Mp + b*(Ho*Wo) + ho*Wo + wo.  The in-kernel pool then reduces
    # four contiguous row groups.
    pr = patches.reshape(B, Ho, 2, Wo, 2, K)
    pr = jnp.transpose(pr, (2, 4, 0, 1, 3, 5)).reshape(4 * Mp, K)
    wg = w.reshape(K, Cout)                      # same (ki, kj, cin) row order

    # Single grid step: at these shapes (4*Mp=128, K=1152, Cout=256) the whole
    # working set is ~1 MiB, far under VMEM on v5e/v6e/v7x.
    return pl.pallas_call(
        _conv_gemm_pool_kernel,
        out_shape=jax.ShapeDtypeStruct((Mp, Cout), jnp.bfloat16),
        grid_spec=pltpu.PrefetchScalarGridSpec(
            num_scalar_prefetch=0,
            grid=(1,),
            in_specs=[
                pl.BlockSpec((4 * Mp, K), lambda i: (0, 0)),   # patches
                pl.BlockSpec((K, Cout), lambda i: (0, 0)),     # conv weight
                pl.BlockSpec((1, Cout), lambda i: (0, 0)),     # bias
            ],
            out_specs=pl.BlockSpec((Mp, Cout), lambda i: (0, 0)),
        ),
        compiler_params=pltpu.CompilerParams(
            dimension_semantics=("arbitrary",)),
        cost_estimate=pl.CostEstimate(
            flops=2 * 4 * Mp * K * Cout, transcendentals=0,
            bytes_accessed=int(4 * Mp * K * 2 + K * Cout * 2 + Cout * 4
                               + Mp * Cout * 2)),
    )(pr, wg, b.reshape(1, Cout)).reshape(B, Ho, Wo, Cout)


def fc_stack(a, params):
    """Fused fc1(relu) -> fc2(relu) -> fc3(relu) -> fc4 in one pallas_call.

    a: (B, 4096) bf16 (NHWC-flatten order, matching fc1_w row layout).
    Returns (B, FC4_PAD) f32; caller slices the first NUM_CLASSES columns.
    """
    B, K1 = a.shape
    w1, b1 = params["fc1_w"], params["fc1_b"]
    w2, b2 = params["fc2_w"], params["fc2_b"]
    w3, b3 = params["fc3_w"], params["fc3_b"]
    w4, b4 = params["fc4_w"], params["fc4_b"]
    N1, N2, N3, N4 = w1.shape[1], w2.shape[1], w3.shape[1], w4.shape[1]

    # fc1's K axis streamed in 2048-wide chunks (grid=2 for K1=4096): fewer,
    # bigger DMAs cut per-grid-step overhead 4x vs tk=512.  With default
    # double buffering the footprint is ~11 MiB (w1 chunk 4 MiB x2 + residents
    # ~3.4 MiB + scratch), inside the scoped VMEM limit on v5e/v6e/v7x, so
    # single-buffering the resident fc2..fc4 weights is not required.
    tk = 2048 if K1 % 2048 == 0 else K1
    nk = K1 // tk
    if a.dtype != jnp.bfloat16:        # no-op: the conv kernel already emits bf16
        a = a.astype(jnp.bfloat16)

    flops = 2 * B * (K1 * N1 + N1 * N2 + N2 * N3 + N3 * N4)
    bytes_accessed = (a.size * 2
                      + (w1.size + w2.size + w3.size + w4.size) * 2
                      + (b1.size + b2.size + b3.size + b4.size) * 4
                      + B * N4 * 4)

    # TODO(synk): on v7x (2 TCs) a leading 'parallel' axis splitting w1's N
    # across cores would halve the fc1 weight-stream time; it needs a split
    # h1 accumulator + a follow-up fc2..fc4 step, so it is left out here.
    return pl.pallas_call(
        _fc_stack_kernel,
        out_shape=jax.ShapeDtypeStruct((B, N4), jnp.float32),
        grid_spec=pltpu.PrefetchScalarGridSpec(
            num_scalar_prefetch=0,
            grid=(nk,),
            in_specs=[
                pl.BlockSpec((B, tk), lambda k: (0, k)),      # a (streamed K)
                pl.BlockSpec((tk, N1), lambda k: (k, 0)),     # fc1_w (streamed)
                pl.BlockSpec((1, N1), lambda k: (0, 0)),      # fc1_b
                pl.BlockSpec((N1, N2), lambda k: (0, 0)),     # fc2_w (resident)
                pl.BlockSpec((1, N2), lambda k: (0, 0)),      # fc2_b
                pl.BlockSpec((N2, N3), lambda k: (0, 0)),     # fc3_w (resident)
                pl.BlockSpec((1, N3), lambda k: (0, 0)),      # fc3_b
                pl.BlockSpec((N3, N4), lambda k: (0, 0)),     # fc4_w (resident)
                pl.BlockSpec((1, N4), lambda k: (0, 0)),      # fc4_b
            ],
            out_specs=pl.BlockSpec((B, N4), lambda k: (0, 0)),
            scratch_shapes=[pltpu.VMEM((B, N1), jnp.float32)],  # fc1 accumulator
        ),
        compiler_params=pltpu.CompilerParams(
            dimension_semantics=("arbitrary",),
            # ~11 MiB working set: fits v5e(16)/v6e(32)/v7x(32) scoped VMEM;
            # set explicitly so the config is portable.
            vmem_limit_bytes=32 * 1024 * 1024),
        cost_estimate=pl.CostEstimate(
            flops=int(flops), transcendentals=0,
            bytes_accessed=int(bytes_accessed)),
    )(a, w1, b1.reshape(1, N1), w2, b2.reshape(1, N2),
      w3, b3.reshape(1, N3), w4, b4.reshape(1, N4))


# ----------------------------------------------------------------------------
# Model
# ----------------------------------------------------------------------------
def init_params(key):
    ks = jax.random.split(key, 10)

    def w_init(k, shape, fan_in, dtype=jnp.bfloat16):
        w = (jax.random.normal(k, shape, dtype=jnp.float32)
             / jnp.sqrt(jnp.float32(fan_in)))
        return w.astype(dtype)

    # fc4 padded from 10 to 128 output columns (zeros) for lane-dense stores.
    fc4_w = jnp.pad(w_init(ks[6], (256, NUM_CLASSES), 256),
                    ((0, 0), (0, FC4_PAD - NUM_CLASSES)))
    fc4_b = jnp.pad(w_init(ks[7], (NUM_CLASSES,), 256, jnp.float32),
                    (0, FC4_PAD - NUM_CLASSES))

    return {
        # conv weight stored HWIO (torch OIHW -> transpose(2, 3, 1, 0)), bf16.
        "conv3_w": w_init(ks[0], (3, 3, 128, 256), 1152),
        "conv3_b": w_init(ks[1], (256,), 1152, jnp.float32),
        # fc weights stored (in, out), bf16.  fc1_w rows are in NHWC-flatten
        # order (h, w, c); a torch checkpoint's fc1.weight.T (rows in CHW
        # order) would be permuted once at load time:
        #   wT.reshape(256, 4, 4, 1024).transpose(1, 2, 0, 3).reshape(4096, 1024)
        "fc1_w": w_init(ks[2], (256 * 4 * 4, 1024), 4096),
        "fc1_b": w_init(ks[3], (1024,), 4096, jnp.float32),
        "fc2_w": w_init(ks[4], (1024, 512), 1024),
        "fc2_b": w_init(ks[5], (512,), 1024, jnp.float32),
        "fc3_w": w_init(ks[8], (512, 256), 512),
        "fc3_b": w_init(ks[9], (256,), 512, jnp.float32),
        "fc4_w": fc4_w,
        "fc4_b": fc4_b,
    }


def cifar_server2_forward(params, x_nchw):
    """Forward pass of CifarServer2.  x_nchw: (B, 128, 8, 8) float32."""
    x = jnp.transpose(x_nchw, (0, 2, 3, 1))                  # NCHW -> NHWC
    # conv3 + ReLU + 2x2 max-pool fused in one kernel -> (B, 4, 4, 256) bf16.
    x = conv3x3_relu_pool(x, params["conv3_w"], params["conv3_b"])
    # Dropout(0.25): identity at inference.
    # TODO(synk): no training-mode dropout path.
    B = x.shape[0]
    # Flatten in NHWC order; fc1_w rows are stored in the matching order, so
    # no per-call transpose back to NCHW is needed.
    a = x.reshape(B, -1)                                     # (B, 4096) bf16
    out = fc_stack(a, params)                                # (B, 128) f32
    return out[:, :NUM_CLASSES]


if __name__ == "__main__":
    key = jax.random.PRNGKey(0)
    pkey, xkey = jax.random.split(key)
    params = init_params(pkey)
    # conv3(128->256, pad 1) on 8x8 -> pool -> 4x4 -> 256*4*4 matches fc1.
    x = jax.random.normal(xkey, (2, 128, 8, 8), dtype=jnp.float32)

    fwd = jax.jit(cifar_server2_forward)
    out = jax.block_until_ready(fwd(params, x))

    assert out.shape == (2, NUM_CLASSES), out.shape
    assert out.dtype == jnp.float32
    assert bool(jnp.all(jnp.isfinite(out)))
    print("KERNEL_OK")
</pallas_src>

<mosaic_0001>
module attributes {stable_mosaic.version = 11 : i64} {
  func.func @_conv_gemm_pool_kernel(%arg0: i32, %arg1: memref<128x1152xbf16, #tpu.memory_space<vmem>>, %arg2: memref<1152x256xbf16, #tpu.memory_space<vmem>>, %arg3: memref<1x256xf32, #tpu.memory_space<vmem>>, %arg4: memref<32x256xbf16, #tpu.memory_space<vmem>>) attributes {dimension_semantics = [#tpu.dimension_semantics<arbitrary>], iteration_bounds = array<i64: 1>, scalar_prefetch = 0 : i64, scratch_operands = 0 : i64, tpu.core_type = #tpu.core_type<tc>, window_params = [{pipeline_mode = #tpu.pipeline_mode<synchronous>, transform_indices = @transform_0, window_bounds = array<i64: 128, 1152>}, {pipeline_mode = #tpu.pipeline_mode<synchronous>, transform_indices = @transform_1, window_bounds = array<i64: 1152, 256>}, {pipeline_mode = #tpu.pipeline_mode<synchronous>, transform_indices = @transform_2, window_bounds = array<i64: 1, 256>}, {pipeline_mode = #tpu.pipeline_mode<synchronous>, transform_indices = @transform_3, window_bounds = array<i64: 32, 256>}]} {
    %c0 = arith.constant 0 : index
    %c0_0 = arith.constant 0 : index
    %0 = vector.load %arg1[%c0, %c0_0] : memref<128x1152xbf16, #tpu.memory_space<vmem>>, vector<128x1152xbf16>
    %c0_1 = arith.constant 0 : index
    %c0_2 = arith.constant 0 : index
    %1 = vector.load %arg2[%c0_1, %c0_2] : memref<1152x256xbf16, #tpu.memory_space<vmem>>, vector<1152x256xbf16>
    %cst = arith.constant dense<0.000000e+00> : vector<128x256xf32>
    %2 = tpu.matmul %0, %1, %cst {dimension_numbers = #tpu.dot_dimension_numbers<[1], [0], [0], [1], [0, 0, 1, 1], [], []>} : vector<128x1152xbf16>, vector<1152x256xbf16>, vector<128x256xf32> -> vector<128x256xf32>
    %3 = vector.extract_strided_slice %2 {offsets = [0, 0], sizes = [32, 256], strides = [1, 1]} : vector<128x256xf32> to vector<32x256xf32>
    %4 = vector.extract_strided_slice %2 {offsets = [32, 0], sizes = [32, 256], strides = [1, 1]} : vector<128x256xf32> to vector<32x256xf32>
    %5 = arith.maximumf %3, %4 : vector<32x256xf32>
    %6 = vector.extract_strided_slice %2 {offsets = [64, 0], sizes = [32, 256], strides = [1, 1]} : vector<128x256xf32> to vector<32x256xf32>
    %7 = vector.extract_strided_slice %2 {offsets = [96, 0], sizes = [32, 256], strides = [1, 1]} : vector<128x256xf32> to vector<32x256xf32>
    %8 = arith.maximumf %6, %7 : vector<32x256xf32>
    %9 = arith.maximumf %5, %8 : vector<32x256xf32>
    %c0_3 = arith.constant 0 : index
    %c0_4 = arith.constant 0 : index
    %10 = vector.load %arg3[%c0_3, %c0_4] : memref<1x256xf32, #tpu.memory_space<vmem>>, vector<1x256xf32>
    %11 = vector.broadcast %10 : vector<1x256xf32> to vector<32x256xf32>
    %12 = arith.addf %9, %11 : vector<32x256xf32>
    %cst_5 = arith.constant 0.000000e+00 : f32
    %13 = vector.broadcast %cst_5 : f32 to vector<32x256xf32>
    %14 = arith.maximumf %12, %13 : vector<32x256xf32>
    %15 = arith.truncf %14 : vector<32x256xf32> to vector<32x256xbf16>
    %c0_6 = arith.constant 0 : index
    %c0_7 = arith.constant 0 : index
    %16 = vector.load %arg4[%c0_6, %c0_7] : memref<32x256xbf16, #tpu.memory_space<vmem>>, vector<32x256xbf16>
    tpu.vector_store %arg4[%c0_6, %c0_7], %15 {strides = array<i32>} : memref<32x256xbf16, #tpu.memory_space<vmem>>, vector<32x256xbf16>,
    return
  }
  func.func @transform_0(%arg0: i32) -> (i32, i32) {
    %c0_i32 = arith.constant 0 : i32
    %c0_i32_0 = arith.constant 0 : i32
    %c0_i32_1 = arith.constant 0 : i32
    return %c0_i32, %c0_i32_0 : i32, i32
  }
  func.func @transform_1(%arg0: i32) -> (i32, i32) {
    %c0_i32 = arith.constant 0 : i32
    %c0_i32_0 = arith.constant 0 : i32
    %c0_i32_1 = arith.constant 0 : i32
    return %c0_i32, %c0_i32_0 : i32, i32
  }
  func.func @transform_2(%arg0: i32) -> (i32, i32) {
    %c0_i32 = arith.constant 0 : i32
    %c0_i32_0 = arith.constant 0 : i32
    %c0_i32_1 = arith.constant 0 : i32
    return %c0_i32, %c0_i32_0 : i32, i32
  }
  func.func @transform_3(%arg0: i32) -> (i32, i32) {
    %c0_i32 = arith.constant 0 : i32
    %c0_i32_0 = arith.constant 0 : i32
    %c0_i32_1 = arith.constant 0 : i32
    return %c0_i32, %c0_i32_0 : i32, i32
  }
}

module attributes {stable_mosaic.version = 11 : i64} {
  func.func @_fc_stack_kernel(%arg0: i32, %arg1: memref<2x2048xbf16, #tpu.memory_space<vmem>>, %arg2: memref<2048x1024xbf16, #tpu.memory_space<vmem>>, %arg3: memref<1x1024xf32, #tpu.memory_space<vmem>>, %arg4: memref<1024x512xbf16, #tpu.memory_space<vmem>>, %arg5: memref<1x512xf32, #tpu.memory_space<vmem>>, %arg6: memref<512x256xbf16, #tpu.memory_space<vmem>>, %arg7: memref<1x256xf32, #tpu.memory_space<vmem>>, %arg8: memref<256x128xbf16, #tpu.memory_space<vmem>>, %arg9: memref<1x128xf32, #tpu.memory_space<vmem>>, %arg10: memref<2x128xf32, #tpu.memory_space<vmem>>, %arg11: memref<2x1024xf32, #tpu.memory_space<vmem>>) attributes {dimension_semantics = [#tpu.dimension_semantics<arbitrary>], iteration_bounds = array<i64: 2>, scalar_prefetch = 0 : i64, scratch_operands = 1 : i64, tpu.core_type = #tpu.core_type<tc>, window_params = [{transform_indices = @transform_0, window_bounds = array<i64: 2, 2048>}, {transform_indices = @transform_1, window_bounds = array<i64: 2048, 1024>}, {pipeline_mode = #tpu.pipeline_mode<synchronous>, transform_indices = @transform_2, window_bounds = array<i64: 1, 1024>}, {pipeline_mode = #tpu.pipeline_mode<synchronous>, transform_indices = @transform_3, window_bounds = array<i64: 1024, 512>}, {pipeline_mode = #tpu.pipeline_mode<synchronous>, transform_indices = @transform_4, window_bounds = array<i64: 1, 512>}, {pipeline_mode = #tpu.pipeline_mode<synchronous>, transform_indices = @transform_5, window_bounds = array<i64: 512, 256>}, {pipeline_mode = #tpu.pipeline_mode<synchronous>, transform_indices = @transform_6, window_bounds = array<i64: 1, 256>}, {pipeline_mode = #tpu.pipeline_mode<synchronous>, transform_indices = @transform_7, window_bounds = array<i64: 256, 128>}, {pipeline_mode = #tpu.pipeline_mode<synchronous>, transform_indices = @transform_8, window_bounds = array<i64: 1, 128>}, {pipeline_mode = #tpu.pipeline_mode<synchronous>, transform_indices = @transform_9, window_bounds = array<i64: 2, 128>}]} {
    %c0_i32 = arith.constant 0 : i32
    %0 = arith.cmpi eq, %arg0, %c0_i32 : i32
    %1 = arith.extui %0 : i1 to i32
    %c0_i32_0 = arith.constant 0 : i32
    %2 = arith.cmpi ne, %1, %c0_i32_0 : i32
    scf.if %2 {
      %c0_9 = arith.constant 0 : index
      %c0_10 = arith.constant 0 : index
      %12 = vector.load %arg3[%c0_9, %c0_10] : memref<1x1024xf32, #tpu.memory_space<vmem>>, vector<1x1024xf32>
      %13 = vector.shape_cast %12 : vector<1x1024xf32> to vector<1x1024xf32>
      %14 = vector.broadcast %13 : vector<1x1024xf32> to vector<2x1024xf32>
      %c0_11 = arith.constant 0 : index
      %c0_12 = arith.constant 0 : index
      %15 = vector.load %arg11[%c0_11, %c0_12] : memref<2x1024xf32, #tpu.memory_space<vmem>>, vector<2x1024xf32>
      tpu.vector_store %arg11[%c0_11, %c0_12], %14 {strides = array<i32>} : memref<2x1024xf32, #tpu.memory_space<vmem>>, vector<2x1024xf32>,
    } else {
    }
    %c0 = arith.constant 0 : index
    %c0_1 = arith.constant 0 : index
    %3 = vector.load %arg11[%c0, %c0_1] : memref<2x1024xf32, #tpu.memory_space<vmem>>, vector<2x1024xf32>
    %c0_2 = arith.constant 0 : index
    %c0_3 = arith.constant 0 : index
    %4 = vector.load %arg1[%c0_2, %c0_3] : memref<2x2048xbf16, #tpu.memory_space<vmem>>, vector<2x2048xbf16>
    %c0_4 = arith.constant 0 : index
    %c0_5 = arith.constant 0 : index
    %5 = vector.load %arg2[%c0_4, %c0_5] : memref<2048x1024xbf16, #tpu.memory_space<vmem>>, vector<2048x1024xbf16>
    %cst = arith.constant dense<0.000000e+00> : vector<2x1024xf32>
    %6 = tpu.matmul %4, %5, %cst {dimension_numbers = #tpu.dot_dimension_numbers<[1], [0], [0], [1], [0, 0, 1, 1], [], []>} : vector<2x2048xbf16>, vector<2048x1024xbf16>, vector<2x1024xf32> -> vector<2x1024xf32>
    %7 = arith.addf %3, %6 : vector<2x1024xf32>
    %c0_6 = arith.constant 0 : index
    %c0_7 = arith.constant 0 : index
    %8 = vector.load %arg11[%c0_6, %c0_7] : memref<2x1024xf32, #tpu.memory_space<vmem>>, vector<2x1024xf32>
    tpu.vector_store %arg11[%c0_6, %c0_7], %7 {strides = array<i32>} : memref<2x1024xf32, #tpu.memory_space<vmem>>, vector<2x1024xf32>,
    %c1_i32 = arith.constant 1 : i32
    %9 = arith.cmpi eq, %arg0, %c1_i32 : i32
    %10 = arith.extui %9 : i1 to i32
    %c0_i32_8 = arith.constant 0 : i32
    %11 = arith.cmpi ne, %10, %c0_i32_8 : i32
    scf.if %11 {
      %c0_9 = arith.constant 0 : index
      %c0_10 = arith.constant 0 : index
      %12 = vector.load %arg11[%c0_9, %c0_10] : memref<2x1024xf32, #tpu.memory_space<vmem>>, vector<2x1024xf32>
      %cst_11 = arith.constant 0.000000e+00 : f32
      %13 = vector.broadcast %cst_11 : f32 to vector<2x1024xf32>
      %14 = arith.maximumf %12, %13 : vector<2x1024xf32>
      %15 = arith.truncf %14 : vector<2x1024xf32> to vector<2x1024xbf16>
      %c0_12 = arith.constant 0 : index
      %c0_13 = arith.constant 0 : index
      %16 = vector.load %arg4[%c0_12, %c0_13] : memref<1024x512xbf16, #tpu.memory_space<vmem>>, vector<1024x512xbf16>
      %cst_14 = arith.constant dense<0.000000e+00> : vector<2x512xf32>
      %17 = tpu.matmul %15, %16, %cst_14 {dimension_numbers = #tpu.dot_dimension_numbers<[1], [0], [0], [1], [0, 0, 1, 1], [], []>} : vector<2x1024xbf16>, vector<1024x512xbf16>, vector<2x512xf32> -> vector<2x512xf32>
      %c0_15 = arith.constant 0 : index
      %c0_16 = arith.constant 0 : index
      %18 = vector.load %arg5[%c0_15, %c0_16] : memref<1x512xf32, #tpu.memory_space<vmem>>, vector<1x512xf32>
      %19 = vector.broadcast %18 : vector<1x512xf32> to vector<2x512xf32>
      %20 = arith.addf %17, %19 : vector<2x512xf32>
      %cst_17 = arith.constant 0.000000e+00 : f32
      %21 = vector.broadcast %cst_17 : f32 to vector<2x512xf32>
      %22 = arith.maximumf %20, %21 : vector<2x512xf32>
      %23 = arith.truncf %22 : vector<2x512xf32> to vector<2x512xbf16>
      %c0_18 = arith.constant 0 : index
      %c0_19 = arith.constant 0 : index
      %24 = vector.load %arg6[%c0_18, %c0_19] : memref<512x256xbf16, #tpu.memory_space<vmem>>, vector<512x256xbf16>
      %cst_20 = arith.constant dense<0.000000e+00> : vector<2x256xf32>
      %25 = tpu.matmul %23, %24, %cst_20 {dimension_numbers = #tpu.dot_dimension_numbers<[1], [0], [0], [1], [0, 0, 1, 1], [], []>} : vector<2x512xbf16>, vector<512x256xbf16>, vector<2x256xf32> -> vector<2x256xf32>
      %c0_21 = arith.constant 0 : index
      %c0_22 = arith.constant 0 : index
      %26 = vector.load %arg7[%c0_21, %c0_22] : memref<1x256xf32, #tpu.memory_space<vmem>>, vector<1x256xf32>
      %27 = vector.broadcast %26 : vector<1x256xf32> to vector<2x256xf32>
      %28 = arith.addf %25, %27 : vector<2x256xf32>
      %cst_23 = arith.constant 0.000000e+00 : f32
      %29 = vector.broadcast %cst_23 : f32 to vector<2x256xf32>
      %30 = arith.maximumf %28, %29 : vector<2x256xf32>
      %31 = arith.truncf %30 : vector<2x256xf32> to vector<2x256xbf16>
      %c0_24 = arith.constant 0 : index
      %c0_25 = arith.constant 0 : index
      %32 = vector.load %arg8[%c0_24, %c0_25] : memref<256x128xbf16, #tpu.memory_space<vmem>>, vector<256x128xbf16>
      %cst_26 = arith.constant dense<0.000000e+00> : vector<2x128xf32>
      %33 = tpu.matmul %31, %32, %cst_26 {dimension_numbers = #tpu.dot_dimension_numbers<[1], [0], [0], [1], [0, 0, 1, 1], [], []>} : vector<2x256xbf16>, vector<256x128xbf16>, vector<2x128xf32> -> vector<2x128xf32>
      %c0_27 = arith.constant 0 : index
      %c0_28 = arith.constant 0 : index
      %34 = vector.load %arg9[%c0_27, %c0_28] : memref<1x128xf32, #tpu.memory_space<vmem>>, vector<1x128xf32>
      %35 = vector.broadcast %34 : vector<1x128xf32> to vector<2x128xf32>
      %36 = arith.addf %33, %35 : vector<2x128xf32>
      %c0_29 = arith.constant 0 : index
      %c0_30 = arith.constant 0 : index
      %37 = vector.load %arg10[%c0_29, %c0_30] : memref<2x128xf32, #tpu.memory_space<vmem>>, vector<2x128xf32>
      tpu.vector_store %arg10[%c0_29, %c0_30], %36 {strides = array<i32>} : memref<2x128xf32, #tpu.memory_space<vmem>>, vector<2x128xf32>,
    } else {
    }
    return
  }
  func.func @transform_0(%arg0: i32) -> (i32, i32) {
    %c0_i32 = arith.constant 0 : i32
    %c0_i32_0 = arith.constant 0 : i32
    return %c0_i32, %arg0 : i32, i32
  }
  func.func @transform_1(%arg0: i32) -> (i32, i32) {
    %c0_i32 = arith.constant 0 : i32
    %c0_i32_0 = arith.constant 0 : i32
    return %arg0, %c0_i32 : i32, i32
  }
  func.func @transform_2(%arg0: i32) -> (i32, i32) {
    %c0_i32 = arith.constant 0 : i32
    %c0_i32_0 = arith.constant 0 : i32
    %c0_i32_1 = arith.constant 0 : i32
    return %c0_i32, %c0_i32_0 : i32, i32
  }
  func.func @transform_3(%arg0: i32) -> (i32, i32) {
    %c0_i32 = arith.constant 0 : i32
    %c0_i32_0 = arith.constant 0 : i32
    %c0_i32_1 = arith.constant 0 : i32
    return %c0_i32, %c0_i32_0 : i32, i32
  }
  func.func @transform_4(%arg0: i32) -> (i32, i32) {
    %c0_i32 = arith.constant 0 : i32
    %c0_i32_0 = arith.constant 0 : i32
    %c0_i32_1 = arith.constant 0 : i32
    return %c0_i32, %c0_i32_0 : i32, i32
  }
  func.func @transform_5(%arg0: i32) -> (i32, i32) {
    %c0_i32 = arith.constant 0 : i32
    %c0_i32_0 = arith.constant 0 : i32
    %c0_i32_1 = arith.constant 0 : i32
    return %c0_i32, %c0_i32_0 : i32, i32
  }
  func.func @transform_6(%arg0: i32) -> (i32, i32) {
    %c0_i32 = arith.constant 0 : i32
    %c0_i32_0 = arith.constant 0 : i32
    %c0_i32_1 = arith.constant 0 : i32
    return %c0_i32, %c0_i32_0 : i32, i32
  }
  func.func @transform_7(%arg0: i32) -> (i32, i32) {
    %c0_i32 = arith.constant 0 : i32
    %c0_i32_0 = arith.constant 0 : i32
    %c0_i32_1 = arith.constant 0 : i32
    return %c0_i32, %c0_i32_0 : i32, i32
  }
  func.func @transform_8(%arg0: i32) -> (i32, i32) {
    %c0_i32 = arith.constant 0 : i32
    %c0_i32_0 = arith.constant 0 : i32
    %c0_i32_1 = arith.constant 0 : i32
    return %c0_i32, %c0_i32_0 : i32, i32
  }
  func.func @transform_9(%arg0: i32) -> (i32, i32) {
    %c0_i32 = arith.constant 0 : i32
    %c0_i32_0 = arith.constant 0 : i32
    %c0_i32_1 = arith.constant 0 : i32
    return %c0_i32, %c0_i32_0 : i32, i32
  }
}

</mosaic_0001>

<llo_original>
// kernel: cifar_server2_forward.2
$region0: #{cifar_server2_forward.2}
  #allocation0 [shape = 'u32[]', space=smem, size = 0x4, offset = 0x4, fixed_abs, tag = 'smem constant byte address 0x4 - core index']
  #allocation1 [shape = 'u32[144,128]{1,0:T(1,128)}', space=vmem, size = 0x12000, scoped, tag = 'internal scratch']
  %s0 = inlined_call_operand.vmem [shape: bf16[128,1152], index: 0, kind: input, shape index: {}]
  %s1 = inlined_call_operand.hbm [shape: bf16[1152,256], index: 1, kind: input, shape index: {}]
  %s2 = inlined_call_operand.hbm [shape: f32[1,256], index: 2, kind: input, shape index: {}]
  %s3 = inlined_call_operand.vmem [shape: bf16[32,256], index: 3, kind: output, shape index: {}]
  %s4 = sld [smem:[#allocation0]]
  $region30: #{cifar_server2_forward.2} parent=0
    _
  %s6 = ssub.s32 1, %s4
  %s7 = scalar_select 0, %s6, %s4
  $region1: #{cifar_server2_forward.2} parent=0
    #allocation2 [shape = 'u8[589824]{0}', space=vmem, size = 0x90000, scoped, tag = 'input window, operand 1, single buffered']
    #allocation3 [shape = 's32[1]{0}', space=sflag, size = 0x4, scoped, tag = 'scoped memory for cifar_server2_forward.2']
    #allocation4 [shape = 'u8[1024]{0}', space=vmem, size = 0x400, scoped, tag = 'input window, operand 2, single buffered']
    #allocation5 [shape = 's32[1]{0}', space=sflag, size = 0x4, scoped, tag = 'scoped memory for cifar_server2_forward.2']
    %8 = vsyncpa [#allocation3], 0
    %9 = vsyncpa [#allocation5], 0
    // Predicated region
    $region2: #{cifar_server2_forward.2} parent=1 // pred_check
      _
    $region3: #{cifar_server2_forward.2} parent=1 // pred_check_branch
      %11 = sbr.rel (0) target = $region5
    $region4: #{cifar_server2_forward.2} parent=1 // pred_region
      _
    $region5: #{cifar_server2_forward.2} parent=1 // pred_fallthru
      _
    // Predicated region
    $region6: #{cifar_server2_forward.2} parent=1 // pred_check
      _
    $region7: #{cifar_server2_forward.2} parent=1 // pred_check_branch
      %13 = sbr.rel (0) target = $region9
    $region8: #{cifar_server2_forward.2} parent=1 // pred_region
      %s15 = ssub.s32 18432, 18432
      %16 = vsyncadd [#allocation3], %s15
      %s17 = sshll.u32 [#allocation2], 4
      %s18 = int_to_ptr.vmem [resolvable:$true] %s17
      %23 = dma.hbm_to_vmem [thread:$0]  %s1, 18432, %s18, [#allocation3], 128, 128, 8
    $region9: #{cifar_server2_forward.2} parent=1 // pred_fallthru
      _
    // Predicated region
    $region10: #{cifar_server2_forward.2} parent=1 // pred_check
      _
    $region11: #{cifar_server2_forward.2} parent=1 // pred_check_branch
      %25 = sbr.rel (0) target = $region13
    $region12: #{cifar_server2_forward.2} parent=1 // pred_region
      %s27 = ssub.s32 32, 32
      %28 = vsyncadd [#allocation5], %s27
      %s30 = sshll.u32 [#allocation4], 4
      %s31 = int_to_ptr.vmem [resolvable:$true] %s30
      %33 = dma.hbm_to_vmem [thread:$0]  %s2, 32, %s31, [#allocation5]
    $region13: #{cifar_server2_forward.2} parent=1 // pred_fallthru
      _
    // Predicated region
    $region14: #{cifar_server2_forward.2} parent=1 // pred_check
      _
    $region15: #{cifar_server2_forward.2} parent=1 // pred_check_branch
      %35 = sbr.rel (0) target = $region17
    $region16: #{cifar_server2_forward.2} parent=1 // pred_region
      %36 = dma.done [#allocation3], 18432
    $region17: #{cifar_server2_forward.2} parent=1 // pred_fallthru
      _
    // Predicated region
    $region18: #{cifar_server2_forward.2} parent=1 // pred_check
      _
    $region19: #{cifar_server2_forward.2} parent=1 // pred_check_branch
      %38 = sbr.rel (0) target = $region21
    $region20: #{cifar_server2_forward.2} parent=1 // pred_region
      %39 = dma.done [#allocation5], 32
    $region21: #{cifar_server2_forward.2} parent=1 // pred_fallthru
      _
    %v41 = vld [vmem:[%s0] sm:$0xff]
    %v42 = vld [vmem:[%s0 + $0x8] sm:$0xff]
    %v43 = vld [vmem:[%s0 + $0x10] sm:$0xff]
    %v44 = vld [vmem:[%s0 + $0x18] sm:$0xff]
    %v45 = vld [vmem:[%s0 + $0x20] sm:$0xf]
    %v46 = vld [vmem:[%s0 + $0x24] sm:$0xff]
    %v47 = vld [vmem:[%s0 + $0x2c] sm:$0xff]
    %v48 = vld [vmem:[%s0 + $0x34] sm:$0xff]
    %v49 = vld [vmem:[%s0 + $0x3c] sm:$0xff]
    %v50 = vld [vmem:[%s0 + $0x44] sm:$0xf]
    %v51 = vld [vmem:[%s0 + $0x48] sm:$0xff]
    %v52 = vld [vmem:[%s0 + $0x50] sm:$0xff]
    %v53 = vld [vmem:[%s0 + $0x58] sm:$0xff]
    %v54 = vld [vmem:[%s0 + $0x60] sm:$0xff]
    %v55 = vld [vmem:[%s0 + $0x68] sm:$0xf]
    %v56 = vld [vmem:[%s0 + $0x6c] sm:$0xff]
    %v57 = vld [vmem:[%s0 + $0x74] sm:$0xff]
    %v58 = vld [vmem:[%s0 + $0x7c] sm:$0xff]
    %v59 = vld [vmem:[%s0 + $0x84] sm:$0xff]
    %v60 = vld [vmem:[%s0 + $0x8c] sm:$0xf]
    %v61 = vld [vmem:[%s0 + $0x90] sm:$0xff]
    %v62 = vld [vmem:[%s0 + $0x98] sm:$0xff]
    %v63 = vld [vmem:[%s0 + $0xa0] sm:$0xff]
    %v64 = vld [vmem:[%s0 + $0xa8] sm:$0xff]
    %v65 = vld [vmem:[%s0 + $0xb0] sm:$0xf]
    %v66 = vld [vmem:[%s0 + $0xb4] sm:$0xff]
    %v67 = vld [vmem:[%s0 + $0xbc] sm:$0xff]
    %v68 = vld [vmem:[%s0 + $0xc4] sm:$0xff]
    %v69 = vld [vmem:[%s0 + $0xcc] sm:$0xff]
    %v70 = vld [vmem:[%s0 + $0xd4] sm:$0xf]
    %v71 = vld [vmem:[%s0 + $0xd8] sm:$0xff]
    %v72 = vld [vmem:[%s0 + $0xe0] sm:$0xff]
    %v73 = vld [vmem:[%s0 + $0xe8] sm:$0xff]
    %v74 = vld [vmem:[%s0 + $0xf0] sm:$0xff]
    %v75 = vld [vmem:[%s0 + $0xf8] sm:$0xf]
    %v76 = vld [vmem:[%s0 + $0xfc] sm:$0xff]
    %v77 = vld [vmem:[%s0 + $0x104] sm:$0xff]
    %v78 = vld [vmem:[%s0 + $0x10c] sm:$0xff]
    %v79 = vld [vmem:[%s0 + $0x114] sm:$0xff]
    %v80 = vld [vmem:[%s0 + $0x11c] sm:$0xf]
    %v81 = vld [vmem:[%s0 + $0x120] sm:$0xff]
    %v82 = vld [vmem:[%s0 + $0x128] sm:$0xff]
    %v83 = vld [vmem:[%s0 + $0x130] sm:$0xff]
    %v84 = vld [vmem:[%s0 + $0x138] sm:$0xff]
    %v85 = vld [vmem:[%s0 + $0x140] sm:$0xf]
    %v86 = vld [vmem:[%s0 + $0x144] sm:$0xff]
    %v87 = vld [vmem:[%s0 + $0x14c] sm:$0xff]
    %v88 = vld [vmem:[%s0 + $0x154] sm:$0xff]
    %v89 = vld [vmem:[%s0 + $0x15c] sm:$0xff]
    %v90 = vld [vmem:[%s0 + $0x164] sm:$0xf]
    %v91 = vld [vmem:[%s0 + $0x168] sm:$0xff]
    %v92 = vld [vmem:[%s0 + $0x170] sm:$0xff]
    %v93 = vld [vmem:[%s0 + $0x178] sm:$0xff]
    %v94 = vld [vmem:[%s0 + $0x180] sm:$0xff]
    %v95 = vld [vmem:[%s0 + $0x188] sm:$0xf]
    %v96 = vld [vmem:[%s0 + $0x18c] sm:$0xff]
    %v97 = vld [vmem:[%s0 + $0x194] sm:$0xff]
    %v98 = vld [vmem:[%s0 + $0x19c] sm:$0xff]
    %v99 = vld [vmem:[%s0 + $0x1a4] sm:$0xff]
    %v100 = vld [vmem:[%s0 + $0x1ac] sm:$0xf]
    %v101 = vld [vmem:[%s0 + $0x1b0] sm:$0xff]
    %v102 = vld [vmem:[%s0 + $0x1b8] sm:$0xff]
    %v103 = vld [vmem:[%s0 + $0x1c0] sm:$0xff]
    %v104 = vld [vmem:[%s0 + $0x1c8] sm:$0xff]
    %v105 = vld [vmem:[%s0 + $0x1d0] sm:$0xf]
    %v106 = vld [vmem:[%s0 + $0x1d4] sm:$0xff]
    %v107 = vld [vmem:[%s0 + $0x1dc] sm:$0xff]
    %v108 = vld [vmem:[%s0 + $0x1e4] sm:$0xff]
    %v109 = vld [vmem:[%s0 + $0x1ec] sm:$0xff]
    %v110 = vld [vmem:[%s0 + $0x1f4] sm:$0xf]
    %v111 = vld [vmem:[%s0 + $0x1f8] sm:$0xff]
    %v112 = vld [vmem:[%s0 + $0x200] sm:$0xff]
    %v113 = vld [vmem:[%s0 + $0x208] sm:$0xff]
    %v114 = vld [vmem:[%s0 + $0x210] sm:$0xff]
    %v115 = vld [vmem:[%s0 + $0x218] sm:$0xf]
    %v116 = vld [vmem:[%s0 + $0x21c] sm:$0xff]
    %v117 = vld [vmem:[%s0 + $0x224] sm:$0xff]
    %v118 = vld [vmem:[%s0 + $0x22c] sm:$0xff]
    %v119 = vld [vmem:[%s0 + $0x234] sm:$0xff]
    %v120 = vld [vmem:[%s0 + $0x23c] sm:$0xf]
    %v121 = vld [vmem:[#allocation2] sm:$0xff]
    %v122 = vld [vmem:[#allocation2 + $0x8] sm:$0xff]
    %v123 = vld [vmem:[#allocation2 + $0x10] sm:$0xff]
    %v124 = vld [vmem:[#allocation2 + $0x18] sm:$0xff]
    %v125 = vld [vmem:[#allocation2 + $0x20] sm:$0xff]
    %v126 = vld [vmem:[#allocation2 + $0x28] sm:$0xff]
    %v127 = vld [vmem:[#allocation2 + $0x30] sm:$0xff]
    %v128 = vld [vmem:[#allocation2 + $0x38] sm:$0xff]
    %v129 = vld [vmem:[#allocation2 + $0x40] sm:$0xff]
    %v130 = vld [vmem:[#allocation2 + $0x48] sm:$0xff]
    %v131 = vld [vmem:[#allocation2 + $0x50] sm:$0xff]
    %v132 = vld [vmem:[#allocation2 + $0x58] sm:$0xff]
    %v133 = vld [vmem:[#allocation2 + $0x60] sm:$0xff]
    %v134 = vld [vmem:[#allocation2 + $0x68] sm:$0xff]
    %v135 = vld [vmem:[#allocation2 + $0x70] sm:$0xff]
    %v136 = vld [vmem:[#allocation2 + $0x78] sm:$0xff]
    %v137 = vld [vmem:[#allocation2 + $0x80] sm:$0xff]
    %v138 = vld [vmem:[#allocation2 + $0x88] sm:$0xff]
    %v139 = vld [vmem:[#allocation2 + $0x90] sm:$0xff]
    %v140 = vld [vmem:[#allocation2 + $0x98] sm:$0xff]
    %v141 = vld [vmem:[#allocation2 + $0xa0] sm:$0xff]
    %v142 = vld [vmem:[#allocation2 + $0xa8] sm:$0xff]
    %v143 = vld [vmem:[#allocation2 + $0xb0] sm:$0xff]
    %v144 = vld [vmem:[#allocation2 + $0xb8] sm:$0xff]
    %v145 = vld [vmem:[#allocation2 + $0xc0] sm:$0xff]
    %v146 = vld [vmem:[#allocation2 + $0xc8] sm:$0xff]
    %v147 = vld [vmem:[#allocation2 + $0xd0] sm:$0xff]
    %v148 = vld [vmem:[#allocation2 + $0xd8] sm:$0xff]
    %v149 = vld [vmem:[#allocation2 + $0xe0] sm:$0xff]
    %v150 = vld [vmem:[#allocation2 + $0xe8] sm:$0xff]
    %v151 = vld [vmem:[#allocation2 + $0xf0] sm:$0xff]
    %v152 = vld [vmem:[#allocation2 + $0xf8] sm:$0xff]
    %v153 = vld [vmem:[#allocation2 + $0x100] sm:$0xff]
    %v154 = vld [vmem:[#allocation2 + $0x108] sm:$0xff]
    %v155 = vld [vmem:[#allocation2 + $0x110] sm:$0xff]
    %v156 = vld [vmem:[#allocation2 + $0x118] sm:$0xff]
    %v157 = vld [vmem:[#allocation2 + $0x120] sm:$0xff]
    %v158 = vld [vmem:[#allocation2 + $0x128] sm:$0xff]
    %v159 = vld [vmem:[#allocation2 + $0x130] sm:$0xff]
    %v160 = vld [vmem:[#allocation2 + $0x138] sm:$0xff]
    %v161 = vld [vmem:[#allocation2 + $0x140] sm:$0xff]
    %v162 = vld [vmem:[#allocation2 + $0x148] sm:$0xff]
    %v163 = vld [vmem:[#allocation2 + $0x150] sm:$0xff]
    %v164 = vld [vmem:[#allocation2 + $0x158] sm:$0xff]
    %v165 = vld [vmem:[#allocation2 + $0x160] sm:$0xff]
    %v166 = vld [vmem:[#allocation2 + $0x168] sm:$0xff]
    %v167 = vld [vmem:[#allocation2 + $0x170] sm:$0xff]
    %v168 = vld [vmem:[#allocation2 + $0x178] sm:$0xff]
    %v169 = vld [vmem:[#allocation2 + $0x180] sm:$0xff]
    %v170 = vld [vmem:[#allocation2 + $0x188] sm:$0xff]
    %v171 = vld [vmem:[#allocation2 + $0x190] sm:$0xff]
    %v172 = vld [vmem:[#allocation2 + $0x198] sm:$0xff]
    %v173 = vld [vmem:[#allocation2 + $0x1a0] sm:$0xff]
    %v174 = vld [vmem:[#allocation2 + $0x1a8] sm:$0xff]
    %v175 = vld [vmem:[#allocation2 + $0x1b0] sm:$0xff]
    %v176 = vld [vmem:[#allocation2 + $0x1b8] sm:$0xff]
    %v177 = vld [vmem:[#allocation2 + $0x1c0] sm:$0xff]
    %v178 = vld [vmem:[#allocation2 + $0x1c8] sm:$0xff]
    %v179 = vld [vmem:[#allocation2 + $0x1d0] sm:$0xff]
    %v180 = vld [vmem:[#allocation2 + $0x1d8] sm:$0xff]
    %v181 = vld [vmem:[#allocation2 + $0x1e0] sm:$0xff]
    %v182 = vld [vmem:[#allocation2 + $0x1e8] sm:$0xff]
    %v183 = vld [vmem:[#allocation2 + $0x1f0] sm:$0xff]
    %v184 = vld [vmem:[#allocation2 + $0x1f8] sm:$0xff]
    %v185 = vld [vmem:[#allocation2 + $0x200] sm:$0xff]
    %v186 = vld [vmem:[#allocation2 + $0x208] sm:$0xff]
    %v187 = vld [vmem:[#allocation2 + $0x210] sm:$0xff]
    %v188 = vld [vmem:[#allocation2 + $0x218] sm:$0xff]
    %v189 = vld [vmem:[#allocation2 + $0x220] sm:$0xff]
    %v190 = vld [vmem:[#allocation2 + $0x228] sm:$0xff]
    %v191 = vld [vmem:[#allocation2 + $0x230] sm:$0xff]
    %v192 = vld [vmem:[#allocation2 + $0x238] sm:$0xff]
    %v193 = vld [vmem:[#allocation2 + $0x240] sm:$0xff]
    %v194 = vld [vmem:[#allocation2 + $0x248] sm:$0xff]
    %v195 = vld [vmem:[#allocation2 + $0x250] sm:$0xff]
    %v196 = vld [vmem:[#allocation2 + $0x258] sm:$0xff]
    %v197 = vld [vmem:[#allocation2 + $0x260] sm:$0xff]
    %v198 = vld [vmem:[#allocation2 + $0x268] sm:$0xff]
    %v199 = vld [vmem:[#allocation2 + $0x270] sm:$0xff]
    %v200 = vld [vmem:[#allocation2 + $0x278] sm:$0xff]
    %v201 = vld [vmem:[#allocation2 + $0x280] sm:$0xff]
    %v202 = vld [vmem:[#allocation2 + $0x288] sm:$0xff]
    %v203 = vld [vmem:[#allocation2 + $0x290] sm:$0xff]
    %v204 = vld [vmem:[#allocation2 + $0x298] sm:$0xff]
    %v205 = vld [vmem:[#allocation2 + $0x2a0] sm:$0xff]
    %v206 = vld [vmem:[#allocation2 + $0x2a8] sm:$0xff]
    %v207 = vld [vmem:[#allocation2 + $0x2b0] sm:$0xff]
    %v208 = vld [vmem:[#allocation2 + $0x2b8] sm:$0xff]
    %v209 = vld [vmem:[#allocation2 + $0x2c0] sm:$0xff]
    %v210 = vld [vmem:[#allocation2 + $0x2c8] sm:$0xff]
    %v211 = vld [vmem:[#allocation2 + $0x2d0] sm:$0xff]
    %v212 = vld [vmem:[#allocation2 + $0x2d8] sm:$0xff]
    %v213 = vld [vmem:[#allocation2 + $0x2e0] sm:$0xff]
    %v214 = vld [vmem:[#allocation2 + $0x2e8] sm:$0xff]
    %v215 = vld [vmem:[#allocation2 + $0x2f0] sm:$0xff]
    %v216 = vld [vmem:[#allocation2 + $0x2f8] sm:$0xff]
    %v217 = vld [vmem:[#allocation2 + $0x300] sm:$0xff]
    %v218 = vld [vmem:[#allocation2 + $0x308] sm:$0xff]
    %v219 = vld [vmem:[#allocation2 + $0x310] sm:$0xff]
    %v220 = vld [vmem:[#allocation2 + $0x318] sm:$0xff]
    %v221 = vld [vmem:[#allocation2 + $0x320] sm:$0xff]
    %v222 = vld [vmem:[#allocation2 + $0x328] sm:$0xff]
    %v223 = vld [vmem:[#allocation2 + $0x330] sm:$0xff]
    %v224 = vld [vmem:[#allocation2 + $0x338] sm:$0xff]
    %v225 = vld [vmem:[#allocation2 + $0x340] sm:$0xff]
    %v226 = vld [vmem:[#allocation2 + $0x348] sm:$0xff]
    %v227 = vld [vmem:[#allocation2 + $0x350] sm:$0xff]
    %v228 = vld [vmem:[#allocation2 + $0x358] sm:$0xff]
    %v229 = vld [vmem:[#allocation2 + $0x360] sm:$0xff]
    %v230 = vld [vmem:[#allocation2 + $0x368] sm:$0xff]
    %v231 = vld [vmem:[#allocation2 + $0x370] sm:$0xff]
    %v232 = vld [vmem:[#allocation2 + $0x378] sm:$0xff]
    %v233 = vld [vmem:[#allocation2 + $0x380] sm:$0xff]
    %v234 = vld [vmem:[#allocation2 + $0x388] sm:$0xff]
    %v235 = vld [vmem:[#allocation2 + $0x390] sm:$0xff]
    %v236 = vld [vmem:[#allocation2 + $0x398] sm:$0xff]
    %v237 = vld [vmem:[#allocation2 + $0x3a0] sm:$0xff]
    %v238 = vld [vmem:[#allocation2 + $0x3a8] sm:$0xff]
    %v239 = vld [vmem:[#allocation2 + $0x3b0] sm:$0xff]
    %v240 = vld [vmem:[#allocation2 + $0x3b8] sm:$0xff]
    %v241 = vld [vmem:[#allocation2 + $0x3c0] sm:$0xff]
    %v242 = vld [vmem:[#allocation2 + $0x3c8] sm:$0xff]
    %v243 = vld [vmem:[#allocation2 + $0x3d0] sm:$0xff]
    %v244 = vld [vmem:[#allocation2 + $0x3d8] sm:$0xff]
    %v245 = vld [vmem:[#allocation2 + $0x3e0] sm:$0xff]
    %v246 = vld [vmem:[#allocation2 + $0x3e8] sm:$0xff]
    %v247 = vld [vmem:[#allocation2 + $0x3f0] sm:$0xff]
    %v248 = vld [vmem:[#allocation2 + $0x3f8] sm:$0xff]
    %v249 = vld [vmem:[#allocation2 + $0x400] sm:$0xff]
    %v250 = vld [vmem:[#allocation2 + $0x408] sm:$0xff]
    %v251 = vld [vmem:[#allocation2 + $0x410] sm:$0xff]
    %v252 = vld [vmem:[#allocation2 + $0x418] sm:$0xff]
    %v253 = vld [vmem:[#allocation2 + $0x420] sm:$0xff]
    %v254 = vld [vmem:[#allocation2 + $0x428] sm:$0xff]
    %v255 = vld [vmem:[#allocation2 + $0x430] sm:$0xff]
    %v256 = vld [vmem:[#allocation2 + $0x438] sm:$0xff]
    %v257 = vld [vmem:[#allocation2 + $0x440] sm:$0xff]
    %v258 = vld [vmem:[#allocation2 + $0x448] sm:$0xff]
    %v259 = vld [vmem:[#allocation2 + $0x450] sm:$0xff]
    %v260 = vld [vmem:[#allocation2 + $0x458] sm:$0xff]
    %v261 = vld [vmem:[#allocation2 + $0x460] sm:$0xff]
    %v262 = vld [vmem:[#allocation2 + $0x468] sm:$0xff]
    %v263 = vld [vmem:[#allocation2 + $0x470] sm:$0xff]
    %v264 = vld [vmem:[#allocation2 + $0x478] sm:$0xff]
    %v345 = vunpack.c.l.b16 %v41
    %v346 = vunpack.c.h.b16 %v41
    %v347 = vunpack.c.l.b16 %v42
    %v348 = vunpack.c.h.b16 %v42
    %v349 = vunpack.c.l.b16 %v43
    %v350 = vunpack.c.h.b16 %v43
    %v351 = vunpack.c.l.b16 %v44
    %v352 = vunpack.c.h.b16 %v44
    %v353 = vunpack.c.l.b16 %v45
    %v354 = vunpack.c.l.b16 %v46
    %v355 = vunpack.c.h.b16 %v46
    %v356 = vunpack.c.l.b16 %v47
    %v357 = vunpack.c.h.b16 %v47
    %v358 = vunpack.c.l.b16 %v48
    %v359 = vunpack.c.h.b16 %v48
    %v360 = vunpack.c.l.b16 %v49
    %v361 = vunpack.c.h.b16 %v49
    %v362 = vunpack.c.l.b16 %v50
    %v363 = vunpack.c.l.b16 %v51
    %v364 = vunpack.c.h.b16 %v51
    %v365 = vunpack.c.l.b16 %v52
    %v366 = vunpack.c.h.b16 %v52
    %v367 = vunpack.c.l.b16 %v53
    %v368 = vunpack.c.h.b16 %v53
    %v369 = vunpack.c.l.b16 %v54
    %v370 = vunpack.c.h.b16 %v54
    %v371 = vunpack.c.l.b16 %v55
    %v372 = vunpack.c.l.b16 %v56
    %v373 = vunpack.c.h.b16 %v56
    %v374 = vunpack.c.l.b16 %v57
    %v375 = vunpack.c.h.b16 %v57
    %v376 = vunpack.c.l.b16 %v58
    %v377 = vunpack.c.h.b16 %v58
    %v378 = vunpack.c.l.b16 %v59
    %v379 = vunpack.c.h.b16 %v59
    %v380 = vunpack.c.l.b16 %v60
    %v381 = vunpack.c.l.b16 %v61
    %v382 = vunpack.c.h.b16 %v61
    %v383 = vunpack.c.l.b16 %v62
    %v384 = vunpack.c.h.b16 %v62
    %v385 = vunpack.c.l.b16 %v63
    %v386 = vunpack.c.h.b16 %v63
    %v387 = vunpack.c.l.b16 %v64
    %v388 = vunpack.c.h.b16 %v64
    %v389 = vunpack.c.l.b16 %v65
    %v390 = vunpack.c.l.b16 %v66
    %v391 = vunpack.c.h.b16 %v66
    %v392 = vunpack.c.l.b16 %v67
    %v393 = vunpack.c.h.b16 %v67
    %v394 = vunpack.c.l.b16 %v68
    %v395 = vunpack.c.h.b16 %v68
    %v396 = vunpack.c.l.b16 %v69
    %v397 = vunpack.c.h.b16 %v69
    %v398 = vunpack.c.l.b16 %v70
    %v399 = vunpack.c.l.b16 %v71
    %v400 = vunpack.c.h.b16 %v71
    %v401 = vunpack.c.l.b16 %v72
    %v402 = vunpack.c.h.b16 %v72
    %v403 = vunpack.c.l.b16 %v73
    %v404 = vunpack.c.h.b16 %v73
    %v405 = vunpack.c.l.b16 %v74
    %v406 = vunpack.c.h.b16 %v74
    %v407 = vunpack.c.l.b16 %v75
    %v408 = vunpack.c.l.b16 %v76
    %v409 = vunpack.c.h.b16 %v76
    %v410 = vunpack.c.l.b16 %v77
    %v411 = vunpack.c.h.b16 %v77
    %v412 = vunpack.c.l.b16 %v78
    %v413 = vunpack.c.h.b16 %v78
    %v414 = vunpack.c.l.b16 %v79
    %v415 = vunpack.c.h.b16 %v79
    %v416 = vunpack.c.l.b16 %v80
    %v417 = vunpack.c.l.b16 %v81
    %v418 = vunpack.c.h.b16 %v81
    %v419 = vunpack.c.l.b16 %v82
    %v420 = vunpack.c.h.b16 %v82
    %v421 = vunpack.c.l.b16 %v83
    %v422 = vunpack.c.h.b16 %v83
    %v423 = vunpack.c.l.b16 %v84
    %v424 = vunpack.c.h.b16 %v84
    %v425 = vunpack.c.l.b16 %v85
    %v426 = vunpack.c.l.b16 %v86
    %v427 = vunpack.c.h.b16 %v86
    %v428 = vunpack.c.l.b16 %v87
    %v429 = vunpack.c.h.b16 %v87
    %v430 = vunpack.c.l.b16 %v88
    %v431 = vunpack.c.h.b16 %v88
    %v432 = vunpack.c.l.b16 %v89
    %v433 = vunpack.c.h.b16 %v89
    %v434 = vunpack.c.l.b16 %v90
    %v435 = vunpack.c.l.b16 %v91
    %v436 = vunpack.c.h.b16 %v91
    %v437 = vunpack.c.l.b16 %v92
    %v438 = vunpack.c.h.b16 %v92
    %v439 = vunpack.c.l.b16 %v93
    %v440 = vunpack.c.h.b16 %v93
    %v441 = vunpack.c.l.b16 %v94
    %v442 = vunpack.c.h.b16 %v94
    %v443 = vunpack.c.l.b16 %v95
    %v444 = vunpack.c.l.b16 %v96
    %v445 = vunpack.c.h.b16 %v96
    %v446 = vunpack.c.l.b16 %v97
    %v447 = vunpack.c.h.b16 %v97
    %v448 = vunpack.c.l.b16 %v98
    %v449 = vunpack.c.h.b16 %v98
    %v450 = vunpack.c.l.b16 %v99
    %v451 = vunpack.c.h.b16 %v99
    %v452 = vunpack.c.l.b16 %v100
    %v453 = vunpack.c.l.b16 %v101
    %v454 = vunpack.c.h.b16 %v101
    %v455 = vunpack.c.l.b16 %v102
    %v456 = vunpack.c.h.b16 %v102
    %v457 = vunpack.c.l.b16 %v103
    %v458 = vunpack.c.h.b16 %v103
    %v459 = vunpack.c.l.b16 %v104
    %v460 = vunpack.c.h.b16 %v104
    %v461 = vunpack.c.l.b16 %v105
    %v462 = vunpack.c.l.b16 %v106
    %v463 = vunpack.c.h.b16 %v106
    %v464 = vunpack.c.l.b16 %v107
    %v465 = vunpack.c.h.b16 %v107
    %v466 = vunpack.c.l.b16 %v108
    %v467 = vunpack.c.h.b16 %v108
    %v468 = vunpack.c.l.b16 %v109
    %v469 = vunpack.c.h.b16 %v109
    %v470 = vunpack.c.l.b16 %v110
    %v471 = vunpack.c.l.b16 %v111
    %v472 = vunpack.c.h.b16 %v111
    %v473 = vunpack.c.l.b16 %v112
    %v474 = vunpack.c.h.b16 %v112
    %v475 = vunpack.c.l.b16 %v113
    %v476 = vunpack.c.h.b16 %v113
    %v477 = vunpack.c.l.b16 %v114
    %v478 = vunpack.c.h.b16 %v114
    %v479 = vunpack.c.l.b16 %v115
    %v480 = vunpack.c.l.b16 %v116
    %v481 = vunpack.c.h.b16 %v116
    %v482 = vunpack.c.l.b16 %v117
    %v483 = vunpack.c.h.b16 %v117
    %v484 = vunpack.c.l.b16 %v118
    %v485 = vunpack.c.h.b16 %v118
    %v486 = vunpack.c.l.b16 %v119
    %v487 = vunpack.c.h.b16 %v119
    %v488 = vunpack.c.l.b16 %v120
    %v489 = vpack.c.b16 %v354, %v345
    %v490 = vpack.c.b16 %v355, %v346
    %v491 = vpack.c.b16 %v356, %v347
    %v492 = vpack.c.b16 %v357, %v348
    %v493 = vpack.c.b16 %v358, %v349
    %v494 = vpack.c.b16 %v359, %v350
    %v495 = vpack.c.b16 %v360, %v351
    %v496 = vpack.c.b16 %v361, %v352
    %v497 = vpack.c.b16 %v362, %v353
    %v498 = vpack.c.b16 %v372, %v363
    %v499 = vpack.c.b16 %v373, %v364
    %v500 = vpack.c.b16 %v374, %v365
    %v501 = vpack.c.b16 %v375, %v366
    %v502 = vpack.c.b16 %v376, %v367
    %v503 = vpack.c.b16 %v377, %v368
    %v504 = vpack.c.b16 %v378, %v369
    %v505 = vpack.c.b16 %v379, %v370
    %v506 = vpack.c.b16 %v380, %v371
    %v507 = vpack.c.b16 %v390, %v381
    %v508 = vpack.c.b16 %v391, %v382
    %v509 = vpack.c.b16 %v392, %v383
    %v510 = vpack.c.b16 %v393, %v384
    %v511 = vpack.c.b16 %v394, %v385
    %v512 = vpack.c.b16 %v395, %v386
    %v513 = vpack.c.b16 %v396, %v387
    %v514 = vpack.c.b16 %v397, %v388
    %v515 = vpack.c.b16 %v398, %v389
    %v516 = vpack.c.b16 %v408, %v399
    %v517 = vpack.c.b16 %v409, %v400
    %v518 = vpack.c.b16 %v410, %v401
    %v519 = vpack.c.b16 %v411, %v402
    %v520 = vpack.c.b16 %v412, %v403
    %v521 = vpack.c.b16 %v413, %v404
    %v522 = vpack.c.b16 %v414, %v405
    %v523 = vpack.c.b16 %v415, %v406
    %v524 = vpack.c.b16 %v416, %v407
    %v525 = vpack.c.b16 %v426, %v417
    %v526 = vpack.c.b16 %v427, %v418
    %v527 = vpack.c.b16 %v428, %v419
    %v528 = vpack.c.b16 %v429, %v420
    %v529 = vpack.c.b16 %v430, %v421
    %v530 = vpack.c.b16 %v431, %v422
    %v531 = vpack.c.b16 %v432, %v423
    %v532 = vpack.c.b16 %v433, %v424
    %v533 = vpack.c.b16 %v434, %v425
    %v534 = vpack.c.b16 %v444, %v435
    %v535 = vpack.c.b16 %v445, %v436
    %v536 = vpack.c.b16 %v446, %v437
    %v537 = vpack.c.b16 %v447, %v438
    %v538 = vpack.c.b16 %v448, %v439
    %v539 = vpack.c.b16 %v449, %v440
    %v540 = vpack.c.b16 %v450, %v441
    %v541 = vpack.c.b16 %v451, %v442
    %v542 = vpack.c.b16 %v452, %v443
    %v543 = vpack.c.b16 %v462, %v453
    %v544 = vpack.c.b16 %v463, %v454
    %v545 = vpack.c.b16 %v464, %v455
    %v546 = vpack.c.b16 %v465, %v456
    %v547 = vpack.c.b16 %v466, %v457
    %v548 = vpack.c.b16 %v467, %v458
    %v549 = vpack.c.b16 %v468, %v459
    %v550 = vpack.c.b16 %v469, %v460
    %v551 = vpack.c.b16 %v470, %v461
    %v552 = vpack.c.b16 %v480, %v471
    %v553 = vpack.c.b16 %v481, %v472
    %v554 = vpack.c.b16 %v482, %v473
    %v555 = vpack.c.b16 %v483, %v474
    %v556 = vpack.c.b16 %v484, %v475
    %v557 = vpack.c.b16 %v485, %v476
    %v558 = vpack.c.b16 %v486, %v477
    %v559 = vpack.c.b16 %v487, %v478
    %v560 = vpack.c.b16 %v488, %v479
    %v777 = vunpack.c.l.b16 %v121
    %v778 = vunpack.c.h.b16 %v121
    %v779 = vunpack.c.l.b16 %v122
    %v780 = vunpack.c.h.b16 %v122
    %v781 = vunpack.c.l.b16 %v123
    %v782 = vunpack.c.h.b16 %v123
    %v783 = vunpack.c.l.b16 %v124
    %v784 = vunpack.c.h.b16 %v124
    %v785 = vunpack.c.l.b16 %v125
    %v786 = vunpack.c.h.b16 %v125
    %v787 = vunpack.c.l.b16 %v126
    %v788 = vunpack.c.h.b16 %v126
    %v789 = vunpack.c.l.b16 %v127
    %v790 = vunpack.c.h.b16 %v127
    %v791 = vunpack.c.l.b16 %v128
    %v792 = vunpack.c.h.b16 %v128
    %v793 = vunpack.c.l.b16 %v129
    %v794 = vunpack.c.h.b16 %v129
    %v795 = vunpack.c.l.b16 %v130
    %v796 = vunpack.c.h.b16 %v130
    %v797 = vunpack.c.l.b16 %v131
    %v798 = vunpack.c.h.b16 %v131
    %v799 = vunpack.c.l.b16 %v132
    %v800 = vunpack.c.h.b16 %v132
    %v801 = vunpack.c.l.b16 %v133
    %v802 = vunpack.c.h.b16 %v133
    %v803 = vunpack.c.l.b16 %v134
    %v804 = vunpack.c.h.b16 %v134
    %v805 = vunpack.c.l.b16 %v135
    %v806 = vunpack.c.h.b16 %v135
    %v807 = vunpack.c.l.b16 %v136
    %v808 = vunpack.c.h.b16 %v136
    %v809 = vunpack.c.l.b16 %v137
    %v810 = vunpack.c.h.b16 %v137
    %v811 = vunpack.c.l.b16 %v138
    %v812 = vunpack.c.h.b16 %v138
    %v813 = vunpack.c.l.b16 %v139
    %v814 = vunpack.c.h.b16 %v139
    %v815 = vunpack.c.l.b16 %v140
    %v816 = vunpack.c.h.b16 %v140
    %v817 = vunpack.c.l.b16 %v141
    %v818 = vunpack.c.h.b16 %v141
    %v819 = vunpack.c.l.b16 %v142
    %v820 = vunpack.c.h.b16 %v142
    %v821 = vunpack.c.l.b16 %v143
    %v822 = vunpack.c.h.b16 %v143
    %v823 = vunpack.c.l.b16 %v144
    %v824 = vunpack.c.h.b16 %v144
    %v825 = vunpack.c.l.b16 %v145
    %v826 = vunpack.c.h.b16 %v145
    %v827 = vunpack.c.l.b16 %v146
    %v828 = vunpack.c.h.b16 %v146
    %v829 = vunpack.c.l.b16 %v147
    %v830 = vunpack.c.h.b16 %v147
    %v831 = vunpack.c.l.b16 %v148
    %v832 = vunpack.c.h.b16 %v148
    %v833 = vunpack.c.l.b16 %v149
    %v834 = vunpack.c.h.b16 %v149
    %v835 = vunpack.c.l.b16 %v150
    %v836 = vunpack.c.h.b16 %v150
    %v837 = vunpack.c.l.b16 %v151
    %v838 = vunpack.c.h.b16 %v151
    %v839 = vunpack.c.l.b16 %v152
    %v840 = vunpack.c.h.b16 %v152
    %v841 = vunpack.c.l.b16 %v153
    %v842 = vunpack.c.h.b16 %v153
    %v843 = vunpack.c.l.b16 %v154
    %v844 = vunpack.c.h.b16 %v154
    %v845 = vunpack.c.l.b16 %v155
    %v846 = vunpack.c.h.b16 %v155
    %v847 = vunpack.c.l.b16 %v156
    %v848 = vunpack.c.h.b16 %v156
    %v849 = vunpack.c.l.b16 %v157
    %v850 = vunpack.c.h.b16 %v157
    %v851 = vunpack.c.l.b16 %v158
    %v852 = vunpack.c.h.b16 %v158
    %v853 = vunpack.c.l.b16 %v159
    %v854 = vunpack.c.h.b16 %v159
    %v855 = vunpack.c.l.b16 %v160
    %v856 = vunpack.c.h.b16 %v160
    %v857 = vunpack.c.l.b16 %v161
    %v858 = vunpack.c.h.b16 %v161
    %v859 = vunpack.c.l.b16 %v162
    %v860 = vunpack.c.h.b16 %v162
    %v861 = vunpack.c.l.b16 %v163
    %v862 = vunpack.c.h.b16 %v163
    %v863 = vunpack.c.l.b16 %v164
    %v864 = vunpack.c.h.b16 %v164
    %v865 = vunpack.c.l.b16 %v165
    %v866 = vunpack.c.h.b16 %v165
    %v867 = vunpack.c.l.b16 %v166
    %v868 = vunpack.c.h.b16 %v166
    %v869 = vunpack.c.l.b16 %v167
    %v870 = vunpack.c.h.b16 %v167
    %v871 = vunpack.c.l.b16 %v168
    %v872 = vunpack.c.h.b16 %v168
    %v873 = vunpack.c.l.b16 %v169
    %v874 = vunpack.c.h.b16 %v169
    %v875 = vunpack.c.l.b16 %v170
    %v876 = vunpack.c.h.b16 %v170
    %v877 = vunpack.c.l.b16 %v171
    %v878 = vunpack.c.h.b16 %v171
    %v879 = vunpack.c.l.b16 %v172
    %v880 = vunpack.c.h.b16 %v172
    %v881 = vunpack.c.l.b16 %v173
    %v882 = vunpack.c.h.b16 %v173
    %v883 = vunpack.c.l.b16 %v174
    %v884 = vunpack.c.h.b16 %v174
    %v885 = vunpack.c.l.b16 %v175
    %v886 = vunpack.c.h.b16 %v175
    %v887 = vunpack.c.l.b16 %v176
    %v888 = vunpack.c.h.b16 %v176
    %v889 = vunpack.c.l.b16 %v177
    %v890 = vunpack.c.h.b16 %v177
    %v891 = vunpack.c.l.b16 %v178
    %v892 = vunpack.c.h.b16 %v178
    %v893 = vunpack.c.l.b16 %v179
    %v894 = vunpack.c.h.b16 %v179
    %v895 = vunpack.c.l.b16 %v180
    %v896 = vunpack.c.h.b16 %v180
    %v897 = vunpack.c.l.b16 %v181
    %v898 = vunpack.c.h.b16 %v181
    %v899 = vunpack.c.l.b16 %v182
    %v900 = vunpack.c.h.b16 %v182
    %v901 = vunpack.c.l.b16 %v183
    %v902 = vunpack.c.h.b16 %v183
    %v903 = vunpack.c.l.b16 %v184
    %v904 = vunpack.c.h.b16 %v184
    %v905 = vunpack.c.l.b16 %v185
    %v906 = vunpack.c.h.b16 %v185
    %v907 = vunpack.c.l.b16 %v186
    %v908 = vunpack.c.h.b16 %v186
    %v909 = vunpack.c.l.b16 %v187
    %v910 = vunpack.c.h.b16 %v187
    %v911 = vunpack.c.l.b16 %v188
    %v912 = vunpack.c.h.b16 %v188
    %v913 = vunpack.c.l.b16 %v189
    %v914 = vunpack.c.h.b16 %v189
    %v915 = vunpack.c.l.b16 %v190
    %v916 = vunpack.c.h.b16 %v190
    %v917 = vunpack.c.l.b16 %v191
    %v918 = vunpack.c.h.b16 %v191
    %v919 = vunpack.c.l.b16 %v192
    %v920 = vunpack.c.h.b16 %v192
    %v921 = vunpack.c.l.b16 %v193
    %v922 = vunpack.c.h.b16 %v193
    %v923 = vunpack.c.l.b16 %v194
    %v924 = vunpack.c.h.b16 %v194
    %v925 = vunpack.c.l.b16 %v195
    %v926 = vunpack.c.h.b16 %v195
    %v927 = vunpack.c.l.b16 %v196
    %v928 = vunpack.c.h.b16 %v196
    %v929 = vunpack.c.l.b16 %v197
    %v930 = vunpack.c.h.b16 %v197
    %v931 = vunpack.c.l.b16 %v198
    %v932 = vunpack.c.h.b16 %v198
    %v933 = vunpack.c.l.b16 %v199
    %v934 = vunpack.c.h.b16 %v199
    %v935 = vunpack.c.l.b16 %v200
    %v936 = vunpack.c.h.b16 %v200
    %v937 = vunpack.c.l.b16 %v201
    %v938 = vunpack.c.h.b16 %v201
    %v939 = vunpack.c.l.b16 %v202
    %v940 = vunpack.c.h.b16 %v202
    %v941 = vunpack.c.l.b16 %v203
    %v942 = vunpack.c.h.b16 %v203
    %v943 = vunpack.c.l.b16 %v204
    %v944 = vunpack.c.h.b16 %v204
    %v945 = vunpack.c.l.b16 %v205
    %v946 = vunpack.c.h.b16 %v205
    %v947 = vunpack.c.l.b16 %v206
    %v948 = vunpack.c.h.b16 %v206
    %v949 = vunpack.c.l.b16 %v207
    %v950 = vunpack.c.h.b16 %v207
    %v951 = vunpack.c.l.b16 %v208
    %v952 = vunpack.c.h.b16 %v208
    %v953 = vunpack.c.l.b16 %v209
    %v954 = vunpack.c.h.b16 %v209
    %v955 = vunpack.c.l.b16 %v210
    %v956 = vunpack.c.h.b16 %v210
    %v957 = vunpack.c.l.b16 %v211
    %v958 = vunpack.c.h.b16 %v211
    %v959 = vunpack.c.l.b16 %v212
    %v960 = vunpack.c.h.b16 %v212
    %v961 = vunpack.c.l.b16 %v213
    %v962 = vunpack.c.h.b16 %v213
    %v963 = vunpack.c.l.b16 %v214
    %v964 = vunpack.c.h.b16 %v214
    %v965 = vunpack.c.l.b16 %v215
    %v966 = vunpack.c.h.b16 %v215
    %v967 = vunpack.c.l.b16 %v216
    %v968 = vunpack.c.h.b16 %v216
    %v969 = vunpack.c.l.b16 %v217
    %v970 = vunpack.c.h.b16 %v217
    %v971 = vunpack.c.l.b16 %v218
    %v972 = vunpack.c.h.b16 %v218
    %v973 = vunpack.c.l.b16 %v219
    %v974 = vunpack.c.h.b16 %v219
    %v975 = vunpack.c.l.b16 %v220
    %v976 = vunpack.c.h.b16 %v220
    %v977 = vunpack.c.l.b16 %v221
    %v978 = vunpack.c.h.b16 %v221
    %v979 = vunpack.c.l.b16 %v222
    %v980 = vunpack.c.h.b16 %v222
    %v981 = vunpack.c.l.b16 %v223
    %v982 = vunpack.c.h.b16 %v223
    %v983 = vunpack.c.l.b16 %v224
    %v984 = vunpack.c.h.b16 %v224
    %v985 = vunpack.c.l.b16 %v225
    %v986 = vunpack.c.h.b16 %v225
    %v987 = vunpack.c.l.b16 %v226
    %v988 = vunpack.c.h.b16 %v226
    %v989 = vunpack.c.l.b16 %v227
    %v990 = vunpack.c.h.b16 %v227
    %v991 = vunpack.c.l.b16 %v228
    %v992 = vunpack.c.h.b16 %v228
    %v993 = vunpack.c.l.b16 %v229
    %v994 = vunpack.c.h.b16 %v229
    %v995 = vunpack.c.l.b16 %v230
    %v996 = vunpack.c.h.b16 %v230
    %v997 = vunpack.c.l.b16 %v231
    %v998 = vunpack.c.h.b16 %v231
    %v999 = vunpack.c.l.b16 %v232
    %v1000 = vunpack.c.h.b16 %v232
    %v1001 = vunpack.c.l.b16 %v233
    %v1002 = vunpack.c.h.b16 %v233
    %v1003 = vunpack.c.l.b16 %v234
    %v1004 = vunpack.c.h.b16 %v234
    %v1005 = vunpack.c.l.b16 %v235
    %v1006 = vunpack.c.h.b16 %v235
    %v1007 = vunpack.c.l.b16 %v236
    %v1008 = vunpack.c.h.b16 %v236
    %v1009 = vunpack.c.l.b16 %v237
    %v1010 = vunpack.c.h.b16 %v237
    %v1011 = vunpack.c.l.b16 %v238
    %v1012 = vunpack.c.h.b16 %v238
    %v1013 = vunpack.c.l.b16 %v239
    %v1014 = vunpack.c.h.b16 %v239
    %v1015 = vunpack.c.l.b16 %v240
    %v1016 = vunpack.c.h.b16 %v240
    %v1017 = vunpack.c.l.b16 %v241
    %v1018 = vunpack.c.h.b16 %v241
    %v1019 = vunpack.c.l.b16 %v242
    %v1020 = vunpack.c.h.b16 %v242
    %v1021 = vunpack.c.l.b16 %v243
    %v1022 = vunpack.c.h.b16 %v243
    %v1023 = vunpack.c.l.b16 %v244
    %v1024 = vunpack.c.h.b16 %v244
    %v1025 = vunpack.c.l.b16 %v245
    %v1026 = vunpack.c.h.b16 %v245
    %v1027 = vunpack.c.l.b16 %v246
    %v1028 = vunpack.c.h.b16 %v246
    %v1029 = vunpack.c.l.b16 %v247
    %v1030 = vunpack.c.h.b16 %v247
    %v1031 = vunpack.c.l.b16 %v248
    %v1032 = vunpack.c.h.b16 %v248
    %v1033 = vunpack.c.l.b16 %v249
    %v1034 = vunpack.c.h.b16 %v249
    %v1035 = vunpack.c.l.b16 %v250
    %v1036 = vunpack.c.h.b16 %v250
    %v1037 = vunpack.c.l.b16 %v251
    %v1038 = vunpack.c.h.b16 %v251
    %v1039 = vunpack.c.l.b16 %v252
    %v1040 = vunpack.c.h.b16 %v252
    %v1041 = vunpack.c.l.b16 %v253
    %v1042 = vunpack.c.h.b16 %v253
    %v1043 = vunpack.c.l.b16 %v254
    %v1044 = vunpack.c.h.b16 %v254
    %v1045 = vunpack.c.l.b16 %v255
    %v1046 = vunpack.c.h.b16 %v255
    %v1047 = vunpack.c.l.b16 %v256
    %v1048 = vunpack.c.h.b16 %v256
    %v1049 = vunpack.c.l.b16 %v257
    %v1050 = vunpack.c.h.b16 %v257
    %v1051 = vunpack.c.l.b16 %v258
    %v1052 = vunpack.c.h.b16 %v258
    %v1053 = vunpack.c.l.b16 %v259
    %v1054 = vunpack.c.h.b16 %v259
    %v1055 = vunpack.c.l.b16 %v260
    %v1056 = vunpack.c.h.b16 %v260
    %v1057 = vunpack.c.l.b16 %v261
    %v1058 = vunpack.c.h.b16 %v261
    %v1059 = vunpack.c.l.b16 %v262
    %v1060 = vunpack.c.h.b16 %v262
    %v1061 = vunpack.c.l.b16 %v263
    %v1062 = vunpack.c.h.b16 %v263
    %v1063 = vunpack.c.l.b16 %v264
    %v1064 = vunpack.c.h.b16 %v264
    %v1065 = vpack.c.b16 %v779, %v777
    %v1066 = vpack.c.b16 %v780, %v778
    %v1067 = vpack.c.b16 %v783, %v781
    %v1068 = vpack.c.b16 %v784, %v782
    %v1069 = vpack.c.b16 %v787, %v785
    %v1070 = vpack.c.b16 %v788, %v786
    %v1071 = vpack.c.b16 %v791, %v789
    %v1072 = vpack.c.b16 %v792, %v790
    %v1073 = vpack.c.b16 %v795, %v793
    %v1074 = vpack.c.b16 %v796, %v794
    %v1075 = vpack.c.b16 %v799, %v797
    %v1076 = vpack.c.b16 %v800, %v798
    %v1077 = vpack.c.b16 %v803, %v801
    %v1078 = vpack.c.b16 %v804, %v802
    %v1079 = vpack.c.b16 %v807, %v805
    %v1080 = vpack.c.b16 %v808, %v806
    %v1081 = vpack.c.b16 %v811, %v809
    %v1082 = vpack.c.b16 %v812, %v810
    %v1083 = vpack.c.b16 %v815, %v813
    %v1084 = vpack.c.b16 %v816, %v814
    %v1085 = vpack.c.b16 %v819, %v817
    %v1086 = vpack.c.b16 %v820, %v818
    %v1087 = vpack.c.b16 %v823, %v821
    %v1088 = vpack.c.b16 %v824, %v822
    %v1089 = vpack.c.b16 %v827, %v825
    %v1090 = vpack.c.b16 %v828, %v826
    %v1091 = vpack.c.b16 %v831, %v829
    %v1092 = vpack.c.b16 %v832, %v830
    %v1093 = vpack.c.b16 %v835, %v833
    %v1094 = vpack.c.b16 %v836, %v834
    %v1095 = vpack.c.b16 %v839, %v837
    %v1096 = vpack.c.b16 %v840, %v838
    %v1097 = vpack.c.b16 %v843, %v841
    %v1098 = vpack.c.b16 %v844, %v842
    %v1099 = vpack.c.b16 %v847, %v845
    %v1100 = vpack.c.b16 %v848, %v846
    %v1101 = vpack.c.b16 %v851, %v849
    %v1102 = vpack.c.b16 %v852, %v850
    %v1103 = vpack.c.b16 %v855, %v853
    %v1104 = vpack.c.b16 %v856, %v854
    %v1105 = vpack.c.b16 %v859, %v857
    %v1106 = vpack.c.b16 %v860, %v858
    %v1107 = vpack.c.b16 %v863, %v861
    %v1108 = vpack.c.b16 %v864, %v862
    %v1109 = vpack.c.b16 %v867, %v865
    %v1110 = vpack.c.b16 %v868, %v866
    %v1111 = vpack.c.b16 %v871, %v869
    %v1112 = vpack.c.b16 %v872, %v870
    %v1113 = vpack.c.b16 %v875, %v873
    %v1114 = vpack.c.b16 %v876, %v874
    %v1115 = vpack.c.b16 %v879, %v877
    %v1116 = vpack.c.b16 %v880, %v878
    %v1117 = vpack.c.b16 %v883, %v881
    %v1118 = vpack.c.b16 %v884, %v882
    %v1119 = vpack.c.b16 %v887, %v885
    %v1120 = vpack.c.b16 %v888, %v886
    %v1121 = vpack.c.b16 %v891, %v889
    %v1122 = vpack.c.b16 %v892, %v890
    %v1123 = vpack.c.b16 %v895, %v893
    %v1124 = vpack.c.b16 %v896, %v894
    %v1125 = vpack.c.b16 %v899, %v897
    %v1126 = vpack.c.b16 %v900, %v898
    %v1127 = vpack.c.b16 %v903, %v901
    %v1128 = vpack.c.b16 %v904, %v902
    %v1129 = vpack.c.b16 %v907, %v905
    %v1130 = vpack.c.b16 %v908, %v906
    %v1131 = vpack.c.b16 %v911, %v909
    %v1132 = vpack.c.b16 %v912, %v910
    %v1133 = vpack.c.b16 %v915, %v913
    %v1134 = vpack.c.b16 %v916, %v914
    %v1135 = vpack.c.b16 %v919, %v917
    %v1136 = vpack.c.b16 %v920, %v918
    %v1137 = vpack.c.b16 %v923, %v921
    %v1138 = vpack.c.b16 %v924, %v922
    %v1139 = vpack.c.b16 %v927, %v925
    %v1140 = vpack.c.b16 %v928, %v926
    %v1141 = vpack.c.b16 %v931, %v929
    %v1142 = vpack.c.b16 %v932, %v930
    %v1143 = vpack.c.b16 %v935, %v933
    %v1144 = vpack.c.b16 %v936, %v934
    %v1145 = vpack.c.b16 %v939, %v937
    %v1146 = vpack.c.b16 %v940, %v938
    %v1147 = vpack.c.b16 %v943, %v941
    %v1148 = vpack.c.b16 %v944, %v942
    %v1149 = vpack.c.b16 %v947, %v945
    %v1150 = vpack.c.b16 %v948, %v946
    %v1151 = vpack.c.b16 %v951, %v949
    %v1152 = vpack.c.b16 %v952, %v950
    %v1153 = vpack.c.b16 %v955, %v953
    %v1154 = vpack.c.b16 %v956, %v954
    %v1155 = vpack.c.b16 %v959, %v957
    %v1156 = vpack.c.b16 %v960, %v958
    %v1157 = vpack.c.b16 %v963, %v961
    %v1158 = vpack.c.b16 %v964, %v962
    %v1159 = vpack.c.b16 %v967, %v965
    %v1160 = vpack.c.b16 %v968, %v966
    %v1161 = vpack.c.b16 %v971, %v969
    %v1162 = vpack.c.b16 %v972, %v970
    %v1163 = vpack.c.b16 %v975, %v973
    %v1164 = vpack.c.b16 %v976, %v974
    %v1165 = vpack.c.b16 %v979, %v977
    %v1166 = vpack.c.b16 %v980, %v978
    %v1167 = vpack.c.b16 %v983, %v981
    %v1168 = vpack.c.b16 %v984, %v982
    %v1169 = vpack.c.b16 %v987, %v985
    %v1170 = vpack.c.b16 %v988, %v986
    %v1171 = vpack.c.b16 %v991, %v989
    %v1172 = vpack.c.b16 %v992, %v990
    %v1173 = vpack.c.b16 %v995, %v993
    %v1174 = vpack.c.b16 %v996, %v994
    %v1175 = vpack.c.b16 %v999, %v997
    %v1176 = vpack.c.b16 %v1000, %v998
    %v1177 = vpack.c.b16 %v1003, %v1001
    %v1178 = vpack.c.b16 %v1004, %v1002
    %v1179 = vpack.c.b16 %v1007, %v1005
    %v1180 = vpack.c.b16 %v1008, %v1006
    %v1181 = vpack.c.b16 %v1011, %v1009
    %v1182 = vpack.c.b16 %v1012, %v1010
    %v1183 = vpack.c.b16 %v1015, %v1013
    %v1184 = vpack.c.b16 %v1016, %v1014
    %v1185 = vpack.c.b16 %v1019, %v1017
    %v1186 = vpack.c.b16 %v1020, %v1018
    %v1187 = vpack.c.b16 %v1023, %v1021
    %v1188 = vpack.c.b16 %v1024, %v1022
    %v1189 = vpack.c.b16 %v1027, %v1025
    %v1190 = vpack.c.b16 %v1028, %v1026
    %v1191 = vpack.c.b16 %v1031, %v1029
    %v1192 = vpack.c.b16 %v1032, %v1030
    %v1193 = vpack.c.b16 %v1035, %v1033
    %v1194 = vpack.c.b16 %v1036, %v1034
    %v1195 = vpack.c.b16 %v1039, %v1037
    %v1196 = vpack.c.b16 %v1040, %v1038
    %v1197 = vpack.c.b16 %v1043, %v1041
    %v1198 = vpack.c.b16 %v1044, %v1042
    %v1199 = vpack.c.b16 %v1047, %v1045
    %v1200 = vpack.c.b16 %v1048, %v1046
    %v1201 = vpack.c.b16 %v1051, %v1049
    %v1202 = vpack.c.b16 %v1052, %v1050
    %v1203 = vpack.c.b16 %v1055, %v1053
    %v1204 = vpack.c.b16 %v1056, %v1054
    %v1205 = vpack.c.b16 %v1059, %v1057
    %v1206 = vpack.c.b16 %v1060, %v1058
    %v1207 = vpack.c.b16 %v1063, %v1061
    %v1208 = vpack.c.b16 %v1064, %v1062
    %1353 = vmatprep.subr.bf16.mxu0 %v1066
    %1354 = vmatpush1.bf16.msra.mxu0 %v1065
    %1355 = vmatprep.subr.bf16.mxu0 %v1068
    %1356 = vmatpush1.bf16.msra.mxu0 %v1067
    %1357 = vmatprep.subr.bf16.mxu0 %v1070
    %1358 = vmatpush1.bf16.msra.mxu0 %v1069
    %1359 = vmatprep.subr.bf16.mxu0 %v1072
    %1360 = vmatpush1.bf16.msra.mxu0 %v1071
    %1361 = vmatprep.subr.bf16.mxu0 %v1074
    %1362 = vmatpush1.bf16.msra.mxu0 %v1073
    %1363 = vmatprep.subr.bf16.mxu0 %v1076
    %1364 = vmatpush1.bf16.msra.mxu0 %v1075
    %1365 = vmatprep.subr.bf16.mxu0 %v1078
    %1366 = vmatpush1.bf16.msra.mxu0 %v1077
    %1367 = vmatprep.subr.bf16.mxu0 %v1080
    %1368 = vmatpush1.bf16.msra.mxu0 %v1079
    %1369 = vmatprep.subr.bf16.mxu0 %v1082
    %1370 = vmatpush1.bf16.msra.mxu0 %v1081
    %1371 = vmatprep.subr.bf16.mxu0 %v1084
    %1372 = vmatpush1.bf16.msra.mxu0 %v1083
    %1373 = vmatprep.subr.bf16.mxu0 %v1086
    %1374 = vmatpush1.bf16.msra.mxu0 %v1085
    %1375 = vmatprep.subr.bf16.mxu0 %v1088
    %1376 = vmatpush1.bf16.msra.mxu0 %v1087
    %1377 = vmatprep.subr.bf16.mxu0 %v1090
    %1378 = vmatpush1.bf16.msra.mxu0 %v1089
    %1379 = vmatprep.subr.bf16.mxu0 %v1092
    %1380 = vmatpush1.bf16.msra.mxu0 %v1091
    %1381 = vmatprep.subr.bf16.mxu0 %v1094
    %1382 = vmatpush1.bf16.msra.mxu0 %v1093
    %1383 = vmatprep.subr.bf16.mxu0 %v1096
    %1384 = vmatpush1.bf16.msra.mxu0 %v1095
    %1385 = vmatprep.mubr.bf16.mxu0 %v490
    %1386 = vmatmul.mubr.bf16.gmra.mrb[0].mxu0 %v489
    %v1387 = vpop.f32.mrb[0].mxu0
    %v1388 = vadd.f32 0.0, %v1387
    %v1389 = vpop.f32.mrb[0].mxu0
    %v1390 = vadd.f32 0.0, %v1389
    %v1391 = vpop.f32.mrb[0].mxu0
    %v1392 = vadd.f32 0.0, %v1391
    %v1393 = vpop.f32.mrb[0].mxu0
    %v1394 = vadd.f32 0.0, %v1393
    %1395 = vmatprep.mubr.bf16.mxu0 %v499
    %1396 = vmatmul.mubr.bf16.gmra.mrb[0].mxu0 %v498
    %v1397 = vpop.f32.mrb[0].mxu0
    %v1398 = vadd.f32 0.0, %v1397
    %v1399 = vpop.f32.mrb[0].mxu0
    %v1400 = vadd.f32 0.0, %v1399
    %v1401 = vpop.f32.mrb[0].mxu0
    %v1402 = vadd.f32 0.0, %v1401
    %v1403 = vpop.f32.mrb[0].mxu0
    %v1404 = vadd.f32 0.0, %v1403
    %1405 = vmatprep.mubr.bf16.mxu0 %v508
    %1406 = vmatmul.mubr.bf16.gmra.mrb[0].mxu0 %v507
    %v1407 = vpop.f32.mrb[0].mxu0
    %v1408 = vadd.f32 0.0, %v1407
    %v1409 = vpop.f32.mrb[0].mxu0
    %v1410 = vadd.f32 0.0, %v1409
    %v1411 = vpop.f32.mrb[0].mxu0
    %v1412 = vadd.f32 0.0, %v1411
    %v1413 = vpop.f32.mrb[0].mxu0
    %v1414 = vadd.f32 0.0, %v1413
    %1415 = vmatprep.mubr.bf16.mxu0 %v517
    %1416 = vmatmul.mubr.bf16.gmra.mrb[0].mxu0 %v516
    %v1417 = vpop.f32.mrb[0].mxu0
    %v1418 = vadd.f32 0.0, %v1417
    %v1419 = vpop.f32.mrb[0].mxu0
    %v1420 = vadd.f32 0.0, %v1419
    %v1421 = vpop.f32.mrb[0].mxu0
    %v1422 = vadd.f32 0.0, %v1421
    %v1423 = vpop.f32.mrb[0].mxu0
    %v1424 = vadd.f32 0.0, %v1423
    %1425 = vmatprep.mubr.bf16.mxu0 %v526
    %1426 = vmatmul.mubr.bf16.gmra.mrb[0].mxu0 %v525
    %v1427 = vpop.f32.mrb[0].mxu0
    %v1428 = vadd.f32 0.0, %v1427
    %v1429 = vpop.f32.mrb[0].mxu0
    %v1430 = vadd.f32 0.0, %v1429
    %v1431 = vpop.f32.mrb[0].mxu0
    %v1432 = vadd.f32 0.0, %v1431
    %v1433 = vpop.f32.mrb[0].mxu0
    %v1434 = vadd.f32 0.0, %v1433
    %1435 = vmatprep.mubr.bf16.mxu0 %v535
    %1436 = vmatmul.mubr.bf16.gmra.mrb[0].mxu0 %v534
    %v1437 = vpop.f32.mrb[0].mxu0
    %v1438 = vadd.f32 0.0, %v1437
    %v1439 = vpop.f32.mrb[0].mxu0
    %v1440 = vadd.f32 0.0, %v1439
    %v1441 = vpop.f32.mrb[0].mxu0
    %v1442 = vadd.f32 0.0, %v1441
    %v1443 = vpop.f32.mrb[0].mxu0
    %v1444 = vadd.f32 0.0, %v1443
    %1445 = vmatprep.mubr.bf16.mxu0 %v544
    %1446 = vmatmul.mubr.bf16.gmra.mrb[0].mxu0 %v543
    %v1447 = vpop.f32.mrb[0].mxu0
    %v1448 = vadd.f32 0.0, %v1447
    %v1449 = vpop.f32.mrb[0].mxu0
    %v1450 = vadd.f32 0.0, %v1449
    %v1451 = vpop.f32.mrb[0].mxu0
    %v1452 = vadd.f32 0.0, %v1451
    %v1453 = vpop.f32.mrb[0].mxu0
    %v1454 = vadd.f32 0.0, %v1453
    %1455 = vmatprep.mubr.bf16.mxu0 %v553
    %1456 = vmatmul.mubr.bf16.gmra.mrb[0].mxu0 %v552
    %v1457 = vpop.f32.mrb[0].mxu0
    %v1458 = vadd.f32 0.0, %v1457
    %v1459 = vpop.f32.mrb[0].mxu0
    %v1460 = vadd.f32 0.0, %v1459
    %v1461 = vpop.f32.mrb[0].mxu0
    %v1462 = vadd.f32 0.0, %v1461
    %v1463 = vpop.f32.mrb[0].mxu0
    %v1464 = vadd.f32 0.0, %v1463
    %1465 = vdwg.mxu0
    %1466 = vmatprep.subr.bf16.mxu0 %v1098
    %1467 = vmatpush1.bf16.msra.mxu0 %v1097
    %1468 = vmatprep.subr.bf16.mxu0 %v1100
    %1469 = vmatpush1.bf16.msra.mxu0 %v1099
    %1470 = vmatprep.subr.bf16.mxu0 %v1102
    %1471 = vmatpush1.bf16.msra.mxu0 %v1101
    %1472 = vmatprep.subr.bf16.mxu0 %v1104
    %1473 = vmatpush1.bf16.msra.mxu0 %v1103
    %1474 = vmatprep.subr.bf16.mxu0 %v1106
    %1475 = vmatpush1.bf16.msra.mxu0 %v1105
    %1476 = vmatprep.subr.bf16.mxu0 %v1108
    %1477 = vmatpush1.bf16.msra.mxu0 %v1107
    %1478 = vmatprep.subr.bf16.mxu0 %v1110
    %1479 = vmatpush1.bf16.msra.mxu0 %v1109
    %1480 = vmatprep.subr.bf16.mxu0 %v1112
    %1481 = vmatpush1.bf16.msra.mxu0 %v1111
    %1482 = vmatprep.subr.bf16.mxu0 %v1114
    %1483 = vmatpush1.bf16.msra.mxu0 %v1113
    %1484 = vmatprep.subr.bf16.mxu0 %v1116
    %1485 = vmatpush1.bf16.msra.mxu0 %v1115
    %1486 = vmatprep.subr.bf16.mxu0 %v1118
    %1487 = vmatpush1.bf16.msra.mxu0 %v1117
    %1488 = vmatprep.subr.bf16.mxu0 %v1120
    %1489 = vmatpush1.bf16.msra.mxu0 %v1119
    %1490 = vmatprep.subr.bf16.mxu0 %v1122
    %1491 = vmatpush1.bf16.msra.mxu0 %v1121
    %1492 = vmatprep.subr.bf16.mxu0 %v1124
    %1493 = vmatpush1.bf16.msra.mxu0 %v1123
    %1494 = vmatprep.subr.bf16.mxu0 %v1126
    %1495 = vmatpush1.bf16.msra.mxu0 %v1125
    %1496 = vmatprep.subr.bf16.mxu0 %v1128
    %1497 = vmatpush1.bf16.msra.mxu0 %v1127
    %1498 = vmatprep.mubr.bf16.mxu0 %v492
    %1499 = vmatmul.mubr.bf16.gmra.mrb[0].mxu0 %v491
    %v1500 = vpop.f32.mrb[0].mxu0
    %v1501 = vadd.f32 %v1388, %v1500
    %v1502 = vpop.f32.mrb[0].mxu0
    %v1503 = vadd.f32 %v1390, %v1502
    %v1504 = vpop.f32.mrb[0].mxu0
    %v1505 = vadd.f32 %v1392, %v1504
    %v1506 = vpop.f32.mrb[0].mxu0
    %v1507 = vadd.f32 %v1394, %v1506
    %1508 = vmatprep.mubr.bf16.mxu0 %v501
    %1509 = vmatmul.mubr.bf16.gmra.mrb[0].mxu0 %v500
    %v1510 = vpop.f32.mrb[0].mxu0
    %v1511 = vadd.f32 %v1398, %v1510
    %v1512 = vpop.f32.mrb[0].mxu0
    %v1513 = vadd.f32 %v1400, %v1512
    %v1514 = vpop.f32.mrb[0].mxu0
    %v1515 = vadd.f32 %v1402, %v1514
    %v1516 = vpop.f32.mrb[0].mxu0
    %v1517 = vadd.f32 %v1404, %v1516
    %1518 = vmatprep.mubr.bf16.mxu0 %v510
    %1519 = vmatmul.mubr.bf16.gmra.mrb[0].mxu0 %v509
    %v1520 = vpop.f32.mrb[0].mxu0
    %v1521 = vadd.f32 %v1408, %v1520
    %v1522 = vpop.f32.mrb[0].mxu0
    %v1523 = vadd.f32 %v1410, %v1522
    %v1524 = vpop.f32.mrb[0].mxu0
    %v1525 = vadd.f32 %v1412, %v1524
    %v1526 = vpop.f32.mrb[0].mxu0
    %v1527 = vadd.f32 %v1414, %v1526
    %1528 = vmatprep.mubr.bf16.mxu0 %v519
    %1529 = vmatmul.mubr.bf16.gmra.mrb[0].mxu0 %v518
    %v1530 = vpop.f32.mrb[0].mxu0
    %v1531 = vadd.f32 %v1418, %v1530
    %v1532 = vpop.f32.mrb[0].mxu0
    %v1533 = vadd.f32 %v1420, %v1532
    %v1534 = vpop.f32.mrb[0].mxu0
    %v1535 = vadd.f32 %v1422, %v1534
    %v1536 = vpop.f32.mrb[0].mxu0
    %v1537 = vadd.f32 %v1424, %v1536
    %1538 = vmatprep.mubr.bf16.mxu0 %v528
    %1539 = vmatmul.mubr.bf16.gmra.mrb[0].mxu0 %v527
    %v1540 = vpop.f32.mrb[0].mxu0
    %v1541 = vadd.f32 %v1428, %v1540
    %v1542 = vpop.f32.mrb[0].mxu0
    %v1543 = vadd.f32 %v1430, %v1542
    %v1544 = vpop.f32.mrb[0].mxu0
    %v1545 = vadd.f32 %v1432, %v1544
    %v1546 = vpop.f32.mrb[0].mxu0
    %v1547 = vadd.f32 %v1434, %v1546
    %1548 = vmatprep.mubr.bf16.mxu0 %v537
    %1549 = vmatmul.mubr.bf16.gmra.mrb[0].mxu0 %v536
    %v1550 = vpop.f32.mrb[0].mxu0
    %v1551 = vadd.f32 %v1438, %v1550
    %v1552 = vpop.f32.mrb[0].mxu0
    %v1553 = vadd.f32 %v1440, %v1552
    %v1554 = vpop.f32.mrb[0].mxu0
    %v1555 = vadd.f32 %v1442, %v1554
    %v1556 = vpop.f32.mrb[0].mxu0
    %v1557 = vadd.f32 %v1444, %v1556
    %1558 = vmatprep.mubr.bf16.mxu0 %v546
    %1559 = vmatmul.mubr.bf16.gmra.mrb[0].mxu0 %v545
    %v1560 = vpop.f32.mrb[0].mxu0
    %v1561 = vadd.f32 %v1448, %v1560
    %v1562 = vpop.f32.mrb[0].mxu0
    %v1563 = vadd.f32 %v1450, %v1562
    %v1564 = vpop.f32.mrb[0].mxu0
    %v1565 = vadd.f32 %v1452, %v1564
    %v1566 = vpop.f32.mrb[0].mxu0
    %v1567 = vadd.f32 %v1454, %v1566
    %1568 = vmatprep.mubr.bf16.mxu0 %v555
    %1569 = vmatmul.mubr.bf16.gmra.mrb[0].mxu0 %v554
    %v1570 = vpop.f32.mrb[0].mxu0
    %v1571 = vadd.f32 %v1458, %v1570
    %v1572 = vpop.f32.mrb[0].mxu0
    %v1573 = vadd.f32 %v1460, %v1572
    %v1574 = vpop.f32.mrb[0].mxu0
    %v1575 = vadd.f32 %v1462, %v1574
    %v1576 = vpop.f32.mrb[0].mxu0
    %v1577 = vadd.f32 %v1464, %v1576
    %1578 = vdwg.mxu0
    %1579 = vmatprep.subr.bf16.mxu0 %v1130
    %1580 = vmatpush1.bf16.msra.mxu0 %v1129
    %1581 = vmatprep.subr.bf16.mxu0 %v1132
    %1582 = vmatpush1.bf16.msra.mxu0 %v1131
    %1583 = vmatprep.subr.bf16.mxu0 %v1134
    %1584 = vmatpush1.bf16.msra.mxu0 %v1133
    %1585 = vmatprep.subr.bf16.mxu0 %v1136
    %1586 = vmatpush1.bf16.msra.mxu0 %v1135
    %1587 = vmatprep.subr.bf16.mxu0 %v1138
    %1588 = vmatpush1.bf16.msra.mxu0 %v1137
    %1589 = vmatprep.subr.bf16.mxu0 %v1140
    %1590 = vmatpush1.bf16.msra.mxu0 %v1139
    %1591 = vmatprep.subr.bf16.mxu0 %v1142
    %1592 = vmatpush1.bf16.msra.mxu0 %v1141
    %1593 = vmatprep.subr.bf16.mxu0 %v1144
    %1594 = vmatpush1.bf16.msra.mxu0 %v1143
    %1595 = vmatprep.subr.bf16.mxu0 %v1146
    %1596 = vmatpush1.bf16.msra.mxu0 %v1145
    %1597 = vmatprep.subr.bf16.mxu0 %v1148
    %1598 = vmatpush1.bf16.msra.mxu0 %v1147
    %1599 = vmatprep.subr.bf16.mxu0 %v1150
    %1600 = vmatpush1.bf16.msra.mxu0 %v1149
    %1601 = vmatprep.subr.bf16.mxu0 %v1152
    %1602 = vmatpush1.bf16.msra.mxu0 %v1151
    %1603 = vmatprep.subr.bf16.mxu0 %v1154
    %1604 = vmatpush1.bf16.msra.mxu0 %v1153
    %1605 = vmatprep.subr.bf16.mxu0 %v1156
    %1606 = vmatpush1.bf16.msra.mxu0 %v1155
    %1607 = vmatprep.subr.bf16.mxu0 %v1158
    %1608 = vmatpush1.bf16.msra.mxu0 %v1157
    %1609 = vmatprep.subr.bf16.mxu0 %v1160
    %1610 = vmatpush1.bf16.msra.mxu0 %v1159
    %1611 = vmatprep.mubr.bf16.mxu0 %v494
    %1612 = vmatmul.mubr.bf16.gmra.mrb[0].mxu0 %v493
    %v1613 = vpop.f32.mrb[0].mxu0
    %v1614 = vadd.f32 %v1501, %v1613
    %v1615 = vpop.f32.mrb[0].mxu0
    %v1616 = vadd.f32 %v1503, %v1615
    %v1617 = vpop.f32.mrb[0].mxu0
    %v1618 = vadd.f32 %v1505, %v1617
    %v1619 = vpop.f32.mrb[0].mxu0
    %v1620 = vadd.f32 %v1507, %v1619
    %1621 = vmatprep.mubr.bf16.mxu0 %v503
    %1622 = vmatmul.mubr.bf16.gmra.mrb[0].mxu0 %v502
    %v1623 = vpop.f32.mrb[0].mxu0
    %v1624 = vadd.f32 %v1511, %v1623
    %v1625 = vpop.f32.mrb[0].mxu0
    %v1626 = vadd.f32 %v1513, %v1625
    %v1627 = vpop.f32.mrb[0].mxu0
    %v1628 = vadd.f32 %v1515, %v1627
    %v1629 = vpop.f32.mrb[0].mxu0
    %v1630 = vadd.f32 %v1517, %v1629
    %1631 = vmatprep.mubr.bf16.mxu0 %v512
    %1632 = vmatmul.mubr.bf16.gmra.mrb[0].mxu0 %v511
    %v1633 = vpop.f32.mrb[0].mxu0
    %v1634 = vadd.f32 %v1521, %v1633
    %v1635 = vpop.f32.mrb[0].mxu0
    %v1636 = vadd.f32 %v1523, %v1635
    %v1637 = vpop.f32.mrb[0].mxu0
    %v1638 = vadd.f32 %v1525, %v1637
    %v1639 = vpop.f32.mrb[0].mxu0
    %v1640 = vadd.f32 %v1527, %v1639
    %1641 = vmatprep.mubr.bf16.mxu0 %v521
    %1642 = vmatmul.mubr.bf16.gmra.mrb[0].mxu0 %v520
    %v1643 = vpop.f32.mrb[0].mxu0
    %v1644 = vadd.f32 %v1531, %v1643
    %v1645 = vpop.f32.mrb[0].mxu0
    %v1646 = vadd.f32 %v1533, %v1645
    %v1647 = vpop.f32.mrb[0].mxu0
    %v1648 = vadd.f32 %v1535, %v1647
    %v1649 = vpop.f32.mrb[0].mxu0
    %v1650 = vadd.f32 %v1537, %v1649
    %1651 = vmatprep.mubr.bf16.mxu0 %v530
    %1652 = vmatmul.mubr.bf16.gmra.mrb[0].mxu0 %v529
    %v1653 = vpop.f32.mrb[0].mxu0
    %v1654 = vadd.f32 %v1541, %v1653
    %v1655 = vpop.f32.mrb[0].mxu0
    %v1656 = vadd.f32 %v1543, %v1655
    %v1657 = vpop.f32.mrb[0].mxu0
    %v1658 = vadd.f32 %v1545, %v1657
    %v1659 = vpop.f32.mrb[0].mxu0
    %v1660 = vadd.f32 %v1547, %v1659
    %1661 = vmatprep.mubr.bf16.mxu0 %v539
    %1662 = vmatmul.mubr.bf16.gmra.mrb[0].mxu0 %v538
    %v1663 = vpop.f32.mrb[0].mxu0
    %v1664 = vadd.f32 %v1551, %v1663
    %v1665 = vpop.f32.mrb[0].mxu0
    %v1666 = vadd.f32 %v1553, %v1665
    %v1667 = vpop.f32.mrb[0].mxu0
    %v1668 = vadd.f32 %v1555, %v1667
    %v1669 = vpop.f32.mrb[0].mxu0
    %v1670 = vadd.f32 %v1557, %v1669
    %1671 = vmatprep.mubr.bf16.mxu0 %v548
    %1672 = vmatmul.mubr.bf16.gmra.mrb[0].mxu0 %v547
    %v1673 = vpop.f32.mrb[0].mxu0
    %v1674 = vadd.f32 %v1561, %v1673
    %v1675 = vpop.f32.mrb[0].mxu0
    %v1676 = vadd.f32 %v1563, %v1675
    %v1677 = vpop.f32.mrb[0].mxu0
    %v1678 = vadd.f32 %v1565, %v1677
    %v1679 = vpop.f32.mrb[0].mxu0
    %v1680 = vadd.f32 %v1567, %v1679
    %1681 = vmatprep.mubr.bf16.mxu0 %v557
    %1682 = vmatmul.mubr.bf16.gmra.mrb[0].mxu0 %v556
    %v1683 = vpop.f32.mrb[0].mxu0
    %v1684 = vadd.f32 %v1571, %v1683
    %v1685 = vpop.f32.mrb[0].mxu0
    %v1686 = vadd.f32 %v1573, %v1685
    %v1687 = vpop.f32.mrb[0].mxu0
    %v1688 = vadd.f32 %v1575, %v1687
    %v1689 = vpop.f32.mrb[0].mxu0
    %v1690 = vadd.f32 %v1577, %v1689
    %1691 = vdwg.mxu0
    %1692 = vmatprep.subr.bf16.mxu0 %v1162
    %1693 = vmatpush1.bf16.msra.mxu0 %v1161
    %1694 = vmatprep.subr.bf16.mxu0 %v1164
    %1695 = vmatpush1.bf16.msra.mxu0 %v1163
    %1696 = vmatprep.subr.bf16.mxu0 %v1166
    %1697 = vmatpush1.bf16.msra.mxu0 %v1165
    %1698 = vmatprep.subr.bf16.mxu0 %v1168
    %1699 = vmatpush1.bf16.msra.mxu0 %v1167
    %1700 = vmatprep.subr.bf16.mxu0 %v1170
    %1701 = vmatpush1.bf16.msra.mxu0 %v1169
    %1702 = vmatprep.subr.bf16.mxu0 %v1172
    %1703 = vmatpush1.bf16.msra.mxu0 %v1171
    %1704 = vmatprep.subr.bf16.mxu0 %v1174
    %1705 = vmatpush1.bf16.msra.mxu0 %v1173
    %1706 = vmatprep.subr.bf16.mxu0 %v1176
    %1707 = vmatpush1.bf16.msra.mxu0 %v1175
    %1708 = vmatprep.subr.bf16.mxu0 %v1178
    %1709 = vmatpush1.bf16.msra.mxu0 %v1177
    %1710 = vmatprep.subr.bf16.mxu0 %v1180
    %1711 = vmatpush1.bf16.msra.mxu0 %v1179
    %1712 = vmatprep.subr.bf16.mxu0 %v1182
    %1713 = vmatpush1.bf16.msra.mxu0 %v1181
    %1714 = vmatprep.subr.bf16.mxu0 %v1184
    %1715 = vmatpush1.bf16.msra.mxu0 %v1183
    %1716 = vmatprep.subr.bf16.mxu0 %v1186
    %1717 = vmatpush1.bf16.msra.mxu0 %v1185
    %1718 = vmatprep.subr.bf16.mxu0 %v1188
    %1719 = vmatpush1.bf16.msra.mxu0 %v1187
    %1720 = vmatprep.subr.bf16.mxu0 %v1190
    %1721 = vmatpush1.bf16.msra.mxu0 %v1189
    %1722 = vmatprep.subr.bf16.mxu0 %v1192
    %1723 = vmatpush1.bf16.msra.mxu0 %v1191
    %1724 = vmatprep.mubr.bf16.mxu0 %v496
    %1725 = vmatmul.mubr.bf16.gmra.mrb[0].mxu0 %v495
    %v1726 = vpop.f32.mrb[0].mxu0
    %v1727 = vadd.f32 %v1614, %v1726
    %v1728 = vpop.f32.mrb[0].mxu0
    %v1729 = vadd.f32 %v1616, %v1728
    %v1730 = vpop.f32.mrb[0].mxu0
    %v1731 = vadd.f32 %v1618, %v1730
    %v1732 = vpop.f32.mrb[0].mxu0
    %v1733 = vadd.f32 %v1620, %v1732
    %1734 = vmatprep.mubr.bf16.mxu0 %v505
    %1735 = vmatmul.mubr.bf16.gmra.mrb[0].mxu0 %v504
    %v1736 = vpop.f32.mrb[0].mxu0
    %v1737 = vadd.f32 %v1624, %v1736
    %v1738 = vpop.f32.mrb[0].mxu0
    %v1739 = vadd.f32 %v1626, %v1738
    %v1740 = vpop.f32.mrb[0].mxu0
    %v1741 = vadd.f32 %v1628, %v1740
    %v1742 = vpop.f32.mrb[0].mxu0
    %v1743 = vadd.f32 %v1630, %v1742
    %1744 = vmatprep.mubr.bf16.mxu0 %v514
    %1745 = vmatmul.mubr.bf16.gmra.mrb[0].mxu0 %v513
    %v1746 = vpop.f32.mrb[0].mxu0
    %v1747 = vadd.f32 %v1634, %v1746
    %v1748 = vpop.f32.mrb[0].mxu0
    %v1749 = vadd.f32 %v1636, %v1748
    %v1750 = vpop.f32.mrb[0].mxu0
    %v1751 = vadd.f32 %v1638, %v1750
    %v1752 = vpop.f32.mrb[0].mxu0
    %v1753 = vadd.f32 %v1640, %v1752
    %1754 = vmatprep.mubr.bf16.mxu0 %v523
    %1755 = vmatmul.mubr.bf16.gmra.mrb[0].mxu0 %v522
    %v1756 = vpop.f32.mrb[0].mxu0
    %v1757 = vadd.f32 %v1644, %v1756
    %v1758 = vpop.f32.mrb[0].mxu0
    %v1759 = vadd.f32 %v1646, %v1758
    %v1760 = vpop.f32.mrb[0].mxu0
    %v1761 = vadd.f32 %v1648, %v1760
    %v1762 = vpop.f32.mrb[0].mxu0
    %v1763 = vadd.f32 %v1650, %v1762
    %1764 = vmatprep.mubr.bf16.mxu0 %v532
    %1765 = vmatmul.mubr.bf16.gmra.mrb[0].mxu0 %v531
    %v1766 = vpop.f32.mrb[0].mxu0
    %v1767 = vadd.f32 %v1654, %v1766
    %v1768 = vpop.f32.mrb[0].mxu0
    %v1769 = vadd.f32 %v1656, %v1768
    %v1770 = vpop.f32.mrb[0].mxu0
    %v1771 = vadd.f32 %v1658, %v1770
    %v1772 = vpop.f32.mrb[0].mxu0
    %v1773 = vadd.f32 %v1660, %v1772
    %1774 = vmatprep.mubr.bf16.mxu0 %v541
    %1775 = vmatmul.mubr.bf16.gmra.mrb[0].mxu0 %v540
    %v1776 = vpop.f32.mrb[0].mxu0
    %v1777 = vadd.f32 %v1664, %v1776
    %v1778 = vpop.f32.mrb[0].mxu0
    %v1779 = vadd.f32 %v1666, %v1778
    %v1780 = vpop.f32.mrb[0].mxu0
    %v1781 = vadd.f32 %v1668, %v1780
    %v1782 = vpop.f32.mrb[0].mxu0
    %v1783 = vadd.f32 %v1670, %v1782
    %1784 = vmatprep.mubr.bf16.mxu0 %v550
    %1785 = vmatmul.mubr.bf16.gmra.mrb[0].mxu0 %v549
    %v1786 = vpop.f32.mrb[0].mxu0
    %v1787 = vadd.f32 %v1674, %v1786
    %v1788 = vpop.f32.mrb[0].mxu0
    %v1789 = vadd.f32 %v1676, %v1788
    %v1790 = vpop.f32.mrb[0].mxu0
    %v1791 = vadd.f32 %v1678, %v1790
    %v1792 = vpop.f32.mrb[0].mxu0
    %v1793 = vadd.f32 %v1680, %v1792
    %1794 = vmatprep.mubr.bf16.mxu0 %v559
    %1795 = vmatmul.mubr.bf16.gmra.mrb[0].mxu0 %v558
    %v1796 = vpop.f32.mrb[0].mxu0
    %v1797 = vadd.f32 %v1684, %v1796
    %v1798 = vpop.f32.mrb[0].mxu0
    %v1799 = vadd.f32 %v1686, %v1798
    %v1800 = vpop.f32.mrb[0].mxu0
    %v1801 = vadd.f32 %v1688, %v1800
    %v1802 = vpop.f32.mrb[0].mxu0
    %v1803 = vadd.f32 %v1690, %v1802
    %1804 = vdwg.mxu0
    %1805 = vmatprep.subr.bf16.mxu0 %v1194
    %1806 = vmatpush1.bf16.msra.mxu0 %v1193
    %1807 = vmatprep.subr.bf16.mxu0 %v1196
    %1808 = vmatpush1.bf16.msra.mxu0 %v1195
    %1809 = vmatprep.subr.bf16.mxu0 %v1198
    %1810 = vmatpush1.bf16.msra.mxu0 %v1197
    %1811 = vmatprep.subr.bf16.mxu0 %v1200
    %1812 = vmatpush1.bf16.msra.mxu0 %v1199
    %1813 = vmatprep.subr.bf16.mxu0 %v1202
    %1814 = vmatpush1.bf16.msra.mxu0 %v1201
    %1815 = vmatprep.subr.bf16.mxu0 %v1204
    %1816 = vmatpush1.bf16.msra.mxu0 %v1203
    %1817 = vmatprep.subr.bf16.mxu0 %v1206
    %1818 = vmatpush1.bf16.msra.mxu0 %v1205
    %1819 = vmatprep.subr.bf16.mxu0 %v1208
    %1820 = vmatpush1.bf16.msra.mxu0 %v1207
    %1821 = vmatprep.subr.bf16.mxu0 0
    %1822 = vmatpush1.bf16.msra.mxu0 0
    %1823 = vmatprep.subr.bf16.mxu0 0
    %1824 = vmatpush1.bf16.msra.mxu0 0
    %1825 = vmatprep.subr.bf16.mxu0 0
    %1826 = vmatpush1.bf16.msra.mxu0 0
    %1827 = vmatprep.subr.bf16.mxu0 0
    %1828 = vmatpush1.bf16.msra.mxu0 0
    %1829 = vmatprep.subr.bf16.mxu0 0
    %1830 = vmatpush1.bf16.msra.mxu0 0
    %1831 = vmatprep.subr.bf16.mxu0 0
    %1832 = vmatpush1.bf16.msra.mxu0 0
    %1833 = vmatprep.subr.bf16.mxu0 0
    %1834 = vmatpush1.bf16.msra.mxu0 0
    %1835 = vmatprep.subr.bf16.mxu0 0
    %1836 = vmatpush1.bf16.msra.mxu0 0
    %1837 = vmatprep.mubr.bf16.mxu0 0
    %1838 = vmatmul.mubr.bf16.gmra.mrb[0].mxu0 %v497
    %v1839 = vpop.f32.mrb[0].mxu0
    %v1840 = vadd.f32 %v1727, %v1839
    %v1841 = vpop.f32.mrb[0].mxu0
    %v1842 = vadd.f32 %v1729, %v1841
    %v1843 = vpop.f32.mrb[0].mxu0
    %v1844 = vadd.f32 %v1731, %v1843
    %v1845 = vpop.f32.mrb[0].mxu0
    %v1846 = vadd.f32 %v1733, %v1845
    %1847 = vmatprep.mubr.bf16.mxu0 0
    %1848 = vmatmul.mubr.bf16.gmra.mrb[0].mxu0 %v506
    %v1849 = vpop.f32.mrb[0].mxu0
    %v1850 = vadd.f32 %v1737, %v1849
    %v1851 = vpop.f32.mrb[0].mxu0
    %v1852 = vadd.f32 %v1739, %v1851
    %v1853 = vpop.f32.mrb[0].mxu0
    %v1854 = vadd.f32 %v1741, %v1853
    %v1855 = vpop.f32.mrb[0].mxu0
    %v1856 = vadd.f32 %v1743, %v1855
    %1857 = vmatprep.mubr.bf16.mxu0 0
    %1858 = vmatmul.mubr.bf16.gmra.mrb[0].mxu0 %v515
    %v1859 = vpop.f32.mrb[0].mxu0
    %v1860 = vadd.f32 %v1747, %v1859
    %v1861 = vpop.f32.mrb[0].mxu0
    %v1862 = vadd.f32 %v1749, %v1861
    %v1863 = vpop.f32.mrb[0].mxu0
    %v1864 = vadd.f32 %v1751, %v1863
    %v1865 = vpop.f32.mrb[0].mxu0
    %v1866 = vadd.f32 %v1753, %v1865
    %1867 = vmatprep.mubr.bf16.mxu0 0
    %1868 = vmatmul.mubr.bf16.gmra.mrb[0].mxu0 %v524
    %v1869 = vpop.f32.mrb[0].mxu0
    %v1870 = vadd.f32 %v1757, %v1869
    %v1871 = vpop.f32.mrb[0].mxu0
    %v1872 = vadd.f32 %v1759, %v1871
    %v1873 = vpop.f32.mrb[0].mxu0
    %v1874 = vadd.f32 %v1761, %v1873
    %v1875 = vpop.f32.mrb[0].mxu0
    %v1876 = vadd.f32 %v1763, %v1875
    %1877 = vmatprep.mubr.bf16.mxu0 0
    %1878 = vmatmul.mubr.bf16.gmra.mrb[0].mxu0 %v533
    %v1879 = vpop.f32.mrb[0].mxu0
    %v1880 = vadd.f32 %v1767, %v1879
    %v1881 = vpop.f32.mrb[0].mxu0
    %v1882 = vadd.f32 %v1769, %v1881
    %v1883 = vpop.f32.mrb[0].mxu0
    %v1884 = vadd.f32 %v1771, %v1883
    %v1885 = vpop.f32.mrb[0].mxu0
    %v1886 = vadd.f32 %v1773, %v1885
    %1887 = vmatprep.mubr.bf16.mxu0 0
    %1888 = vmatmul.mubr.bf16.gmra.mrb[0].mxu0 %v542
    %v1889 = vpop.f32.mrb[0].mxu0
    %v1890 = vadd.f32 %v1777, %v1889
    %v1891 = vpop.f32.mrb[0].mxu0
    %v1892 = vadd.f32 %v1779, %v1891
    %v1893 = vpop.f32.mrb[0].mxu0
    %v1894 = vadd.f32 %v1781, %v1893
    %v1895 = vpop.f32.mrb[0].mxu0
    %v1896 = vadd.f32 %v1783, %v1895
    %1897 = vmatprep.mubr.bf16.mxu0 0
    %1898 = vmatmul.mubr.bf16.gmra.mrb[0].mxu0 %v551
    %v1899 = vpop.f32.mrb[0].mxu0
    %v1900 = vadd.f32 %v1787, %v1899
    %v1901 = vpop.f32.mrb[0].mxu0
    %v1902 = vadd.f32 %v1789, %v1901
    %v1903 = vpop.f32.mrb[0].mxu0
    %v1904 = vadd.f32 %v1791, %v1903
    %v1905 = vpop.f32.mrb[0].mxu0
    %v1906 = vadd.f32 %v1793, %v1905
    %1907 = vmatprep.mubr.bf16.mxu0 0
    %1908 = vmatmul.mubr.bf16.gmra.mrb[0].mxu0 %v560
    %v1909 = vpop.f32.mrb[0].mxu0
    %v1910 = vadd.f32 %v1797, %v1909
    %v1911 = vpop.f32.mrb[0].mxu0
    %v1912 = vadd.f32 %v1799, %v1911
    %v1913 = vpop.f32.mrb[0].mxu0
    %v1914 = vadd.f32 %v1801, %v1913
    %v1915 = vpop.f32.mrb[0].mxu0
    %v1916 = vadd.f32 %v1803, %v1915
    %1917 = vdwg.mxu0
    %v1918 = vmax.f32 %v1840, %v1860
    %v1919 = vmax.f32 %v1842, %v1862
    %v1920 = vmax.f32 %v1844, %v1864
    %v1921 = vmax.f32 %v1846, %v1866
    %v1922 = vmax.f32 %v1850, %v1870
    %v1923 = vmax.f32 %v1852, %v1872
    %v1924 = vmax.f32 %v1854, %v1874
    %v1925 = vmax.f32 %v1856, %v1876
    %v1926 = vmax.f32 %v1880, %v1900
    %v1927 = vmax.f32 %v1882, %v1902
    %v1928 = vmax.f32 %v1884, %v1904
    %v1929 = vmax.f32 %v1886, %v1906
    %v1930 = vmax.f32 %v1890, %v1910
    %v1931 = vmax.f32 %v1892, %v1912
    %v1932 = vmax.f32 %v1894, %v1914
    %v1933 = vmax.f32 %v1896, %v1916
    %v1934 = vmax.f32 %v1918, %v1926
    %v1935 = vmax.f32 %v1919, %v1927
    %v1936 = vmax.f32 %v1920, %v1928
    %v1937 = vmax.f32 %v1921, %v1929
    %v1938 = vmax.f32 %v1922, %v1930
    %v1939 = vmax.f32 %v1923, %v1931
    %v1940 = vmax.f32 %v1924, %v1932
    %v1941 = vmax.f32 %v1925, %v1933
    %v1942 = vld [vmem:[#allocation4] sm:$0x3]
    %v1944 = vlaneseq
    %v1945 = vshrl.u32 %v1944, 7
    %v1946 = vsub.s32 0, %v1945
    %v1947 = vrot.slane %v1942, %v1946
    %v1948 = vlaneseq
    %v1949 = vshrl.u32 %v1948, 7
    %v1950 = vsub.s32 1, %v1949
    %v1951 = vrot.slane %v1942, %v1950
    %v1954 = vadd.f32 %v1934, %v1947
    %v1955 = vadd.f32 %v1935, %v1951
    %v1956 = vadd.f32 %v1936, %v1947
    %v1957 = vadd.f32 %v1937, %v1951
    %v1958 = vadd.f32 %v1938, %v1947
    %v1959 = vadd.f32 %v1939, %v1951
    %v1960 = vadd.f32 %v1940, %v1947
    %v1961 = vadd.f32 %v1941, %v1951
    %v1962 = vmax.f32 %v1954, 0.0
    %v1963 = vmax.f32 %v1955, 0.0
    %v1964 = vmax.f32 %v1956, 0.0
    %v1965 = vmax.f32 %v1957, 0.0
    %v1966 = vmax.f32 %v1958, 0.0
    %v1967 = vmax.f32 %v1959, 0.0
    %v1968 = vmax.f32 %v1960, 0.0
    %v1969 = vmax.f32 %v1961, 0.0
    %v1970 = vpack.c.bf16 %v1964, %v1962
    %v1971 = vpack.c.bf16 %v1965, %v1963
    %v1972 = vpack.c.bf16 %v1968, %v1966
    %v1973 = vpack.c.bf16 %v1969, %v1967
    %v1978 = vunpack.c.l.b16 %v1970
    %v1979 = vunpack.c.l.b16 %v1971
    %v1980 = vunpack.c.h.b16 %v1970
    %v1981 = vunpack.c.h.b16 %v1971
    %v1982 = vunpack.c.l.b16 %v1972
    %v1983 = vunpack.c.l.b16 %v1973
    %v1984 = vunpack.c.h.b16 %v1972
    %v1985 = vunpack.c.h.b16 %v1973
    %v1986 = vpack.c.b16 %v1979, %v1978
    %v1987 = vpack.c.b16 %v1981, %v1980
    %v1988 = vpack.c.b16 %v1983, %v1982
    %v1989 = vpack.c.b16 %v1985, %v1984
    %1994 = vst [vmem:[%s3] sm:$0xff] %v1986
    %1995 = vst [vmem:[%s3 + $0x8] sm:$0xff] %v1987
    %1996 = vst [vmem:[%s3 + $0x10] sm:$0xff] %v1988
    %1997 = vst [vmem:[%s3 + $0x18] sm:$0xff] %v1989
    // Predicated region
    $region22: #{cifar_server2_forward.2} parent=1 // pred_check
      _
    $region23: #{cifar_server2_forward.2} parent=1 // pred_check_branch
      %1999 = sbr.rel (0) target = $region25
    $region24: #{cifar_server2_forward.2} parent=1 // pred_region
      _
    $region25: #{cifar_server2_forward.2} parent=1 // pred_fallthru
      _
    // Predicated region
    $region26: #{cifar_server2_forward.2} parent=1 // pred_check
      _
    $region27: #{cifar_server2_forward.2} parent=1 // pred_check_branch
      %2001 = sbr.rel (0) target = $region29
    $region28: #{cifar_server2_forward.2} parent=1 // pred_region
      _
    $region29: #{cifar_server2_forward.2} parent=1 // pred_fallthru
      _
    %2002 = vsyncpa [#allocation3], 1
    %2003 = vsyncpa [#allocation5], 1

// kernel: cifar_server2_forward.3
$region0: #{cifar_server2_forward.3}
  #allocation0 [shape = 'u32[]', space=smem, size = 0x4, offset = 0x4, fixed_abs, tag = 'smem constant byte address 0x4 - core index']
  #allocation1 [shape = 'u32[144,128]{1,0:T(1,128)}', space=vmem, size = 0x12000, scoped, tag = 'internal scratch']
  #allocation2 [shape = 'f32[2,1024]{1,0:T(2,128)}', space=vmem, size = 0x2000, scoped, tag = 'scratch operand']
  %s0 = inlined_call_operand.vmem [shape: bf16[2,4096], index: 0, kind: input, shape index: {}]
  %s1 = inlined_call_operand.hbm [shape: bf16[4096,1024], index: 1, kind: input, shape index: {}]
  %s2 = inlined_call_operand.hbm [shape: f32[1,1024], index: 2, kind: input, shape index: {}]
  %s3 = inlined_call_operand.hbm [shape: bf16[1024,512], index: 3, kind: input, shape index: {}]
  %s4 = inlined_call_operand.hbm [shape: f32[1,512], index: 4, kind: input, shape index: {}]
  %s5 = inlined_call_operand.hbm [shape: bf16[512,256], index: 5, kind: input, shape index: {}]
  %s6 = inlined_call_operand.hbm [shape: f32[1,256], index: 6, kind: input, shape index: {}]
  %s7 = inlined_call_operand.hbm [shape: bf16[256,128], index: 7, kind: input, shape index: {}]
  %s8 = inlined_call_operand.hbm [shape: f32[1,128], index: 8, kind: input, shape index: {}]
  %s9 = inlined_call_operand.hbm [shape: f32[2,128], index: 9, kind: output, shape index: {}]
  %s10 = sld [smem:[#allocation0]]
  $region109: #{cifar_server2_forward.3} parent=0
    _
  %s12 = ssub.s32 1, %s10
  %s13 = scalar_select 0, %s12, %s10
  $region1: #{cifar_server2_forward.3} parent=0
    #allocation3 [shape = 'u8[8388608]{0}', space=vmem, size = 0x800000, scoped, tag = 'input window, operand 1']
    #allocation4 [shape = 's32[2]{0}', space=sflag, size = 0x8, scoped, tag = 'scoped memory for cifar_server2_forward.3']
    #allocation5 [shape = 's32[2]{0}', space=sflag, size = 0x8, scoped, tag = 'scoped memory for cifar_server2_forward.3']
    #allocation6 [shape = 'u8[4096]{0}', space=vmem, size = 0x1000, scoped, tag = 'input window, operand 2, single buffered']
    #allocation7 [shape = 's32[1]{0}', space=sflag, size = 0x4, scoped, tag = 'scoped memory for cifar_server2_forward.3']
    #allocation8 [shape = 'u8[1048576]{0}', space=vmem, size = 0x100000, scoped, tag = 'input window, operand 3, single buffered']
    #allocation9 [shape = 'u8[2048]{0}', space=vmem, size = 0x800, scoped, tag = 'input window, operand 4, single buffered']
    #allocation10 [shape = 's32[1]{0}', space=sflag, size = 0x4, scoped, tag = 'scoped memory for cifar_server2_forward.3']
    #allocation11 [shape = 'u8[262144]{0}', space=vmem, size = 0x40000, scoped, tag = 'input window, operand 5, single buffered']
    #allocation12 [shape = 'u8[1024]{0}', space=vmem, size = 0x400, scoped, tag = 'input window, operand 6, single buffered']
    #allocation13 [shape = 's32[1]{0}', space=sflag, size = 0x4, scoped, tag = 'scoped memory for cifar_server2_forward.3']
    #allocation14 [shape = 'u8[65536]{0}', space=vmem, size = 0x10000, scoped, tag = 'input window, operand 7, single buffered']
    #allocation15 [shape = 'u8[512]{0}', space=vmem, size = 0x400, scoped, tag = 'input window, operand 8, single buffered']
    #allocation16 [shape = 's32[1]{0}', space=sflag, size = 0x4, scoped, tag = 'scoped memory for cifar_server2_forward.3']
    #allocation17 [shape = 'u8[1024]{0}', space=vmem, size = 0x400, scoped, tag = 'output window, operand 0, single buffered']
    %14 = vsyncpa [#allocation4], 0
    %s15 = scalar_lea.sflag [#allocation4], 1
    %16 = vsyncpa %s15, 0
    %17 = vsyncpa [#allocation7], 0
    %18 = vsyncpa [#allocation10], 0
    %19 = vsyncpa [#allocation13], 0
    %20 = vsyncpa [#allocation16], 0
    %21 = vsyncpa [#allocation5], 0
    loop: start=0, step=1, limit=4
    $region2: #{cifar_server2_forward.3} parent=1 // loop_pre_header
      _
    $region3: #{cifar_server2_forward.3} parent=1 // loop_header
      %s23 = sphi 0, %s27
      %p24 = scmp.ge.s32.totalorder %s23, 4
      %s33 = sphi 0, %s35
      %s36 = sphi 0, %s33
      %s37 = sphi 0, %s36
      %s53 = sphi 0, %s37
      %s59 = sphi 0, %s61
      %s62 = sphi 0, %s59
      %s63 = sphi 0, %s62
      %s79 = sphi 0, %s63
      %s83 = sphi 0, %s83
      %s85 = sphi 0, %s83
      %s86 = sphi 0, %s85
      %s100 = sphi 0, %s86
      %s104 = sphi 0, %s104
      %s106 = sphi 0, %s104
      %s107 = sphi 0, %s106
      %s121 = sphi 0, %s107
      %s125 = sphi 0, %s125
      %s127 = sphi 0, %s125
      %s128 = sphi 0, %s127
      %s142 = sphi 0, %s128
      %s146 = sphi 0, %s146
      %s148 = sphi 0, %s146
      %s149 = sphi 0, %s148
      %s163 = sphi 0, %s149
      %s167 = sphi 0, %s167
      %s169 = sphi 0, %s167
      %s170 = sphi 0, %s169
      %s184 = sphi 0, %s170
      %s188 = sphi 0, %s188
      %s190 = sphi 0, %s188
      %s191 = sphi 0, %s190
      %s205 = sphi 0, %s191
      %s209 = sphi 0, %s209
      %s211 = sphi 0, %s209
      %s212 = sphi 0, %s211
      %s226 = sphi 0, %s212
      %s230 = sphi 0, %s230
      %s232 = sphi 0, %s230
      %s233 = sphi 0, %s232
      %s247 = sphi 0, %s233
    $region4: #{cifar_server2_forward.3} parent=1 // loop_header_branch
      %26 = sbr.rel (%p24) target = $region8
    $region5: #{cifar_server2_forward.3} parent=1 // loop_body
      %s28 = ssub.s32 %s23, 1
      %s29 = ssub.s32 %s23, 2
      %s30 = sadd.s32 %s23, 1
      %s31 = ssub.s32 %s23, %s30
      %p32 = scmp.eq.s32.totalorder %s31, 0
      %s34 = sadd.s32 %s33, 1
      %s35 = scalar_select %p32, %s33, %s34
      %p38 = pneg %p32
      %p39 = scmp.eq.s32.totalorder %s23, 1
      %p40 = por %p38, %p39
      %p41 = scmp.ne.s32.totalorder %s33, %s36
      %p42 = scmp.eq.s32.totalorder %s23, 0
      %p43 = por %p41, %p42
      %p44 = scmp.ne.s32.totalorder %s33, %s36
      %p45 = scmp.eq.s32.totalorder %s28, 1
      %p46 = por %p44, %p45
      %p47 = scmp.ne.s32.totalorder %s36, %s37
      %p48 = scmp.eq.s32.totalorder %s28, 0
      %p49 = por %p47, %p48
      %p50 = scmp.ne.s32.totalorder %s36, %s37
      %p51 = scmp.eq.s32.totalorder %s29, 1
      %p52 = por %p50, %p51
      %p54 = scmp.ne.s32.totalorder %s37, %s53
      %p55 = scmp.eq.s32.totalorder %s29, 0
      %p56 = por %p54, %p55
      %s57 = ssub.s32 %s23, %s30
      %p58 = scmp.eq.s32.totalorder %s57, 0
      %s60 = sadd.s32 %s59, 1
      %s61 = scalar_select %p58, %s59, %s60
      %p64 = pneg %p58
      %p65 = scmp.eq.s32.totalorder %s23, 1
      %p66 = por %p64, %p65
      %p67 = scmp.ne.s32.totalorder %s59, %s62
      %p68 = scmp.eq.s32.totalorder %s23, 0
      %p69 = por %p67, %p68
      %p70 = scmp.ne.s32.totalorder %s59, %s62
      %p71 = scmp.eq.s32.totalorder %s28, 1
      %p72 = por %p70, %p71
      %p73 = scmp.ne.s32.totalorder %s62, %s63
      %p74 = scmp.eq.s32.totalorder %s28, 0
      %p75 = por %p73, %p74
      %p76 = scmp.ne.s32.totalorder %s62, %s63
      %p77 = scmp.eq.s32.totalorder %s29, 1
      %p78 = por %p76, %p77
      %p80 = scmp.ne.s32.totalorder %s63, %s79
      %p81 = scmp.eq.s32.totalorder %s29, 0
      %p82 = por %p80, %p81
      %s84 = sadd.s32 %s83, 1
      %p87 = scmp.eq.s32.totalorder %s23, 1
      %p88 = scmp.ne.s32.totalorder %s83, %s85
      %p89 = scmp.eq.s32.totalorder %s23, 0
      %p90 = por %p88, %p89
      %p91 = scmp.ne.s32.totalorder %s83, %s85
      %p92 = scmp.eq.s32.totalorder %s28, 1
      %p93 = por %p91, %p92
      %p94 = scmp.ne.s32.totalorder %s85, %s86
      %p95 = scmp.eq.s32.totalorder %s28, 0
      %p96 = por %p94, %p95
      %p97 = scmp.ne.s32.totalorder %s85, %s86
      %p98 = scmp.eq.s32.totalorder %s29, 1
      %p99 = por %p97, %p98
      %p101 = scmp.ne.s32.totalorder %s86, %s100
      %p102 = scmp.eq.s32.totalorder %s29, 0
      %p103 = por %p101, %p102
      %s105 = sadd.s32 %s104, 1
      %p108 = scmp.eq.s32.totalorder %s23, 1
      %p109 = scmp.ne.s32.totalorder %s104, %s106
      %p110 = scmp.eq.s32.totalorder %s23, 0
      %p111 = por %p109, %p110
      %p112 = scmp.ne.s32.totalorder %s104, %s106
      %p113 = scmp.eq.s32.totalorder %s28, 1
      %p114 = por %p112, %p113
      %p115 = scmp.ne.s32.totalorder %s106, %s107
      %p116 = scmp.eq.s32.totalorder %s28, 0
      %p117 = por %p115, %p116
      %p118 = scmp.ne.s32.totalorder %s106, %s107
      %p119 = scmp.eq.s32.totalorder %s29, 1
      %p120 = por %p118, %p119
      %p122 = scmp.ne.s32.totalorder %s107, %s121
      %p123 = scmp.eq.s32.totalorder %s29, 0
      %p124 = por %p122, %p123
      %s126 = sadd.s32 %s125, 1
      %p129 = scmp.eq.s32.totalorder %s23, 1
      %p130 = scmp.ne.s32.totalorder %s125, %s127
      %p131 = scmp.eq.s32.totalorder %s23, 0
      %p132 = por %p130, %p131
      %p133 = scmp.ne.s32.totalorder %s125, %s127
      %p134 = scmp.eq.s32.totalorder %s28, 1
      %p135 = por %p133, %p134
      %p136 = scmp.ne.s32.totalorder %s127, %s128
      %p137 = scmp.eq.s32.totalorder %s28, 0
      %p138 = por %p136, %p137
      %p139 = scmp.ne.s32.totalorder %s127, %s128
      %p140 = scmp.eq.s32.totalorder %s29, 1
      %p141 = por %p139, %p140
      %p143 = scmp.ne.s32.totalorder %s128, %s142
      %p144 = scmp.eq.s32.totalorder %s29, 0
      %p145 = por %p143, %p144
      %s147 = sadd.s32 %s146, 1
      %p150 = scmp.eq.s32.totalorder %s23, 1
      %p151 = scmp.ne.s32.totalorder %s146, %s148
      %p152 = scmp.eq.s32.totalorder %s23, 0
      %p153 = por %p151, %p152
      %p154 = scmp.ne.s32.totalorder %s146, %s148
      %p155 = scmp.eq.s32.totalorder %s28, 1
      %p156 = por %p154, %p155
      %p157 = scmp.ne.s32.totalorder %s148, %s149
      %p158 = scmp.eq.s32.totalorder %s28, 0
      %p159 = por %p157, %p158
      %p160 = scmp.ne.s32.totalorder %s148, %s149
      %p161 = scmp.eq.s32.totalorder %s29, 1
      %p162 = por %p160, %p161
      %p164 = scmp.ne.s32.totalorder %s149, %s163
      %p165 = scmp.eq.s32.totalorder %s29, 0
      %p166 = por %p164, %p165
      %s168 = sadd.s32 %s167, 1
      %p171 = scmp.eq.s32.totalorder %s23, 1
      %p172 = scmp.ne.s32.totalorder %s167, %s169
      %p173 = scmp.eq.s32.totalorder %s23, 0
      %p174 = por %p172, %p173
      %p175 = scmp.ne.s32.totalorder %s167, %s169
      %p176 = scmp.eq.s32.totalorder %s28, 1
      %p177 = por %p175, %p176
      %p178 = scmp.ne.s32.totalorder %s169, %s170
      %p179 = scmp.eq.s32.totalorder %s28, 0
      %p180 = por %p178, %p179
      %p181 = scmp.ne.s32.totalorder %s169, %s170
      %p182 = scmp.eq.s32.totalorder %s29, 1
      %p183 = por %p181, %p182
      %p185 = scmp.ne.s32.totalorder %s170, %s184
      %p186 = scmp.eq.s32.totalorder %s29, 0
      %p187 = por %p185, %p186
      %s189 = sadd.s32 %s188, 1
      %p192 = scmp.eq.s32.totalorder %s23, 1
      %p193 = scmp.ne.s32.totalorder %s188, %s190
      %p194 = scmp.eq.s32.totalorder %s23, 0
      %p195 = por %p193, %p194
      %p196 = scmp.ne.s32.totalorder %s188, %s190
      %p197 = scmp.eq.s32.totalorder %s28, 1
      %p198 = por %p196, %p197
      %p199 = scmp.ne.s32.totalorder %s190, %s191
      %p200 = scmp.eq.s32.totalorder %s28, 0
      %p201 = por %p199, %p200
      %p202 = scmp.ne.s32.totalorder %s190, %s191
      %p203 = scmp.eq.s32.totalorder %s29, 1
      %p204 = por %p202, %p203
      %p206 = scmp.ne.s32.totalorder %s191, %s205
      %p207 = scmp.eq.s32.totalorder %s29, 0
      %p208 = por %p206, %p207
      %s210 = sadd.s32 %s209, 1
      %p213 = scmp.eq.s32.totalorder %s23, 1
      %p214 = scmp.ne.s32.totalorder %s209, %s211
      %p215 = scmp.eq.s32.totalorder %s23, 0
      %p216 = por %p214, %p215
      %p217 = scmp.ne.s32.totalorder %s209, %s211
      %p218 = scmp.eq.s32.totalorder %s28, 1
      %p219 = por %p217, %p218
      %p220 = scmp.ne.s32.totalorder %s211, %s212
      %p221 = scmp.eq.s32.totalorder %s28, 0
      %p222 = por %p220, %p221
      %p223 = scmp.ne.s32.totalorder %s211, %s212
      %p224 = scmp.eq.s32.totalorder %s29, 1
      %p225 = por %p223, %p224
      %p227 = scmp.ne.s32.totalorder %s212, %s226
      %p228 = scmp.eq.s32.totalorder %s29, 0
      %p229 = por %p227, %p228
      %s231 = sadd.s32 %s230, 1
      %p234 = scmp.eq.s32.totalorder %s23, 1
      %p235 = scmp.ne.s32.totalorder %s230, %s232
      %p236 = scmp.eq.s32.totalorder %s23, 0
      %p237 = por %p235, %p236
      %p238 = scmp.ne.s32.totalorder %s230, %s232
      %p239 = scmp.eq.s32.totalorder %s28, 1
      %p240 = por %p238, %p239
      %p241 = scmp.ne.s32.totalorder %s232, %s233
      %p242 = scmp.eq.s32.totalorder %s28, 0
      %p243 = por %p241, %p242
      %p244 = scmp.ne.s32.totalorder %s232, %s233
      %p245 = scmp.eq.s32.totalorder %s29, 1
      %p246 = por %p244, %p245
      %p248 = scmp.ne.s32.totalorder %s233, %s247
      %p249 = scmp.eq.s32.totalorder %s29, 0
      %p250 = por %p248, %p249
      %p251 = scmp.le.s32.totalorder 1, %s23
      %p252 = scmp.lt.s32.totalorder %s23, 3
      %p253 = pnand %p251, %p252
      %p254 = pneg %p253
      // Predicated region
      $region9: #{cifar_server2_forward.3} parent=5 // pred_check
        _
      $region10: #{cifar_server2_forward.3} parent=5 // pred_check_branch
        %256 = sbr.rel (%p253) target = $region12
      $region11: #{cifar_server2_forward.3} parent=5 // pred_region
        %s257 = ssub.s32 %s23, 1
        // Predicated region
        $region13: #{cifar_server2_forward.3} parent=11 // pred_check
          %p258 = pneg %p96
        $region14: #{cifar_server2_forward.3} parent=11 // pred_check_branch
          %260 = sbr.rel (%p258) target = $region16
        $region15: #{cifar_server2_forward.3} parent=11 // pred_region
          %s262 = ssub.s32 128, 128
          %263 = vsyncadd [#allocation7], %s262
          %s265 = sshll.u32 [#allocation6], 4
          %s266 = int_to_ptr.vmem [resolvable:$true] %s265
          %268 = dma.hbm_to_vmem [thread:$0]  %s2, 128, %s266, [#allocation7]
        $region16: #{cifar_server2_forward.3} parent=11 // pred_fallthru
          _
        // Predicated region
        $region17: #{cifar_server2_forward.3} parent=11 // pred_check
          %p269 = pneg %p117
        $region18: #{cifar_server2_forward.3} parent=11 // pred_check_branch
          %271 = sbr.rel (%p269) target = $region20
        $region19: #{cifar_server2_forward.3} parent=11 // pred_region
          %s273 = ssub.s32 32768, 32768
          %274 = vsyncadd [#allocation7], %s273
          %s275 = sshll.u32 [#allocation8], 4
          %s276 = int_to_ptr.vmem [resolvable:$true] %s275
          %281 = dma.hbm_to_vmem [thread:$0]  %s3, 32768, %s276, [#allocation7], 256, 256, 16
        $region20: #{cifar_server2_forward.3} parent=11 // pred_fallthru
          _
        // Predicated region
        $region21: #{cifar_server2_forward.3} parent=11 // pred_check
          %p282 = pneg %p138
        $region22: #{cifar_server2_forward.3} parent=11 // pred_check_branch
          %284 = sbr.rel (%p282) target = $region24
        $region23: #{cifar_server2_forward.3} parent=11 // pred_region
          %s286 = ssub.s32 64, 64
          %287 = vsyncadd [#allocation10], %s286
          %s289 = sshll.u32 [#allocation9], 4
          %s290 = int_to_ptr.vmem [resolvable:$true] %s289
          %292 = dma.hbm_to_vmem [thread:$0]  %s4, 64, %s290, [#allocation10]
        $region24: #{cifar_server2_forward.3} parent=11 // pred_fallthru
          _
        // Predicated region
        $region25: #{cifar_server2_forward.3} parent=11 // pred_check
          %p293 = pneg %p159
        $region26: #{cifar_server2_forward.3} parent=11 // pred_check_branch
          %295 = sbr.rel (%p293) target = $region28
        $region27: #{cifar_server2_forward.3} parent=11 // pred_region
          %s297 = ssub.s32 8192, 8192
          %298 = vsyncadd [#allocation10], %s297
          %s299 = sshll.u32 [#allocation11], 4
          %s300 = int_to_ptr.vmem [resolvable:$true] %s299
          %305 = dma.hbm_to_vmem [thread:$0]  %s5, 8192, %s300, [#allocation10], 128, 128, 8
        $region28: #{cifar_server2_forward.3} parent=11 // pred_fallthru
          _
        // Predicated region
        $region29: #{cifar_server2_forward.3} parent=11 // pred_check
          %p306 = pneg %p180
        $region30: #{cifar_server2_forward.3} parent=11 // pred_check_branch
          %308 = sbr.rel (%p306) target = $region32
        $region31: #{cifar_server2_forward.3} parent=11 // pred_region
          %s310 = ssub.s32 32, 32
          %311 = vsyncadd [#allocation13], %s310
          %s313 = sshll.u32 [#allocation12], 4
          %s314 = int_to_ptr.vmem [resolvable:$true] %s313
          %316 = dma.hbm_to_vmem [thread:$0]  %s6, 32, %s314, [#allocation13]
        $region32: #{cifar_server2_forward.3} parent=11 // pred_fallthru
          _
        // Predicated region
        $region33: #{cifar_server2_forward.3} parent=11 // pred_check
          %p317 = pneg %p201
        $region34: #{cifar_server2_forward.3} parent=11 // pred_check_branch
          %319 = sbr.rel (%p317) target = $region36
        $region35: #{cifar_server2_forward.3} parent=11 // pred_region
          %s321 = ssub.s32 2048, 2048
          %322 = vsyncadd [#allocation13], %s321
          %s323 = sshll.u32 [#allocation14], 4
          %s324 = int_to_ptr.vmem [resolvable:$true] %s323
          %329 = dma.hbm_to_vmem [thread:$0]  %s7, 2048, %s324, [#allocation13], 64, 64, 4
        $region36: #{cifar_server2_forward.3} parent=11 // pred_fallthru
          _
        // Predicated region
        $region37: #{cifar_server2_forward.3} parent=11 // pred_check
          %p330 = pneg %p222
        $region38: #{cifar_server2_forward.3} parent=11 // pred_check_branch
          %332 = sbr.rel (%p330) target = $region40
        $region39: #{cifar_server2_forward.3} parent=11 // pred_region
          %s334 = ssub.s32 16, 16
          %335 = vsyncadd [#allocation16], %s334
          %s337 = sshll.u32 [#allocation15], 4
          %s338 = int_to_ptr.vmem [resolvable:$true] %s337
          %340 = dma.hbm_to_vmem [thread:$0]  %s8, 16, %s338, [#allocation16]
        $region40: #{cifar_server2_forward.3} parent=11 // pred_fallthru
          _
      $region12: #{cifar_server2_forward.3} parent=5 // pred_fallthru
        _
      %p341 = scmp.lt.s32.totalorder %s23, 2
      // Predicated region
      $region41: #{cifar_server2_forward.3} parent=5 // pred_check
        %p342 = pneg %p341
      $region42: #{cifar_server2_forward.3} parent=5 // pred_check_branch
        %344 = sbr.rel (%p342) target = $region44
      $region43: #{cifar_server2_forward.3} parent=5 // pred_region
        // Predicated region
        $region45: #{cifar_server2_forward.3} parent=43 // pred_check
          %p345 = pneg %p43
        $region46: #{cifar_server2_forward.3} parent=43 // pred_check_branch
          %347 = sbr.rel (%p345) target = $region48
        $region47: #{cifar_server2_forward.3} parent=43 // pred_region
          %s348 = smul.u32 16, %s23
          %p349 = scmp.lt.s32.totalorder %s348, 31
          %s350 = scalar_select %p349, %s348, 31
          %s351 = scalar_lea.vmem %s0, %s350
          %s352 = smul.u32 16, %s23
        $region48: #{cifar_server2_forward.3} parent=43 // pred_fallthru
          _
        // Predicated region
        $region49: #{cifar_server2_forward.3} parent=43 // pred_check
          %p353 = pneg %p69
        $region50: #{cifar_server2_forward.3} parent=43 // pred_check_branch
          %355 = sbr.rel (%p353) target = $region52
        $region51: #{cifar_server2_forward.3} parent=43 // pred_region
          %s356 = sand.u32 %s59, 1
          %s357 = scalar_lea.sflag [#allocation4], %s356
          %s358 = sand.u32 %s59, 1
          %s359 = smul.addr %s358, 8192
          %s360 = scalar_lea.vmem [#allocation3], %s359
          %s361 = smul.u32 256, %s23
          %s363 = ssub.s32 131072, 131072
          %364 = vsyncadd %s357, %s363
          %s365 = smul.addr %s361, 8
          %s366 = smul.addr %s365, 64
          %s367 = scalar_lea.hbm %s1, %s366
          %s368 = sshll.u32 %s360, 4
          %s369 = int_to_ptr.vmem [resolvable:$true] %s368
          %374 = dma.hbm_to_vmem [thread:$0]  %s367, 131072, %s369, %s357, 512, 512, 32
        $region52: #{cifar_server2_forward.3} parent=43 // pred_fallthru
          _
      $region44: #{cifar_server2_forward.3} parent=5 // pred_fallthru
        _
      %p375 = scmp.le.s32.totalorder 1, %s23
      %p376 = scmp.lt.s32.totalorder %s23, 3
      %p377 = pnand %p375, %p376
      %p378 = pneg %p377
      // Predicated region
      $region53: #{cifar_server2_forward.3} parent=5 // pred_check
        _
      $region54: #{cifar_server2_forward.3} parent=5 // pred_check_branch
        %380 = sbr.rel (%p377) target = $region56
      $region55: #{cifar_server2_forward.3} parent=5 // pred_region
        %s381 = ssub.s32 %s23, 1
        %s382 = sand.u32 %s62, 1
        %s383 = scalar_lea.sflag [#allocation4], %s382
        %s384 = sand.u32 %s62, 1
        %s385 = smul.addr %s384, 8192
        %s386 = scalar_lea.vmem [#allocation3], %s385
        // Predicated region
        $region57: #{cifar_server2_forward.3} parent=55 // pred_check
          %p387 = pneg %p75
        $region58: #{cifar_server2_forward.3} parent=55 // pred_check_branch
          %389 = sbr.rel (%p387) target = $region60
        $region59: #{cifar_server2_forward.3} parent=55 // pred_region
          %390 = dma.done %s383, 131072
        $region60: #{cifar_server2_forward.3} parent=55 // pred_fallthru
          _
        // Predicated region
        $region61: #{cifar_server2_forward.3} parent=55 // pred_check
          %p391 = pneg %p96
        $region62: #{cifar_server2_forward.3} parent=55 // pred_check_branch
          %393 = sbr.rel (%p391) target = $region64
        $region63: #{cifar_server2_forward.3} parent=55 // pred_region
          %394 = dma.done [#allocation7], 128
        $region64: #{cifar_server2_forward.3} parent=55 // pred_fallthru
          _
        // Predicated region
        $region65: #{cifar_server2_forward.3} parent=55 // pred_check
          %p395 = pneg %p117
        $region66: #{cifar_server2_forward.3} parent=55 // pred_check_branch
          %397 = sbr.rel (%p395) target = $region68
        $region67: #{cifar_server2_forward.3} parent=55 // pred_region
          %398 = dma.done [#allocation7], 32768
        $region68: #{cifar_server2_forward.3} parent=55 // pred_fallthru
          _
        // Predicated region
        $region69: #{cifar_server2_forward.3} parent=55 // pred_check
          %p399 = pneg %p138
        $region70: #{cifar_server2_forward.3} parent=55 // pred_check_branch
          %401 = sbr.rel (%p399) target = $region72
        $region71: #{cifar_server2_forward.3} parent=55 // pred_region
          %402 = dma.done [#allocation10], 64
        $region72: #{cifar_server2_forward.3} parent=55 // pred_fallthru
          _
        // Predicated region
        $region73: #{cifar_server2_forward.3} parent=55 // pred_check
          %p403 = pneg %p159
        $region74: #{cifar_server2_forward.3} parent=55 // pred_check_branch
          %405 = sbr.rel (%p403) target = $region76
        $region75: #{cifar_server2_forward.3} parent=55 // pred_region
          %406 = dma.done [#allocation10], 8192
        $region76: #{cifar_server2_forward.3} parent=55 // pred_fallthru
          _
        // Predicated region
        $region77: #{cifar_server2_forward.3} parent=55 // pred_check
          %p407 = pneg %p180
        $region78: #{cifar_server2_forward.3} parent=55 // pred_check_branch
          %409 = sbr.rel (%p407) target = $region80
        $region79: #{cifar_server2_forward.3} parent=55 // pred_region
          %410 = dma.done [#allocation13], 32
        $region80: #{cifar_server2_forward.3} parent=55 // pred_fallthru
          _
        // Predicated region
        $region81: #{cifar_server2_forward.3} parent=55 // pred_check
          %p411 = pneg %p201
        $region82: #{cifar_server2_forward.3} parent=55 // pred_check_branch
          %413 = sbr.rel (%p411) target = $region84
        $region83: #{cifar_server2_forward.3} parent=55 // pred_region
          %414 = dma.done [#allocation13], 2048
        $region84: #{cifar_server2_forward.3} parent=55 // pred_fallthru
          _
        // Predicated region
        $region85: #{cifar_server2_forward.3} parent=55 // pred_check
          %p415 = pneg %p222
        $region86: #{cifar_server2_forward.3} parent=55 // pred_check_branch
          %417 = sbr.rel (%p415) target = $region88
        $region87: #{cifar_server2_forward.3} parent=55 // pred_region
          %418 = dma.done [#allocation16], 16
        $region88: #{cifar_server2_forward.3} parent=55 // pred_fallthru
          _
        %s419 = smul.u32 16, %s28
        %p420 = scmp.lt.s32.totalorder %s419, 31
        %s421 = scalar_select %p420, %s419, 31
        %s422 = scalar_lea.vmem %s0, %s421
        %p423 = pneg %p49
        %p424 = pneg %p46
        %s425 = sand.u32 %s62, 1
        %s426 = scalar_lea.sflag [#allocation4], %s425
        %s427 = sand.u32 %s62, 1
        %s428 = smul.addr %s427, 8192
        %s429 = scalar_lea.vmem [#allocation3], %s428
        %p430 = pneg %p75
        %p431 = pneg %p72
        %p432 = pneg %p96
        %p433 = pneg %p93
        %p434 = pneg %p117
        %p435 = pneg %p114
        %p436 = pneg %p138
        %p437 = pneg %p135
        %p438 = pneg %p159
        %p439 = pneg %p156
        %p440 = pneg %p180
        %p441 = pneg %p177
        %p442 = pneg %p201
        %p443 = pneg %p198
        %p444 = pneg %p222
        %p445 = pneg %p219
        %p446 = pneg %p243
        %p447 = pneg %p240
        %s448 = smul.u32 16, %s28
        %p449 = scmp.lt.s32.totalorder %s448, 31
        %s450 = scalar_select %p449, %s448, 31
        %s451 = scalar_lea.vmem %s0, %s450
        %s452 = smul.u32 16, %s28
        %s453 = smul.u32 256, %s28
        %p455 = scmp.eq.s32.totalorder %s28, 0
        // Predicated region
        $region89: #{cifar_server2_forward.3} parent=55 // pred_check
          %p456 = pneg %p455
        $region90: #{cifar_server2_forward.3} parent=55 // pred_check_branch
          %458 = sbr.rel (%p456) target = $region92
        $region91: #{cifar_server2_forward.3} parent=55 // pred_region
          %v459 = vld [vmem:[#allocation6] sm:$0xff]
          %v461 = vlaneseq
          %v462 = vshrl.u32 %v461, 7
          %v463 = vsub.s32 0, %v462
          %v464 = vrot.slane %v459, %v463
          %v465 = vlaneseq
          %v466 = vshrl.u32 %v465, 7
          %v467 = vsub.s32 1, %v466
          %v468 = vrot.slane %v459, %v467
          %v469 = vlaneseq
          %v470 = vshrl.u32 %v469, 7
          %v471 = vsub.s32 2, %v470
          %v472 = vrot.slane %v459, %v471
          %v473 = vlaneseq
          %v474 = vshrl.u32 %v473, 7
          %v475 = vsub.s32 3, %v474
          %v476 = vrot.slane %v459, %v475
          %v477 = vlaneseq
          %v478 = vshrl.u32 %v477, 7
          %v479 = vsub.s32 4, %v478
          %v480 = vrot.slane %v459, %v479
          %v481 = vlaneseq
          %v482 = vshrl.u32 %v481, 7
          %v483 = vsub.s32 5, %v482
          %v484 = vrot.slane %v459, %v483
          %v485 = vlaneseq
          %v486 = vshrl.u32 %v485, 7
          %v487 = vsub.s32 6, %v486
          %v488 = vrot.slane %v459, %v487
          %v489 = vlaneseq
          %v490 = vshrl.u32 %v489, 7
          %v491 = vsub.s32 7, %v490
          %v492 = vrot.slane %v459, %v491
          %v493 = vcombine.low %v464, %v468
          %v494 = vcombine.low %v472, %v476
          %v496 = vunpack.c.l.s4 1983009808
          %v497 = vunpack.c.0.s8 %v496
          %v498 = vlaneseq
          %v499 = vshrl.u32 %v498, 7
          %v500 = vsub.s32 %v497, %v499
          %v501 = vrot.slane %v493, %v500
          %v503 = vunpack.c.l.s4 1983009808
          %v504 = vunpack.c.0.s8 %v503
          %v505 = vlaneseq
          %v506 = vshrl.u32 %v505, 7
          %v507 = vsub.s32 %v504, %v506
          %v508 = vrot.slane %v494, %v507
          %v509 = vcombine.low %v501, %v508
          %v510 = vcombine.low %v480, %v484
          %v511 = vcombine.low %v488, %v492
          %v513 = vunpack.c.l.s4 1983009808
          %v514 = vunpack.c.0.s8 %v513
          %v515 = vlaneseq
          %v516 = vshrl.u32 %v515, 7
          %v517 = vsub.s32 %v514, %v516
          %v518 = vrot.slane %v510, %v517
          %v520 = vunpack.c.l.s4 1983009808
          %v521 = vunpack.c.0.s8 %v520
          %v522 = vlaneseq
          %v523 = vshrl.u32 %v522, 7
          %v524 = vsub.s32 %v521, %v523
          %v525 = vrot.slane %v511, %v524
          %v526 = vcombine.low %v518, %v525
          %529 = vst [vmem:[#allocation2] sm:$0xff] %v509
          %530 = vst [vmem:[#allocation2 + $0x8] sm:$0xff] %v526
        $region92: #{cifar_server2_forward.3} parent=55 // pred_fallthru
          _
        %v531 = vld [vmem:[#allocation2] sm:$0xff]
        %v532 = vld [vmem:[#allocation2 + $0x8] sm:$0xff]
        %v533 = vld [vmem:[%s451] sm:$0xff]
        %v534 = vld [vmem:[%s451 + $0x8] sm:$0xff]
        %v535 = vld [vmem:[%s386] sm:$0xff]
        %v536 = vld [vmem:[%s386 + $0x8] sm:$0xff]
        %v537 = vld [vmem:[%s386 + $0x10] sm:$0xff]
        %v538 = vld [vmem:[%s386 + $0x18] sm:$0xff]
        %v539 = vld [vmem:[%s386 + $0x20] sm:$0xff]
        %v540 = vld [vmem:[%s386 + $0x28] sm:$0xff]
        %v541 = vld [vmem:[%s386 + $0x30] sm:$0xff]
        %v542 = vld [vmem:[%s386 + $0x38] sm:$0xff]
        %v543 = vld [vmem:[%s386 + $0x40] sm:$0xff]
        %v544 = vld [vmem:[%s386 + $0x48] sm:$0xff]
        %v545 = vld [vmem:[%s386 + $0x50] sm:$0xff]
        %v546 = vld [vmem:[%s386 + $0x58] sm:$0xff]
        %v547 = vld [vmem:[%s386 + $0x60] sm:$0xff]
        %v548 = vld [vmem:[%s386 + $0x68] sm:$0xff]
        %v549 = vld [vmem:[%s386 + $0x70] sm:$0xff]
        %v550 = vld [vmem:[%s386 + $0x78] sm:$0xff]
        %v551 = vld [vmem:[%s386 + $0x80] sm:$0xff]
        %v552 = vld [vmem:[%s386 + $0x88] sm:$0xff]
        %v553 = vld [vmem:[%s386 + $0x90] sm:$0xff]
        %v554 = vld [vmem:[%s386 + $0x98] sm:$0xff]
        %v555 = vld [vmem:[%s386 + $0xa0] sm:$0xff]
        %v556 = vld [vmem:[%s386 + $0xa8] sm:$0xff]
        %v557 = vld [vmem:[%s386 + $0xb0] sm:$0xff]
        %v558 = vld [vmem:[%s386 + $0xb8] sm:$0xff]
        %v559 = vld [vmem:[%s386 + $0xc0] sm:$0xff]
        %v560 = vld [vmem:[%s386 + $0xc8] sm:$0xff]
        %v561 = vld [vmem:[%s386 + $0xd0] sm:$0xff]
        %v562 = vld [vmem:[%s386 + $0xd8] sm:$0xff]
        %v563 = vld [vmem:[%s386 + $0xe0] sm:$0xff]
        %v564 = vld [vmem:[%s386 + $0xe8] sm:$0xff]
        %v565 = vld [vmem:[%s386 + $0xf0] sm:$0xff]
        %v566 = vld [vmem:[%s386 + $0xf8] sm:$0xff]
        %v567 = vld [vmem:[%s386 + $0x100] sm:$0xff]
        %v568 = vld [vmem:[%s386 + $0x108] sm:$0xff]
        %v569 = vld [vmem:[%s386 + $0x110] sm:$0xff]
        %v570 = vld [vmem:[%s386 + $0x118] sm:$0xff]
        %v571 = vld [vmem:[%s386 + $0x120] sm:$0xff]
        %v572 = vld [vmem:[%s386 + $0x128] sm:$0xff]
        %v573 = vld [vmem:[%s386 + $0x130] sm:$0xff]
        %v574 = vld [vmem:[%s386 + $0x138] sm:$0xff]
        %v575 = vld [vmem:[%s386 + $0x140] sm:$0xff]
        %v576 = vld [vmem:[%s386 + $0x148] sm:$0xff]
        %v577 = vld [vmem:[%s386 + $0x150] sm:$0xff]
        %v578 = vld [vmem:[%s386 + $0x158] sm:$0xff]
        %v579 = vld [vmem:[%s386 + $0x160] sm:$0xff]
        %v580 = vld [vmem:[%s386 + $0x168] sm:$0xff]
        %v581 = vld [vmem:[%s386 + $0x170] sm:$0xff]
        %v582 = vld [vmem:[%s386 + $0x178] sm:$0xff]
        %v583 = vld [vmem:[%s386 + $0x180] sm:$0xff]
        %v584 = vld [vmem:[%s386 + $0x188] sm:$0xff]
        %v585 = vld [vmem:[%s386 + $0x190] sm:$0xff]
        %v586 = vld [vmem:[%s386 + $0x198] sm:$0xff]
        %v587 = vld [vmem:[%s386 + $0x1a0] sm:$0xff]
        %v588 = vld [vmem:[%s386 + $0x1a8] sm:$0xff]
        %v589 = vld [vmem:[%s386 + $0x1b0] sm:$0xff]
        %v590 = vld [vmem:[%s386 + $0x1b8] sm:$0xff]
        %v591 = vld [vmem:[%s386 + $0x1c0] sm:$0xff]
        %v592 = vld [vmem:[%s386 + $0x1c8] sm:$0xff]
        %v593 = vld [vmem:[%s386 + $0x1d0] sm:$0xff]
        %v594 = vld [vmem:[%s386 + $0x1d8] sm:$0xff]
        %v595 = vld [vmem:[%s386 + $0x1e0] sm:$0xff]
        %v596 = vld [vmem:[%s386 + $0x1e8] sm:$0xff]
        %v597 = vld [vmem:[%s386 + $0x1f0] sm:$0xff]
        %v598 = vld [vmem:[%s386 + $0x1f8] sm:$0xff]
        %v599 = vld [vmem:[%s386 + $0x200] sm:$0xff]
        %v600 = vld [vmem:[%s386 + $0x208] sm:$0xff]
        %v601 = vld [vmem:[%s386 + $0x210] sm:$0xff]
        %v602 = vld [vmem:[%s386 + $0x218] sm:$0xff]
        %v603 = vld [vmem:[%s386 + $0x220] sm:$0xff]
        %v604 = vld [vmem:[%s386 + $0x228] sm:$0xff]
        %v605 = vld [vmem:[%s386 + $0x230] sm:$0xff]
        %v606 = vld [vmem:[%s386 + $0x238] sm:$0xff]
        %v607 = vld [vmem:[%s386 + $0x240] sm:$0xff]
        %v608 = vld [vmem:[%s386 + $0x248] sm:$0xff]
        %v609 = vld [vmem:[%s386 + $0x250] sm:$0xff]
        %v610 = vld [vmem:[%s386 + $0x258] sm:$0xff]
        %v611 = vld [vmem:[%s386 + $0x260] sm:$0xff]
        %v612 = vld [vmem:[%s386 + $0x268] sm:$0xff]
        %v613 = vld [vmem:[%s386 + $0x270] sm:$0xff]
        %v614 = vld [vmem:[%s386 + $0x278] sm:$0xff]
        %v615 = vld [vmem:[%s386 + $0x280] sm:$0xff]
        %v616 = vld [vmem:[%s386 + $0x288] sm:$0xff]
        %v617 = vld [vmem:[%s386 + $0x290] sm:$0xff]
        %v618 = vld [vmem:[%s386 + $0x298] sm:$0xff]
        %v619 = vld [vmem:[%s386 + $0x2a0] sm:$0xff]
        %v620 = vld [vmem:[%s386 + $0x2a8] sm:$0xff]
        %v621 = vld [vmem:[%s386 + $0x2b0] sm:$0xff]
        %v622 = vld [vmem:[%s386 + $0x2b8] sm:$0xff]
        %v623 = vld [vmem:[%s386 + $0x2c0] sm:$0xff]
        %v624 = vld [vmem:[%s386 + $0x2c8] sm:$0xff]
        %v625 = vld [vmem:[%s386 + $0x2d0] sm:$0xff]
        %v626 = vld [vmem:[%s386 + $0x2d8] sm:$0xff]
        %v627 = vld [vmem:[%s386 + $0x2e0] sm:$0xff]
        %v628 = vld [vmem:[%s386 + $0x2e8] sm:$0xff]
        %v629 = vld [vmem:[%s386 + $0x2f0] sm:$0xff]
        %v630 = vld [vmem:[%s386 + $0x2f8] sm:$0xff]
        %v631 = vld [vmem:[%s386 + $0x300] sm:$0xff]
        %v632 = vld [vmem:[%s386 + $0x308] sm:$0xff]
        %v633 = vld [vmem:[%s386 + $0x310] sm:$0xff]
        %v634 = vld [vmem:[%s386 + $0x318] sm:$0xff]
        %v635 = vld [vmem:[%s386 + $0x320] sm:$0xff]
        %v636 = vld [vmem:[%s386 + $0x328] sm:$0xff]
        %v637 = vld [vmem:[%s386 + $0x330] sm:$0xff]
        %v638 = vld [vmem:[%s386 + $0x338] sm:$0xff]
        %v639 = vld [vmem:[%s386 + $0x340] sm:$0xff]
        %v640 = vld [vmem:[%s386 + $0x348] sm:$0xff]
        %v641 = vld [vmem:[%s386 + $0x350] sm:$0xff]
        %v642 = vld [vmem:[%s386 + $0x358] sm:$0xff]
        %v643 = vld [vmem:[%s386 + $0x360] sm:$0xff]
        %v644 = vld [vmem:[%s386 + $0x368] sm:$0xff]
        %v645 = vld [vmem:[%s386 + $0x370] sm:$0xff]
        %v646 = vld [vmem:[%s386 + $0x378] sm:$0xff]
        %v647 = vld [vmem:[%s386 + $0x380] sm:$0xff]
        %v648 = vld [vmem:[%s386 + $0x388] sm:$0xff]
        %v649 = vld [vmem:[%s386 + $0x390] sm:$0xff]
        %v650 = vld [vmem:[%s386 + $0x398] sm:$0xff]
        %v651 = vld [vmem:[%s386 + $0x3a0] sm:$0xff]
        %v652 = vld [vmem:[%s386 + $0x3a8] sm:$0xff]
        %v653 = vld [vmem:[%s386 + $0x3b0] sm:$0xff]
        %v654 = vld [vmem:[%s386 + $0x3b8] sm:$0xff]
        %v655 = vld [vmem:[%s386 + $0x3c0] sm:$0xff]
        %v656 = vld [vmem:[%s386 + $0x3c8] sm:$0xff]
        %v657 = vld [vmem:[%s386 + $0x3d0] sm:$0xff]
        %v658 = vld [vmem:[%s386 + $0x3d8] sm:$0xff]
        %v659 = vld [vmem:[%s386 + $0x3e0] sm:$0xff]
        %v660 = vld [vmem:[%s386 + $0x3e8] sm:$0xff]
        %v661 = vld [vmem:[%s386 + $0x3f0] sm:$0xff]
        %v662 = vld [vmem:[%s386 + $0x3f8] sm:$0xff]
        %v663 = vld [vmem:[%s386 + $0x400] sm:$0xff]
        %v664 = vld [vmem:[%s386 + $0x408] sm:$0xff]
        %v665 = vld [vmem:[%s386 + $0x410] sm:$0xff]
        %v666 = vld [vmem:[%s386 + $0x418] sm:$0xff]
        %v667 = vld [vmem:[%s386 + $0x420] sm:$0xff]
        %v668 = vld [vmem:[%s386 + $0x428] sm:$0xff]
        %v669 = vld [vmem:[%s386 + $0x430] sm:$0xff]
        %v670 = vld [vmem:[%s386 + $0x438] sm:$0xff]
        %v671 = vld [vmem:[%s386 + $0x440] sm:$0xff]
        %v672 = vld [vmem:[%s386 + $0x448] sm:$0xff]
        %v673 = vld [vmem:[%s386 + $0x450] sm:$0xff]
        %v674 = vld [vmem:[%s386 + $0x458] sm:$0xff]
        %v675 = vld [vmem:[%s386 + $0x460] sm:$0xff]
        %v676 = vld [vmem:[%s386 + $0x468] sm:$0xff]
        %v677 = vld [vmem:[%s386 + $0x470] sm:$0xff]
        %v678 = vld [vmem:[%s386 + $0x478] sm:$0xff]
        %v679 = vld [vmem:[%s386 + $0x480] sm:$0xff]
        %v680 = vld [vmem:[%s386 + $0x488] sm:$0xff]
        %v681 = vld [vmem:[%s386 + $0x490] sm:$0xff]
        %v682 = vld [vmem:[%s386 + $0x498] sm:$0xff]
        %v683 = vld [vmem:[%s386 + $0x4a0] sm:$0xff]
        %v684 = vld [vmem:[%s386 + $0x4a8] sm:$0xff]
        %v685 = vld [vmem:[%s386 + $0x4b0] sm:$0xff]
        %v686 = vld [vmem:[%s386 + $0x4b8] sm:$0xff]
        %v687 = vld [vmem:[%s386 + $0x4c0] sm:$0xff]
        %v688 = vld [vmem:[%s386 + $0x4c8] sm:$0xff]
        %v689 = vld [vmem:[%s386 + $0x4d0] sm:$0xff]
        %v690 = vld [vmem:[%s386 + $0x4d8] sm:$0xff]
        %v691 = vld [vmem:[%s386 + $0x4e0] sm:$0xff]
        %v692 = vld [vmem:[%s386 + $0x4e8] sm:$0xff]
        %v693 = vld [vmem:[%s386 + $0x4f0] sm:$0xff]
        %v694 = vld [vmem:[%s386 + $0x4f8] sm:$0xff]
        %v695 = vld [vmem:[%s386 + $0x500] sm:$0xff]
        %v696 = vld [vmem:[%s386 + $0x508] sm:$0xff]
        %v697 = vld [vmem:[%s386 + $0x510] sm:$0xff]
        %v698 = vld [vmem:[%s386 + $0x518] sm:$0xff]
        %v699 = vld [vmem:[%s386 + $0x520] sm:$0xff]
        %v700 = vld [vmem:[%s386 + $0x528] sm:$0xff]
        %v701 = vld [vmem:[%s386 + $0x530] sm:$0xff]
        %v702 = vld [vmem:[%s386 + $0x538] sm:$0xff]
        %v703 = vld [vmem:[%s386 + $0x540] sm:$0xff]
        %v704 = vld [vmem:[%s386 + $0x548] sm:$0xff]
        %v705 = vld [vmem:[%s386 + $0x550] sm:$0xff]
        %v706 = vld [vmem:[%s386 + $0x558] sm:$0xff]
        %v707 = vld [vmem:[%s386 + $0x560] sm:$0xff]
        %v708 = vld [vmem:[%s386 + $0x568] sm:$0xff]
        %v709 = vld [vmem:[%s386 + $0x570] sm:$0xff]
        %v710 = vld [vmem:[%s386 + $0x578] sm:$0xff]
        %v711 = vld [vmem:[%s386 + $0x580] sm:$0xff]
        %v712 = vld [vmem:[%s386 + $0x588] sm:$0xff]
        %v713 = vld [vmem:[%s386 + $0x590] sm:$0xff]
        %v714 = vld [vmem:[%s386 + $0x598] sm:$0xff]
        %v715 = vld [vmem:[%s386 + $0x5a0] sm:$0xff]
        %v716 = vld [vmem:[%s386 + $0x5a8] sm:$0xff]
        %v717 = vld [vmem:[%s386 + $0x5b0] sm:$0xff]
        %v718 = vld [vmem:[%s386 + $0x5b8] sm:$0xff]
        %v719 = vld [vmem:[%s386 + $0x5c0] sm:$0xff]
        %v720 = vld [vmem:[%s386 + $0x5c8] sm:$0xff]
        %v721 = vld [vmem:[%s386 + $0x5d0] sm:$0xff]
        %v722 = vld [vmem:[%s386 + $0x5d8] sm:$0xff]
        %v723 = vld [vmem:[%s386 + $0x5e0] sm:$0xff]
        %v724 = vld [vmem:[%s386 + $0x5e8] sm:$0xff]
        %v725 = vld [vmem:[%s386 + $0x5f0] sm:$0xff]
        %v726 = vld [vmem:[%s386 + $0x5f8] sm:$0xff]
        %v727 = vld [vmem:[%s386 + $0x600] sm:$0xff]
        %v728 = vld [vmem:[%s386 + $0x608] sm:$0xff]
        %v729 = vld [vmem:[%s386 + $0x610] sm:$0xff]
        %v730 = vld [vmem:[%s386 + $0x618] sm:$0xff]
        %v731 = vld [vmem:[%s386 + $0x620] sm:$0xff]
        %v732 = vld [vmem:[%s386 + $0x628] sm:$0xff]
        %v733 = vld [vmem:[%s386 + $0x630] sm:$0xff]
        %v734 = vld [vmem:[%s386 + $0x638] sm:$0xff]
        %v735 = vld [vmem:[%s386 + $0x640] sm:$0xff]
        %v736 = vld [vmem:[%s386 + $0x648] sm:$0xff]
        %v737 = vld [vmem:[%s386 + $0x650] sm:$0xff]
        %v738 = vld [vmem:[%s386 + $0x658] sm:$0xff]
        %v739 = vld [vmem:[%s386 + $0x660] sm:$0xff]
        %v740 = vld [vmem:[%s386 + $0x668] sm:$0xff]
        %v741 = vld [vmem:[%s386 + $0x670] sm:$0xff]
        %v742 = vld [vmem:[%s386 + $0x678] sm:$0xff]
        %v743 = vld [vmem:[%s386 + $0x680] sm:$0xff]
        %v744 = vld [vmem:[%s386 + $0x688] sm:$0xff]
        %v745 = vld [vmem:[%s386 + $0x690] sm:$0xff]
        %v746 = vld [vmem:[%s386 + $0x698] sm:$0xff]
        %v747 = vld [vmem:[%s386 + $0x6a0] sm:$0xff]
        %v748 = vld [vmem:[%s386 + $0x6a8] sm:$0xff]
        %v749 = vld [vmem:[%s386 + $0x6b0] sm:$0xff]
        %v750 = vld [vmem:[%s386 + $0x6b8] sm:$0xff]
        %v751 = vld [vmem:[%s386 + $0x6c0] sm:$0xff]
        %v752 = vld [vmem:[%s386 + $0x6c8] sm:$0xff]
        %v753 = vld [vmem:[%s386 + $0x6d0] sm:$0xff]
        %v754 = vld [vmem:[%s386 + $0x6d8] sm:$0xff]
        %v755 = vld [vmem:[%s386 + $0x6e0] sm:$0xff]
        %v756 = vld [vmem:[%s386 + $0x6e8] sm:$0xff]
        %v757 = vld [vmem:[%s386 + $0x6f0] sm:$0xff]
        %v758 = vld [vmem:[%s386 + $0x6f8] sm:$0xff]
        %v759 = vld [vmem:[%s386 + $0x700] sm:$0xff]
        %v760 = vld [vmem:[%s386 + $0x708] sm:$0xff]
        %v761 = vld [vmem:[%s386 + $0x710] sm:$0xff]
        %v762 = vld [vmem:[%s386 + $0x718] sm:$0xff]
        %v763 = vld [vmem:[%s386 + $0x720] sm:$0xff]
        %v764 = vld [vmem:[%s386 + $0x728] sm:$0xff]
        %v765 = vld [vmem:[%s386 + $0x730] sm:$0xff]
        %v766 = vld [vmem:[%s386 + $0x738] sm:$0xff]
        %v767 = vld [vmem:[%s386 + $0x740] sm:$0xff]
        %v768 = vld [vmem:[%s386 + $0x748] sm:$0xff]
        %v769 = vld [vmem:[%s386 + $0x750] sm:$0xff]
        %v770 = vld [vmem:[%s386 + $0x758] sm:$0xff]
        %v771 = vld [vmem:[%s386 + $0x760] sm:$0xff]
        %v772 = vld [vmem:[%s386 + $0x768] sm:$0xff]
        %v773 = vld [vmem:[%s386 + $0x770] sm:$0xff]
        %v774 = vld [vmem:[%s386 + $0x778] sm:$0xff]
        %v775 = vld [vmem:[%s386 + $0x780] sm:$0xff]
        %v776 = vld [vmem:[%s386 + $0x788] sm:$0xff]
        %v777 = vld [vmem:[%s386 + $0x790] sm:$0xff]
        %v778 = vld [vmem:[%s386 + $0x798] sm:$0xff]
        %v779 = vld [vmem:[%s386 + $0x7a0] sm:$0xff]
        %v780 = vld [vmem:[%s386 + $0x7a8] sm:$0xff]
        %v781 = vld [vmem:[%s386 + $0x7b0] sm:$0xff]
        %v782 = vld [vmem:[%s386 + $0x7b8] sm:$0xff]
        %v783 = vld [vmem:[%s386 + $0x7c0] sm:$0xff]
        %v784 = vld [vmem:[%s386 + $0x7c8] sm:$0xff]
        %v785 = vld [vmem:[%s386 + $0x7d0] sm:$0xff]
        %v786 = vld [vmem:[%s386 + $0x7d8] sm:$0xff]
        %v787 = vld [vmem:[%s386 + $0x7e0] sm:$0xff]
        %v788 = vld [vmem:[%s386 + $0x7e8] sm:$0xff]
        %v789 = vld [vmem:[%s386 + $0x7f0] sm:$0xff]
        %v790 = vld [vmem:[%s386 + $0x7f8] sm:$0xff]
        %v791 = vld [vmem:[%s386 + $0x800] sm:$0xff]
        %v792 = vld [vmem:[%s386 + $0x808] sm:$0xff]
        %v793 = vld [vmem:[%s386 + $0x810] sm:$0xff]
        %v794 = vld [vmem:[%s386 + $0x818] sm:$0xff]
        %v795 = vld [vmem:[%s386 + $0x820] sm:$0xff]
        %v796 = vld [vmem:[%s386 + $0x828] sm:$0xff]
        %v797 = vld [vmem:[%s386 + $0x830] sm:$0xff]
        %v798 = vld [vmem:[%s386 + $0x838] sm:$0xff]
        %v799 = vld [vmem:[%s386 + $0x840] sm:$0xff]
        %v800 = vld [vmem:[%s386 + $0x848] sm:$0xff]
        %v801 = vld [vmem:[%s386 + $0x850] sm:$0xff]
        %v802 = vld [vmem:[%s386 + $0x858] sm:$0xff]
        %v803 = vld [vmem:[%s386 + $0x860] sm:$0xff]
        %v804 = vld [vmem:[%s386 + $0x868] sm:$0xff]
        %v805 = vld [vmem:[%s386 + $0x870] sm:$0xff]
        %v806 = vld [vmem:[%s386 + $0x878] sm:$0xff]
        %v807 = vld [vmem:[%s386 + $0x880] sm:$0xff]
        %v808 = vld [vmem:[%s386 + $0x888] sm:$0xff]
        %v809 = vld [vmem:[%s386 + $0x890] sm:$0xff]
        %v810 = vld [vmem:[%s386 + $0x898] sm:$0xff]
        %v811 = vld [vmem:[%s386 + $0x8a0] sm:$0xff]
        %v812 = vld [vmem:[%s386 + $0x8a8] sm:$0xff]
        %v813 = vld [vmem:[%s386 + $0x8b0] sm:$0xff]
        %v814 = vld [vmem:[%s386 + $0x8b8] sm:$0xff]
        %v815 = vld [vmem:[%s386 + $0x8c0] sm:$0xff]
        %v816 = vld [vmem:[%s386 + $0x8c8] sm:$0xff]
        %v817 = vld [vmem:[%s386 + $0x8d0] sm:$0xff]
        %v818 = vld [vmem:[%s386 + $0x8d8] sm:$0xff]
        %v819 = vld [vmem:[%s386 + $0x8e0] sm:$0xff]
        %v820 = vld [vmem:[%s386 + $0x8e8] sm:$0xff]
        %v821 = vld [vmem:[%s386 + $0x8f0] sm:$0xff]
        %v822 = vld [vmem:[%s386 + $0x8f8] sm:$0xff]
        %v823 = vld [vmem:[%s386 + $0x900] sm:$0xff]
        %v824 = vld [vmem:[%s386 + $0x908] sm:$0xff]
        %v825 = vld [vmem:[%s386 + $0x910] sm:$0xff]
        %v826 = vld [vmem:[%s386 + $0x918] sm:$0xff]
        %v827 = vld [vmem:[%s386 + $0x920] sm:$0xff]
        %v828 = vld [vmem:[%s386 + $0x928] sm:$0xff]
        %v829 = vld [vmem:[%s386 + $0x930] sm:$0xff]
        %v830 = vld [vmem:[%s386 + $0x938] sm:$0xff]
        %v831 = vld [vmem:[%s386 + $0x940] sm:$0xff]
        %v832 = vld [vmem:[%s386 + $0x948] sm:$0xff]
        %v833 = vld [vmem:[%s386 + $0x950] sm:$0xff]
        %v834 = vld [vmem:[%s386 + $0x958] sm:$0xff]
        %v835 = vld [vmem:[%s386 + $0x960] sm:$0xff]
        %v836 = vld [vmem:[%s386 + $0x968] sm:$0xff]
        %v837 = vld [vmem:[%s386 + $0x970] sm:$0xff]
        %v838 = vld [vmem:[%s386 + $0x978] sm:$0xff]
        %v839 = vld [vmem:[%s386 + $0x980] sm:$0xff]
        %v840 = vld [vmem:[%s386 + $0x988] sm:$0xff]
        %v841 = vld [vmem:[%s386 + $0x990] sm:$0xff]
        %v842 = vld [vmem:[%s386 + $0x998] sm:$0xff]
        %v843 = vld [vmem:[%s386 + $0x9a0] sm:$0xff]
        %v844 = vld [vmem:[%s386 + $0x9a8] sm:$0xff]
        %v845 = vld [vmem:[%s386 + $0x9b0] sm:$0xff]
        %v846 = vld [vmem:[%s386 + $0x9b8] sm:$0xff]
        %v847 = vld [vmem:[%s386 + $0x9c0] sm:$0xff]
        %v848 = vld [vmem:[%s386 + $0x9c8] sm:$0xff]
        %v849 = vld [vmem:[%s386 + $0x9d0] sm:$0xff]
        %v850 = vld [vmem:[%s386 + $0x9d8] sm:$0xff]
        %v851 = vld [vmem:[%s386 + $0x9e0] sm:$0xff]
        %v852 = vld [vmem:[%s386 + $0x9e8] sm:$0xff]
        %v853 = vld [vmem:[%s386 + $0x9f0] sm:$0xff]
        %v854 = vld [vmem:[%s386 + $0x9f8] sm:$0xff]
        %v855 = vld [vmem:[%s386 + $0xa00] sm:$0xff]
        %v856 = vld [vmem:[%s386 + $0xa08] sm:$0xff]
        %v857 = vld [vmem:[%s386 + $0xa10] sm:$0xff]
        %v858 = vld [vmem:[%s386 + $0xa18] sm:$0xff]
        %v859 = vld [vmem:[%s386 + $0xa20] sm:$0xff]
        %v860 = vld [vmem:[%s386 + $0xa28] sm:$0xff]
        %v861 = vld [vmem:[%s386 + $0xa30] sm:$0xff]
        %v862 = vld [vmem:[%s386 + $0xa38] sm:$0xff]
        %v863 = vld [vmem:[%s386 + $0xa40] sm:$0xff]
        %v864 = vld [vmem:[%s386 + $0xa48] sm:$0xff]
        %v865 = vld [vmem:[%s386 + $0xa50] sm:$0xff]
        %v866 = vld [vmem:[%s386 + $0xa58] sm:$0xff]
        %v867 = vld [vmem:[%s386 + $0xa60] sm:$0xff]
        %v868 = vld [vmem:[%s386 + $0xa68] sm:$0xff]
        %v869 = vld [vmem:[%s386 + $0xa70] sm:$0xff]
        %v870 = vld [vmem:[%s386 + $0xa78] sm:$0xff]
        %v871 = vld [vmem:[%s386 + $0xa80] sm:$0xff]
        %v872 = vld [vmem:[%s386 + $0xa88] sm:$0xff]
        %v873 = vld [vmem:[%s386 + $0xa90] sm:$0xff]
        %v874 = vld [vmem:[%s386 + $0xa98] sm:$0xff]
        %v875 = vld [vmem:[%s386 + $0xaa0] sm:$0xff]
        %v876 = vld [vmem:[%s386 + $0xaa8] sm:$0xff]
        %v877 = vld [vmem:[%s386 + $0xab0] sm:$0xff]
        %v878 = vld [vmem:[%s386 + $0xab8] sm:$0xff]
        %v879 = vld [vmem:[%s386 + $0xac0] sm:$0xff]
        %v880 = vld [vmem:[%s386 + $0xac8] sm:$0xff]
        %v881 = vld [vmem:[%s386 + $0xad0] sm:$0xff]
        %v882 = vld [vmem:[%s386 + $0xad8] sm:$0xff]
        %v883 = vld [vmem:[%s386 + $0xae0] sm:$0xff]
        %v884 = vld [vmem:[%s386 + $0xae8] sm:$0xff]
        %v885 = vld [vmem:[%s386 + $0xaf0] sm:$0xff]
        %v886 = vld [vmem:[%s386 + $0xaf8] sm:$0xff]
        %v887 = vld [vmem:[%s386 + $0xb00] sm:$0xff]
        %v888 = vld [vmem:[%s386 + $0xb08] sm:$0xff]
        %v889 = vld [vmem:[%s386 + $0xb10] sm:$0xff]
        %v890 = vld [vmem:[%s386 + $0xb18] sm:$0xff]
        %v891 = vld [vmem:[%s386 + $0xb20] sm:$0xff]
        %v892 = vld [vmem:[%s386 + $0xb28] sm:$0xff]
        %v893 = vld [vmem:[%s386 + $0xb30] sm:$0xff]
        %v894 = vld [vmem:[%s386 + $0xb38] sm:$0xff]
        %v895 = vld [vmem:[%s386 + $0xb40] sm:$0xff]
        %v896 = vld [vmem:[%s386 + $0xb48] sm:$0xff]
        %v897 = vld [vmem:[%s386 + $0xb50] sm:$0xff]
        %v898 = vld [vmem:[%s386 + $0xb58] sm:$0xff]
        %v899 = vld [vmem:[%s386 + $0xb60] sm:$0xff]
        %v900 = vld [vmem:[%s386 + $0xb68] sm:$0xff]
        %v901 = vld [vmem:[%s386 + $0xb70] sm:$0xff]
        %v902 = vld [vmem:[%s386 + $0xb78] sm:$0xff]
        %v903 = vld [vmem:[%s386 + $0xb80] sm:$0xff]
        %v904 = vld [vmem:[%s386 + $0xb88] sm:$0xff]
        %v905 = vld [vmem:[%s386 + $0xb90] sm:$0xff]
        %v906 = vld [vmem:[%s386 + $0xb98] sm:$0xff]
        %v907 = vld [vmem:[%s386 + $0xba0] sm:$0xff]
        %v908 = vld [vmem:[%s386 + $0xba8] sm:$0xff]
        %v909 = vld [vmem:[%s386 + $0xbb0] sm:$0xff]
        %v910 = vld [vmem:[%s386 + $0xbb8] sm:$0xff]
        %v911 = vld [vmem:[%s386 + $0xbc0] sm:$0xff]
        %v912 = vld [vmem:[%s386 + $0xbc8] sm:$0xff]
        %v913 = vld [vmem:[%s386 + $0xbd0] sm:$0xff]
        %v914 = vld [vmem:[%s386 + $0xbd8] sm:$0xff]
        %v915 = vld [vmem:[%s386 + $0xbe0] sm:$0xff]
        %v916 = vld [vmem:[%s386 + $0xbe8] sm:$0xff]
        %v917 = vld [vmem:[%s386 + $0xbf0] sm:$0xff]
        %v918 = vld [vmem:[%s386 + $0xbf8] sm:$0xff]
        %v919 = vld [vmem:[%s386 + $0xc00] sm:$0xff]
        %v920 = vld [vmem:[%s386 + $0xc08] sm:$0xff]
        %v921 = vld [vmem:[%s386 + $0xc10] sm:$0xff]
        %v922 = vld [vmem:[%s386 + $0xc18] sm:$0xff]
        %v923 = vld [vmem:[%s386 + $0xc20] sm:$0xff]
        %v924 = vld [vmem:[%s386 + $0xc28] sm:$0xff]
        %v925 = vld [vmem:[%s386 + $0xc30] sm:$0xff]
        %v926 = vld [vmem:[%s386 + $0xc38] sm:$0xff]
        %v927 = vld [vmem:[%s386 + $0xc40] sm:$0xff]
        %v928 = vld [vmem:[%s386 + $0xc48] sm:$0xff]
        %v929 = vld [vmem:[%s386 + $0xc50] sm:$0xff]
        %v930 = vld [vmem:[%s386 + $0xc58] sm:$0xff]
        %v931 = vld [vmem:[%s386 + $0xc60] sm:$0xff]
        %v932 = vld [vmem:[%s386 + $0xc68] sm:$0xff]
        %v933 = vld [vmem:[%s386 + $0xc70] sm:$0xff]
        %v934 = vld [vmem:[%s386 + $0xc78] sm:$0xff]
        %v935 = vld [vmem:[%s386 + $0xc80] sm:$0xff]
        %v936 = vld [vmem:[%s386 + $0xc88] sm:$0xff]
        %v937 = vld [vmem:[%s386 + $0xc90] sm:$0xff]
        %v938 = vld [vmem:[%s386 + $0xc98] sm:$0xff]
        %v939 = vld [vmem:[%s386 + $0xca0] sm:$0xff]
        %v940 = vld [vmem:[%s386 + $0xca8] sm:$0xff]
        %v941 = vld [vmem:[%s386 + $0xcb0] sm:$0xff]
        %v942 = vld [vmem:[%s386 + $0xcb8] sm:$0xff]
        %v943 = vld [vmem:[%s386 + $0xcc0] sm:$0xff]
        %v944 = vld [vmem:[%s386 + $0xcc8] sm:$0xff]
        %v945 = vld [vmem:[%s386 + $0xcd0] sm:$0xff]
        %v946 = vld [vmem:[%s386 + $0xcd8] sm:$0xff]
        %v947 = vld [vmem:[%s386 + $0xce0] sm:$0xff]
        %v948 = vld [vmem:[%s386 + $0xce8] sm:$0xff]
        %v949 = vld [vmem:[%s386 + $0xcf0] sm:$0xff]
        %v950 = vld [vmem:[%s386 + $0xcf8] sm:$0xff]
        %v951 = vld [vmem:[%s386 + $0xd00] sm:$0xff]
        %v952 = vld [vmem:[%s386 + $0xd08] sm:$0xff]
        %v953 = vld [vmem:[%s386 + $0xd10] sm:$0xff]
        %v954 = vld [vmem:[%s386 + $0xd18] sm:$0xff]
        %v955 = vld [vmem:[%s386 + $0xd20] sm:$0xff]
        %v956 = vld [vmem:[%s386 + $0xd28] sm:$0xff]
        %v957 = vld [vmem:[%s386 + $0xd30] sm:$0xff]
        %v958 = vld [vmem:[%s386 + $0xd38] sm:$0xff]
        %v959 = vld [vmem:[%s386 + $0xd40] sm:$0xff]
        %v960 = vld [vmem:[%s386 + $0xd48] sm:$0xff]
        %v961 = vld [vmem:[%s386 + $0xd50] sm:$0xff]
        %v962 = vld [vmem:[%s386 + $0xd58] sm:$0xff]
        %v963 = vld [vmem:[%s386 + $0xd60] sm:$0xff]
        %v964 = vld [vmem:[%s386 + $0xd68] sm:$0xff]
        %v965 = vld [vmem:[%s386 + $0xd70] sm:$0xff]
        %v966 = vld [vmem:[%s386 + $0xd78] sm:$0xff]
        %v967 = vld [vmem:[%s386 + $0xd80] sm:$0xff]
        %v968 = vld [vmem:[%s386 + $0xd88] sm:$0xff]
        %v969 = vld [vmem:[%s386 + $0xd90] sm:$0xff]
        %v970 = vld [vmem:[%s386 + $0xd98] sm:$0xff]
        %v971 = vld [vmem:[%s386 + $0xda0] sm:$0xff]
        %v972 = vld [vmem:[%s386 + $0xda8] sm:$0xff]
        %v973 = vld [vmem:[%s386 + $0xdb0] sm:$0xff]
        %v974 = vld [vmem:[%s386 + $0xdb8] sm:$0xff]
        %v975 = vld [vmem:[%s386 + $0xdc0] sm:$0xff]
        %v976 = vld [vmem:[%s386 + $0xdc8] sm:$0xff]
        %v977 = vld [vmem:[%s386 + $0xdd0] sm:$0xff]
        %v978 = vld [vmem:[%s386 + $0xdd8] sm:$0xff]
        %v979 = vld [vmem:[%s386 + $0xde0] sm:$0xff]
        %v980 = vld [vmem:[%s386 + $0xde8] sm:$0xff]
        %v981 = vld [vmem:[%s386 + $0xdf0] sm:$0xff]
        %v982 = vld [vmem:[%s386 + $0xdf8] sm:$0xff]
        %v983 = vld [vmem:[%s386 + $0xe00] sm:$0xff]
        %v984 = vld [vmem:[%s386 + $0xe08] sm:$0xff]
        %v985 = vld [vmem:[%s386 + $0xe10] sm:$0xff]
        %v986 = vld [vmem:[%s386 + $0xe18] sm:$0xff]
        %v987 = vld [vmem:[%s386 + $0xe20] sm:$0xff]
        %v988 = vld [vmem:[%s386 + $0xe28] sm:$0xff]
        %v989 = vld [vmem:[%s386 + $0xe30] sm:$0xff]
        %v990 = vld [vmem:[%s386 + $0xe38] sm:$0xff]
        %v991 = vld [vmem:[%s386 + $0xe40] sm:$0xff]
        %v992 = vld [vmem:[%s386 + $0xe48] sm:$0xff]
        %v993 = vld [vmem:[%s386 + $0xe50] sm:$0xff]
        %v994 = vld [vmem:[%s386 + $0xe58] sm:$0xff]
        %v995 = vld [vmem:[%s386 + $0xe60] sm:$0xff]
        %v996 = vld [vmem:[%s386 + $0xe68] sm:$0xff]
        %v997 = vld [vmem:[%s386 + $0xe70] sm:$0xff]
        %v998 = vld [vmem:[%s386 + $0xe78] sm:$0xff]
        %v999 = vld [vmem:[%s386 + $0xe80] sm:$0xff]
        %v1000 = vld [vmem:[%s386 + $0xe88] sm:$0xff]
        %v1001 = vld [vmem:[%s386 + $0xe90] sm:$0xff]
        %v1002 = vld [vmem:[%s386 + $0xe98] sm:$0xff]
        %v1003 = vld [vmem:[%s386 + $0xea0] sm:$0xff]
        %v1004 = vld [vmem:[%s386 + $0xea8] sm:$0xff]
        %v1005 = vld [vmem:[%s386 + $0xeb0] sm:$0xff]
        %v1006 = vld [vmem:[%s386 + $0xeb8] sm:$0xff]
        %v1007 = vld [vmem:[%s386 + $0xec0] sm:$0xff]
        %v1008 = vld [vmem:[%s386 + $0xec8] sm:$0xff]
        %v1009 = vld [vmem:[%s386 + $0xed0] sm:$0xff]
        %v1010 = vld [vmem:[%s386 + $0xed8] sm:$0xff]
        %v1011 = vld [vmem:[%s386 + $0xee0] sm:$0xff]
        %v1012 = vld [vmem:[%s386 + $0xee8] sm:$0xff]
        %v1013 = vld [vmem:[%s386 + $0xef0] sm:$0xff]
        %v1014 = vld [vmem:[%s386 + $0xef8] sm:$0xff]
        %v1015 = vld [vmem:[%s386 + $0xf00] sm:$0xff]
        %v1016 = vld [vmem:[%s386 + $0xf08] sm:$0xff]
        %v1017 = vld [vmem:[%s386 + $0xf10] sm:$0xff]
        %v1018 = vld [vmem:[%s386 + $0xf18] sm:$0xff]
        %v1019 = vld [vmem:[%s386 + $0xf20] sm:$0xff]
        %v1020 = vld [vmem:[%s386 + $0xf28] sm:$0xff]
        %v1021 = vld [vmem:[%s386 + $0xf30] sm:$0xff]
        %v1022 = vld [vmem:[%s386 + $0xf38] sm:$0xff]
        %v1023 = vld [vmem:[%s386 + $0xf40] sm:$0xff]
        %v1024 = vld [vmem:[%s386 + $0xf48] sm:$0xff]
        %v1025 = vld [vmem:[%s386 + $0xf50] sm:$0xff]
        %v1026 = vld [vmem:[%s386 + $0xf58] sm:$0xff]
        %v1027 = vld [vmem:[%s386 + $0xf60] sm:$0xff]
        %v1028 = vld [vmem:[%s386 + $0xf68] sm:$0xff]
        %v1029 = vld [vmem:[%s386 + $0xf70] sm:$0xff]
        %v1030 = vld [vmem:[%s386 + $0xf78] sm:$0xff]
        %v1031 = vld [vmem:[%s386 + $0xf80] sm:$0xff]
        %v1032 = vld [vmem:[%s386 + $0xf88] sm:$0xff]
        %v1033 = vld [vmem:[%s386 + $0xf90] sm:$0xff]
        %v1034 = vld [vmem:[%s386 + $0xf98] sm:$0xff]
        %v1035 = vld [vmem:[%s386 + $0xfa0] sm:$0xff]
        %v1036 = vld [vmem:[%s386 + $0xfa8] sm:$0xff]
        %v1037 = vld [vmem:[%s386 + $0xfb0] sm:$0xff]
        %v1038 = vld [vmem:[%s386 + $0xfb8] sm:$0xff]
        %v1039 = vld [vmem:[%s386 + $0xfc0] sm:$0xff]
        %v1040 = vld [vmem:[%s386 + $0xfc8] sm:$0xff]
        %v1041 = vld [vmem:[%s386 + $0xfd0] sm:$0xff]
        %v1042 = vld [vmem:[%s386 + $0xfd8] sm:$0xff]
        %v1043 = vld [vmem:[%s386 + $0xfe0] sm:$0xff]
        %v1044 = vld [vmem:[%s386 + $0xfe8] sm:$0xff]
        %v1045 = vld [vmem:[%s386 + $0xff0] sm:$0xff]
        %v1046 = vld [vmem:[%s386 + $0xff8] sm:$0xff]
        %v1047 = vld [vmem:[%s386 + $0x1000] sm:$0xff]
        %v1048 = vld [vmem:[%s386 + $0x1008] sm:$0xff]
        %v1049 = vld [vmem:[%s386 + $0x1010] sm:$0xff]
        %v1050 = vld [vmem:[%s386 + $0x1018] sm:$0xff]
        %v1051 = vld [vmem:[%s386 + $0x1020] sm:$0xff]
        %v1052 = vld [vmem:[%s386 + $0x1028] sm:$0xff]
        %v1053 = vld [vmem:[%s386 + $0x1030] sm:$0xff]
        %v1054 = vld [vmem:[%s386 + $0x1038] sm:$0xff]
        %v1055 = vld [vmem:[%s386 + $0x1040] sm:$0xff]
        %v1056 = vld [vmem:[%s386 + $0x1048] sm:$0xff]
        %v1057 = vld [vmem:[%s386 + $0x1050] sm:$0xff]
        %v1058 = vld [vmem:[%s386 + $0x1058] sm:$0xff]
        %v1059 = vld [vmem:[%s386 + $0x1060] sm:$0xff]
        %v1060 = vld [vmem:[%s386 + $0x1068] sm:$0xff]
        %v1061 = vld [vmem:[%s386 + $0x1070] sm:$0xff]
        %v1062 = vld [vmem:[%s386 + $0x1078] sm:$0xff]
        %v1063 = vld [vmem:[%s386 + $0x1080] sm:$0xff]
        %v1064 = vld [vmem:[%s386 + $0x1088] sm:$0xff]
        %v1065 = vld [vmem:[%s386 + $0x1090] sm:$0xff]
        %v1066 = vld [vmem:[%s386 + $0x1098] sm:$0xff]
        %v1067 = vld [vmem:[%s386 + $0x10a0] sm:$0xff]
        %v1068 = vld [vmem:[%s386 + $0x10a8] sm:$0xff]
        %v1069 = vld [vmem:[%s386 + $0x10b0] sm:$0xff]
        %v1070 = vld [vmem:[%s386 + $0x10b8] sm:$0xff]
        %v1071 = vld [vmem:[%s386 + $0x10c0] sm:$0xff]
        %v1072 = vld [vmem:[%s386 + $0x10c8] sm:$0xff]
        %v1073 = vld [vmem:[%s386 + $0x10d0] sm:$0xff]
        %v1074 = vld [vmem:[%s386 + $0x10d8] sm:$0xff]
        %v1075 = vld [vmem:[%s386 + $0x10e0] sm:$0xff]
        %v1076 = vld [vmem:[%s386 + $0x10e8] sm:$0xff]
        %v1077 = vld [vmem:[%s386 + $0x10f0] sm:$0xff]
        %v1078 = vld [vmem:[%s386 + $0x10f8] sm:$0xff]
        %v1079 = vld [vmem:[%s386 + $0x1100] sm:$0xff]
        %v1080 = vld [vmem:[%s386 + $0x1108] sm:$0xff]
        %v1081 = vld [vmem:[%s386 + $0x1110] sm:$0xff]
        %v1082 = vld [vmem:[%s386 + $0x1118] sm:$0xff]
        %v1083 = vld [vmem:[%s386 + $0x1120] sm:$0xff]
        %v1084 = vld [vmem:[%s386 + $0x1128] sm:$0xff]
        %v1085 = vld [vmem:[%s386 + $0x1130] sm:$0xff]
        %v1086 = vld [vmem:[%s386 + $0x1138] sm:$0xff]
        %v1087 = vld [vmem:[%s386 + $0x1140] sm:$0xff]
        %v1088 = vld [vmem:[%s386 + $0x1148] sm:$0xff]
        %v1089 = vld [vmem:[%s386 + $0x1150] sm:$0xff]
        %v1090 = vld [vmem:[%s386 + $0x1158] sm:$0xff]
        %v1091 = vld [vmem:[%s386 + $0x1160] sm:$0xff]
        %v1092 = vld [vmem:[%s386 + $0x1168] sm:$0xff]
        %v1093 = vld [vmem:[%s386 + $0x1170] sm:$0xff]
        %v1094 = vld [vmem:[%s386 + $0x1178] sm:$0xff]
        %v1095 = vld [vmem:[%s386 + $0x1180] sm:$0xff]
        %v1096 = vld [vmem:[%s386 + $0x1188] sm:$0xff]
        %v1097 = vld [vmem:[%s386 + $0x1190] sm:$0xff]
        %v1098 = vld [vmem:[%s386 + $0x1198] sm:$0xff]
        %v1099 = vld [vmem:[%s386 + $0x11a0] sm:$0xff]
        %v1100 = vld [vmem:[%s386 + $0x11a8] sm:$0xff]
        %v1101 = vld [vmem:[%s386 + $0x11b0] sm:$0xff]
        %v1102 = vld [vmem:[%s386 + $0x11b8] sm:$0xff]
        %v1103 = vld [vmem:[%s386 + $0x11c0] sm:$0xff]
        %v1104 = vld [vmem:[%s386 + $0x11c8] sm:$0xff]
        %v1105 = vld [vmem:[%s386 + $0x11d0] sm:$0xff]
        %v1106 = vld [vmem:[%s386 + $0x11d8] sm:$0xff]
        %v1107 = vld [vmem:[%s386 + $0x11e0] sm:$0xff]
        %v1108 = vld [vmem:[%s386 + $0x11e8] sm:$0xff]
        %v1109 = vld [vmem:[%s386 + $0x11f0] sm:$0xff]
        %v1110 = vld [vmem:[%s386 + $0x11f8] sm:$0xff]
        %v1111 = vld [vmem:[%s386 + $0x1200] sm:$0xff]
        %v1112 = vld [vmem:[%s386 + $0x1208] sm:$0xff]
        %v1113 = vld [vmem:[%s386 + $0x1210] sm:$0xff]
        %v1114 = vld [vmem:[%s386 + $0x1218] sm:$0xff]
        %v1115 = vld [vmem:[%s386 + $0x1220] sm:$0xff]
        %v1116 = vld [vmem:[%s386 + $0x1228] sm:$0xff]
        %v1117 = vld [vmem:[%s386 + $0x1230] sm:$0xff]
        %v1118 = vld [vmem:[%s386 + $0x1238] sm:$0xff]
        %v1119 = vld [vmem:[%s386 + $0x1240] sm:$0xff]
        %v1120 = vld [vmem:[%s386 + $0x1248] sm:$0xff]
        %v1121 = vld [vmem:[%s386 + $0x1250] sm:$0xff]
        %v1122 = vld [vmem:[%s386 + $0x1258] sm:$0xff]
        %v1123 = vld [vmem:[%s386 + $0x1260] sm:$0xff]
        %v1124 = vld [vmem:[%s386 + $0x1268] sm:$0xff]
        %v1125 = vld [vmem:[%s386 + $0x1270] sm:$0xff]
        %v1126 = vld [vmem:[%s386 + $0x1278] sm:$0xff]
        %v1127 = vld [vmem:[%s386 + $0x1280] sm:$0xff]
        %v1128 = vld [vmem:[%s386 + $0x1288] sm:$0xff]
        %v1129 = vld [vmem:[%s386 + $0x1290] sm:$0xff]
        %v1130 = vld [vmem:[%s386 + $0x1298] sm:$0xff]
        %v1131 = vld [vmem:[%s386 + $0x12a0] sm:$0xff]
        %v1132 = vld [vmem:[%s386 + $0x12a8] sm:$0xff]
        %v1133 = vld [vmem:[%s386 + $0x12b0] sm:$0xff]
        %v1134 = vld [vmem:[%s386 + $0x12b8] sm:$0xff]
        %v1135 = vld [vmem:[%s386 + $0x12c0] sm:$0xff]
        %v1136 = vld [vmem:[%s386 + $0x12c8] sm:$0xff]
        %v1137 = vld [vmem:[%s386 + $0x12d0] sm:$0xff]
        %v1138 = vld [vmem:[%s386 + $0x12d8] sm:$0xff]
        %v1139 = vld [vmem:[%s386 + $0x12e0] sm:$0xff]
        %v1140 = vld [vmem:[%s386 + $0x12e8] sm:$0xff]
        %v1141 = vld [vmem:[%s386 + $0x12f0] sm:$0xff]
        %v1142 = vld [vmem:[%s386 + $0x12f8] sm:$0xff]
        %v1143 = vld [vmem:[%s386 + $0x1300] sm:$0xff]
        %v1144 = vld [vmem:[%s386 + $0x1308] sm:$0xff]
        %v1145 = vld [vmem:[%s386 + $0x1310] sm:$0xff]
        %v1146 = vld [vmem:[%s386 + $0x1318] sm:$0xff]
        %v1147 = vld [vmem:[%s386 + $0x1320] sm:$0xff]
        %v1148 = vld [vmem:[%s386 + $0x1328] sm:$0xff]
        %v1149 = vld [vmem:[%s386 + $0x1330] sm:$0xff]
        %v1150 = vld [vmem:[%s386 + $0x1338] sm:$0xff]
        %v1151 = vld [vmem:[%s386 + $0x1340] sm:$0xff]
        %v1152 = vld [vmem:[%s386 + $0x1348] sm:$0xff]
        %v1153 = vld [vmem:[%s386 + $0x1350] sm:$0xff]
        %v1154 = vld [vmem:[%s386 + $0x1358] sm:$0xff]
        %v1155 = vld [vmem:[%s386 + $0x1360] sm:$0xff]
        %v1156 = vld [vmem:[%s386 + $0x1368] sm:$0xff]
        %v1157 = vld [vmem:[%s386 + $0x1370] sm:$0xff]
        %v1158 = vld [vmem:[%s386 + $0x1378] sm:$0xff]
        %v1159 = vld [vmem:[%s386 + $0x1380] sm:$0xff]
        %v1160 = vld [vmem:[%s386 + $0x1388] sm:$0xff]
        %v1161 = vld [vmem:[%s386 + $0x1390] sm:$0xff]
        %v1162 = vld [vmem:[%s386 + $0x1398] sm:$0xff]
        %v1163 = vld [vmem:[%s386 + $0x13a0] sm:$0xff]
        %v1164 = vld [vmem:[%s386 + $0x13a8] sm:$0xff]
        %v1165 = vld [vmem:[%s386 + $0x13b0] sm:$0xff]
        %v1166 = vld [vmem:[%s386 + $0x13b8] sm:$0xff]
        %v1167 = vld [vmem:[%s386 + $0x13c0] sm:$0xff]
        %v1168 = vld [vmem:[%s386 + $0x13c8] sm:$0xff]
        %v1169 = vld [vmem:[%s386 + $0x13d0] sm:$0xff]
        %v1170 = vld [vmem:[%s386 + $0x13d8] sm:$0xff]
        %v1171 = vld [vmem:[%s386 + $0x13e0] sm:$0xff]
        %v1172 = vld [vmem:[%s386 + $0x13e8] sm:$0xff]
        %v1173 = vld [vmem:[%s386 + $0x13f0] sm:$0xff]
        %v1174 = vld [vmem:[%s386 + $0x13f8] sm:$0xff]
        %v1175 = vld [vmem:[%s386 + $0x1400] sm:$0xff]
        %v1176 = vld [vmem:[%s386 + $0x1408] sm:$0xff]
        %v1177 = vld [vmem:[%s386 + $0x1410] sm:$0xff]
        %v1178 = vld [vmem:[%s386 + $0x1418] sm:$0xff]
        %v1179 = vld [vmem:[%s386 + $0x1420] sm:$0xff]
        %v1180 = vld [vmem:[%s386 + $0x1428] sm:$0xff]
        %v1181 = vld [vmem:[%s386 + $0x1430] sm:$0xff]
        %v1182 = vld [vmem:[%s386 + $0x1438] sm:$0xff]
        %v1183 = vld [vmem:[%s386 + $0x1440] sm:$0xff]
        %v1184 = vld [vmem:[%s386 + $0x1448] sm:$0xff]
        %v1185 = vld [vmem:[%s386 + $0x1450] sm:$0xff]
        %v1186 = vld [vmem:[%s386 + $0x1458] sm:$0xff]
        %v1187 = vld [vmem:[%s386 + $0x1460] sm:$0xff]
        %v1188 = vld [vmem:[%s386 + $0x1468] sm:$0xff]
        %v1189 = vld [vmem:[%s386 + $0x1470] sm:$0xff]
        %v1190 = vld [vmem:[%s386 + $0x1478] sm:$0xff]
        %v1191 = vld [vmem:[%s386 + $0x1480] sm:$0xff]
        %v1192 = vld [vmem:[%s386 + $0x1488] sm:$0xff]
        %v1193 = vld [vmem:[%s386 + $0x1490] sm:$0xff]
        %v1194 = vld [vmem:[%s386 + $0x1498] sm:$0xff]
        %v1195 = vld [vmem:[%s386 + $0x14a0] sm:$0xff]
        %v1196 = vld [vmem:[%s386 + $0x14a8] sm:$0xff]
        %v1197 = vld [vmem:[%s386 + $0x14b0] sm:$0xff]
        %v1198 = vld [vmem:[%s386 + $0x14b8] sm:$0xff]
        %v1199 = vld [vmem:[%s386 + $0x14c0] sm:$0xff]
        %v1200 = vld [vmem:[%s386 + $0x14c8] sm:$0xff]
        %v1201 = vld [vmem:[%s386 + $0x14d0] sm:$0xff]
        %v1202 = vld [vmem:[%s386 + $0x14d8] sm:$0xff]
        %v1203 = vld [vmem:[%s386 + $0x14e0] sm:$0xff]
        %v1204 = vld [vmem:[%s386 + $0x14e8] sm:$0xff]
        %v1205 = vld [vmem:[%s386 + $0x14f0] sm:$0xff]
        %v1206 = vld [vmem:[%s386 + $0x14f8] sm:$0xff]
        %v1207 = vld [vmem:[%s386 + $0x1500] sm:$0xff]
        %v1208 = vld [vmem:[%s386 + $0x1508] sm:$0xff]
        %v1209 = vld [vmem:[%s386 + $0x1510] sm:$0xff]
        %v1210 = vld [vmem:[%s386 + $0x1518] sm:$0xff]
        %v1211 = vld [vmem:[%s386 + $0x1520] sm:$0xff]
        %v1212 = vld [vmem:[%s386 + $0x1528] sm:$0xff]
        %v1213 = vld [vmem:[%s386 + $0x1530] sm:$0xff]
        %v1214 = vld [vmem:[%s386 + $0x1538] sm:$0xff]
        %v1215 = vld [vmem:[%s386 + $0x1540] sm:$0xff]
        %v1216 = vld [vmem:[%s386 + $0x1548] sm:$0xff]
        %v1217 = vld [vmem:[%s386 + $0x1550] sm:$0xff]
        %v1218 = vld [vmem:[%s386 + $0x1558] sm:$0xff]
        %v1219 = vld [vmem:[%s386 + $0x1560] sm:$0xff]
        %v1220 = vld [vmem:[%s386 + $0x1568] sm:$0xff]
        %v1221 = vld [vmem:[%s386 + $0x1570] sm:$0xff]
        %v1222 = vld [vmem:[%s386 + $0x1578] sm:$0xff]
        %v1223 = vld [vmem:[%s386 + $0x1580] sm:$0xff]
        %v1224 = vld [vmem:[%s386 + $0x1588] sm:$0xff]
        %v1225 = vld [vmem:[%s386 + $0x1590] sm:$0xff]
        %v1226 = vld [vmem:[%s386 + $0x1598] sm:$0xff]
        %v1227 = vld [vmem:[%s386 + $0x15a0] sm:$0xff]
        %v1228 = vld [vmem:[%s386 + $0x15a8] sm:$0xff]
        %v1229 = vld [vmem:[%s386 + $0x15b0] sm:$0xff]
        %v1230 = vld [vmem:[%s386 + $0x15b8] sm:$0xff]
        %v1231 = vld [vmem:[%s386 + $0x15c0] sm:$0xff]
        %v1232 = vld [vmem:[%s386 + $0x15c8] sm:$0xff]
        %v1233 = vld [vmem:[%s386 + $0x15d0] sm:$0xff]
        %v1234 = vld [vmem:[%s386 + $0x15d8] sm:$0xff]
        %v1235 = vld [vmem:[%s386 + $0x15e0] sm:$0xff]
        %v1236 = vld [vmem:[%s386 + $0x15e8] sm:$0xff]
        %v1237 = vld [vmem:[%s386 + $0x15f0] sm:$0xff]
        %v1238 = vld [vmem:[%s386 + $0x15f8] sm:$0xff]
        %v1239 = vld [vmem:[%s386 + $0x1600] sm:$0xff]
        %v1240 = vld [vmem:[%s386 + $0x1608] sm:$0xff]
        %v1241 = vld [vmem:[%s386 + $0x1610] sm:$0xff]
        %v1242 = vld [vmem:[%s386 + $0x1618] sm:$0xff]
        %v1243 = vld [vmem:[%s386 + $0x1620] sm:$0xff]
        %v1244 = vld [vmem:[%s386 + $0x1628] sm:$0xff]
        %v1245 = vld [vmem:[%s386 + $0x1630] sm:$0xff]
        %v1246 = vld [vmem:[%s386 + $0x1638] sm:$0xff]
        %v1247 = vld [vmem:[%s386 + $0x1640] sm:$0xff]
        %v1248 = vld [vmem:[%s386 + $0x1648] sm:$0xff]
        %v1249 = vld [vmem:[%s386 + $0x1650] sm:$0xff]
        %v1250 = vld [vmem:[%s386 + $0x1658] sm:$0xff]
        %v1251 = vld [vmem:[%s386 + $0x1660] sm:$0xff]
        %v1252 = vld [vmem:[%s386 + $0x1668] sm:$0xff]
        %v1253 = vld [vmem:[%s386 + $0x1670] sm:$0xff]
        %v1254 = vld [vmem:[%s386 + $0x1678] sm:$0xff]
        %v1255 = vld [vmem:[%s386 + $0x1680] sm:$0xff]
        %v1256 = vld [vmem:[%s386 + $0x1688] sm:$0xff]
        %v1257 = vld [vmem:[%s386 + $0x1690] sm:$0xff]
        %v1258 = vld [vmem:[%s386 + $0x1698] sm:$0xff]
        %v1259 = vld [vmem:[%s386 + $0x16a0] sm:$0xff]
        %v1260 = vld [vmem:[%s386 + $0x16a8] sm:$0xff]
        %v1261 = vld [vmem:[%s386 + $0x16b0] sm:$0xff]
        %v1262 = vld [vmem:[%s386 + $0x16b8] sm:$0xff]
        %v1263 = vld [vmem:[%s386 + $0x16c0] sm:$0xff]
        %v1264 = vld [vmem:[%s386 + $0x16c8] sm:$0xff]
        %v1265 = vld [vmem:[%s386 + $0x16d0] sm:$0xff]
        %v1266 = vld [vmem:[%s386 + $0x16d8] sm:$0xff]
        %v1267 = vld [vmem:[%s386 + $0x16e0] sm:$0xff]
        %v1268 = vld [vmem:[%s386 + $0x16e8] sm:$0xff]
        %v1269 = vld [vmem:[%s386 + $0x16f0] sm:$0xff]
        %v1270 = vld [vmem:[%s386 + $0x16f8] sm:$0xff]
        %v1271 = vld [vmem:[%s386 + $0x1700] sm:$0xff]
        %v1272 = vld [vmem:[%s386 + $0x1708] sm:$0xff]
        %v1273 = vld [vmem:[%s386 + $0x1710] sm:$0xff]
        %v1274 = vld [vmem:[%s386 + $0x1718] sm:$0xff]
        %v1275 = vld [vmem:[%s386 + $0x1720] sm:$0xff]
        %v1276 = vld [vmem:[%s386 + $0x1728] sm:$0xff]
        %v1277 = vld [vmem:[%s386 + $0x1730] sm:$0xff]
        %v1278 = vld [vmem:[%s386 + $0x1738] sm:$0xff]
        %v1279 = vld [vmem:[%s386 + $0x1740] sm:$0xff]
        %v1280 = vld [vmem:[%s386 + $0x1748] sm:$0xff]
        %v1281 = vld [vmem:[%s386 + $0x1750] sm:$0xff]
        %v1282 = vld [vmem:[%s386 + $0x1758] sm:$0xff]
        %v1283 = vld [vmem:[%s386 + $0x1760] sm:$0xff]
        %v1284 = vld [vmem:[%s386 + $0x1768] sm:$0xff]
        %v1285 = vld [vmem:[%s386 + $0x1770] sm:$0xff]
        %v1286 = vld [vmem:[%s386 + $0x1778] sm:$0xff]
        %v1287 = vld [vmem:[%s386 + $0x1780] sm:$0xff]
        %v1288 = vld [vmem:[%s386 + $0x1788] sm:$0xff]
        %v1289 = vld [vmem:[%s386 + $0x1790] sm:$0xff]
        %v1290 = vld [vmem:[%s386 + $0x1798] sm:$0xff]
        %v1291 = vld [vmem:[%s386 + $0x17a0] sm:$0xff]
        %v1292 = vld [vmem:[%s386 + $0x17a8] sm:$0xff]
        %v1293 = vld [vmem:[%s386 + $0x17b0] sm:$0xff]
        %v1294 = vld [vmem:[%s386 + $0x17b8] sm:$0xff]
        %v1295 = vld [vmem:[%s386 + $0x17c0] sm:$0xff]
        %v1296 = vld [vmem:[%s386 + $0x17c8] sm:$0xff]
        %v1297 = vld [vmem:[%s386 + $0x17d0] sm:$0xff]
        %v1298 = vld [vmem:[%s386 + $0x17d8] sm:$0xff]
        %v1299 = vld [vmem:[%s386 + $0x17e0] sm:$0xff]
        %v1300 = vld [vmem:[%s386 + $0x17e8] sm:$0xff]
        %v1301 = vld [vmem:[%s386 + $0x17f0] sm:$0xff]
        %v1302 = vld [vmem:[%s386 + $0x17f8] sm:$0xff]
        %v1303 = vld [vmem:[%s386 + $0x1800] sm:$0xff]
        %v1304 = vld [vmem:[%s386 + $0x1808] sm:$0xff]
        %v1305 = vld [vmem:[%s386 + $0x1810] sm:$0xff]
        %v1306 = vld [vmem:[%s386 + $0x1818] sm:$0xff]
        %v1307 = vld [vmem:[%s386 + $0x1820] sm:$0xff]
        %v1308 = vld [vmem:[%s386 + $0x1828] sm:$0xff]
        %v1309 = vld [vmem:[%s386 + $0x1830] sm:$0xff]
        %v1310 = vld [vmem:[%s386 + $0x1838] sm:$0xff]
        %v1311 = vld [vmem:[%s386 + $0x1840] sm:$0xff]
        %v1312 = vld [vmem:[%s386 + $0x1848] sm:$0xff]
        %v1313 = vld [vmem:[%s386 + $0x1850] sm:$0xff]
        %v1314 = vld [vmem:[%s386 + $0x1858] sm:$0xff]
        %v1315 = vld [vmem:[%s386 + $0x1860] sm:$0xff]
        %v1316 = vld [vmem:[%s386 + $0x1868] sm:$0xff]
        %v1317 = vld [vmem:[%s386 + $0x1870] sm:$0xff]
        %v1318 = vld [vmem:[%s386 + $0x1878] sm:$0xff]
        %v1319 = vld [vmem:[%s386 + $0x1880] sm:$0xff]
        %v1320 = vld [vmem:[%s386 + $0x1888] sm:$0xff]
        %v1321 = vld [vmem:[%s386 + $0x1890] sm:$0xff]
        %v1322 = vld [vmem:[%s386 + $0x1898] sm:$0xff]
        %v1323 = vld [vmem:[%s386 + $0x18a0] sm:$0xff]
        %v1324 = vld [vmem:[%s386 + $0x18a8] sm:$0xff]
        %v1325 = vld [vmem:[%s386 + $0x18b0] sm:$0xff]
        %v1326 = vld [vmem:[%s386 + $0x18b8] sm:$0xff]
        %v1327 = vld [vmem:[%s386 + $0x18c0] sm:$0xff]
        %v1328 = vld [vmem:[%s386 + $0x18c8] sm:$0xff]
        %v1329 = vld [vmem:[%s386 + $0x18d0] sm:$0xff]
        %v1330 = vld [vmem:[%s386 + $0x18d8] sm:$0xff]
        %v1331 = vld [vmem:[%s386 + $0x18e0] sm:$0xff]
        %v1332 = vld [vmem:[%s386 + $0x18e8] sm:$0xff]
        %v1333 = vld [vmem:[%s386 + $0x18f0] sm:$0xff]
        %v1334 = vld [vmem:[%s386 + $0x18f8] sm:$0xff]
        %v1335 = vld [vmem:[%s386 + $0x1900] sm:$0xff]
        %v1336 = vld [vmem:[%s386 + $0x1908] sm:$0xff]
        %v1337 = vld [vmem:[%s386 + $0x1910] sm:$0xff]
        %v1338 = vld [vmem:[%s386 + $0x1918] sm:$0xff]
        %v1339 = vld [vmem:[%s386 + $0x1920] sm:$0xff]
        %v1340 = vld [vmem:[%s386 + $0x1928] sm:$0xff]
        %v1341 = vld [vmem:[%s386 + $0x1930] sm:$0xff]
        %v1342 = vld [vmem:[%s386 + $0x1938] sm:$0xff]
        %v1343 = vld [vmem:[%s386 + $0x1940] sm:$0xff]
        %v1344 = vld [vmem:[%s386 + $0x1948] sm:$0xff]
        %v1345 = vld [vmem:[%s386 + $0x1950] sm:$0xff]
        %v1346 = vld [vmem:[%s386 + $0x1958] sm:$0xff]
        %v1347 = vld [vmem:[%s386 + $0x1960] sm:$0xff]
        %v1348 = vld [vmem:[%s386 + $0x1968] sm:$0xff]
        %v1349 = vld [vmem:[%s386 + $0x1970] sm:$0xff]
        %v1350 = vld [vmem:[%s386 + $0x1978] sm:$0xff]
        %v1351 = vld [vmem:[%s386 + $0x1980] sm:$0xff]
        %v1352 = vld [vmem:[%s386 + $0x1988] sm:$0xff]
        %v1353 = vld [vmem:[%s386 + $0x1990] sm:$0xff]
        %v1354 = vld [vmem:[%s386 + $0x1998] sm:$0xff]
        %v1355 = vld [vmem:[%s386 + $0x19a0] sm:$0xff]
        %v1356 = vld [vmem:[%s386 + $0x19a8] sm:$0xff]
        %v1357 = vld [vmem:[%s386 + $0x19b0] sm:$0xff]
        %v1358 = vld [vmem:[%s386 + $0x19b8] sm:$0xff]
        %v1359 = vld [vmem:[%s386 + $0x19c0] sm:$0xff]
        %v1360 = vld [vmem:[%s386 + $0x19c8] sm:$0xff]
        %v1361 = vld [vmem:[%s386 + $0x19d0] sm:$0xff]
        %v1362 = vld [vmem:[%s386 + $0x19d8] sm:$0xff]
        %v1363 = vld [vmem:[%s386 + $0x19e0] sm:$0xff]
        %v1364 = vld [vmem:[%s386 + $0x19e8] sm:$0xff]
        %v1365 = vld [vmem:[%s386 + $0x19f0] sm:$0xff]
        %v1366 = vld [vmem:[%s386 + $0x19f8] sm:$0xff]
        %v1367 = vld [vmem:[%s386 + $0x1a00] sm:$0xff]
        %v1368 = vld [vmem:[%s386 + $0x1a08] sm:$0xff]
        %v1369 = vld [vmem:[%s386 + $0x1a10] sm:$0xff]
        %v1370 = vld [vmem:[%s386 + $0x1a18] sm:$0xff]
        %v1371 = vld [vmem:[%s386 + $0x1a20] sm:$0xff]
        %v1372 = vld [vmem:[%s386 + $0x1a28] sm:$0xff]
        %v1373 = vld [vmem:[%s386 + $0x1a30] sm:$0xff]
        %v1374 = vld [vmem:[%s386 + $0x1a38] sm:$0xff]
        %v1375 = vld [vmem:[%s386 + $0x1a40] sm:$0xff]
        %v1376 = vld [vmem:[%s386 + $0x1a48] sm:$0xff]
        %v1377 = vld [vmem:[%s386 + $0x1a50] sm:$0xff]
        %v1378 = vld [vmem:[%s386 + $0x1a58] sm:$0xff]
        %v1379 = vld [vmem:[%s386 + $0x1a60] sm:$0xff]
        %v1380 = vld [vmem:[%s386 + $0x1a68] sm:$0xff]
        %v1381 = vld [vmem:[%s386 + $0x1a70] sm:$0xff]
        %v1382 = vld [vmem:[%s386 + $0x1a78] sm:$0xff]
        %v1383 = vld [vmem:[%s386 + $0x1a80] sm:$0xff]
        %v1384 = vld [vmem:[%s386 + $0x1a88] sm:$0xff]
        %v1385 = vld [vmem:[%s386 + $0x1a90] sm:$0xff]
        %v1386 = vld [vmem:[%s386 + $0x1a98] sm:$0xff]
        %v1387 = vld [vmem:[%s386 + $0x1aa0] sm:$0xff]
        %v1388 = vld [vmem:[%s386 + $0x1aa8] sm:$0xff]
        %v1389 = vld [vmem:[%s386 + $0x1ab0] sm:$0xff]
        %v1390 = vld [vmem:[%s386 + $0x1ab8] sm:$0xff]
        %v1391 = vld [vmem:[%s386 + $0x1ac0] sm:$0xff]
        %v1392 = vld [vmem:[%s386 + $0x1ac8] sm:$0xff]
        %v1393 = vld [vmem:[%s386 + $0x1ad0] sm:$0xff]
        %v1394 = vld [vmem:[%s386 + $0x1ad8] sm:$0xff]
        %v1395 = vld [vmem:[%s386 + $0x1ae0] sm:$0xff]
        %v1396 = vld [vmem:[%s386 + $0x1ae8] sm:$0xff]
        %v1397 = vld [vmem:[%s386 + $0x1af0] sm:$0xff]
        %v1398 = vld [vmem:[%s386 + $0x1af8] sm:$0xff]
        %v1399 = vld [vmem:[%s386 + $0x1b00] sm:$0xff]
        %v1400 = vld [vmem:[%s386 + $0x1b08] sm:$0xff]
        %v1401 = vld [vmem:[%s386 + $0x1b10] sm:$0xff]
        %v1402 = vld [vmem:[%s386 + $0x1b18] sm:$0xff]
        %v1403 = vld [vmem:[%s386 + $0x1b20] sm:$0xff]
        %v1404 = vld [vmem:[%s386 + $0x1b28] sm:$0xff]
        %v1405 = vld [vmem:[%s386 + $0x1b30] sm:$0xff]
        %v1406 = vld [vmem:[%s386 + $0x1b38] sm:$0xff]
        %v1407 = vld [vmem:[%s386 + $0x1b40] sm:$0xff]
        %v1408 = vld [vmem:[%s386 + $0x1b48] sm:$0xff]
        %v1409 = vld [vmem:[%s386 + $0x1b50] sm:$0xff]
        %v1410 = vld [vmem:[%s386 + $0x1b58] sm:$0xff]
        %v1411 = vld [vmem:[%s386 + $0x1b60] sm:$0xff]
        %v1412 = vld [vmem:[%s386 + $0x1b68] sm:$0xff]
        %v1413 = vld [vmem:[%s386 + $0x1b70] sm:$0xff]
        %v1414 = vld [vmem:[%s386 + $0x1b78] sm:$0xff]
        %v1415 = vld [vmem:[%s386 + $0x1b80] sm:$0xff]
        %v1416 = vld [vmem:[%s386 + $0x1b88] sm:$0xff]
        %v1417 = vld [vmem:[%s386 + $0x1b90] sm:$0xff]
        %v1418 = vld [vmem:[%s386 + $0x1b98] sm:$0xff]
        %v1419 = vld [vmem:[%s386 + $0x1ba0] sm:$0xff]
        %v1420 = vld [vmem:[%s386 + $0x1ba8] sm:$0xff]
        %v1421 = vld [vmem:[%s386 + $0x1bb0] sm:$0xff]
        %v1422 = vld [vmem:[%s386 + $0x1bb8] sm:$0xff]
        %v1423 = vld [vmem:[%s386 + $0x1bc0] sm:$0xff]
        %v1424 = vld [vmem:[%s386 + $0x1bc8] sm:$0xff]
        %v1425 = vld [vmem:[%s386 + $0x1bd0] sm:$0xff]
        %v1426 = vld [vmem:[%s386 + $0x1bd8] sm:$0xff]
        %v1427 = vld [vmem:[%s386 + $0x1be0] sm:$0xff]
        %v1428 = vld [vmem:[%s386 + $0x1be8] sm:$0xff]
        %v1429 = vld [vmem:[%s386 + $0x1bf0] sm:$0xff]
        %v1430 = vld [vmem:[%s386 + $0x1bf8] sm:$0xff]
        %v1431 = vld [vmem:[%s386 + $0x1c00] sm:$0xff]
        %v1432 = vld [vmem:[%s386 + $0x1c08] sm:$0xff]
        %v1433 = vld [vmem:[%s386 + $0x1c10] sm:$0xff]
        %v1434 = vld [vmem:[%s386 + $0x1c18] sm:$0xff]
        %v1435 = vld [vmem:[%s386 + $0x1c20] sm:$0xff]
        %v1436 = vld [vmem:[%s386 + $0x1c28] sm:$0xff]
        %v1437 = vld [vmem:[%s386 + $0x1c30] sm:$0xff]
        %v1438 = vld [vmem:[%s386 + $0x1c38] sm:$0xff]
        %v1439 = vld [vmem:[%s386 + $0x1c40] sm:$0xff]
        %v1440 = vld [vmem:[%s386 + $0x1c48] sm:$0xff]
        %v1441 = vld [vmem:[%s386 + $0x1c50] sm:$0xff]
        %v1442 = vld [vmem:[%s386 + $0x1c58] sm:$0xff]
        %v1443 = vld [vmem:[%s386 + $0x1c60] sm:$0xff]
        %v1444 = vld [vmem:[%s386 + $0x1c68] sm:$0xff]
        %v1445 = vld [vmem:[%s386 + $0x1c70] sm:$0xff]
        %v1446 = vld [vmem:[%s386 + $0x1c78] sm:$0xff]
        %v1447 = vld [vmem:[%s386 + $0x1c80] sm:$0xff]
        %v1448 = vld [vmem:[%s386 + $0x1c88] sm:$0xff]
        %v1449 = vld [vmem:[%s386 + $0x1c90] sm:$0xff]
        %v1450 = vld [vmem:[%s386 + $0x1c98] sm:$0xff]
        %v1451 = vld [vmem:[%s386 + $0x1ca0] sm:$0xff]
        %v1452 = vld [vmem:[%s386 + $0x1ca8] sm:$0xff]
        %v1453 = vld [vmem:[%s386 + $0x1cb0] sm:$0xff]
        %v1454 = vld [vmem:[%s386 + $0x1cb8] sm:$0xff]
        %v1455 = vld [vmem:[%s386 + $0x1cc0] sm:$0xff]
        %v1456 = vld [vmem:[%s386 + $0x1cc8] sm:$0xff]
        %v1457 = vld [vmem:[%s386 + $0x1cd0] sm:$0xff]
        %v1458 = vld [vmem:[%s386 + $0x1cd8] sm:$0xff]
        %v1459 = vld [vmem:[%s386 + $0x1ce0] sm:$0xff]
        %v1460 = vld [vmem:[%s386 + $0x1ce8] sm:$0xff]
        %v1461 = vld [vmem:[%s386 + $0x1cf0] sm:$0xff]
        %v1462 = vld [vmem:[%s386 + $0x1cf8] sm:$0xff]
        %v1463 = vld [vmem:[%s386 + $0x1d00] sm:$0xff]
        %v1464 = vld [vmem:[%s386 + $0x1d08] sm:$0xff]
        %v1465 = vld [vmem:[%s386 + $0x1d10] sm:$0xff]
        %v1466 = vld [vmem:[%s386 + $0x1d18] sm:$0xff]
        %v1467 = vld [vmem:[%s386 + $0x1d20] sm:$0xff]
        %v1468 = vld [vmem:[%s386 + $0x1d28] sm:$0xff]
        %v1469 = vld [vmem:[%s386 + $0x1d30] sm:$0xff]
        %v1470 = vld [vmem:[%s386 + $0x1d38] sm:$0xff]
        %v1471 = vld [vmem:[%s386 + $0x1d40] sm:$0xff]
        %v1472 = vld [vmem:[%s386 + $0x1d48] sm:$0xff]
        %v1473 = vld [vmem:[%s386 + $0x1d50] sm:$0xff]
        %v1474 = vld [vmem:[%s386 + $0x1d58] sm:$0xff]
        %v1475 = vld [vmem:[%s386 + $0x1d60] sm:$0xff]
        %v1476 = vld [vmem:[%s386 + $0x1d68] sm:$0xff]
        %v1477 = vld [vmem:[%s386 + $0x1d70] sm:$0xff]
        %v1478 = vld [vmem:[%s386 + $0x1d78] sm:$0xff]
        %v1479 = vld [vmem:[%s386 + $0x1d80] sm:$0xff]
        %v1480 = vld [vmem:[%s386 + $0x1d88] sm:$0xff]
        %v1481 = vld [vmem:[%s386 + $0x1d90] sm:$0xff]
        %v1482 = vld [vmem:[%s386 + $0x1d98] sm:$0xff]
        %v1483 = vld [vmem:[%s386 + $0x1da0] sm:$0xff]
        %v1484 = vld [vmem:[%s386 + $0x1da8] sm:$0xff]
        %v1485 = vld [vmem:[%s386 + $0x1db0] sm:$0xff]
        %v1486 = vld [vmem:[%s386 + $0x1db8] sm:$0xff]
        %v1487 = vld [vmem:[%s386 + $0x1dc0] sm:$0xff]
        %v1488 = vld [vmem:[%s386 + $0x1dc8] sm:$0xff]
        %v1489 = vld [vmem:[%s386 + $0x1dd0] sm:$0xff]
        %v1490 = vld [vmem:[%s386 + $0x1dd8] sm:$0xff]
        %v1491 = vld [vmem:[%s386 + $0x1de0] sm:$0xff]
        %v1492 = vld [vmem:[%s386 + $0x1de8] sm:$0xff]
        %v1493 = vld [vmem:[%s386 + $0x1df0] sm:$0xff]
        %v1494 = vld [vmem:[%s386 + $0x1df8] sm:$0xff]
        %v1495 = vld [vmem:[%s386 + $0x1e00] sm:$0xff]
        %v1496 = vld [vmem:[%s386 + $0x1e08] sm:$0xff]
        %v1497 = vld [vmem:[%s386 + $0x1e10] sm:$0xff]
        %v1498 = vld [vmem:[%s386 + $0x1e18] sm:$0xff]
        %v1499 = vld [vmem:[%s386 + $0x1e20] sm:$0xff]
        %v1500 = vld [vmem:[%s386 + $0x1e28] sm:$0xff]
        %v1501 = vld [vmem:[%s386 + $0x1e30] sm:$0xff]
        %v1502 = vld [vmem:[%s386 + $0x1e38] sm:$0xff]
        %v1503 = vld [vmem:[%s386 + $0x1e40] sm:$0xff]
        %v1504 = vld [vmem:[%s386 + $0x1e48] sm:$0xff]
        %v1505 = vld [vmem:[%s386 + $0x1e50] sm:$0xff]
        %v1506 = vld [vmem:[%s386 + $0x1e58] sm:$0xff]
        %v1507 = vld [vmem:[%s386 + $0x1e60] sm:$0xff]
        %v1508 = vld [vmem:[%s386 + $0x1e68] sm:$0xff]
        %v1509 = vld [vmem:[%s386 + $0x1e70] sm:$0xff]
        %v1510 = vld [vmem:[%s386 + $0x1e78] sm:$0xff]
        %v1511 = vld [vmem:[%s386 + $0x1e80] sm:$0xff]
        %v1512 = vld [vmem:[%s386 + $0x1e88] sm:$0xff]
        %v1513 = vld [vmem:[%s386 + $0x1e90] sm:$0xff]
        %v1514 = vld [vmem:[%s386 + $0x1e98] sm:$0xff]
        %v1515 = vld [vmem:[%s386 + $0x1ea0] sm:$0xff]
        %v1516 = vld [vmem:[%s386 + $0x1ea8] sm:$0xff]
        %v1517 = vld [vmem:[%s386 + $0x1eb0] sm:$0xff]
        %v1518 = vld [vmem:[%s386 + $0x1eb8] sm:$0xff]
        %v1519 = vld [vmem:[%s386 + $0x1ec0] sm:$0xff]
        %v1520 = vld [vmem:[%s386 + $0x1ec8] sm:$0xff]
        %v1521 = vld [vmem:[%s386 + $0x1ed0] sm:$0xff]
        %v1522 = vld [vmem:[%s386 + $0x1ed8] sm:$0xff]
        %v1523 = vld [vmem:[%s386 + $0x1ee0] sm:$0xff]
        %v1524 = vld [vmem:[%s386 + $0x1ee8] sm:$0xff]
        %v1525 = vld [vmem:[%s386 + $0x1ef0] sm:$0xff]
        %v1526 = vld [vmem:[%s386 + $0x1ef8] sm:$0xff]
        %v1527 = vld [vmem:[%s386 + $0x1f00] sm:$0xff]
        %v1528 = vld [vmem:[%s386 + $0x1f08] sm:$0xff]
        %v1529 = vld [vmem:[%s386 + $0x1f10] sm:$0xff]
        %v1530 = vld [vmem:[%s386 + $0x1f18] sm:$0xff]
        %v1531 = vld [vmem:[%s386 + $0x1f20] sm:$0xff]
        %v1532 = vld [vmem:[%s386 + $0x1f28] sm:$0xff]
        %v1533 = vld [vmem:[%s386 + $0x1f30] sm:$0xff]
        %v1534 = vld [vmem:[%s386 + $0x1f38] sm:$0xff]
        %v1535 = vld [vmem:[%s386 + $0x1f40] sm:$0xff]
        %v1536 = vld [vmem:[%s386 + $0x1f48] sm:$0xff]
        %v1537 = vld [vmem:[%s386 + $0x1f50] sm:$0xff]
        %v1538 = vld [vmem:[%s386 + $0x1f58] sm:$0xff]
        %v1539 = vld [vmem:[%s386 + $0x1f60] sm:$0xff]
        %v1540 = vld [vmem:[%s386 + $0x1f68] sm:$0xff]
        %v1541 = vld [vmem:[%s386 + $0x1f70] sm:$0xff]
        %v1542 = vld [vmem:[%s386 + $0x1f78] sm:$0xff]
        %v1543 = vld [vmem:[%s386 + $0x1f80] sm:$0xff]
        %v1544 = vld [vmem:[%s386 + $0x1f88] sm:$0xff]
        %v1545 = vld [vmem:[%s386 + $0x1f90] sm:$0xff]
        %v1546 = vld [vmem:[%s386 + $0x1f98] sm:$0xff]
        %v1547 = vld [vmem:[%s386 + $0x1fa0] sm:$0xff]
        %v1548 = vld [vmem:[%s386 + $0x1fa8] sm:$0xff]
        %v1549 = vld [vmem:[%s386 + $0x1fb0] sm:$0xff]
        %v1550 = vld [vmem:[%s386 + $0x1fb8] sm:$0xff]
        %v1551 = vld [vmem:[%s386 + $0x1fc0] sm:$0xff]
        %v1552 = vld [vmem:[%s386 + $0x1fc8] sm:$0xff]
        %v1553 = vld [vmem:[%s386 + $0x1fd0] sm:$0xff]
        %v1554 = vld [vmem:[%s386 + $0x1fd8] sm:$0xff]
        %v1555 = vld [vmem:[%s386 + $0x1fe0] sm:$0xff]
        %v1556 = vld [vmem:[%s386 + $0x1fe8] sm:$0xff]
        %v1557 = vld [vmem:[%s386 + $0x1ff0] sm:$0xff]
        %v1558 = vld [vmem:[%s386 + $0x1ff8] sm:$0xff]
        %v1561 = vcombine.high %v533, %v533
        %v1563 = vunpack.c.l.s4 1966171168
        %v1564 = vunpack.c.0.s8 %v1563
        %v1565 = vlaneseq
        %v1566 = vshrl.u32 %v1565, 7
        %v1567 = vsub.s32 %v1564, %v1566
        %v1568 = vrot.slane %v533, %v1567
        %v1570 = vunpack.c.l.s4 1966171168
        %v1571 = vunpack.c.0.s8 %v1570
        %v1572 = vlaneseq
        %v1573 = vshrl.u32 %v1572, 7
        %v1574 = vsub.s32 %v1571, %v1573
        %v1575 = vrot.slane %v1561, %v1574
        %v1576 = vcombine.high %v1568, %v1568
        %v1577 = vcombine.high %v1575, %v1575
        %v1579 = vunpack.c.l.s4 1966171168
        %v1580 = vunpack.c.0.s8 %v1579
        %v1581 = vlaneseq
        %v1582 = vshrl.u32 %v1581, 7
        %v1583 = vsub.s32 %v1580, %v1582
        %v1584 = vrot.slane %v1568, %v1583
        %v1586 = vunpack.c.l.s4 1966171168
        %v1587 = vunpack.c.0.s8 %v1586
        %v1588 = vlaneseq
        %v1589 = vshrl.u32 %v1588, 7
        %v1590 = vsub.s32 %v1587, %v1589
        %v1591 = vrot.slane %v1575, %v1590
        %v1593 = vunpack.c.l.s4 1966171168
        %v1594 = vunpack.c.0.s8 %v1593
        %v1595 = vlaneseq
        %v1596 = vshrl.u32 %v1595, 7
        %v1597 = vsub.s32 %v1594, %v1596
        %v1598 = vrot.slane %v1576, %v1597
        %v1600 = vunpack.c.l.s4 1966171168
        %v1601 = vunpack.c.0.s8 %v1600
        %v1602 = vlaneseq
        %v1603 = vshrl.u32 %v1602, 7
        %v1604 = vsub.s32 %v1601, %v1603
        %v1605 = vrot.slane %v1577, %v1604
        %v1606 = vcombine.high %v1584, %v1584
        %v1607 = vcombine.high %v1591, %v1591
        %v1608 = vcombine.high %v1598, %v1598
        %v1609 = vcombine.high %v1605, %v1605
        %v1610 = vcombine.high %v534, %v534
        %v1612 = vunpack.c.l.s4 1966171168
        %v1613 = vunpack.c.0.s8 %v1612
        %v1614 = vlaneseq
        %v1615 = vshrl.u32 %v1614, 7
        %v1616 = vsub.s32 %v1613, %v1615
        %v1617 = vrot.slane %v534, %v1616
        %v1619 = vunpack.c.l.s4 1966171168
        %v1620 = vunpack.c.0.s8 %v1619
        %v1621 = vlaneseq
        %v1622 = vshrl.u32 %v1621, 7
        %v1623 = vsub.s32 %v1620, %v1622
        %v1624 = vrot.slane %v1610, %v1623
        %v1625 = vcombine.high %v1617, %v1617
        %v1626 = vcombine.high %v1624, %v1624
        %v1628 = vunpack.c.l.s4 1966171168
        %v1629 = vunpack.c.0.s8 %v1628
        %v1630 = vlaneseq
        %v1631 = vshrl.u32 %v1630, 7
        %v1632 = vsub.s32 %v1629, %v1631
        %v1633 = vrot.slane %v1617, %v1632
        %v1635 = vunpack.c.l.s4 1966171168
        %v1636 = vunpack.c.0.s8 %v1635
        %v1637 = vlaneseq
        %v1638 = vshrl.u32 %v1637, 7
        %v1639 = vsub.s32 %v1636, %v1638
        %v1640 = vrot.slane %v1624, %v1639
        %v1642 = vunpack.c.l.s4 1966171168
        %v1643 = vunpack.c.0.s8 %v1642
        %v1644 = vlaneseq
        %v1645 = vshrl.u32 %v1644, 7
        %v1646 = vsub.s32 %v1643, %v1645
        %v1647 = vrot.slane %v1625, %v1646
        %v1649 = vunpack.c.l.s4 1966171168
        %v1650 = vunpack.c.0.s8 %v1649
        %v1651 = vlaneseq
        %v1652 = vshrl.u32 %v1651, 7
        %v1653 = vsub.s32 %v1650, %v1652
        %v1654 = vrot.slane %v1626, %v1653
        %v1655 = vcombine.high %v1633, %v1633
        %v1656 = vcombine.high %v1640, %v1640
        %v1657 = vcombine.high %v1647, %v1647
        %v1658 = vcombine.high %v1654, %v1654
        %v2699 = vunpack.c.l.b16 %v535
        %v2700 = vunpack.c.h.b16 %v535
        %v2701 = vunpack.c.l.b16 %v536
        %v2702 = vunpack.c.h.b16 %v536
        %v2703 = vunpack.c.l.b16 %v537
        %v2704 = vunpack.c.h.b16 %v537
        %v2705 = vunpack.c.l.b16 %v538
        %v2706 = vunpack.c.h.b16 %v538
        %v2707 = vunpack.c.l.b16 %v539
        %v2708 = vunpack.c.h.b16 %v539
        %v2709 = vunpack.c.l.b16 %v540
        %v2710 = vunpack.c.h.b16 %v540
        %v2711 = vunpack.c.l.b16 %v541
        %v2712 = vunpack.c.h.b16 %v541
        %v2713 = vunpack.c.l.b16 %v542
        %v2714 = vunpack.c.h.b16 %v542
        %v2715 = vunpack.c.l.b16 %v543
        %v2716 = vunpack.c.h.b16 %v543
        %v2717 = vunpack.c.l.b16 %v544
        %v2718 = vunpack.c.h.b16 %v544
        %v2719 = vunpack.c.l.b16 %v545
        %v2720 = vunpack.c.h.b16 %v545
        %v2721 = vunpack.c.l.b16 %v546
        %v2722 = vunpack.c.h.b16 %v546
        %v2723 = vunpack.c.l.b16 %v547
        %v2724 = vunpack.c.h.b16 %v547
        %v2725 = vunpack.c.l.b16 %v548
        %v2726 = vunpack.c.h.b16 %v548
        %v2727 = vunpack.c.l.b16 %v549
        %v2728 = vunpack.c.h.b16 %v549
        %v2729 = vunpack.c.l.b16 %v550
        %v2730 = vunpack.c.h.b16 %v550
        %v2731 = vunpack.c.l.b16 %v551
        %v2732 = vunpack.c.h.b16 %v551
        %v2733 = vunpack.c.l.b16 %v552
        %v2734 = vunpack.c.h.b16 %v552
        %v2735 = vunpack.c.l.b16 %v553
        %v2736 = vunpack.c.h.b16 %v553
        %v2737 = vunpack.c.l.b16 %v554
        %v2738 = vunpack.c.h.b16 %v554
        %v2739 = vunpack.c.l.b16 %v555
        %v2740 = vunpack.c.h.b16 %v555
        %v2741 = vunpack.c.l.b16 %v556
        %v2742 = vunpack.c.h.b16 %v556
        %v2743 = vunpack.c.l.b16 %v557
        %v2744 = vunpack.c.h.b16 %v557
        %v2745 = vunpack.c.l.b16 %v558
        %v2746 = vunpack.c.h.b16 %v558
        %v2747 = vunpack.c.l.b16 %v559
        %v2748 = vunpack.c.h.b16 %v559
        %v2749 = vunpack.c.l.b16 %v560
        %v2750 = vunpack.c.h.b16 %v560
        %v2751 = vunpack.c.l.b16 %v561
        %v2752 = vunpack.c.h.b16 %v561
        %v2753 = vunpack.c.l.b16 %v562
        %v2754 = vunpack.c.h.b16 %v562
        %v2755 = vunpack.c.l.b16 %v563
        %v2756 = vunpack.c.h.b16 %v563
        %v2757 = vunpack.c.l.b16 %v564
        %v2758 = vunpack.c.h.b16 %v564
        %v2759 = vunpack.c.l.b16 %v565
        %v2760 = vunpack.c.h.b16 %v565
        %v2761 = vunpack.c.l.b16 %v566
        %v2762 = vunpack.c.h.b16 %v566
        %v2763 = vunpack.c.l.b16 %v567
        %v2764 = vunpack.c.h.b16 %v567
        %v2765 = vunpack.c.l.b16 %v568
        %v2766 = vunpack.c.h.b16 %v568
        %v2767 = vunpack.c.l.b16 %v569
        %v2768 = vunpack.c.h.b16 %v569
        %v2769 = vunpack.c.l.b16 %v570
        %v2770 = vunpack.c.h.b16 %v570
        %v2771 = vunpack.c.l.b16 %v571
        %v2772 = vunpack.c.h.b16 %v571
        %v2773 = vunpack.c.l.b16 %v572
        %v2774 = vunpack.c.h.b16 %v572
        %v2775 = vunpack.c.l.b16 %v573
        %v2776 = vunpack.c.h.b16 %v573
        %v2777 = vunpack.c.l.b16 %v574
        %v2778 = vunpack.c.h.b16 %v574
        %v2779 = vunpack.c.l.b16 %v575
        %v2780 = vunpack.c.h.b16 %v575
        %v2781 = vunpack.c.l.b16 %v576
        %v2782 = vunpack.c.h.b16 %v576
        %v2783 = vunpack.c.l.b16 %v577
        %v2784 = vunpack.c.h.b16 %v577
        %v2785 = vunpack.c.l.b16 %v578
        %v2786 = vunpack.c.h.b16 %v578
        %v2787 = vunpack.c.l.b16 %v579
        %v2788 = vunpack.c.h.b16 %v579
        %v2789 = vunpack.c.l.b16 %v580
        %v2790 = vunpack.c.h.b16 %v580
        %v2791 = vunpack.c.l.b16 %v581
        %v2792 = vunpack.c.h.b16 %v581
        %v2793 = vunpack.c.l.b16 %v582
        %v2794 = vunpack.c.h.b16 %v582
        %v2795 = vunpack.c.l.b16 %v583
        %v2796 = vunpack.c.h.b16 %v583
        %v2797 = vunpack.c.l.b16 %v584
        %v2798 = vunpack.c.h.b16 %v584
        %v2799 = vunpack.c.l.b16 %v585
        %v2800 = vunpack.c.h.b16 %v585
        %v2801 = vunpack.c.l.b16 %v586
        %v2802 = vunpack.c.h.b16 %v586
        %v2803 = vunpack.c.l.b16 %v587
        %v2804 = vunpack.c.h.b16 %v587
        %v2805 = vunpack.c.l.b16 %v588
        %v2806 = vunpack.c.h.b16 %v588
        %v2807 = vunpack.c.l.b16 %v589
        %v2808 = vunpack.c.h.b16 %v589
        %v2809 = vunpack.c.l.b16 %v590
        %v2810 = vunpack.c.h.b16 %v590
        %v2811 = vunpack.c.l.b16 %v591
        %v2812 = vunpack.c.h.b16 %v591
        %v2813 = vunpack.c.l.b16 %v592
        %v2814 = vunpack.c.h.b16 %v592
        %v2815 = vunpack.c.l.b16 %v593
        %v2816 = vunpack.c.h.b16 %v593
        %v2817 = vunpack.c.l.b16 %v594
        %v2818 = vunpack.c.h.b16 %v594
        %v2819 = vunpack.c.l.b16 %v595
        %v2820 = vunpack.c.h.b16 %v595
        %v2821 = vunpack.c.l.b16 %v596
        %v2822 = vunpack.c.h.b16 %v596
        %v2823 = vunpack.c.l.b16 %v597
        %v2824 = vunpack.c.h.b16 %v597
        %v2825 = vunpack.c.l.b16 %v598
        %v2826 = vunpack.c.h.b16 %v598
        %v2827 = vunpack.c.l.b16 %v599
        %v2828 = vunpack.c.h.b16 %v599
        %v2829 = vunpack.c.l.b16 %v600
        %v2830 = vunpack.c.h.b16 %v600
        %v2831 = vunpack.c.l.b16 %v601
        %v2832 = vunpack.c.h.b16 %v601
        %v2833 = vunpack.c.l.b16 %v602
        %v2834 = vunpack.c.h.b16 %v602
        %v2835 = vunpack.c.l.b16 %v603
        %v2836 = vunpack.c.h.b16 %v603
        %v2837 = vunpack.c.l.b16 %v604
        %v2838 = vunpack.c.h.b16 %v604
        %v2839 = vunpack.c.l.b16 %v605
        %v2840 = vunpack.c.h.b16 %v605
        %v2841 = vunpack.c.l.b16 %v606
        %v2842 = vunpack.c.h.b16 %v606
        %v2843 = vunpack.c.l.b16 %v607
        %v2844 = vunpack.c.h.b16 %v607
        %v2845 = vunpack.c.l.b16 %v608
        %v2846 = vunpack.c.h.b16 %v608
        %v2847 = vunpack.c.l.b16 %v609
        %v2848 = vunpack.c.h.b16 %v609
        %v2849 = vunpack.c.l.b16 %v610
        %v2850 = vunpack.c.h.b16 %v610
        %v2851 = vunpack.c.l.b16 %v611
        %v2852 = vunpack.c.h.b16 %v611
        %v2853 = vunpack.c.l.b16 %v612
        %v2854 = vunpack.c.h.b16 %v612
        %v2855 = vunpack.c.l.b16 %v613
        %v2856 = vunpack.c.h.b16 %v613
        %v2857 = vunpack.c.l.b16 %v614
        %v2858 = vunpack.c.h.b16 %v614
        %v2859 = vunpack.c.l.b16 %v615
        %v2860 = vunpack.c.h.b16 %v615
        %v2861 = vunpack.c.l.b16 %v616
        %v2862 = vunpack.c.h.b16 %v616
        %v2863 = vunpack.c.l.b16 %v617
        %v2864 = vunpack.c.h.b16 %v617
        %v2865 = vunpack.c.l.b16 %v618
        %v2866 = vunpack.c.h.b16 %v618
        %v2867 = vunpack.c.l.b16 %v619
        %v2868 = vunpack.c.h.b16 %v619
        %v2869 = vunpack.c.l.b16 %v620
        %v2870 = vunpack.c.h.b16 %v620
        %v2871 = vunpack.c.l.b16 %v621
        %v2872 = vunpack.c.h.b16 %v621
        %v2873 = vunpack.c.l.b16 %v622
        %v2874 = vunpack.c.h.b16 %v622
        %v2875 = vunpack.c.l.b16 %v623
        %v2876 = vunpack.c.h.b16 %v623
        %v2877 = vunpack.c.l.b16 %v624
        %v2878 = vunpack.c.h.b16 %v624
        %v2879 = vunpack.c.l.b16 %v625
        %v2880 = vunpack.c.h.b16 %v625
        %v2881 = vunpack.c.l.b16 %v626
        %v2882 = vunpack.c.h.b16 %v626
        %v2883 = vunpack.c.l.b16 %v627
        %v2884 = vunpack.c.h.b16 %v627
        %v2885 = vunpack.c.l.b16 %v628
        %v2886 = vunpack.c.h.b16 %v628
        %v2887 = vunpack.c.l.b16 %v629
        %v2888 = vunpack.c.h.b16 %v629
        %v2889 = vunpack.c.l.b16 %v630
        %v2890 = vunpack.c.h.b16 %v630
        %v2891 = vunpack.c.l.b16 %v631
        %v2892 = vunpack.c.h.b16 %v631
        %v2893 = vunpack.c.l.b16 %v632
        %v2894 = vunpack.c.h.b16 %v632
        %v2895 = vunpack.c.l.b16 %v633
        %v2896 = vunpack.c.h.b16 %v633
        %v2897 = vunpack.c.l.b16 %v634
        %v2898 = vunpack.c.h.b16 %v634
        %v2899 = vunpack.c.l.b16 %v635
        %v2900 = vunpack.c.h.b16 %v635
        %v2901 = vunpack.c.l.b16 %v636
        %v2902 = vunpack.c.h.b16 %v636
        %v2903 = vunpack.c.l.b16 %v637
        %v2904 = vunpack.c.h.b16 %v637
        %v2905 = vunpack.c.l.b16 %v638
        %v2906 = vunpack.c.h.b16 %v638
        %v2907 = vunpack.c.l.b16 %v639
        %v2908 = vunpack.c.h.b16 %v639
        %v2909 = vunpack.c.l.b16 %v640
        %v2910 = vunpack.c.h.b16 %v640
        %v2911 = vunpack.c.l.b16 %v641
        %v2912 = vunpack.c.h.b16 %v641
        %v2913 = vunpack.c.l.b16 %v642
        %v2914 = vunpack.c.h.b16 %v642
        %v2915 = vunpack.c.l.b16 %v643
        %v2916 = vunpack.c.h.b16 %v643
        %v2917 = vunpack.c.l.b16 %v644
        %v2918 = vunpack.c.h.b16 %v644
        %v2919 = vunpack.c.l.b16 %v645
        %v2920 = vunpack.c.h.b16 %v645
        %v2921 = vunpack.c.l.b16 %v646
        %v2922 = vunpack.c.h.b16 %v646
        %v2923 = vunpack.c.l.b16 %v647
        %v2924 = vunpack.c.h.b16 %v647
        %v2925 = vunpack.c.l.b16 %v648
        %v2926 = vunpack.c.h.b16 %v648
        %v2927 = vunpack.c.l.b16 %v649
        %v2928 = vunpack.c.h.b16 %v649
        %v2929 = vunpack.c.l.b16 %v650
        %v2930 = vunpack.c.h.b16 %v650
        %v2931 = vunpack.c.l.b16 %v651
        %v2932 = vunpack.c.h.b16 %v651
        %v2933 = vunpack.c.l.b16 %v652
        %v2934 = vunpack.c.h.b16 %v652
        %v2935 = vunpack.c.l.b16 %v653
        %v2936 = vunpack.c.h.b16 %v653
        %v2937 = vunpack.c.l.b16 %v654
        %v2938 = vunpack.c.h.b16 %v654
        %v2939 = vunpack.c.l.b16 %v655
        %v2940 = vunpack.c.h.b16 %v655
        %v2941 = vunpack.c.l.b16 %v656
        %v2942 = vunpack.c.h.b16 %v656
        %v2943 = vunpack.c.l.b16 %v657
        %v2944 = vunpack.c.h.b16 %v657
        %v2945 = vunpack.c.l.b16 %v658
        %v2946 = vunpack.c.h.b16 %v658
        %v2947 = vunpack.c.l.b16 %v659
        %v2948 = vunpack.c.h.b16 %v659
        %v2949 = vunpack.c.l.b16 %v660
        %v2950 = vunpack.c.h.b16 %v660
        %v2951 = vunpack.c.l.b16 %v661
        %v2952 = vunpack.c.h.b16 %v661
        %v2953 = vunpack.c.l.b16 %v662
        %v2954 = vunpack.c.h.b16 %v662
        %v2955 = vunpack.c.l.b16 %v663
        %v2956 = vunpack.c.h.b16 %v663
        %v2957 = vunpack.c.l.b16 %v664
        %v2958 = vunpack.c.h.b16 %v664
        %v2959 = vunpack.c.l.b16 %v665
        %v2960 = vunpack.c.h.b16 %v665
        %v2961 = vunpack.c.l.b16 %v666
        %v2962 = vunpack.c.h.b16 %v666
        %v2963 = vunpack.c.l.b16 %v667
        %v2964 = vunpack.c.h.b16 %v667
        %v2965 = vunpack.c.l.b16 %v668
        %v2966 = vunpack.c.h.b16 %v668
        %v2967 = vunpack.c.l.b16 %v669
        %v2968 = vunpack.c.h.b16 %v669
        %v2969 = vunpack.c.l.b16 %v670
        %v2970 = vunpack.c.h.b16 %v670
        %v2971 = vunpack.c.l.b16 %v671
        %v2972 = vunpack.c.h.b16 %v671
        %v2973 = vunpack.c.l.b16 %v672
        %v2974 = vunpack.c.h.b16 %v672
        %v2975 = vunpack.c.l.b16 %v673
        %v2976 = vunpack.c.h.b16 %v673
        %v2977 = vunpack.c.l.b16 %v674
        %v2978 = vunpack.c.h.b16 %v674
        %v2979 = vunpack.c.l.b16 %v675
        %v2980 = vunpack.c.h.b16 %v675
        %v2981 = vunpack.c.l.b16 %v676
        %v2982 = vunpack.c.h.b16 %v676
        %v2983 = vunpack.c.l.b16 %v677
        %v2984 = vunpack.c.h.b16 %v677
        %v2985 = vunpack.c.l.b16 %v678
        %v2986 = vunpack.c.h.b16 %v678
        %v2987 = vunpack.c.l.b16 %v679
        %v2988 = vunpack.c.h.b16 %v679
        %v2989 = vunpack.c.l.b16 %v680
        %v2990 = vunpack.c.h.b16 %v680
        %v2991 = vunpack.c.l.b16 %v681
        %v2992 = vunpack.c.h.b16 %v681
        %v2993 = vunpack.c.l.b16 %v682
        %v2994 = vunpack.c.h.b16 %v682
        %v2995 = vunpack.c.l.b16 %v683
        %v2996 = vunpack.c.h.b16 %v683
        %v2997 = vunpack.c.l.b16 %v684
        %v2998 = vunpack.c.h.b16 %v684
        %v2999 = vunpack.c.l.b16 %v685
        %v3000 = vunpack.c.h.b16 %v685
        %v3001 = vunpack.c.l.b16 %v686
        %v3002 = vunpack.c.h.b16 %v686
        %v3003 = vunpack.c.l.b16 %v687
        %v3004 = vunpack.c.h.b16 %v687
        %v3005 = vunpack.c.l.b16 %v688
        %v3006 = vunpack.c.h.b16 %v688
        %v3007 = vunpack.c.l.b16 %v689
        %v3008 = vunpack.c.h.b16 %v689
        %v3009 = vunpack.c.l.b16 %v690
        %v3010 = vunpack.c.h.b16 %v690
        %v3011 = vunpack.c.l.b16 %v691
        %v3012 = vunpack.c.h.b16 %v691
        %v3013 = vunpack.c.l.b16 %v692
        %v3014 = vunpack.c.h.b16 %v692
        %v3015 = vunpack.c.l.b16 %v693
        %v3016 = vunpack.c.h.b16 %v693
        %v3017 = vunpack.c.l.b16 %v694
        %v3018 = vunpack.c.h.b16 %v694
        %v3019 = vunpack.c.l.b16 %v695
        %v3020 = vunpack.c.h.b16 %v695
        %v3021 = vunpack.c.l.b16 %v696
        %v3022 = vunpack.c.h.b16 %v696
        %v3023 = vunpack.c.l.b16 %v697
        %v3024 = vunpack.c.h.b16 %v697
        %v3025 = vunpack.c.l.b16 %v698
        %v3026 = vunpack.c.h.b16 %v698
        %v3027 = vunpack.c.l.b16 %v699
        %v3028 = vunpack.c.h.b16 %v699
        %v3029 = vunpack.c.l.b16 %v700
        %v3030 = vunpack.c.h.b16 %v700
        %v3031 = vunpack.c.l.b16 %v701
        %v3032 = vunpack.c.h.b16 %v701
        %v3033 = vunpack.c.l.b16 %v702
        %v3034 = vunpack.c.h.b16 %v702
        %v3035 = vunpack.c.l.b16 %v703
        %v3036 = vunpack.c.h.b16 %v703
        %v3037 = vunpack.c.l.b16 %v704
        %v3038 = vunpack.c.h.b16 %v704
        %v3039 = vunpack.c.l.b16 %v705
        %v3040 = vunpack.c.h.b16 %v705
        %v3041 = vunpack.c.l.b16 %v706
        %v3042 = vunpack.c.h.b16 %v706
        %v3043 = vunpack.c.l.b16 %v707
        %v3044 = vunpack.c.h.b16 %v707
        %v3045 = vunpack.c.l.b16 %v708
        %v3046 = vunpack.c.h.b16 %v708
        %v3047 = vunpack.c.l.b16 %v709
        %v3048 = vunpack.c.h.b16 %v709
        %v3049 = vunpack.c.l.b16 %v710
        %v3050 = vunpack.c.h.b16 %v710
        %v3051 = vunpack.c.l.b16 %v711
        %v3052 = vunpack.c.h.b16 %v711
        %v3053 = vunpack.c.l.b16 %v712
        %v3054 = vunpack.c.h.b16 %v712
        %v3055 = vunpack.c.l.b16 %v713
        %v3056 = vunpack.c.h.b16 %v713
        %v3057 = vunpack.c.l.b16 %v714
        %v3058 = vunpack.c.h.b16 %v714
        %v3059 = vunpack.c.l.b16 %v715
        %v3060 = vunpack.c.h.b16 %v715
        %v3061 = vunpack.c.l.b16 %v716
        %v3062 = vunpack.c.h.b16 %v716
        %v3063 = vunpack.c.l.b16 %v717
        %v3064 = vunpack.c.h.b16 %v717
        %v3065 = vunpack.c.l.b16 %v718
        %v3066 = vunpack.c.h.b16 %v718
        %v3067 = vunpack.c.l.b16 %v719
        %v3068 = vunpack.c.h.b16 %v719
        %v3069 = vunpack.c.l.b16 %v720
        %v3070 = vunpack.c.h.b16 %v720
        %v3071 = vunpack.c.l.b16 %v721
        %v3072 = vunpack.c.h.b16 %v721
        %v3073 = vunpack.c.l.b16 %v722
        %v3074 = vunpack.c.h.b16 %v722
        %v3075 = vunpack.c.l.b16 %v723
        %v3076 = vunpack.c.h.b16 %v723
        %v3077 = vunpack.c.l.b16 %v724
        %v3078 = vunpack.c.h.b16 %v724
        %v3079 = vunpack.c.l.b16 %v725
        %v3080 = vunpack.c.h.b16 %v725
        %v3081 = vunpack.c.l.b16 %v726
        %v3082 = vunpack.c.h.b16 %v726
        %v3083 = vunpack.c.l.b16 %v727
        %v3084 = vunpack.c.h.b16 %v727
        %v3085 = vunpack.c.l.b16 %v728
        %v3086 = vunpack.c.h.b16 %v728
        %v3087 = vunpack.c.l.b16 %v729
        %v3088 = vunpack.c.h.b16 %v729
        %v3089 = vunpack.c.l.b16 %v730
        %v3090 = vunpack.c.h.b16 %v730
        %v3091 = vunpack.c.l.b16 %v731
        %v3092 = vunpack.c.h.b16 %v731
        %v3093 = vunpack.c.l.b16 %v732
        %v3094 = vunpack.c.h.b16 %v732
        %v3095 = vunpack.c.l.b16 %v733
        %v3096 = vunpack.c.h.b16 %v733
        %v3097 = vunpack.c.l.b16 %v734
        %v3098 = vunpack.c.h.b16 %v734
        %v3099 = vunpack.c.l.b16 %v735
        %v3100 = vunpack.c.h.b16 %v735
        %v3101 = vunpack.c.l.b16 %v736
        %v3102 = vunpack.c.h.b16 %v736
        %v3103 = vunpack.c.l.b16 %v737
        %v3104 = vunpack.c.h.b16 %v737
        %v3105 = vunpack.c.l.b16 %v738
        %v3106 = vunpack.c.h.b16 %v738
        %v3107 = vunpack.c.l.b16 %v739
        %v3108 = vunpack.c.h.b16 %v739
        %v3109 = vunpack.c.l.b16 %v740
        %v3110 = vunpack.c.h.b16 %v740
        %v3111 = vunpack.c.l.b16 %v741
        %v3112 = vunpack.c.h.b16 %v741
        %v3113 = vunpack.c.l.b16 %v742
        %v3114 = vunpack.c.h.b16 %v742
        %v3115 = vunpack.c.l.b16 %v743
        %v3116 = vunpack.c.h.b16 %v743
        %v3117 = vunpack.c.l.b16 %v744
        %v3118 = vunpack.c.h.b16 %v744
        %v3119 = vunpack.c.l.b16 %v745
        %v3120 = vunpack.c.h.b16 %v745
        %v3121 = vunpack.c.l.b16 %v746
        %v3122 = vunpack.c.h.b16 %v746
        %v3123 = vunpack.c.l.b16 %v747
        %v3124 = vunpack.c.h.b16 %v747
        %v3125 = vunpack.c.l.b16 %v748
        %v3126 = vunpack.c.h.b16 %v748
        %v3127 = vunpack.c.l.b16 %v749
        %v3128 = vunpack.c.h.b16 %v749
        %v3129 = vunpack.c.l.b16 %v750
        %v3130 = vunpack.c.h.b16 %v750
        %v3131 = vunpack.c.l.b16 %v751
        %v3132 = vunpack.c.h.b16 %v751
        %v3133 = vunpack.c.l.b16 %v752
        %v3134 = vunpack.c.h.b16 %v752
        %v3135 = vunpack.c.l.b16 %v753
        %v3136 = vunpack.c.h.b16 %v753
        %v3137 = vunpack.c.l.b16 %v754
        %v3138 = vunpack.c.h.b16 %v754
        %v3139 = vunpack.c.l.b16 %v755
        %v3140 = vunpack.c.h.b16 %v755
        %v3141 = vunpack.c.l.b16 %v756
        %v3142 = vunpack.c.h.b16 %v756
        %v3143 = vunpack.c.l.b16 %v757
        %v3144 = vunpack.c.h.b16 %v757
        %v3145 = vunpack.c.l.b16 %v758
        %v3146 = vunpack.c.h.b16 %v758
        %v3147 = vunpack.c.l.b16 %v759
        %v3148 = vunpack.c.h.b16 %v759
        %v3149 = vunpack.c.l.b16 %v760
        %v3150 = vunpack.c.h.b16 %v760
        %v3151 = vunpack.c.l.b16 %v761
        %v3152 = vunpack.c.h.b16 %v761
        %v3153 = vunpack.c.l.b16 %v762
        %v3154 = vunpack.c.h.b16 %v762
        %v3155 = vunpack.c.l.b16 %v763
        %v3156 = vunpack.c.h.b16 %v763
        %v3157 = vunpack.c.l.b16 %v764
        %v3158 = vunpack.c.h.b16 %v764
        %v3159 = vunpack.c.l.b16 %v765
        %v3160 = vunpack.c.h.b16 %v765
        %v3161 = vunpack.c.l.b16 %v766
        %v3162 = vunpack.c.h.b16 %v766
        %v3163 = vunpack.c.l.b16 %v767
        %v3164 = vunpack.c.h.b16 %v767
        %v3165 = vunpack.c.l.b16 %v768
        %v3166 = vunpack.c.h.b16 %v768
        %v3167 = vunpack.c.l.b16 %v769
        %v3168 = vunpack.c.h.b16 %v769
        %v3169 = vunpack.c.l.b16 %v770
        %v3170 = vunpack.c.h.b16 %v770
        %v3171 = vunpack.c.l.b16 %v771
        %v3172 = vunpack.c.h.b16 %v771
        %v3173 = vunpack.c.l.b16 %v772
        %v3174 = vunpack.c.h.b16 %v772
        %v3175 = vunpack.c.l.b16 %v773
        %v3176 = vunpack.c.h.b16 %v773
        %v3177 = vunpack.c.l.b16 %v774
        %v3178 = vunpack.c.h.b16 %v774
        %v3179 = vunpack.c.l.b16 %v775
        %v3180 = vunpack.c.h.b16 %v775
        %v3181 = vunpack.c.l.b16 %v776
        %v3182 = vunpack.c.h.b16 %v776
        %v3183 = vunpack.c.l.b16 %v777
        %v3184 = vunpack.c.h.b16 %v777
        %v3185 = vunpack.c.l.b16 %v778
        %v3186 = vunpack.c.h.b16 %v778
        %v3187 = vunpack.c.l.b16 %v779
        %v3188 = vunpack.c.h.b16 %v779
        %v3189 = vunpack.c.l.b16 %v780
        %v3190 = vunpack.c.h.b16 %v780
        %v3191 = vunpack.c.l.b16 %v781
        %v3192 = vunpack.c.h.b16 %v781
        %v3193 = vunpack.c.l.b16 %v782
        %v3194 = vunpack.c.h.b16 %v782
        %v3195 = vunpack.c.l.b16 %v783
        %v3196 = vunpack.c.h.b16 %v783
        %v3197 = vunpack.c.l.b16 %v784
        %v3198 = vunpack.c.h.b16 %v784
        %v3199 = vunpack.c.l.b16 %v785
        %v3200 = vunpack.c.h.b16 %v785
        %v3201 = vunpack.c.l.b16 %v786
        %v3202 = vunpack.c.h.b16 %v786
        %v3203 = vunpack.c.l.b16 %v787
        %v3204 = vunpack.c.h.b16 %v787
        %v3205 = vunpack.c.l.b16 %v788
        %v3206 = vunpack.c.h.b16 %v788
        %v3207 = vunpack.c.l.b16 %v789
        %v3208 = vunpack.c.h.b16 %v789
        %v3209 = vunpack.c.l.b16 %v790
        %v3210 = vunpack.c.h.b16 %v790
        %v3211 = vunpack.c.l.b16 %v791
        %v3212 = vunpack.c.h.b16 %v791
        %v3213 = vunpack.c.l.b16 %v792
        %v3214 = vunpack.c.h.b16 %v792
        %v3215 = vunpack.c.l.b16 %v793
        %v3216 = vunpack.c.h.b16 %v793
        %v3217 = vunpack.c.l.b16 %v794
        %v3218 = vunpack.c.h.b16 %v794
        %v3219 = vunpack.c.l.b16 %v795
        %v3220 = vunpack.c.h.b16 %v795
        %v3221 = vunpack.c.l.b16 %v796
        %v3222 = vunpack.c.h.b16 %v796
        %v3223 = vunpack.c.l.b16 %v797
        %v3224 = vunpack.c.h.b16 %v797
        %v3225 = vunpack.c.l.b16 %v798
        %v3226 = vunpack.c.h.b16 %v798
        %v3227 = vunpack.c.l.b16 %v799
        %v3228 = vunpack.c.h.b16 %v799
        %v3229 = vunpack.c.l.b16 %v800
        %v3230 = vunpack.c.h.b16 %v800
        %v3231 = vunpack.c.l.b16 %v801
        %v3232 = vunpack.c.h.b16 %v801
        %v3233 = vunpack.c.l.b16 %v802
        %v3234 = vunpack.c.h.b16 %v802
        %v3235 = vunpack.c.l.b16 %v803
        %v3236 = vunpack.c.h.b16 %v803
        %v3237 = vunpack.c.l.b16 %v804
        %v3238 = vunpack.c.h.b16 %v804
        %v3239 = vunpack.c.l.b16 %v805
        %v3240 = vunpack.c.h.b16 %v805
        %v3241 = vunpack.c.l.b16 %v806
        %v3242 = vunpack.c.h.b16 %v806
        %v3243 = vunpack.c.l.b16 %v807
        %v3244 = vunpack.c.h.b16 %v807
        %v3245 = vunpack.c.l.b16 %v808
        %v3246 = vunpack.c.h.b16 %v808
        %v3247 = vunpack.c.l.b16 %v809
        %v3248 = vunpack.c.h.b16 %v809
        %v3249 = vunpack.c.l.b16 %v810
        %v3250 = vunpack.c.h.b16 %v810
        %v3251 = vunpack.c.l.b16 %v811
        %v3252 = vunpack.c.h.b16 %v811
        %v3253 = vunpack.c.l.b16 %v812
        %v3254 = vunpack.c.h.b16 %v812
        %v3255 = vunpack.c.l.b16 %v813
        %v3256 = vunpack.c.h.b16 %v813
        %v3257 = vunpack.c.l.b16 %v814
        %v3258 = vunpack.c.h.b16 %v814
        %v3259 = vunpack.c.l.b16 %v815
        %v3260 = vunpack.c.h.b16 %v815
        %v3261 = vunpack.c.l.b16 %v816
        %v3262 = vunpack.c.h.b16 %v816
        %v3263 = vunpack.c.l.b16 %v817
        %v3264 = vunpack.c.h.b16 %v817
        %v3265 = vunpack.c.l.b16 %v818
        %v3266 = vunpack.c.h.b16 %v818
        %v3267 = vunpack.c.l.b16 %v819
        %v3268 = vunpack.c.h.b16 %v819
        %v3269 = vunpack.c.l.b16 %v820
        %v3270 = vunpack.c.h.b16 %v820
        %v3271 = vunpack.c.l.b16 %v821
        %v3272 = vunpack.c.h.b16 %v821
        %v3273 = vunpack.c.l.b16 %v822
        %v3274 = vunpack.c.h.b16 %v822
        %v3275 = vunpack.c.l.b16 %v823
        %v3276 = vunpack.c.h.b16 %v823
        %v3277 = vunpack.c.l.b16 %v824
        %v3278 = vunpack.c.h.b16 %v824
        %v3279 = vunpack.c.l.b16 %v825
        %v3280 = vunpack.c.h.b16 %v825
        %v3281 = vunpack.c.l.b16 %v826
        %v3282 = vunpack.c.h.b16 %v826
        %v3283 = vunpack.c.l.b16 %v827
        %v3284 = vunpack.c.h.b16 %v827
        %v3285 = vunpack.c.l.b16 %v828
        %v3286 = vunpack.c.h.b16 %v828
        %v3287 = vunpack.c.l.b16 %v829
        %v3288 = vunpack.c.h.b16 %v829
        %v3289 = vunpack.c.l.b16 %v830
        %v3290 = vunpack.c.h.b16 %v830
        %v3291 = vunpack.c.l.b16 %v831
        %v3292 = vunpack.c.h.b16 %v831
        %v3293 = vunpack.c.l.b16 %v832
        %v3294 = vunpack.c.h.b16 %v832
        %v3295 = vunpack.c.l.b16 %v833
        %v3296 = vunpack.c.h.b16 %v833
        %v3297 = vunpack.c.l.b16 %v834
        %v3298 = vunpack.c.h.b16 %v834
        %v3299 = vunpack.c.l.b16 %v835
        %v3300 = vunpack.c.h.b16 %v835
        %v3301 = vunpack.c.l.b16 %v836
        %v3302 = vunpack.c.h.b16 %v836
        %v3303 = vunpack.c.l.b16 %v837
        %v3304 = vunpack.c.h.b16 %v837
        %v3305 = vunpack.c.l.b16 %v838
        %v3306 = vunpack.c.h.b16 %v838
        %v3307 = vunpack.c.l.b16 %v839
        %v3308 = vunpack.c.h.b16 %v839
        %v3309 = vunpack.c.l.b16 %v840
        %v3310 = vunpack.c.h.b16 %v840
        %v3311 = vunpack.c.l.b16 %v841
        %v3312 = vunpack.c.h.b16 %v841
        %v3313 = vunpack.c.l.b16 %v842
        %v3314 = vunpack.c.h.b16 %v842
        %v3315 = vunpack.c.l.b16 %v843
        %v3316 = vunpack.c.h.b16 %v843
        %v3317 = vunpack.c.l.b16 %v844
        %v3318 = vunpack.c.h.b16 %v844
        %v3319 = vunpack.c.l.b16 %v845
        %v3320 = vunpack.c.h.b16 %v845
        %v3321 = vunpack.c.l.b16 %v846
        %v3322 = vunpack.c.h.b16 %v846
        %v3323 = vunpack.c.l.b16 %v847
        %v3324 = vunpack.c.h.b16 %v847
        %v3325 = vunpack.c.l.b16 %v848
        %v3326 = vunpack.c.h.b16 %v848
        %v3327 = vunpack.c.l.b16 %v849
        %v3328 = vunpack.c.h.b16 %v849
        %v3329 = vunpack.c.l.b16 %v850
        %v3330 = vunpack.c.h.b16 %v850
        %v3331 = vunpack.c.l.b16 %v851
        %v3332 = vunpack.c.h.b16 %v851
        %v3333 = vunpack.c.l.b16 %v852
        %v3334 = vunpack.c.h.b16 %v852
        %v3335 = vunpack.c.l.b16 %v853
        %v3336 = vunpack.c.h.b16 %v853
        %v3337 = vunpack.c.l.b16 %v854
        %v3338 = vunpack.c.h.b16 %v854
        %v3339 = vunpack.c.l.b16 %v855
        %v3340 = vunpack.c.h.b16 %v855
        %v3341 = vunpack.c.l.b16 %v856
        %v3342 = vunpack.c.h.b16 %v856
        %v3343 = vunpack.c.l.b16 %v857
        %v3344 = vunpack.c.h.b16 %v857
        %v3345 = vunpack.c.l.b16 %v858
        %v3346 = vunpack.c.h.b16 %v858
        %v3347 = vunpack.c.l.b16 %v859
        %v3348 = vunpack.c.h.b16 %v859
        %v3349 = vunpack.c.l.b16 %v860
        %v3350 = vunpack.c.h.b16 %v860
        %v3351 = vunpack.c.l.b16 %v861
        %v3352 = vunpack.c.h.b16 %v861
        %v3353 = vunpack.c.l.b16 %v862
        %v3354 = vunpack.c.h.b16 %v862
        %v3355 = vunpack.c.l.b16 %v863
        %v3356 = vunpack.c.h.b16 %v863
        %v3357 = vunpack.c.l.b16 %v864
        %v3358 = vunpack.c.h.b16 %v864
        %v3359 = vunpack.c.l.b16 %v865
        %v3360 = vunpack.c.h.b16 %v865
        %v3361 = vunpack.c.l.b16 %v866
        %v3362 = vunpack.c.h.b16 %v866
        %v3363 = vunpack.c.l.b16 %v867
        %v3364 = vunpack.c.h.b16 %v867
        %v3365 = vunpack.c.l.b16 %v868
        %v3366 = vunpack.c.h.b16 %v868
        %v3367 = vunpack.c.l.b16 %v869
        %v3368 = vunpack.c.h.b16 %v869
        %v3369 = vunpack.c.l.b16 %v870
        %v3370 = vunpack.c.h.b16 %v870
        %v3371 = vunpack.c.l.b16 %v871
        %v3372 = vunpack.c.h.b16 %v871
        %v3373 = vunpack.c.l.b16 %v872
        %v3374 = vunpack.c.h.b16 %v872
        %v3375 = vunpack.c.l.b16 %v873
        %v3376 = vunpack.c.h.b16 %v873
        %v3377 = vunpack.c.l.b16 %v874
        %v3378 = vunpack.c.h.b16 %v874
        %v3379 = vunpack.c.l.b16 %v875
        %v3380 = vunpack.c.h.b16 %v875
        %v3381 = vunpack.c.l.b16 %v876
        %v3382 = vunpack.c.h.b16 %v876
        %v3383 = vunpack.c.l.b16 %v877
        %v3384 = vunpack.c.h.b16 %v877
        %v3385 = vunpack.c.l.b16 %v878
        %v3386 = vunpack.c.h.b16 %v878
        %v3387 = vunpack.c.l.b16 %v879
        %v3388 = vunpack.c.h.b16 %v879
        %v3389 = vunpack.c.l.b16 %v880
        %v3390 = vunpack.c.h.b16 %v880
        %v3391 = vunpack.c.l.b16 %v881
        %v3392 = vunpack.c.h.b16 %v881
        %v3393 = vunpack.c.l.b16 %v882
        %v3394 = vunpack.c.h.b16 %v882
        %v3395 = vunpack.c.l.b16 %v883
        %v3396 = vunpack.c.h.b16 %v883
        %v3397 = vunpack.c.l.b16 %v884
        %v3398 = vunpack.c.h.b16 %v884
        %v3399 = vunpack.c.l.b16 %v885
        %v3400 = vunpack.c.h.b16 %v885
        %v3401 = vunpack.c.l.b16 %v886
        %v3402 = vunpack.c.h.b16 %v886
        %v3403 = vunpack.c.l.b16 %v887
        %v3404 = vunpack.c.h.b16 %v887
        %v3405 = vunpack.c.l.b16 %v888
        %v3406 = vunpack.c.h.b16 %v888
        %v3407 = vunpack.c.l.b16 %v889
        %v3408 = vunpack.c.h.b16 %v889
        %v3409 = vunpack.c.l.b16 %v890
        %v3410 = vunpack.c.h.b16 %v890
        %v3411 = vunpack.c.l.b16 %v891
        %v3412 = vunpack.c.h.b16 %v891
        %v3413 = vunpack.c.l.b16 %v892
        %v3414 = vunpack.c.h.b16 %v892
        %v3415 = vunpack.c.l.b16 %v893
        %v3416 = vunpack.c.h.b16 %v893
        %v3417 = vunpack.c.l.b16 %v894
        %v3418 = vunpack.c.h.b16 %v894
        %v3419 = vunpack.c.l.b16 %v895
        %v3420 = vunpack.c.h.b16 %v895
        %v3421 = vunpack.c.l.b16 %v896
        %v3422 = vunpack.c.h.b16 %v896
        %v3423 = vunpack.c.l.b16 %v897
        %v3424 = vunpack.c.h.b16 %v897
        %v3425 = vunpack.c.l.b16 %v898
        %v3426 = vunpack.c.h.b16 %v898
        %v3427 = vunpack.c.l.b16 %v899
        %v3428 = vunpack.c.h.b16 %v899
        %v3429 = vunpack.c.l.b16 %v900
        %v3430 = vunpack.c.h.b16 %v900
        %v3431 = vunpack.c.l.b16 %v901
        %v3432 = vunpack.c.h.b16 %v901
        %v3433 = vunpack.c.l.b16 %v902
        %v3434 = vunpack.c.h.b16 %v902
        %v3435 = vunpack.c.l.b16 %v903
        %v3436 = vunpack.c.h.b16 %v903
        %v3437 = vunpack.c.l.b16 %v904
        %v3438 = vunpack.c.h.b16 %v904
        %v3439 = vunpack.c.l.b16 %v905
        %v3440 = vunpack.c.h.b16 %v905
        %v3441 = vunpack.c.l.b16 %v906
        %v3442 = vunpack.c.h.b16 %v906
        %v3443 = vunpack.c.l.b16 %v907
        %v3444 = vunpack.c.h.b16 %v907
        %v3445 = vunpack.c.l.b16 %v908
        %v3446 = vunpack.c.h.b16 %v908
        %v3447 = vunpack.c.l.b16 %v909
        %v3448 = vunpack.c.h.b16 %v909
        %v3449 = vunpack.c.l.b16 %v910
        %v3450 = vunpack.c.h.b16 %v910
        %v3451 = vunpack.c.l.b16 %v911
        %v3452 = vunpack.c.h.b16 %v911
        %v3453 = vunpack.c.l.b16 %v912
        %v3454 = vunpack.c.h.b16 %v912
        %v3455 = vunpack.c.l.b16 %v913
        %v3456 = vunpack.c.h.b16 %v913
        %v3457 = vunpack.c.l.b16 %v914
        %v3458 = vunpack.c.h.b16 %v914
        %v3459 = vunpack.c.l.b16 %v915
        %v3460 = vunpack.c.h.b16 %v915
        %v3461 = vunpack.c.l.b16 %v916
        %v3462 = vunpack.c.h.b16 %v916
        %v3463 = vunpack.c.l.b16 %v917
        %v3464 = vunpack.c.h.b16 %v917
        %v3465 = vunpack.c.l.b16 %v918
        %v3466 = vunpack.c.h.b16 %v918
        %v3467 = vunpack.c.l.b16 %v919
        %v3468 = vunpack.c.h.b16 %v919
        %v3469 = vunpack.c.l.b16 %v920
        %v3470 = vunpack.c.h.b16 %v920
        %v3471 = vunpack.c.l.b16 %v921
        %v3472 = vunpack.c.h.b16 %v921
        %v3473 = vunpack.c.l.b16 %v922
        %v3474 = vunpack.c.h.b16 %v922
        %v3475 = vunpack.c.l.b16 %v923
        %v3476 = vunpack.c.h.b16 %v923
        %v3477 = vunpack.c.l.b16 %v924
        %v3478 = vunpack.c.h.b16 %v924
        %v3479 = vunpack.c.l.b16 %v925
        %v3480 = vunpack.c.h.b16 %v925
        %v3481 = vunpack.c.l.b16 %v926
        %v3482 = vunpack.c.h.b16 %v926
        %v3483 = vunpack.c.l.b16 %v927
        %v3484 = vunpack.c.h.b16 %v927
        %v3485 = vunpack.c.l.b16 %v928
        %v3486 = vunpack.c.h.b16 %v928
        %v3487 = vunpack.c.l.b16 %v929
        %v3488 = vunpack.c.h.b16 %v929
        %v3489 = vunpack.c.l.b16 %v930
        %v3490 = vunpack.c.h.b16 %v930
        %v3491 = vunpack.c.l.b16 %v931
        %v3492 = vunpack.c.h.b16 %v931
        %v3493 = vunpack.c.l.b16 %v932
        %v3494 = vunpack.c.h.b16 %v932
        %v3495 = vunpack.c.l.b16 %v933
        %v3496 = vunpack.c.h.b16 %v933
        %v3497 = vunpack.c.l.b16 %v934
        %v3498 = vunpack.c.h.b16 %v934
        %v3499 = vunpack.c.l.b16 %v935
        %v3500 = vunpack.c.h.b16 %v935
        %v3501 = vunpack.c.l.b16 %v936
        %v3502 = vunpack.c.h.b16 %v936
        %v3503 = vunpack.c.l.b16 %v937
        %v3504 = vunpack.c.h.b16 %v937
        %v3505 = vunpack.c.l.b16 %v938
        %v3506 = vunpack.c.h.b16 %v938
        %v3507 = vunpack.c.l.b16 %v939
        %v3508 = vunpack.c.h.b16 %v939
        %v3509 = vunpack.c.l.b16 %v940
        %v3510 = vunpack.c.h.b16 %v940
        %v3511 = vunpack.c.l.b16 %v941
        %v3512 = vunpack.c.h.b16 %v941
        %v3513 = vunpack.c.l.b16 %v942
        %v3514 = vunpack.c.h.b16 %v942
        %v3515 = vunpack.c.l.b16 %v943
        %v3516 = vunpack.c.h.b16 %v943
        %v3517 = vunpack.c.l.b16 %v944
        %v3518 = vunpack.c.h.b16 %v944
        %v3519 = vunpack.c.l.b16 %v945
        %v3520 = vunpack.c.h.b16 %v945
        %v3521 = vunpack.c.l.b16 %v946
        %v3522 = vunpack.c.h.b16 %v946
        %v3523 = vunpack.c.l.b16 %v947
        %v3524 = vunpack.c.h.b16 %v947
        %v3525 = vunpack.c.l.b16 %v948
        %v3526 = vunpack.c.h.b16 %v948
        %v3527 = vunpack.c.l.b16 %v949
        %v3528 = vunpack.c.h.b16 %v949
        %v3529 = vunpack.c.l.b16 %v950
        %v3530 = vunpack.c.h.b16 %v950
        %v3531 = vunpack.c.l.b16 %v951
        %v3532 = vunpack.c.h.b16 %v951
        %v3533 = vunpack.c.l.b16 %v952
        %v3534 = vunpack.c.h.b16 %v952
        %v3535 = vunpack.c.l.b16 %v953
        %v3536 = vunpack.c.h.b16 %v953
        %v3537 = vunpack.c.l.b16 %v954
        %v3538 = vunpack.c.h.b16 %v954
        %v3539 = vunpack.c.l.b16 %v955
        %v3540 = vunpack.c.h.b16 %v955
        %v3541 = vunpack.c.l.b16 %v956
        %v3542 = vunpack.c.h.b16 %v956
        %v3543 = vunpack.c.l.b16 %v957
        %v3544 = vunpack.c.h.b16 %v957
        %v3545 = vunpack.c.l.b16 %v958
        %v3546 = vunpack.c.h.b16 %v958
        %v3547 = vunpack.c.l.b16 %v959
        %v3548 = vunpack.c.h.b16 %v959
        %v3549 = vunpack.c.l.b16 %v960
        %v3550 = vunpack.c.h.b16 %v960
        %v3551 = vunpack.c.l.b16 %v961
        %v3552 = vunpack.c.h.b16 %v961
        %v3553 = vunpack.c.l.b16 %v962
        %v3554 = vunpack.c.h.b16 %v962
        %v3555 = vunpack.c.l.b16 %v963
        %v3556 = vunpack.c.h.b16 %v963
        %v3557 = vunpack.c.l.b16 %v964
        %v3558 = vunpack.c.h.b16 %v964
        %v3559 = vunpack.c.l.b16 %v965
        %v3560 = vunpack.c.h.b16 %v965
        %v3561 = vunpack.c.l.b16 %v966
        %v3562 = vunpack.c.h.b16 %v966
        %v3563 = vunpack.c.l.b16 %v967
        %v3564 = vunpack.c.h.b16 %v967
        %v3565 = vunpack.c.l.b16 %v968
        %v3566 = vunpack.c.h.b16 %v968
        %v3567 = vunpack.c.l.b16 %v969
        %v3568 = vunpack.c.h.b16 %v969
        %v3569 = vunpack.c.l.b16 %v970
        %v3570 = vunpack.c.h.b16 %v970
        %v3571 = vunpack.c.l.b16 %v971
        %v3572 = vunpack.c.h.b16 %v971
        %v3573 = vunpack.c.l.b16 %v972
        %v3574 = vunpack.c.h.b16 %v972
        %v3575 = vunpack.c.l.b16 %v973
        %v3576 = vunpack.c.h.b16 %v973
        %v3577 = vunpack.c.l.b16 %v974
        %v3578 = vunpack.c.h.b16 %v974
        %v3579 = vunpack.c.l.b16 %v975
        %v3580 = vunpack.c.h.b16 %v975
        %v3581 = vunpack.c.l.b16 %v976
        %v3582 = vunpack.c.h.b16 %v976
        %v3583 = vunpack.c.l.b16 %v977
        %v3584 = vunpack.c.h.b16 %v977
        %v3585 = vunpack.c.l.b16 %v978
        %v3586 = vunpack.c.h.b16 %v978
        %v3587 = vunpack.c.l.b16 %v979
        %v3588 = vunpack.c.h.b16 %v979
        %v3589 = vunpack.c.l.b16 %v980
        %v3590 = vunpack.c.h.b16 %v980
        %v3591 = vunpack.c.l.b16 %v981
        %v3592 = vunpack.c.h.b16 %v981
        %v3593 = vunpack.c.l.b16 %v982
        %v3594 = vunpack.c.h.b16 %v982
        %v3595 = vunpack.c.l.b16 %v983
        %v3596 = vunpack.c.h.b16 %v983
        %v3597 = vunpack.c.l.b16 %v984
        %v3598 = vunpack.c.h.b16 %v984
        %v3599 = vunpack.c.l.b16 %v985
        %v3600 = vunpack.c.h.b16 %v985
        %v3601 = vunpack.c.l.b16 %v986
        %v3602 = vunpack.c.h.b16 %v986
        %v3603 = vunpack.c.l.b16 %v987
        %v3604 = vunpack.c.h.b16 %v987
        %v3605 = vunpack.c.l.b16 %v988
        %v3606 = vunpack.c.h.b16 %v988
        %v3607 = vunpack.c.l.b16 %v989
        %v3608 = vunpack.c.h.b16 %v989
        %v3609 = vunpack.c.l.b16 %v990
        %v3610 = vunpack.c.h.b16 %v990
        %v3611 = vunpack.c.l.b16 %v991
        %v3612 = vunpack.c.h.b16 %v991
        %v3613 = vunpack.c.l.b16 %v992
        %v3614 = vunpack.c.h.b16 %v992
        %v3615 = vunpack.c.l.b16 %v993
        %v3616 = vunpack.c.h.b16 %v993
        %v3617 = vunpack.c.l.b16 %v994
        %v3618 = vunpack.c.h.b16 %v994
        %v3619 = vunpack.c.l.b16 %v995
        %v3620 = vunpack.c.h.b16 %v995
        %v3621 = vunpack.c.l.b16 %v996
        %v3622 = vunpack.c.h.b16 %v996
        %v3623 = vunpack.c.l.b16 %v997
        %v3624 = vunpack.c.h.b16 %v997
        %v3625 = vunpack.c.l.b16 %v998
        %v3626 = vunpack.c.h.b16 %v998
        %v3627 = vunpack.c.l.b16 %v999
        %v3628 = vunpack.c.h.b16 %v999
        %v3629 = vunpack.c.l.b16 %v1000
        %v3630 = vunpack.c.h.b16 %v1000
        %v3631 = vunpack.c.l.b16 %v1001
        %v3632 = vunpack.c.h.b16 %v1001
        %v3633 = vunpack.c.l.b16 %v1002
        %v3634 = vunpack.c.h.b16 %v1002
        %v3635 = vunpack.c.l.b16 %v1003
        %v3636 = vunpack.c.h.b16 %v1003
        %v3637 = vunpack.c.l.b16 %v1004
        %v3638 = vunpack.c.h.b16 %v1004
        %v3639 = vunpack.c.l.b16 %v1005
        %v3640 = vunpack.c.h.b16 %v1005
        %v3641 = vunpack.c.l.b16 %v1006
        %v3642 = vunpack.c.h.b16 %v1006
        %v3643 = vunpack.c.l.b16 %v1007
        %v3644 = vunpack.c.h.b16 %v1007
        %v3645 = vunpack.c.l.b16 %v1008
        %v3646 = vunpack.c.h.b16 %v1008
        %v3647 = vunpack.c.l.b16 %v1009
        %v3648 = vunpack.c.h.b16 %v1009
        %v3649 = vunpack.c.l.b16 %v1010
        %v3650 = vunpack.c.h.b16 %v1010
        %v3651 = vunpack.c.l.b16 %v1011
        %v3652 = vunpack.c.h.b16 %v1011
        %v3653 = vunpack.c.l.b16 %v1012
        %v3654 = vunpack.c.h.b16 %v1012
        %v3655 = vunpack.c.l.b16 %v1013
        %v3656 = vunpack.c.h.b16 %v1013
        %v3657 = vunpack.c.l.b16 %v1014
        %v3658 = vunpack.c.h.b16 %v1014
        %v3659 = vunpack.c.l.b16 %v1015
        %v3660 = vunpack.c.h.b16 %v1015
        %v3661 = vunpack.c.l.b16 %v1016
        %v3662 = vunpack.c.h.b16 %v1016
        %v3663 = vunpack.c.l.b16 %v1017
        %v3664 = vunpack.c.h.b16 %v1017
        %v3665 = vunpack.c.l.b16 %v1018
        %v3666 = vunpack.c.h.b16 %v1018
        %v3667 = vunpack.c.l.b16 %v1019
        %v3668 = vunpack.c.h.b16 %v1019
        %v3669 = vunpack.c.l.b16 %v1020
        %v3670 = vunpack.c.h.b16 %v1020
        %v3671 = vunpack.c.l.b16 %v1021
        %v3672 = vunpack.c.h.b16 %v1021
        %v3673 = vunpack.c.l.b16 %v1022
        %v3674 = vunpack.c.h.b16 %v1022
        %v3675 = vunpack.c.l.b16 %v1023
        %v3676 = vunpack.c.h.b16 %v1023
        %v3677 = vunpack.c.l.b16 %v1024
        %v3678 = vunpack.c.h.b16 %v1024
        %v3679 = vunpack.c.l.b16 %v1025
        %v3680 = vunpack.c.h.b16 %v1025
        %v3681 = vunpack.c.l.b16 %v1026
        %v3682 = vunpack.c.h.b16 %v1026
        %v3683 = vunpack.c.l.b16 %v1027
        %v3684 = vunpack.c.h.b16 %v1027
        %v3685 = vunpack.c.l.b16 %v1028
        %v3686 = vunpack.c.h.b16 %v1028
        %v3687 = vunpack.c.l.b16 %v1029
        %v3688 = vunpack.c.h.b16 %v1029
        %v3689 = vunpack.c.l.b16 %v1030
        %v3690 = vunpack.c.h.b16 %v1030
        %v3691 = vunpack.c.l.b16 %v1031
        %v3692 = vunpack.c.h.b16 %v1031
        %v3693 = vunpack.c.l.b16 %v1032
        %v3694 = vunpack.c.h.b16 %v1032
        %v3695 = vunpack.c.l.b16 %v1033
        %v3696 = vunpack.c.h.b16 %v1033
        %v3697 = vunpack.c.l.b16 %v1034
        %v3698 = vunpack.c.h.b16 %v1034
        %v3699 = vunpack.c.l.b16 %v1035
        %v3700 = vunpack.c.h.b16 %v1035
        %v3701 = vunpack.c.l.b16 %v1036
        %v3702 = vunpack.c.h.b16 %v1036
        %v3703 = vunpack.c.l.b16 %v1037
        %v3704 = vunpack.c.h.b16 %v1037
        %v3705 = vunpack.c.l.b16 %v1038
        %v3706 = vunpack.c.h.b16 %v1038
        %v3707 = vunpack.c.l.b16 %v1039
        %v3708 = vunpack.c.h.b16 %v1039
        %v3709 = vunpack.c.l.b16 %v1040
        %v3710 = vunpack.c.h.b16 %v1040
        %v3711 = vunpack.c.l.b16 %v1041
        %v3712 = vunpack.c.h.b16 %v1041
        %v3713 = vunpack.c.l.b16 %v1042
        %v3714 = vunpack.c.h.b16 %v1042
        %v3715 = vunpack.c.l.b16 %v1043
        %v3716 = vunpack.c.h.b16 %v1043
        %v3717 = vunpack.c.l.b16 %v1044
        %v3718 = vunpack.c.h.b16 %v1044
        %v3719 = vunpack.c.l.b16 %v1045
        %v3720 = vunpack.c.h.b16 %v1045
        %v3721 = vunpack.c.l.b16 %v1046
        %v3722 = vunpack.c.h.b16 %v1046
        %v3723 = vunpack.c.l.b16 %v1047
        %v3724 = vunpack.c.h.b16 %v1047
        %v3725 = vunpack.c.l.b16 %v1048
        %v3726 = vunpack.c.h.b16 %v1048
        %v3727 = vunpack.c.l.b16 %v1049
        %v3728 = vunpack.c.h.b16 %v1049
        %v3729 = vunpack.c.l.b16 %v1050
        %v3730 = vunpack.c.h.b16 %v1050
        %v3731 = vunpack.c.l.b16 %v1051
        %v3732 = vunpack.c.h.b16 %v1051
        %v3733 = vunpack.c.l.b16 %v1052
        %v3734 = vunpack.c.h.b16 %v1052
        %v3735 = vunpack.c.l.b16 %v1053
        %v3736 = vunpack.c.h.b16 %v1053
        %v3737 = vunpack.c.l.b16 %v1054
        %v3738 = vunpack.c.h.b16 %v1054
        %v3739 = vunpack.c.l.b16 %v1055
        %v3740 = vunpack.c.h.b16 %v1055
        %v3741 = vunpack.c.l.b16 %v1056
        %v3742 = vunpack.c.h.b16 %v1056
        %v3743 = vunpack.c.l.b16 %v1057
        %v3744 = vunpack.c.h.b16 %v1057
        %v3745 = vunpack.c.l.b16 %v1058
        %v3746 = vunpack.c.h.b16 %v1058
        %v3747 = vunpack.c.l.b16 %v1059
        %v3748 = vunpack.c.h.b16 %v1059
        %v3749 = vunpack.c.l.b16 %v1060
        %v3750 = vunpack.c.h.b16 %v1060
        %v3751 = vunpack.c.l.b16 %v1061
        %v3752 = vunpack.c.h.b16 %v1061
        %v3753 = vunpack.c.l.b16 %v1062
        %v3754 = vunpack.c.h.b16 %v1062
        %v3755 = vunpack.c.l.b16 %v1063
        %v3756 = vunpack.c.h.b16 %v1063
        %v3757 = vunpack.c.l.b16 %v1064
        %v3758 = vunpack.c.h.b16 %v1064
        %v3759 = vunpack.c.l.b16 %v1065
        %v3760 = vunpack.c.h.b16 %v1065
        %v3761 = vunpack.c.l.b16 %v1066
        %v3762 = vunpack.c.h.b16 %v1066
        %v3763 = vunpack.c.l.b16 %v1067
        %v3764 = vunpack.c.h.b16 %v1067
        %v3765 = vunpack.c.l.b16 %v1068
        %v3766 = vunpack.c.h.b16 %v1068
        %v3767 = vunpack.c.l.b16 %v1069
        %v3768 = vunpack.c.h.b16 %v1069
        %v3769 = vunpack.c.l.b16 %v1070
        %v3770 = vunpack.c.h.b16 %v1070
        %v3771 = vunpack.c.l.b16 %v1071
        %v3772 = vunpack.c.h.b16 %v1071
        %v3773 = vunpack.c.l.b16 %v1072
        %v3774 = vunpack.c.h.b16 %v1072
        %v3775 = vunpack.c.l.b16 %v1073
        %v3776 = vunpack.c.h.b16 %v1073
        %v3777 = vunpack.c.l.b16 %v1074
        %v3778 = vunpack.c.h.b16 %v1074
        %v3779 = vunpack.c.l.b16 %v1075
        %v3780 = vunpack.c.h.b16 %v1075
        %v3781 = vunpack.c.l.b16 %v1076
        %v3782 = vunpack.c.h.b16 %v1076
        %v3783 = vunpack.c.l.b16 %v1077
        %v3784 = vunpack.c.h.b16 %v1077
        %v3785 = vunpack.c.l.b16 %v1078
        %v3786 = vunpack.c.h.b16 %v1078
        %v3787 = vunpack.c.l.b16 %v1079
        %v3788 = vunpack.c.h.b16 %v1079
        %v3789 = vunpack.c.l.b16 %v1080
        %v3790 = vunpack.c.h.b16 %v1080
        %v3791 = vunpack.c.l.b16 %v1081
        %v3792 = vunpack.c.h.b16 %v1081
        %v3793 = vunpack.c.l.b16 %v1082
        %v3794 = vunpack.c.h.b16 %v1082
        %v3795 = vunpack.c.l.b16 %v1083
        %v3796 = vunpack.c.h.b16 %v1083
        %v3797 = vunpack.c.l.b16 %v1084
        %v3798 = vunpack.c.h.b16 %v1084
        %v3799 = vunpack.c.l.b16 %v1085
        %v3800 = vunpack.c.h.b16 %v1085
        %v3801 = vunpack.c.l.b16 %v1086
        %v3802 = vunpack.c.h.b16 %v1086
        %v3803 = vunpack.c.l.b16 %v1087
        %v3804 = vunpack.c.h.b16 %v1087
        %v3805 = vunpack.c.l.b16 %v1088
        %v3806 = vunpack.c.h.b16 %v1088
        %v3807 = vunpack.c.l.b16 %v1089
        %v3808 = vunpack.c.h.b16 %v1089
        %v3809 = vunpack.c.l.b16 %v1090
        %v3810 = vunpack.c.h.b16 %v1090
        %v3811 = vunpack.c.l.b16 %v1091
        %v3812 = vunpack.c.h.b16 %v1091
        %v3813 = vunpack.c.l.b16 %v1092
        %v3814 = vunpack.c.h.b16 %v1092
        %v3815 = vunpack.c.l.b16 %v1093
        %v3816 = vunpack.c.h.b16 %v1093
        %v3817 = vunpack.c.l.b16 %v1094
        %v3818 = vunpack.c.h.b16 %v1094
        %v3819 = vunpack.c.l.b16 %v1095
        %v3820 = vunpack.c.h.b16 %v1095
        %v3821 = vunpack.c.l.b16 %v1096
        %v3822 = vunpack.c.h.b16 %v1096
        %v3823 = vunpack.c.l.b16 %v1097
        %v3824 = vunpack.c.h.b16 %v1097
        %v3825 = vunpack.c.l.b16 %v1098
        %v3826 = vunpack.c.h.b16 %v1098
        %v3827 = vunpack.c.l.b16 %v1099
        %v3828 = vunpack.c.h.b16 %v1099
        %v3829 = vunpack.c.l.b16 %v1100
        %v3830 = vunpack.c.h.b16 %v1100
        %v3831 = vunpack.c.l.b16 %v1101
        %v3832 = vunpack.c.h.b16 %v1101
        %v3833 = vunpack.c.l.b16 %v1102
        %v3834 = vunpack.c.h.b16 %v1102
        %v3835 = vunpack.c.l.b16 %v1103
        %v3836 = vunpack.c.h.b16 %v1103
        %v3837 = vunpack.c.l.b16 %v1104
        %v3838 = vunpack.c.h.b16 %v1104
        %v3839 = vunpack.c.l.b16 %v1105
        %v3840 = vunpack.c.h.b16 %v1105
        %v3841 = vunpack.c.l.b16 %v1106
        %v3842 = vunpack.c.h.b16 %v1106
        %v3843 = vunpack.c.l.b16 %v1107
        %v3844 = vunpack.c.h.b16 %v1107
        %v3845 = vunpack.c.l.b16 %v1108
        %v3846 = vunpack.c.h.b16 %v1108
        %v3847 = vunpack.c.l.b16 %v1109
        %v3848 = vunpack.c.h.b16 %v1109
        %v3849 = vunpack.c.l.b16 %v1110
        %v3850 = vunpack.c.h.b16 %v1110
        %v3851 = vunpack.c.l.b16 %v1111
        %v3852 = vunpack.c.h.b16 %v1111
        %v3853 = vunpack.c.l.b16 %v1112
        %v3854 = vunpack.c.h.b16 %v1112
        %v3855 = vunpack.c.l.b16 %v1113
        %v3856 = vunpack.c.h.b16 %v1113
        %v3857 = vunpack.c.l.b16 %v1114
        %v3858 = vunpack.c.h.b16 %v1114
        %v3859 = vunpack.c.l.b16 %v1115
        %v3860 = vunpack.c.h.b16 %v1115
        %v3861 = vunpack.c.l.b16 %v1116
        %v3862 = vunpack.c.h.b16 %v1116
        %v3863 = vunpack.c.l.b16 %v1117
        %v3864 = vunpack.c.h.b16 %v1117
        %v3865 = vunpack.c.l.b16 %v1118
        %v3866 = vunpack.c.h.b16 %v1118
        %v3867 = vunpack.c.l.b16 %v1119
        %v3868 = vunpack.c.h.b16 %v1119
        %v3869 = vunpack.c.l.b16 %v1120
        %v3870 = vunpack.c.h.b16 %v1120
        %v3871 = vunpack.c.l.b16 %v1121
        %v3872 = vunpack.c.h.b16 %v1121
        %v3873 = vunpack.c.l.b16 %v1122
        %v3874 = vunpack.c.h.b16 %v1122
        %v3875 = vunpack.c.l.b16 %v1123
        %v3876 = vunpack.c.h.b16 %v1123
        %v3877 = vunpack.c.l.b16 %v1124
        %v3878 = vunpack.c.h.b16 %v1124
        %v3879 = vunpack.c.l.b16 %v1125
        %v3880 = vunpack.c.h.b16 %v1125
        %v3881 = vunpack.c.l.b16 %v1126
        %v3882 = vunpack.c.h.b16 %v1126
        %v3883 = vunpack.c.l.b16 %v1127
        %v3884 = vunpack.c.h.b16 %v1127
        %v3885 = vunpack.c.l.b16 %v1128
        %v3886 = vunpack.c.h.b16 %v1128
        %v3887 = vunpack.c.l.b16 %v1129
        %v3888 = vunpack.c.h.b16 %v1129
        %v3889 = vunpack.c.l.b16 %v1130
        %v3890 = vunpack.c.h.b16 %v1130
        %v3891 = vunpack.c.l.b16 %v1131
        %v3892 = vunpack.c.h.b16 %v1131
        %v3893 = vunpack.c.l.b16 %v1132
        %v3894 = vunpack.c.h.b16 %v1132
        %v3895 = vunpack.c.l.b16 %v1133
        %v3896 = vunpack.c.h.b16 %v1133
        %v3897 = vunpack.c.l.b16 %v1134
        %v3898 = vunpack.c.h.b16 %v1134
        %v3899 = vunpack.c.l.b16 %v1135
        %v3900 = vunpack.c.h.b16 %v1135
        %v3901 = vunpack.c.l.b16 %v1136
        %v3902 = vunpack.c.h.b16 %v1136
        %v3903 = vunpack.c.l.b16 %v1137
        %v3904 = vunpack.c.h.b16 %v1137
        %v3905 = vunpack.c.l.b16 %v1138
        %v3906 = vunpack.c.h.b16 %v1138
        %v3907 = vunpack.c.l.b16 %v1139
        %v3908 = vunpack.c.h.b16 %v1139
        %v3909 = vunpack.c.l.b16 %v1140
        %v3910 = vunpack.c.h.b16 %v1140
        %v3911 = vunpack.c.l.b16 %v1141
        %v3912 = vunpack.c.h.b16 %v1141
        %v3913 = vunpack.c.l.b16 %v1142
        %v3914 = vunpack.c.h.b16 %v1142
        %v3915 = vunpack.c.l.b16 %v1143
        %v3916 = vunpack.c.h.b16 %v1143
        %v3917 = vunpack.c.l.b16 %v1144
        %v3918 = vunpack.c.h.b16 %v1144
        %v3919 = vunpack.c.l.b16 %v1145
        %v3920 = vunpack.c.h.b16 %v1145
        %v3921 = vunpack.c.l.b16 %v1146
        %v3922 = vunpack.c.h.b16 %v1146
        %v3923 = vunpack.c.l.b16 %v1147
        %v3924 = vunpack.c.h.b16 %v1147
        %v3925 = vunpack.c.l.b16 %v1148
        %v3926 = vunpack.c.h.b16 %v1148
        %v3927 = vunpack.c.l.b16 %v1149
        %v3928 = vunpack.c.h.b16 %v1149
        %v3929 = vunpack.c.l.b16 %v1150
        %v3930 = vunpack.c.h.b16 %v1150
        %v3931 = vunpack.c.l.b16 %v1151
        %v3932 = vunpack.c.h.b16 %v1151
        %v3933 = vunpack.c.l.b16 %v1152
        %v3934 = vunpack.c.h.b16 %v1152
        %v3935 = vunpack.c.l.b16 %v1153
        %v3936 = vunpack.c.h.b16 %v1153
        %v3937 = vunpack.c.l.b16 %v1154
        %v3938 = vunpack.c.h.b16 %v1154
        %v3939 = vunpack.c.l.b16 %v1155
        %v3940 = vunpack.c.h.b16 %v1155
        %v3941 = vunpack.c.l.b16 %v1156
        %v3942 = vunpack.c.h.b16 %v1156
        %v3943 = vunpack.c.l.b16 %v1157
        %v3944 = vunpack.c.h.b16 %v1157
        %v3945 = vunpack.c.l.b16 %v1158
        %v3946 = vunpack.c.h.b16 %v1158
        %v3947 = vunpack.c.l.b16 %v1159
        %v3948 = vunpack.c.h.b16 %v1159
        %v3949 = vunpack.c.l.b16 %v1160
        %v3950 = vunpack.c.h.b16 %v1160
        %v3951 = vunpack.c.l.b16 %v1161
        %v3952 = vunpack.c.h.b16 %v1161
        %v3953 = vunpack.c.l.b16 %v1162
        %v3954 = vunpack.c.h.b16 %v1162
        %v3955 = vunpack.c.l.b16 %v1163
        %v3956 = vunpack.c.h.b16 %v1163
        %v3957 = vunpack.c.l.b16 %v1164
        %v3958 = vunpack.c.h.b16 %v1164
        %v3959 = vunpack.c.l.b16 %v1165
        %v3960 = vunpack.c.h.b16 %v1165
        %v3961 = vunpack.c.l.b16 %v1166
        %v3962 = vunpack.c.h.b16 %v1166
        %v3963 = vunpack.c.l.b16 %v1167
        %v3964 = vunpack.c.h.b16 %v1167
        %v3965 = vunpack.c.l.b16 %v1168
        %v3966 = vunpack.c.h.b16 %v1168
        %v3967 = vunpack.c.l.b16 %v1169
        %v3968 = vunpack.c.h.b16 %v1169
        %v3969 = vunpack.c.l.b16 %v1170
        %v3970 = vunpack.c.h.b16 %v1170
        %v3971 = vunpack.c.l.b16 %v1171
        %v3972 = vunpack.c.h.b16 %v1171
        %v3973 = vunpack.c.l.b16 %v1172
        %v3974 = vunpack.c.h.b16 %v1172
        %v3975 = vunpack.c.l.b16 %v1173
        %v3976 = vunpack.c.h.b16 %v1173
        %v3977 = vunpack.c.l.b16 %v1174
        %v3978 = vunpack.c.h.b16 %v1174
        %v3979 = vunpack.c.l.b16 %v1175
        %v3980 = vunpack.c.h.b16 %v1175
        %v3981 = vunpack.c.l.b16 %v1176
        %v3982 = vunpack.c.h.b16 %v1176
        %v3983 = vunpack.c.l.b16 %v1177
        %v3984 = vunpack.c.h.b16 %v1177
        %v3985 = vunpack.c.l.b16 %v1178
        %v3986 = vunpack.c.h.b16 %v1178
        %v3987 = vunpack.c.l.b16 %v1179
        %v3988 = vunpack.c.h.b16 %v1179
        %v3989 = vunpack.c.l.b16 %v1180
        %v3990 = vunpack.c.h.b16 %v1180
        %v3991 = vunpack.c.l.b16 %v1181
        %v3992 = vunpack.c.h.b16 %v1181
        %v3993 = vunpack.c.l.b16 %v1182
        %v3994 = vunpack.c.h.b16 %v1182
        %v3995 = vunpack.c.l.b16 %v1183
        %v3996 = vunpack.c.h.b16 %v1183
        %v3997 = vunpack.c.l.b16 %v1184
        %v3998 = vunpack.c.h.b16 %v1184
        %v3999 = vunpack.c.l.b16 %v1185
        %v4000 = vunpack.c.h.b16 %v1185
        %v4001 = vunpack.c.l.b16 %v1186
        %v4002 = vunpack.c.h.b16 %v1186
        %v4003 = vunpack.c.l.b16 %v1187
        %v4004 = vunpack.c.h.b16 %v1187
        %v4005 = vunpack.c.l.b16 %v1188
        %v4006 = vunpack.c.h.b16 %v1188
        %v4007 = vunpack.c.l.b16 %v1189
        %v4008 = vunpack.c.h.b16 %v1189
        %v4009 = vunpack.c.l.b16 %v1190
        %v4010 = vunpack.c.h.b16 %v1190
        %v4011 = vunpack.c.l.b16 %v1191
        %v4012 = vunpack.c.h.b16 %v1191
        %v4013 = vunpack.c.l.b16 %v1192
        %v4014 = vunpack.c.h.b16 %v1192
        %v4015 = vunpack.c.l.b16 %v1193
        %v4016 = vunpack.c.h.b16 %v1193
        %v4017 = vunpack.c.l.b16 %v1194
        %v4018 = vunpack.c.h.b16 %v1194
        %v4019 = vunpack.c.l.b16 %v1195
        %v4020 = vunpack.c.h.b16 %v1195
        %v4021 = vunpack.c.l.b16 %v1196
        %v4022 = vunpack.c.h.b16 %v1196
        %v4023 = vunpack.c.l.b16 %v1197
        %v4024 = vunpack.c.h.b16 %v1197
        %v4025 = vunpack.c.l.b16 %v1198
        %v4026 = vunpack.c.h.b16 %v1198
        %v4027 = vunpack.c.l.b16 %v1199
        %v4028 = vunpack.c.h.b16 %v1199
        %v4029 = vunpack.c.l.b16 %v1200
        %v4030 = vunpack.c.h.b16 %v1200
        %v4031 = vunpack.c.l.b16 %v1201
        %v4032 = vunpack.c.h.b16 %v1201
        %v4033 = vunpack.c.l.b16 %v1202
        %v4034 = vunpack.c.h.b16 %v1202
        %v4035 = vunpack.c.l.b16 %v1203
        %v4036 = vunpack.c.h.b16 %v1203
        %v4037 = vunpack.c.l.b16 %v1204
        %v4038 = vunpack.c.h.b16 %v1204
        %v4039 = vunpack.c.l.b16 %v1205
        %v4040 = vunpack.c.h.b16 %v1205
        %v4041 = vunpack.c.l.b16 %v1206
        %v4042 = vunpack.c.h.b16 %v1206
        %v4043 = vunpack.c.l.b16 %v1207
        %v4044 = vunpack.c.h.b16 %v1207
        %v4045 = vunpack.c.l.b16 %v1208
        %v4046 = vunpack.c.h.b16 %v1208
        %v4047 = vunpack.c.l.b16 %v1209
        %v4048 = vunpack.c.h.b16 %v1209
        %v4049 = vunpack.c.l.b16 %v1210
        %v4050 = vunpack.c.h.b16 %v1210
        %v4051 = vunpack.c.l.b16 %v1211
        %v4052 = vunpack.c.h.b16 %v1211
        %v4053 = vunpack.c.l.b16 %v1212
        %v4054 = vunpack.c.h.b16 %v1212
        %v4055 = vunpack.c.l.b16 %v1213
        %v4056 = vunpack.c.h.b16 %v1213
        %v4057 = vunpack.c.l.b16 %v1214
        %v4058 = vunpack.c.h.b16 %v1214
        %v4059 = vunpack.c.l.b16 %v1215
        %v4060 = vunpack.c.h.b16 %v1215
        %v4061 = vunpack.c.l.b16 %v1216
        %v4062 = vunpack.c.h.b16 %v1216
        %v4063 = vunpack.c.l.b16 %v1217
        %v4064 = vunpack.c.h.b16 %v1217
        %v4065 = vunpack.c.l.b16 %v1218
        %v4066 = vunpack.c.h.b16 %v1218
        %v4067 = vunpack.c.l.b16 %v1219
        %v4068 = vunpack.c.h.b16 %v1219
        %v4069 = vunpack.c.l.b16 %v1220
        %v4070 = vunpack.c.h.b16 %v1220
        %v4071 = vunpack.c.l.b16 %v1221
        %v4072 = vunpack.c.h.b16 %v1221
        %v4073 = vunpack.c.l.b16 %v1222
        %v4074 = vunpack.c.h.b16 %v1222
        %v4075 = vunpack.c.l.b16 %v1223
        %v4076 = vunpack.c.h.b16 %v1223
        %v4077 = vunpack.c.l.b16 %v1224
        %v4078 = vunpack.c.h.b16 %v1224
        %v4079 = vunpack.c.l.b16 %v1225
        %v4080 = vunpack.c.h.b16 %v1225
        %v4081 = vunpack.c.l.b16 %v1226
        %v4082 = vunpack.c.h.b16 %v1226
        %v4083 = vunpack.c.l.b16 %v1227
        %v4084 = vunpack.c.h.b16 %v1227
        %v4085 = vunpack.c.l.b16 %v1228
        %v4086 = vunpack.c.h.b16 %v1228
        %v4087 = vunpack.c.l.b16 %v1229
        %v4088 = vunpack.c.h.b16 %v1229
        %v4089 = vunpack.c.l.b16 %v1230
        %v4090 = vunpack.c.h.b16 %v1230
        %v4091 = vunpack.c.l.b16 %v1231
        %v4092 = vunpack.c.h.b16 %v1231
        %v4093 = vunpack.c.l.b16 %v1232
        %v4094 = vunpack.c.h.b16 %v1232
        %v4095 = vunpack.c.l.b16 %v1233
        %v4096 = vunpack.c.h.b16 %v1233
        %v4097 = vunpack.c.l.b16 %v1234
        %v4098 = vunpack.c.h.b16 %v1234
        %v4099 = vunpack.c.l.b16 %v1235
        %v4100 = vunpack.c.h.b16 %v1235
        %v4101 = vunpack.c.l.b16 %v1236
        %v4102 = vunpack.c.h.b16 %v1236
        %v4103 = vunpack.c.l.b16 %v1237
        %v4104 = vunpack.c.h.b16 %v1237
        %v4105 = vunpack.c.l.b16 %v1238
        %v4106 = vunpack.c.h.b16 %v1238
        %v4107 = vunpack.c.l.b16 %v1239
        %v4108 = vunpack.c.h.b16 %v1239
        %v4109 = vunpack.c.l.b16 %v1240
        %v4110 = vunpack.c.h.b16 %v1240
        %v4111 = vunpack.c.l.b16 %v1241
        %v4112 = vunpack.c.h.b16 %v1241
        %v4113 = vunpack.c.l.b16 %v1242
        %v4114 = vunpack.c.h.b16 %v1242
        %v4115 = vunpack.c.l.b16 %v1243
        %v4116 = vunpack.c.h.b16 %v1243
        %v4117 = vunpack.c.l.b16 %v1244
        %v4118 = vunpack.c.h.b16 %v1244
        %v4119 = vunpack.c.l.b16 %v1245
        %v4120 = vunpack.c.h.b16 %v1245
        %v4121 = vunpack.c.l.b16 %v1246
        %v4122 = vunpack.c.h.b16 %v1246
        %v4123 = vunpack.c.l.b16 %v1247
        %v4124 = vunpack.c.h.b16 %v1247
        %v4125 = vunpack.c.l.b16 %v1248
        %v4126 = vunpack.c.h.b16 %v1248
        %v4127 = vunpack.c.l.b16 %v1249
        %v4128 = vunpack.c.h.b16 %v1249
        %v4129 = vunpack.c.l.b16 %v1250
        %v4130 = vunpack.c.h.b16 %v1250
        %v4131 = vunpack.c.l.b16 %v1251
        %v4132 = vunpack.c.h.b16 %v1251
        %v4133 = vunpack.c.l.b16 %v1252
        %v4134 = vunpack.c.h.b16 %v1252
        %v4135 = vunpack.c.l.b16 %v1253
        %v4136 = vunpack.c.h.b16 %v1253
        %v4137 = vunpack.c.l.b16 %v1254
        %v4138 = vunpack.c.h.b16 %v1254
        %v4139 = vunpack.c.l.b16 %v1255
        %v4140 = vunpack.c.h.b16 %v1255
        %v4141 = vunpack.c.l.b16 %v1256
        %v4142 = vunpack.c.h.b16 %v1256
        %v4143 = vunpack.c.l.b16 %v1257
        %v4144 = vunpack.c.h.b16 %v1257
        %v4145 = vunpack.c.l.b16 %v1258
        %v4146 = vunpack.c.h.b16 %v1258
        %v4147 = vunpack.c.l.b16 %v1259
        %v4148 = vunpack.c.h.b16 %v1259
        %v4149 = vunpack.c.l.b16 %v1260
        %v4150 = vunpack.c.h.b16 %v1260
        %v4151 = vunpack.c.l.b16 %v1261
        %v4152 = vunpack.c.h.b16 %v1261
        %v4153 = vunpack.c.l.b16 %v1262
        %v4154 = vunpack.c.h.b16 %v1262
        %v4155 = vunpack.c.l.b16 %v1263
        %v4156 = vunpack.c.h.b16 %v1263
        %v4157 = vunpack.c.l.b16 %v1264
        %v4158 = vunpack.c.h.b16 %v1264
        %v4159 = vunpack.c.l.b16 %v1265
        %v4160 = vunpack.c.h.b16 %v1265
        %v4161 = vunpack.c.l.b16 %v1266
        %v4162 = vunpack.c.h.b16 %v1266
        %v4163 = vunpack.c.l.b16 %v1267
        %v4164 = vunpack.c.h.b16 %v1267
        %v4165 = vunpack.c.l.b16 %v1268
        %v4166 = vunpack.c.h.b16 %v1268
        %v4167 = vunpack.c.l.b16 %v1269
        %v4168 = vunpack.c.h.b16 %v1269
        %v4169 = vunpack.c.l.b16 %v1270
        %v4170 = vunpack.c.h.b16 %v1270
        %v4171 = vunpack.c.l.b16 %v1271
        %v4172 = vunpack.c.h.b16 %v1271
        %v4173 = vunpack.c.l.b16 %v1272
        %v4174 = vunpack.c.h.b16 %v1272
        %v4175 = vunpack.c.l.b16 %v1273
        %v4176 = vunpack.c.h.b16 %v1273
        %v4177 = vunpack.c.l.b16 %v1274
        %v4178 = vunpack.c.h.b16 %v1274
        %v4179 = vunpack.c.l.b16 %v1275
        %v4180 = vunpack.c.h.b16 %v1275
        %v4181 = vunpack.c.l.b16 %v1276
        %v4182 = vunpack.c.h.b16 %v1276
        %v4183 = vunpack.c.l.b16 %v1277
        %v4184 = vunpack.c.h.b16 %v1277
        %v4185 = vunpack.c.l.b16 %v1278
        %v4186 = vunpack.c.h.b16 %v1278
        %v4187 = vunpack.c.l.b16 %v1279
        %v4188 = vunpack.c.h.b16 %v1279
        %v4189 = vunpack.c.l.b16 %v1280
        %v4190 = vunpack.c.h.b16 %v1280
        %v4191 = vunpack.c.l.b16 %v1281
        %v4192 = vunpack.c.h.b16 %v1281
        %v4193 = vunpack.c.l.b16 %v1282
        %v4194 = vunpack.c.h.b16 %v1282
        %v4195 = vunpack.c.l.b16 %v1283
        %v4196 = vunpack.c.h.b16 %v1283
        %v4197 = vunpack.c.l.b16 %v1284
        %v4198 = vunpack.c.h.b16 %v1284
        %v4199 = vunpack.c.l.b16 %v1285
        %v4200 = vunpack.c.h.b16 %v1285
        %v4201 = vunpack.c.l.b16 %v1286
        %v4202 = vunpack.c.h.b16 %v1286
        %v4203 = vunpack.c.l.b16 %v1287
        %v4204 = vunpack.c.h.b16 %v1287
        %v4205 = vunpack.c.l.b16 %v1288
        %v4206 = vunpack.c.h.b16 %v1288
        %v4207 = vunpack.c.l.b16 %v1289
        %v4208 = vunpack.c.h.b16 %v1289
        %v4209 = vunpack.c.l.b16 %v1290
        %v4210 = vunpack.c.h.b16 %v1290
        %v4211 = vunpack.c.l.b16 %v1291
        %v4212 = vunpack.c.h.b16 %v1291
        %v4213 = vunpack.c.l.b16 %v1292
        %v4214 = vunpack.c.h.b16 %v1292
        %v4215 = vunpack.c.l.b16 %v1293
        %v4216 = vunpack.c.h.b16 %v1293
        %v4217 = vunpack.c.l.b16 %v1294
        %v4218 = vunpack.c.h.b16 %v1294
        %v4219 = vunpack.c.l.b16 %v1295
        %v4220 = vunpack.c.h.b16 %v1295
        %v4221 = vunpack.c.l.b16 %v1296
        %v4222 = vunpack.c.h.b16 %v1296
        %v4223 = vunpack.c.l.b16 %v1297
        %v4224 = vunpack.c.h.b16 %v1297
        %v4225 = vunpack.c.l.b16 %v1298
        %v4226 = vunpack.c.h.b16 %v1298
        %v4227 = vunpack.c.l.b16 %v1299
        %v4228 = vunpack.c.h.b16 %v1299
        %v4229 = vunpack.c.l.b16 %v1300
        %v4230 = vunpack.c.h.b16 %v1300
        %v4231 = vunpack.c.l.b16 %v1301
        %v4232 = vunpack.c.h.b16 %v1301
        %v4233 = vunpack.c.l.b16 %v1302
        %v4234 = vunpack.c.h.b16 %v1302
        %v4235 = vunpack.c.l.b16 %v1303
        %v4236 = vunpack.c.h.b16 %v1303
        %v4237 = vunpack.c.l.b16 %v1304
        %v4238 = vunpack.c.h.b16 %v1304
        %v4239 = vunpack.c.l.b16 %v1305
        %v4240 = vunpack.c.h.b16 %v1305
        %v4241 = vunpack.c.l.b16 %v1306
        %v4242 = vunpack.c.h.b16 %v1306
        %v4243 = vunpack.c.l.b16 %v1307
        %v4244 = vunpack.c.h.b16 %v1307
        %v4245 = vunpack.c.l.b16 %v1308
        %v4246 = vunpack.c.h.b16 %v1308
        %v4247 = vunpack.c.l.b16 %v1309
        %v4248 = vunpack.c.h.b16 %v1309
        %v4249 = vunpack.c.l.b16 %v1310
        %v4250 = vunpack.c.h.b16 %v1310
        %v4251 = vunpack.c.l.b16 %v1311
        %v4252 = vunpack.c.h.b16 %v1311
        %v4253 = vunpack.c.l.b16 %v1312
        %v4254 = vunpack.c.h.b16 %v1312
        %v4255 = vunpack.c.l.b16 %v1313
        %v4256 = vunpack.c.h.b16 %v1313
        %v4257 = vunpack.c.l.b16 %v1314
        %v4258 = vunpack.c.h.b16 %v1314
        %v4259 = vunpack.c.l.b16 %v1315
        %v4260 = vunpack.c.h.b16 %v1315
        %v4261 = vunpack.c.l.b16 %v1316
        %v4262 = vunpack.c.h.b16 %v1316
        %v4263 = vunpack.c.l.b16 %v1317
        %v4264 = vunpack.c.h.b16 %v1317
        %v4265 = vunpack.c.l.b16 %v1318
        %v4266 = vunpack.c.h.b16 %v1318
        %v4267 = vunpack.c.l.b16 %v1319
        %v4268 = vunpack.c.h.b16 %v1319
        %v4269 = vunpack.c.l.b16 %v1320
        %v4270 = vunpack.c.h.b16 %v1320
        %v4271 = vunpack.c.l.b16 %v1321
        %v4272 = vunpack.c.h.b16 %v1321
        %v4273 = vunpack.c.l.b16 %v1322
        %v4274 = vunpack.c.h.b16 %v1322
        %v4275 = vunpack.c.l.b16 %v1323
        %v4276 = vunpack.c.h.b16 %v1323
        %v4277 = vunpack.c.l.b16 %v1324
        %v4278 = vunpack.c.h.b16 %v1324
        %v4279 = vunpack.c.l.b16 %v1325
        %v4280 = vunpack.c.h.b16 %v1325
        %v4281 = vunpack.c.l.b16 %v1326
        %v4282 = vunpack.c.h.b16 %v1326
        %v4283 = vunpack.c.l.b16 %v1327
        %v4284 = vunpack.c.h.b16 %v1327
        %v4285 = vunpack.c.l.b16 %v1328
        %v4286 = vunpack.c.h.b16 %v1328
        %v4287 = vunpack.c.l.b16 %v1329
        %v4288 = vunpack.c.h.b16 %v1329
        %v4289 = vunpack.c.l.b16 %v1330
        %v4290 = vunpack.c.h.b16 %v1330
        %v4291 = vunpack.c.l.b16 %v1331
        %v4292 = vunpack.c.h.b16 %v1331
        %v4293 = vunpack.c.l.b16 %v1332
        %v4294 = vunpack.c.h.b16 %v1332
        %v4295 = vunpack.c.l.b16 %v1333
        %v4296 = vunpack.c.h.b16 %v1333
        %v4297 = vunpack.c.l.b16 %v1334
        %v4298 = vunpack.c.h.b16 %v1334
        %v4299 = vunpack.c.l.b16 %v1335
        %v4300 = vunpack.c.h.b16 %v1335
        %v4301 = vunpack.c.l.b16 %v1336
        %v4302 = vunpack.c.h.b16 %v1336
        %v4303 = vunpack.c.l.b16 %v1337
        %v4304 = vunpack.c.h.b16 %v1337
        %v4305 = vunpack.c.l.b16 %v1338
        %v4306 = vunpack.c.h.b16 %v1338
        %v4307 = vunpack.c.l.b16 %v1339
        %v4308 = vunpack.c.h.b16 %v1339
        %v4309 = vunpack.c.l.b16 %v1340
        %v4310 = vunpack.c.h.b16 %v1340
        %v4311 = vunpack.c.l.b16 %v1341
        %v4312 = vunpack.c.h.b16 %v1341
        %v4313 = vunpack.c.l.b16 %v1342
        %v4314 = vunpack.c.h.b16 %v1342
        %v4315 = vunpack.c.l.b16 %v1343
        %v4316 = vunpack.c.h.b16 %v1343
        %v4317 = vunpack.c.l.b16 %v1344
        %v4318 = vunpack.c.h.b16 %v1344
        %v4319 = vunpack.c.l.b16 %v1345
        %v4320 = vunpack.c.h.b16 %v1345
        %v4321 = vunpack.c.l.b16 %v1346
        %v4322 = vunpack.c.h.b16 %v1346
        %v4323 = vunpack.c.l.b16 %v1347
        %v4324 = vunpack.c.h.b16 %v1347
        %v4325 = vunpack.c.l.b16 %v1348
        %v4326 = vunpack.c.h.b16 %v1348
        %v4327 = vunpack.c.l.b16 %v1349
        %v4328 = vunpack.c.h.b16 %v1349
        %v4329 = vunpack.c.l.b16 %v1350
        %v4330 = vunpack.c.h.b16 %v1350
        %v4331 = vunpack.c.l.b16 %v1351
        %v4332 = vunpack.c.h.b16 %v1351
        %v4333 = vunpack.c.l.b16 %v1352
        %v4334 = vunpack.c.h.b16 %v1352
        %v4335 = vunpack.c.l.b16 %v1353
        %v4336 = vunpack.c.h.b16 %v1353
        %v4337 = vunpack.c.l.b16 %v1354
        %v4338 = vunpack.c.h.b16 %v1354
        %v4339 = vunpack.c.l.b16 %v1355
        %v4340 = vunpack.c.h.b16 %v1355
        %v4341 = vunpack.c.l.b16 %v1356
        %v4342 = vunpack.c.h.b16 %v1356
        %v4343 = vunpack.c.l.b16 %v1357
        %v4344 = vunpack.c.h.b16 %v1357
        %v4345 = vunpack.c.l.b16 %v1358
        %v4346 = vunpack.c.h.b16 %v1358
        %v4347 = vunpack.c.l.b16 %v1359
        %v4348 = vunpack.c.h.b16 %v1359
        %v4349 = vunpack.c.l.b16 %v1360
        %v4350 = vunpack.c.h.b16 %v1360
        %v4351 = vunpack.c.l.b16 %v1361
        %v4352 = vunpack.c.h.b16 %v1361
        %v4353 = vunpack.c.l.b16 %v1362
        %v4354 = vunpack.c.h.b16 %v1362
        %v4355 = vunpack.c.l.b16 %v1363
        %v4356 = vunpack.c.h.b16 %v1363
        %v4357 = vunpack.c.l.b16 %v1364
        %v4358 = vunpack.c.h.b16 %v1364
        %v4359 = vunpack.c.l.b16 %v1365
        %v4360 = vunpack.c.h.b16 %v1365
        %v4361 = vunpack.c.l.b16 %v1366
        %v4362 = vunpack.c.h.b16 %v1366
        %v4363 = vunpack.c.l.b16 %v1367
        %v4364 = vunpack.c.h.b16 %v1367
        %v4365 = vunpack.c.l.b16 %v1368
        %v4366 = vunpack.c.h.b16 %v1368
        %v4367 = vunpack.c.l.b16 %v1369
        %v4368 = vunpack.c.h.b16 %v1369
        %v4369 = vunpack.c.l.b16 %v1370
        %v4370 = vunpack.c.h.b16 %v1370
        %v4371 = vunpack.c.l.b16 %v1371
        %v4372 = vunpack.c.h.b16 %v1371
        %v4373 = vunpack.c.l.b16 %v1372
        %v4374 = vunpack.c.h.b16 %v1372
        %v4375 = vunpack.c.l.b16 %v1373
        %v4376 = vunpack.c.h.b16 %v1373
        %v4377 = vunpack.c.l.b16 %v1374
        %v4378 = vunpack.c.h.b16 %v1374
        %v4379 = vunpack.c.l.b16 %v1375
        %v4380 = vunpack.c.h.b16 %v1375
        %v4381 = vunpack.c.l.b16 %v1376
        %v4382 = vunpack.c.h.b16 %v1376
        %v4383 = vunpack.c.l.b16 %v1377
        %v4384 = vunpack.c.h.b16 %v1377
        %v4385 = vunpack.c.l.b16 %v1378
        %v4386 = vunpack.c.h.b16 %v1378
        %v4387 = vunpack.c.l.b16 %v1379
        %v4388 = vunpack.c.h.b16 %v1379
        %v4389 = vunpack.c.l.b16 %v1380
        %v4390 = vunpack.c.h.b16 %v1380
        %v4391 = vunpack.c.l.b16 %v1381
        %v4392 = vunpack.c.h.b16 %v1381
        %v4393 = vunpack.c.l.b16 %v1382
        %v4394 = vunpack.c.h.b16 %v1382
        %v4395 = vunpack.c.l.b16 %v1383
        %v4396 = vunpack.c.h.b16 %v1383
        %v4397 = vunpack.c.l.b16 %v1384
        %v4398 = vunpack.c.h.b16 %v1384
        %v4399 = vunpack.c.l.b16 %v1385
        %v4400 = vunpack.c.h.b16 %v1385
        %v4401 = vunpack.c.l.b16 %v1386
        %v4402 = vunpack.c.h.b16 %v1386
        %v4403 = vunpack.c.l.b16 %v1387
        %v4404 = vunpack.c.h.b16 %v1387
        %v4405 = vunpack.c.l.b16 %v1388
        %v4406 = vunpack.c.h.b16 %v1388
        %v4407 = vunpack.c.l.b16 %v1389
        %v4408 = vunpack.c.h.b16 %v1389
        %v4409 = vunpack.c.l.b16 %v1390
        %v4410 = vunpack.c.h.b16 %v1390
        %v4411 = vunpack.c.l.b16 %v1391
        %v4412 = vunpack.c.h.b16 %v1391
        %v4413 = vunpack.c.l.b16 %v1392
        %v4414 = vunpack.c.h.b16 %v1392
        %v4415 = vunpack.c.l.b16 %v1393
        %v4416 = vunpack.c.h.b16 %v1393
        %v4417 = vunpack.c.l.b16 %v1394
        %v4418 = vunpack.c.h.b16 %v1394
        %v4419 = vunpack.c.l.b16 %v1395
        %v4420 = vunpack.c.h.b16 %v1395
        %v4421 = vunpack.c.l.b16 %v1396
        %v4422 = vunpack.c.h.b16 %v1396
        %v4423 = vunpack.c.l.b16 %v1397
        %v4424 = vunpack.c.h.b16 %v1397
        %v4425 = vunpack.c.l.b16 %v1398
        %v4426 = vunpack.c.h.b16 %v1398
        %v4427 = vunpack.c.l.b16 %v1399
        %v4428 = vunpack.c.h.b16 %v1399
        %v4429 = vunpack.c.l.b16 %v1400
        %v4430 = vunpack.c.h.b16 %v1400
        %v4431 = vunpack.c.l.b16 %v1401
        %v4432 = vunpack.c.h.b16 %v1401
        %v4433 = vunpack.c.l.b16 %v1402
        %v4434 = vunpack.c.h.b16 %v1402
        %v4435 = vunpack.c.l.b16 %v1403
        %v4436 = vunpack.c.h.b16 %v1403
        %v4437 = vunpack.c.l.b16 %v1404
        %v4438 = vunpack.c.h.b16 %v1404
        %v4439 = vunpack.c.l.b16 %v1405
        %v4440 = vunpack.c.h.b16 %v1405
        %v4441 = vunpack.c.l.b16 %v1406
        %v4442 = vunpack.c.h.b16 %v1406
        %v4443 = vunpack.c.l.b16 %v1407
        %v4444 = vunpack.c.h.b16 %v1407
        %v4445 = vunpack.c.l.b16 %v1408
        %v4446 = vunpack.c.h.b16 %v1408
        %v4447 = vunpack.c.l.b16 %v1409
        %v4448 = vunpack.c.h.b16 %v1409
        %v4449 = vunpack.c.l.b16 %v1410
        %v4450 = vunpack.c.h.b16 %v1410
        %v4451 = vunpack.c.l.b16 %v1411
        %v4452 = vunpack.c.h.b16 %v1411
        %v4453 = vunpack.c.l.b16 %v1412
        %v4454 = vunpack.c.h.b16 %v1412
        %v4455 = vunpack.c.l.b16 %v1413
        %v4456 = vunpack.c.h.b16 %v1413
        %v4457 = vunpack.c.l.b16 %v1414
        %v4458 = vunpack.c.h.b16 %v1414
        %v4459 = vunpack.c.l.b16 %v1415
        %v4460 = vunpack.c.h.b16 %v1415
        %v4461 = vunpack.c.l.b16 %v1416
        %v4462 = vunpack.c.h.b16 %v1416
        %v4463 = vunpack.c.l.b16 %v1417
        %v4464 = vunpack.c.h.b16 %v1417
        %v4465 = vunpack.c.l.b16 %v1418
        %v4466 = vunpack.c.h.b16 %v1418
        %v4467 = vunpack.c.l.b16 %v1419
        %v4468 = vunpack.c.h.b16 %v1419
        %v4469 = vunpack.c.l.b16 %v1420
        %v4470 = vunpack.c.h.b16 %v1420
        %v4471 = vunpack.c.l.b16 %v1421
        %v4472 = vunpack.c.h.b16 %v1421
        %v4473 = vunpack.c.l.b16 %v1422
        %v4474 = vunpack.c.h.b16 %v1422
        %v4475 = vunpack.c.l.b16 %v1423
        %v4476 = vunpack.c.h.b16 %v1423
        %v4477 = vunpack.c.l.b16 %v1424
        %v4478 = vunpack.c.h.b16 %v1424
        %v4479 = vunpack.c.l.b16 %v1425
        %v4480 = vunpack.c.h.b16 %v1425
        %v4481 = vunpack.c.l.b16 %v1426
        %v4482 = vunpack.c.h.b16 %v1426
        %v4483 = vunpack.c.l.b16 %v1427
        %v4484 = vunpack.c.h.b16 %v1427
        %v4485 = vunpack.c.l.b16 %v1428
        %v4486 = vunpack.c.h.b16 %v1428
        %v4487 = vunpack.c.l.b16 %v1429
        %v4488 = vunpack.c.h.b16 %v1429
        %v4489 = vunpack.c.l.b16 %v1430
        %v4490 = vunpack.c.h.b16 %v1430
        %v4491 = vunpack.c.l.b16 %v1431
        %v4492 = vunpack.c.h.b16 %v1431
        %v4493 = vunpack.c.l.b16 %v1432
        %v4494 = vunpack.c.h.b16 %v1432
        %v4495 = vunpack.c.l.b16 %v1433
        %v4496 = vunpack.c.h.b16 %v1433
        %v4497 = vunpack.c.l.b16 %v1434
        %v4498 = vunpack.c.h.b16 %v1434
        %v4499 = vunpack.c.l.b16 %v1435
        %v4500 = vunpack.c.h.b16 %v1435
        %v4501 = vunpack.c.l.b16 %v1436
        %v4502 = vunpack.c.h.b16 %v1436
        %v4503 = vunpack.c.l.b16 %v1437
        %v4504 = vunpack.c.h.b16 %v1437
        %v4505 = vunpack.c.l.b16 %v1438
        %v4506 = vunpack.c.h.b16 %v1438
        %v4507 = vunpack.c.l.b16 %v1439
        %v4508 = vunpack.c.h.b16 %v1439
        %v4509 = vunpack.c.l.b16 %v1440
        %v4510 = vunpack.c.h.b16 %v1440
        %v4511 = vunpack.c.l.b16 %v1441
        %v4512 = vunpack.c.h.b16 %v1441
        %v4513 = vunpack.c.l.b16 %v1442
        %v4514 = vunpack.c.h.b16 %v1442
        %v4515 = vunpack.c.l.b16 %v1443
        %v4516 = vunpack.c.h.b16 %v1443
        %v4517 = vunpack.c.l.b16 %v1444
        %v4518 = vunpack.c.h.b16 %v1444
        %v4519 = vunpack.c.l.b16 %v1445
        %v4520 = vunpack.c.h.b16 %v1445
        %v4521 = vunpack.c.l.b16 %v1446
        %v4522 = vunpack.c.h.b16 %v1446
        %v4523 = vunpack.c.l.b16 %v1447
        %v4524 = vunpack.c.h.b16 %v1447
        %v4525 = vunpack.c.l.b16 %v1448
        %v4526 = vunpack.c.h.b16 %v1448
        %v4527 = vunpack.c.l.b16 %v1449
        %v4528 = vunpack.c.h.b16 %v1449
        %v4529 = vunpack.c.l.b16 %v1450
        %v4530 = vunpack.c.h.b16 %v1450
        %v4531 = vunpack.c.l.b16 %v1451
        %v4532 = vunpack.c.h.b16 %v1451
        %v4533 = vunpack.c.l.b16 %v1452
        %v4534 = vunpack.c.h.b16 %v1452
        %v4535 = vunpack.c.l.b16 %v1453
        %v4536 = vunpack.c.h.b16 %v1453
        %v4537 = vunpack.c.l.b16 %v1454
        %v4538 = vunpack.c.h.b16 %v1454
        %v4539 = vunpack.c.l.b16 %v1455
        %v4540 = vunpack.c.h.b16 %v1455
        %v4541 = vunpack.c.l.b16 %v1456
        %v4542 = vunpack.c.h.b16 %v1456
        %v4543 = vunpack.c.l.b16 %v1457
        %v4544 = vunpack.c.h.b16 %v1457
        %v4545 = vunpack.c.l.b16 %v1458
        %v4546 = vunpack.c.h.b16 %v1458
        %v4547 = vunpack.c.l.b16 %v1459
        %v4548 = vunpack.c.h.b16 %v1459
        %v4549 = vunpack.c.l.b16 %v1460
        %v4550 = vunpack.c.h.b16 %v1460
        %v4551 = vunpack.c.l.b16 %v1461
        %v4552 = vunpack.c.h.b16 %v1461
        %v4553 = vunpack.c.l.b16 %v1462
        %v4554 = vunpack.c.h.b16 %v1462
        %v4555 = vunpack.c.l.b16 %v1463
        %v4556 = vunpack.c.h.b16 %v1463
        %v4557 = vunpack.c.l.b16 %v1464
        %v4558 = vunpack.c.h.b16 %v1464
        %v4559 = vunpack.c.l.b16 %v1465
        %v4560 = vunpack.c.h.b16 %v1465
        %v4561 = vunpack.c.l.b16 %v1466
        %v4562 = vunpack.c.h.b16 %v1466
        %v4563 = vunpack.c.l.b16 %v1467
        %v4564 = vunpack.c.h.b16 %v1467
        %v4565 = vunpack.c.l.b16 %v1468
        %v4566 = vunpack.c.h.b16 %v1468
        %v4567 = vunpack.c.l.b16 %v1469
        %v4568 = vunpack.c.h.b16 %v1469
        %v4569 = vunpack.c.l.b16 %v1470
        %v4570 = vunpack.c.h.b16 %v1470
        %v4571 = vunpack.c.l.b16 %v1471
        %v4572 = vunpack.c.h.b16 %v1471
        %v4573 = vunpack.c.l.b16 %v1472
        %v4574 = vunpack.c.h.b16 %v1472
        %v4575 = vunpack.c.l.b16 %v1473
        %v4576 = vunpack.c.h.b16 %v1473
        %v4577 = vunpack.c.l.b16 %v1474
        %v4578 = vunpack.c.h.b16 %v1474
        %v4579 = vunpack.c.l.b16 %v1475
        %v4580 = vunpack.c.h.b16 %v1475
        %v4581 = vunpack.c.l.b16 %v1476
        %v4582 = vunpack.c.h.b16 %v1476
        %v4583 = vunpack.c.l.b16 %v1477
        %v4584 = vunpack.c.h.b16 %v1477
        %v4585 = vunpack.c.l.b16 %v1478
        %v4586 = vunpack.c.h.b16 %v1478
        %v4587 = vunpack.c.l.b16 %v1479
        %v4588 = vunpack.c.h.b16 %v1479
        %v4589 = vunpack.c.l.b16 %v1480
        %v4590 = vunpack.c.h.b16 %v1480
        %v4591 = vunpack.c.l.b16 %v1481
        %v4592 = vunpack.c.h.b16 %v1481
        %v4593 = vunpack.c.l.b16 %v1482
        %v4594 = vunpack.c.h.b16 %v1482
        %v4595 = vunpack.c.l.b16 %v1483
        %v4596 = vunpack.c.h.b16 %v1483
        %v4597 = vunpack.c.l.b16 %v1484
        %v4598 = vunpack.c.h.b16 %v1484
        %v4599 = vunpack.c.l.b16 %v1485
        %v4600 = vunpack.c.h.b16 %v1485
        %v4601 = vunpack.c.l.b16 %v1486
        %v4602 = vunpack.c.h.b16 %v1486
        %v4603 = vunpack.c.l.b16 %v1487
        %v4604 = vunpack.c.h.b16 %v1487
        %v4605 = vunpack.c.l.b16 %v1488
        %v4606 = vunpack.c.h.b16 %v1488
        %v4607 = vunpack.c.l.b16 %v1489
        %v4608 = vunpack.c.h.b16 %v1489
        %v4609 = vunpack.c.l.b16 %v1490
        %v4610 = vunpack.c.h.b16 %v1490
        %v4611 = vunpack.c.l.b16 %v1491
        %v4612 = vunpack.c.h.b16 %v1491
        %v4613 = vunpack.c.l.b16 %v1492
        %v4614 = vunpack.c.h.b16 %v1492
        %v4615 = vunpack.c.l.b16 %v1493
        %v4616 = vunpack.c.h.b16 %v1493
        %v4617 = vunpack.c.l.b16 %v1494
        %v4618 = vunpack.c.h.b16 %v1494
        %v4619 = vunpack.c.l.b16 %v1495
        %v4620 = vunpack.c.h.b16 %v1495
        %v4621 = vunpack.c.l.b16 %v1496
        %v4622 = vunpack.c.h.b16 %v1496
        %v4623 = vunpack.c.l.b16 %v1497
        %v4624 = vunpack.c.h.b16 %v1497
        %v4625 = vunpack.c.l.b16 %v1498
        %v4626 = vunpack.c.h.b16 %v1498
        %v4627 = vunpack.c.l.b16 %v1499
        %v4628 = vunpack.c.h.b16 %v1499
        %v4629 = vunpack.c.l.b16 %v1500
        %v4630 = vunpack.c.h.b16 %v1500
        %v4631 = vunpack.c.l.b16 %v1501
        %v4632 = vunpack.c.h.b16 %v1501
        %v4633 = vunpack.c.l.b16 %v1502
        %v4634 = vunpack.c.h.b16 %v1502
        %v4635 = vunpack.c.l.b16 %v1503
        %v4636 = vunpack.c.h.b16 %v1503
        %v4637 = vunpack.c.l.b16 %v1504
        %v4638 = vunpack.c.h.b16 %v1504
        %v4639 = vunpack.c.l.b16 %v1505
        %v4640 = vunpack.c.h.b16 %v1505
        %v4641 = vunpack.c.l.b16 %v1506
        %v4642 = vunpack.c.h.b16 %v1506
        %v4643 = vunpack.c.l.b16 %v1507
        %v4644 = vunpack.c.h.b16 %v1507
        %v4645 = vunpack.c.l.b16 %v1508
        %v4646 = vunpack.c.h.b16 %v1508
        %v4647 = vunpack.c.l.b16 %v1509
        %v4648 = vunpack.c.h.b16 %v1509
        %v4649 = vunpack.c.l.b16 %v1510
        %v4650 = vunpack.c.h.b16 %v1510
        %v4651 = vunpack.c.l.b16 %v1511
        %v4652 = vunpack.c.h.b16 %v1511
        %v4653 = vunpack.c.l.b16 %v1512
        %v4654 = vunpack.c.h.b16 %v1512
        %v4655 = vunpack.c.l.b16 %v1513
        %v4656 = vunpack.c.h.b16 %v1513
        %v4657 = vunpack.c.l.b16 %v1514
        %v4658 = vunpack.c.h.b16 %v1514
        %v4659 = vunpack.c.l.b16 %v1515
        %v4660 = vunpack.c.h.b16 %v1515
        %v4661 = vunpack.c.l.b16 %v1516
        %v4662 = vunpack.c.h.b16 %v1516
        %v4663 = vunpack.c.l.b16 %v1517
        %v4664 = vunpack.c.h.b16 %v1517
        %v4665 = vunpack.c.l.b16 %v1518
        %v4666 = vunpack.c.h.b16 %v1518
        %v4667 = vunpack.c.l.b16 %v1519
        %v4668 = vunpack.c.h.b16 %v1519
        %v4669 = vunpack.c.l.b16 %v1520
        %v4670 = vunpack.c.h.b16 %v1520
        %v4671 = vunpack.c.l.b16 %v1521
        %v4672 = vunpack.c.h.b16 %v1521
        %v4673 = vunpack.c.l.b16 %v1522
        %v4674 = vunpack.c.h.b16 %v1522
        %v4675 = vunpack.c.l.b16 %v1523
        %v4676 = vunpack.c.h.b16 %v1523
        %v4677 = vunpack.c.l.b16 %v1524
        %v4678 = vunpack.c.h.b16 %v1524
        %v4679 = vunpack.c.l.b16 %v1525
        %v4680 = vunpack.c.h.b16 %v1525
        %v4681 = vunpack.c.l.b16 %v1526
        %v4682 = vunpack.c.h.b16 %v1526
        %v4683 = vunpack.c.l.b16 %v1527
        %v4684 = vunpack.c.h.b16 %v1527
        %v4685 = vunpack.c.l.b16 %v1528
        %v4686 = vunpack.c.h.b16 %v1528
        %v4687 = vunpack.c.l.b16 %v1529
        %v4688 = vunpack.c.h.b16 %v1529
        %v4689 = vunpack.c.l.b16 %v1530
        %v4690 = vunpack.c.h.b16 %v1530
        %v4691 = vunpack.c.l.b16 %v1531
        %v4692 = vunpack.c.h.b16 %v1531
        %v4693 = vunpack.c.l.b16 %v1532
        %v4694 = vunpack.c.h.b16 %v1532
        %v4695 = vunpack.c.l.b16 %v1533
        %v4696 = vunpack.c.h.b16 %v1533
        %v4697 = vunpack.c.l.b16 %v1534
        %v4698 = vunpack.c.h.b16 %v1534
        %v4699 = vunpack.c.l.b16 %v1535
        %v4700 = vunpack.c.h.b16 %v1535
        %v4701 = vunpack.c.l.b16 %v1536
        %v4702 = vunpack.c.h.b16 %v1536
        %v4703 = vunpack.c.l.b16 %v1537
        %v4704 = vunpack.c.h.b16 %v1537
        %v4705 = vunpack.c.l.b16 %v1538
        %v4706 = vunpack.c.h.b16 %v1538
        %v4707 = vunpack.c.l.b16 %v1539
        %v4708 = vunpack.c.h.b16 %v1539
        %v4709 = vunpack.c.l.b16 %v1540
        %v4710 = vunpack.c.h.b16 %v1540
        %v4711 = vunpack.c.l.b16 %v1541
        %v4712 = vunpack.c.h.b16 %v1541
        %v4713 = vunpack.c.l.b16 %v1542
        %v4714 = vunpack.c.h.b16 %v1542
        %v4715 = vunpack.c.l.b16 %v1543
        %v4716 = vunpack.c.h.b16 %v1543
        %v4717 = vunpack.c.l.b16 %v1544
        %v4718 = vunpack.c.h.b16 %v1544
        %v4719 = vunpack.c.l.b16 %v1545
        %v4720 = vunpack.c.h.b16 %v1545
        %v4721 = vunpack.c.l.b16 %v1546
        %v4722 = vunpack.c.h.b16 %v1546
        %v4723 = vunpack.c.l.b16 %v1547
        %v4724 = vunpack.c.h.b16 %v1547
        %v4725 = vunpack.c.l.b16 %v1548
        %v4726 = vunpack.c.h.b16 %v1548
        %v4727 = vunpack.c.l.b16 %v1549
        %v4728 = vunpack.c.h.b16 %v1549
        %v4729 = vunpack.c.l.b16 %v1550
        %v4730 = vunpack.c.h.b16 %v1550
        %v4731 = vunpack.c.l.b16 %v1551
        %v4732 = vunpack.c.h.b16 %v1551
        %v4733 = vunpack.c.l.b16 %v1552
        %v4734 = vunpack.c.h.b16 %v1552
        %v4735 = vunpack.c.l.b16 %v1553
        %v4736 = vunpack.c.h.b16 %v1553
        %v4737 = vunpack.c.l.b16 %v1554
        %v4738 = vunpack.c.h.b16 %v1554
        %v4739 = vunpack.c.l.b16 %v1555
        %v4740 = vunpack.c.h.b16 %v1555
        %v4741 = vunpack.c.l.b16 %v1556
        %v4742 = vunpack.c.h.b16 %v1556
        %v4743 = vunpack.c.l.b16 %v1557
        %v4744 = vunpack.c.h.b16 %v1557
        %v4745 = vunpack.c.l.b16 %v1558
        %v4746 = vunpack.c.h.b16 %v1558
        %v4747 = vpack.c.b16 %v2707, %v2699
        %v4748 = vpack.c.b16 %v2708, %v2700
        %v4749 = vpack.c.b16 %v2709, %v2701
        %v4750 = vpack.c.b16 %v2710, %v2702
        %v4751 = vpack.c.b16 %v2711, %v2703
        %v4752 = vpack.c.b16 %v2712, %v2704
        %v4753 = vpack.c.b16 %v2713, %v2705
        %v4754 = vpack.c.b16 %v2714, %v2706
        %v4755 = vpack.c.b16 %v2723, %v2715
        %v4756 = vpack.c.b16 %v2724, %v2716
        %v4757 = vpack.c.b16 %v2725, %v2717
        %v4758 = vpack.c.b16 %v2726, %v2718
        %v4759 = vpack.c.b16 %v2727, %v2719
        %v4760 = vpack.c.b16 %v2728, %v2720
        %v4761 = vpack.c.b16 %v2729, %v2721
        %v4762 = vpack.c.b16 %v2730, %v2722
        %v4763 = vpack.c.b16 %v2739, %v2731
        %v4764 = vpack.c.b16 %v2740, %v2732
        %v4765 = vpack.c.b16 %v2741, %v2733
        %v4766 = vpack.c.b16 %v2742, %v2734
        %v4767 = vpack.c.b16 %v2743, %v2735
        %v4768 = vpack.c.b16 %v2744, %v2736
        %v4769 = vpack.c.b16 %v2745, %v2737
        %v4770 = vpack.c.b16 %v2746, %v2738
        %v4771 = vpack.c.b16 %v2755, %v2747
        %v4772 = vpack.c.b16 %v2756, %v2748
        %v4773 = vpack.c.b16 %v2757, %v2749
        %v4774 = vpack.c.b16 %v2758, %v2750
        %v4775 = vpack.c.b16 %v2759, %v2751
        %v4776 = vpack.c.b16 %v2760, %v2752
        %v4777 = vpack.c.b16 %v2761, %v2753
        %v4778 = vpack.c.b16 %v2762, %v2754
        %v4779 = vpack.c.b16 %v2771, %v2763
        %v4780 = vpack.c.b16 %v2772, %v2764
        %v4781 = vpack.c.b16 %v2773, %v2765
        %v4782 = vpack.c.b16 %v2774, %v2766
        %v4783 = vpack.c.b16 %v2775, %v2767
        %v4784 = vpack.c.b16 %v2776, %v2768
        %v4785 = vpack.c.b16 %v2777, %v2769
        %v4786 = vpack.c.b16 %v2778, %v2770
        %v4787 = vpack.c.b16 %v2787, %v2779
        %v4788 = vpack.c.b16 %v2788, %v2780
        %v4789 = vpack.c.b16 %v2789, %v2781
        %v4790 = vpack.c.b16 %v2790, %v2782
        %v4791 = vpack.c.b16 %v2791, %v2783
        %v4792 = vpack.c.b16 %v2792, %v2784
        %v4793 = vpack.c.b16 %v2793, %v2785
        %v4794 = vpack.c.b16 %v2794, %v2786
        %v4795 = vpack.c.b16 %v2803, %v2795
        %v4796 = vpack.c.b16 %v2804, %v2796
        %v4797 = vpack.c.b16 %v2805, %v2797
        %v4798 = vpack.c.b16 %v2806, %v2798
        %v4799 = vpack.c.b16 %v2807, %v2799
        %v4800 = vpack.c.b16 %v2808, %v2800
        %v4801 = vpack.c.b16 %v2809, %v2801
        %v4802 = vpack.c.b16 %v2810, %v2802
        %v4803 = vpack.c.b16 %v2819, %v2811
        %v4804 = vpack.c.b16 %v2820, %v2812
        %v4805 = vpack.c.b16 %v2821, %v2813
        %v4806 = vpack.c.b16 %v2822, %v2814
        %v4807 = vpack.c.b16 %v2823, %v2815
        %v4808 = vpack.c.b16 %v2824, %v2816
        %v4809 = vpack.c.b16 %v2825, %v2817
        %v4810 = vpack.c.b16 %v2826, %v2818
        %v4811 = vpack.c.b16 %v2835, %v2827
        %v4812 = vpack.c.b16 %v2836, %v2828
        %v4813 = vpack.c.b16 %v2837, %v2829
        %v4814 = vpack.c.b16 %v2838, %v2830
        %v4815 = vpack.c.b16 %v2839, %v2831
        %v4816 = vpack.c.b16 %v2840, %v2832
        %v4817 = vpack.c.b16 %v2841, %v2833
        %v4818 = vpack.c.b16 %v2842, %v2834
        %v4819 = vpack.c.b16 %v2851, %v2843
        %v4820 = vpack.c.b16 %v2852, %v2844
        %v4821 = vpack.c.b16 %v2853, %v2845
        %v4822 = vpack.c.b16 %v2854, %v2846
        %v4823 = vpack.c.b16 %v2855, %v2847
        %v4824 = vpack.c.b16 %v2856, %v2848
        %v4825 = vpack.c.b16 %v2857, %v2849
        %v4826 = vpack.c.b16 %v2858, %v2850
        %v4827 = vpack.c.b16 %v2867, %v2859
        %v4828 = vpack.c.b16 %v2868, %v2860
        %v4829 = vpack.c.b16 %v2869, %v2861
        %v4830 = vpack.c.b16 %v2870, %v2862
        %v4831 = vpack.c.b16 %v2871, %v2863
        %v4832 = vpack.c.b16 %v2872, %v2864
        %v4833 = vpack.c.b16 %v2873, %v2865
        %v4834 = vpack.c.b16 %v2874, %v2866
        %v4835 = vpack.c.b16 %v2883, %v2875
        %v4836 = vpack.c.b16 %v2884, %v2876
        %v4837 = vpack.c.b16 %v2885, %v2877
        %v4838 = vpack.c.b16 %v2886, %v2878
        %v4839 = vpack.c.b16 %v2887, %v2879
        %v4840 = vpack.c.b16 %v2888, %v2880
        %v4841 = vpack.c.b16 %v2889, %v2881
        %v4842 = vpack.c.b16 %v2890, %v2882
        %v4843 = vpack.c.b16 %v2899, %v2891
        %v4844 = vpack.c.b16 %v2900, %v2892
        %v4845 = vpack.c.b16 %v2901, %v2893
        %v4846 = vpack.c.b16 %v2902, %v2894
        %v4847 = vpack.c.b16 %v2903, %v2895
        %v4848 = vpack.c.b16 %v2904, %v2896
        %v4849 = vpack.c.b16 %v2905, %v2897
        %v4850 = vpack.c.b16 %v2906, %v2898
        %v4851 = vpack.c.b16 %v2915, %v2907
        %v4852 = vpack.c.b16 %v2916, %v2908
        %v4853 = vpack.c.b16 %v2917, %v2909
        %v4854 = vpack.c.b16 %v2918, %v2910
        %v4855 = vpack.c.b16 %v2919, %v2911
        %v4856 = vpack.c.b16 %v2920, %v2912
        %v4857 = vpack.c.b16 %v2921, %v2913
        %v4858 = vpack.c.b16 %v2922, %v2914
        %v4859 = vpack.c.b16 %v2931, %v2923
        %v4860 = vpack.c.b16 %v2932, %v2924
        %v4861 = vpack.c.b16 %v2933, %v2925
        %v4862 = vpack.c.b16 %v2934, %v2926
        %v4863 = vpack.c.b16 %v2935, %v2927
        %v4864 = vpack.c.b16 %v2936, %v2928
        %v4865 = vpack.c.b16 %v2937, %v2929
        %v4866 = vpack.c.b16 %v2938, %v2930
        %v4867 = vpack.c.b16 %v2947, %v2939
        %v4868 = vpack.c.b16 %v2948, %v2940
        %v4869 = vpack.c.b16 %v2949, %v2941
        %v4870 = vpack.c.b16 %v2950, %v2942
        %v4871 = vpack.c.b16 %v2951, %v2943
        %v4872 = vpack.c.b16 %v2952, %v2944
        %v4873 = vpack.c.b16 %v2953, %v2945
        %v4874 = vpack.c.b16 %v2954, %v2946
        %v4875 = vpack.c.b16 %v2963, %v2955
        %v4876 = vpack.c.b16 %v2964, %v2956
        %v4877 = vpack.c.b16 %v2965, %v2957
        %v4878 = vpack.c.b16 %v2966, %v2958
        %v4879 = vpack.c.b16 %v2967, %v2959
        %v4880 = vpack.c.b16 %v2968, %v2960
        %v4881 = vpack.c.b16 %v2969, %v2961
        %v4882 = vpack.c.b16 %v2970, %v2962
        %v4883 = vpack.c.b16 %v2979, %v2971
        %v4884 = vpack.c.b16 %v2980, %v2972
        %v4885 = vpack.c.b16 %v2981, %v2973
        %v4886 = vpack.c.b16 %v2982, %v2974
        %v4887 = vpack.c.b16 %v2983, %v2975
        %v4888 = vpack.c.b16 %v2984, %v2976
        %v4889 = vpack.c.b16 %v2985, %v2977
        %v4890 = vpack.c.b16 %v2986, %v2978
        %v4891 = vpack.c.b16 %v2995, %v2987
        %v4892 = vpack.c.b16 %v2996, %v2988
        %v4893 = vpack.c.b16 %v2997, %v2989
        %v4894 = vpack.c.b16 %v2998, %v2990
        %v4895 = vpack.c.b16 %v2999, %v2991
        %v4896 = vpack.c.b16 %v3000, %v2992
        %v4897 = vpack.c.b16 %v3001, %v2993
        %v4898 = vpack.c.b16 %v3002, %v2994
        %v4899 = vpack.c.b16 %v3011, %v3003
        %v4900 = vpack.c.b16 %v3012, %v3004
        %v4901 = vpack.c.b16 %v3013, %v3005
        %v4902 = vpack.c.b16 %v3014, %v3006
        %v4903 = vpack.c.b16 %v3015, %v3007
        %v4904 = vpack.c.b16 %v3016, %v3008
        %v4905 = vpack.c.b16 %v3017, %v3009
        %v4906 = vpack.c.b16 %v3018, %v3010
        %v4907 = vpack.c.b16 %v3027, %v3019
        %v4908 = vpack.c.b16 %v3028, %v3020
        %v4909 = vpack.c.b16 %v3029, %v3021
        %v4910 = vpack.c.b16 %v3030, %v3022
        %v4911 = vpack.c.b16 %v3031, %v3023
        %v4912 = vpack.c.b16 %v3032, %v3024
        %v4913 = vpack.c.b16 %v3033, %v3025
        %v4914 = vpack.c.b16 %v3034, %v3026
        %v4915 = vpack.c.b16 %v3043, %v3035
        %v4916 = vpack.c.b16 %v3044, %v3036
        %v4917 = vpack.c.b16 %v3045, %v3037
        %v4918 = vpack.c.b16 %v3046, %v3038
        %v4919 = vpack.c.b16 %v3047, %v3039
        %v4920 = vpack.c.b16 %v3048, %v3040
        %v4921 = vpack.c.b16 %v3049, %v3041
        %v4922 = vpack.c.b16 %v3050, %v3042
        %v4923 = vpack.c.b16 %v3059, %v3051
        %v4924 = vpack.c.b16 %v3060, %v3052
        %v4925 = vpack.c.b16 %v3061, %v3053
        %v4926 = vpack.c.b16 %v3062, %v3054
        %v4927 = vpack.c.b16 %v3063, %v3055
        %v4928 = vpack.c.b16 %v3064, %v3056
        %v4929 = vpack.c.b16 %v3065, %v3057
        %v4930 = vpack.c.b16 %v3066, %v3058
        %v4931 = vpack.c.b16 %v3075, %v3067
        %v4932 = vpack.c.b16 %v3076, %v3068
        %v4933 = vpack.c.b16 %v3077, %v3069
        %v4934 = vpack.c.b16 %v3078, %v3070
        %v4935 = vpack.c.b16 %v3079, %v3071
        %v4936 = vpack.c.b16 %v3080, %v3072
        %v4937 = vpack.c.b16 %v3081, %v3073
        %v4938 = vpack.c.b16 %v3082, %v3074
        %v4939 = vpack.c.b16 %v3091, %v3083
        %v4940 = vpack.c.b16 %v3092, %v3084
        %v4941 = vpack.c.b16 %v3093, %v3085
        %v4942 = vpack.c.b16 %v3094, %v3086
        %v4943 = vpack.c.b16 %v3095, %v3087
        %v4944 = vpack.c.b16 %v3096, %v3088
        %v4945 = vpack.c.b16 %v3097, %v3089
        %v4946 = vpack.c.b16 %v3098, %v3090
        %v4947 = vpack.c.b16 %v3107, %v3099
        %v4948 = vpack.c.b16 %v3108, %v3100
        %v4949 = vpack.c.b16 %v3109, %v3101
        %v4950 = vpack.c.b16 %v3110, %v3102
        %v4951 = vpack.c.b16 %v3111, %v3103
        %v4952 = vpack.c.b16 %v3112, %v3104
        %v4953 = vpack.c.b16 %v3113, %v3105
        %v4954 = vpack.c.b16 %v3114, %v3106
        %v4955 = vpack.c.b16 %v3123, %v3115
        %v4956 = vpack.c.b16 %v3124, %v3116
        %v4957 = vpack.c.b16 %v3125, %v3117
        %v4958 = vpack.c.b16 %v3126, %v3118
        %v4959 = vpack.c.b16 %v3127, %v3119
        %v4960 = vpack.c.b16 %v3128, %v3120
        %v4961 = vpack.c.b16 %v3129, %v3121
        %v4962 = vpack.c.b16 %v3130, %v3122
        %v4963 = vpack.c.b16 %v3139, %v3131
        %v4964 = vpack.c.b16 %v3140, %v3132
        %v4965 = vpack.c.b16 %v3141, %v3133
        %v4966 = vpack.c.b16 %v3142, %v3134
        %v4967 = vpack.c.b16 %v3143, %v3135
        %v4968 = vpack.c.b16 %v3144, %v3136
        %v4969 = vpack.c.b16 %v3145, %v3137
        %v4970 = vpack.c.b16 %v3146, %v3138
        %v4971 = vpack.c.b16 %v3155, %v3147
        %v4972 = vpack.c.b16 %v3156, %v3148
        %v4973 = vpack.c.b16 %v3157, %v3149
        %v4974 = vpack.c.b16 %v3158, %v3150
        %v4975 = vpack.c.b16 %v3159, %v3151
        %v4976 = vpack.c.b16 %v3160, %v3152
        %v4977 = vpack.c.b16 %v3161, %v3153
        %v4978 = vpack.c.b16 %v3162, %v3154
        %v4979 = vpack.c.b16 %v3171, %v3163
        %v4980 = vpack.c.b16 %v3172, %v3164
        %v4981 = vpack.c.b16 %v3173, %v3165
        %v4982 = vpack.c.b16 %v3174, %v3166
        %v4983 = vpack.c.b16 %v3175, %v3167
        %v4984 = vpack.c.b16 %v3176, %v3168
        %v4985 = vpack.c.b16 %v3177, %v3169
        %v4986 = vpack.c.b16 %v3178, %v3170
        %v4987 = vpack.c.b16 %v3187, %v3179
        %v4988 = vpack.c.b16 %v3188, %v3180
        %v4989 = vpack.c.b16 %v3189, %v3181
        %v4990 = vpack.c.b16 %v3190, %v3182
        %v4991 = vpack.c.b16 %v3191, %v3183
        %v4992 = vpack.c.b16 %v3192, %v3184
        %v4993 = vpack.c.b16 %v3193, %v3185
        %v4994 = vpack.c.b16 %v3194, %v3186
        %v4995 = vpack.c.b16 %v3203, %v3195
        %v4996 = vpack.c.b16 %v3204, %v3196
        %v4997 = vpack.c.b16 %v3205, %v3197
        %v4998 = vpack.c.b16 %v3206, %v3198
        %v4999 = vpack.c.b16 %v3207, %v3199
        %v5000 = vpack.c.b16 %v3208, %v3200
        %v5001 = vpack.c.b16 %v3209, %v3201
        %v5002 = vpack.c.b16 %v3210, %v3202
        %v5003 = vpack.c.b16 %v3219, %v3211
        %v5004 = vpack.c.b16 %v3220, %v3212
        %v5005 = vpack.c.b16 %v3221, %v3213
        %v5006 = vpack.c.b16 %v3222, %v3214
        %v5007 = vpack.c.b16 %v3223, %v3215
        %v5008 = vpack.c.b16 %v3224, %v3216
        %v5009 = vpack.c.b16 %v3225, %v3217
        %v5010 = vpack.c.b16 %v3226, %v3218
        %v5011 = vpack.c.b16 %v3235, %v3227
        %v5012 = vpack.c.b16 %v3236, %v3228
        %v5013 = vpack.c.b16 %v3237, %v3229
        %v5014 = vpack.c.b16 %v3238, %v3230
        %v5015 = vpack.c.b16 %v3239, %v3231
        %v5016 = vpack.c.b16 %v3240, %v3232
        %v5017 = vpack.c.b16 %v3241, %v3233
        %v5018 = vpack.c.b16 %v3242, %v3234
        %v5019 = vpack.c.b16 %v3251, %v3243
        %v5020 = vpack.c.b16 %v3252, %v3244
        %v5021 = vpack.c.b16 %v3253, %v3245
        %v5022 = vpack.c.b16 %v3254, %v3246
        %v5023 = vpack.c.b16 %v3255, %v3247
        %v5024 = vpack.c.b16 %v3256, %v3248
        %v5025 = vpack.c.b16 %v3257, %v3249
        %v5026 = vpack.c.b16 %v3258, %v3250
        %v5027 = vpack.c.b16 %v3267, %v3259
        %v5028 = vpack.c.b16 %v3268, %v3260
        %v5029 = vpack.c.b16 %v3269, %v3261
        %v5030 = vpack.c.b16 %v3270, %v3262
        %v5031 = vpack.c.b16 %v3271, %v3263
        %v5032 = vpack.c.b16 %v3272, %v3264
        %v5033 = vpack.c.b16 %v3273, %v3265
        %v5034 = vpack.c.b16 %v3274, %v3266
        %v5035 = vpack.c.b16 %v3283, %v3275
        %v5036 = vpack.c.b16 %v3284, %v3276
        %v5037 = vpack.c.b16 %v3285, %v3277
        %v5038 = vpack.c.b16 %v3286, %v3278
        %v5039 = vpack.c.b16 %v3287, %v3279
        %v5040 = vpack.c.b16 %v3288, %v3280
        %v5041 = vpack.c.b16 %v3289, %v3281
        %v5042 = vpack.c.b16 %v3290, %v3282
        %v5043 = vpack.c.b16 %v3299, %v3291
        %v5044 = vpack.c.b16 %v3300, %v3292
        %v5045 = vpack.c.b16 %v3301, %v3293
        %v5046 = vpack.c.b16 %v3302, %v3294
        %v5047 = vpack.c.b16 %v3303, %v3295
        %v5048 = vpack.c.b16 %v3304, %v3296
        %v5049 = vpack.c.b16 %v3305, %v3297
        %v5050 = vpack.c.b16 %v3306, %v3298
        %v5051 = vpack.c.b16 %v3315, %v3307
        %v5052 = vpack.c.b16 %v3316, %v3308
        %v5053 = vpack.c.b16 %v3317, %v3309
        %v5054 = vpack.c.b16 %v3318, %v3310
        %v5055 = vpack.c.b16 %v3319, %v3311
        %v5056 = vpack.c.b16 %v3320, %v3312
        %v5057 = vpack.c.b16 %v3321, %v3313
        %v5058 = vpack.c.b16 %v3322, %v3314
        %v5059 = vpack.c.b16 %v3331, %v3323
        %v5060 = vpack.c.b16 %v3332, %v3324
        %v5061 = vpack.c.b16 %v3333, %v3325
        %v5062 = vpack.c.b16 %v3334, %v3326
        %v5063 = vpack.c.b16 %v3335, %v3327
        %v5064 = vpack.c.b16 %v3336, %v3328
        %v5065 = vpack.c.b16 %v3337, %v3329
        %v5066 = vpack.c.b16 %v3338, %v3330
        %v5067 = vpack.c.b16 %v3347, %v3339
        %v5068 = vpack.c.b16 %v3348, %v3340
        %v5069 = vpack.c.b16 %v3349, %v3341
        %v5070 = vpack.c.b16 %v3350, %v3342
        %v5071 = vpack.c.b16 %v3351, %v3343
        %v5072 = vpack.c.b16 %v3352, %v3344
        %v5073 = vpack.c.b16 %v3353, %v3345
        %v5074 = vpack.c.b16 %v3354, %v3346
        %v5075 = vpack.c.b16 %v3363, %v3355
        %v5076 = vpack.c.b16 %v3364, %v3356
        %v5077 = vpack.c.b16 %v3365, %v3357
        %v5078 = vpack.c.b16 %v3366, %v3358
        %v5079 = vpack.c.b16 %v3367, %v3359
        %v5080 = vpack.c.b16 %v3368, %v3360
        %v5081 = vpack.c.b16 %v3369, %v3361
        %v5082 = vpack.c.b16 %v3370, %v3362
        %v5083 = vpack.c.b16 %v3379, %v3371
        %v5084 = vpack.c.b16 %v3380, %v3372
        %v5085 = vpack.c.b16 %v3381, %v3373
        %v5086 = vpack.c.b16 %v3382, %v3374
        %v5087 = vpack.c.b16 %v3383, %v3375
        %v5088 = vpack.c.b16 %v3384, %v3376
        %v5089 = vpack.c.b16 %v3385, %v3377
        %v5090 = vpack.c.b16 %v3386, %v3378
        %v5091 = vpack.c.b16 %v3395, %v3387
        %v5092 = vpack.c.b16 %v3396, %v3388
        %v5093 = vpack.c.b16 %v3397, %v3389
        %v5094 = vpack.c.b16 %v3398, %v3390
        %v5095 = vpack.c.b16 %v3399, %v3391
        %v5096 = vpack.c.b16 %v3400, %v3392
        %v5097 = vpack.c.b16 %v3401, %v3393
        %v5098 = vpack.c.b16 %v3402, %v3394
        %v5099 = vpack.c.b16 %v3411, %v3403
        %v5100 = vpack.c.b16 %v3412, %v3404
        %v5101 = vpack.c.b16 %v3413, %v3405
        %v5102 = vpack.c.b16 %v3414, %v3406
        %v5103 = vpack.c.b16 %v3415, %v3407
        %v5104 = vpack.c.b16 %v3416, %v3408
        %v5105 = vpack.c.b16 %v3417, %v3409
        %v5106 = vpack.c.b16 %v3418, %v3410
        %v5107 = vpack.c.b16 %v3427, %v3419
        %v5108 = vpack.c.b16 %v3428, %v3420
        %v5109 = vpack.c.b16 %v3429, %v3421
        %v5110 = vpack.c.b16 %v3430, %v3422
        %v5111 = vpack.c.b16 %v3431, %v3423
        %v5112 = vpack.c.b16 %v3432, %v3424
        %v5113 = vpack.c.b16 %v3433, %v3425
        %v5114 = vpack.c.b16 %v3434, %v3426
        %v5115 = vpack.c.b16 %v3443, %v3435
        %v5116 = vpack.c.b16 %v3444, %v3436
        %v5117 = vpack.c.b16 %v3445, %v3437
        %v5118 = vpack.c.b16 %v3446, %v3438
        %v5119 = vpack.c.b16 %v3447, %v3439
        %v5120 = vpack.c.b16 %v3448, %v3440
        %v5121 = vpack.c.b16 %v3449, %v3441
        %v5122 = vpack.c.b16 %v3450, %v3442
        %v5123 = vpack.c.b16 %v3459, %v3451
        %v5124 = vpack.c.b16 %v3460, %v3452
        %v5125 = vpack.c.b16 %v3461, %v3453
        %v5126 = vpack.c.b16 %v3462, %v3454
        %v5127 = vpack.c.b16 %v3463, %v3455
        %v5128 = vpack.c.b16 %v3464, %v3456
        %v5129 = vpack.c.b16 %v3465, %v3457
        %v5130 = vpack.c.b16 %v3466, %v3458
        %v5131 = vpack.c.b16 %v3475, %v3467
        %v5132 = vpack.c.b16 %v3476, %v3468
        %v5133 = vpack.c.b16 %v3477, %v3469
        %v5134 = vpack.c.b16 %v3478, %v3470
        %v5135 = vpack.c.b16 %v3479, %v3471
        %v5136 = vpack.c.b16 %v3480, %v3472
        %v5137 = vpack.c.b16 %v3481, %v3473
        %v5138 = vpack.c.b16 %v3482, %v3474
        %v5139 = vpack.c.b16 %v3491, %v3483
        %v5140 = vpack.c.b16 %v3492, %v3484
        %v5141 = vpack.c.b16 %v3493, %v3485
        %v5142 = vpack.c.b16 %v3494, %v3486
        %v5143 = vpack.c.b16 %v3495, %v3487
        %v5144 = vpack.c.b16 %v3496, %v3488
        %v5145 = vpack.c.b16 %v3497, %v3489
        %v5146 = vpack.c.b16 %v3498, %v3490
        %v5147 = vpack.c.b16 %v3507, %v3499
        %v5148 = vpack.c.b16 %v3508, %v3500
        %v5149 = vpack.c.b16 %v3509, %v3501
        %v5150 = vpack.c.b16 %v3510, %v3502
        %v5151 = vpack.c.b16 %v3511, %v3503
        %v5152 = vpack.c.b16 %v3512, %v3504
        %v5153 = vpack.c.b16 %v3513, %v3505
        %v5154 = vpack.c.b16 %v3514, %v3506
        %v5155 = vpack.c.b16 %v3523, %v3515
        %v5156 = vpack.c.b16 %v3524, %v3516
        %v5157 = vpack.c.b16 %v3525, %v3517
        %v5158 = vpack.c.b16 %v3526, %v3518
        %v5159 = vpack.c.b16 %v3527, %v3519
        %v5160 = vpack.c.b16 %v3528, %v3520
        %v5161 = vpack.c.b16 %v3529, %v3521
        %v5162 = vpack.c.b16 %v3530, %v3522
        %v5163 = vpack.c.b16 %v3539, %v3531
        %v5164 = vpack.c.b16 %v3540, %v3532
        %v5165 = vpack.c.b16 %v3541, %v3533
        %v5166 = vpack.c.b16 %v3542, %v3534
        %v5167 = vpack.c.b16 %v3543, %v3535
        %v5168 = vpack.c.b16 %v3544, %v3536
        %v5169 = vpack.c.b16 %v3545, %v3537
        %v5170 = vpack.c.b16 %v3546, %v3538
        %v5171 = vpack.c.b16 %v3555, %v3547
        %v5172 = vpack.c.b16 %v3556, %v3548
        %v5173 = vpack.c.b16 %v3557, %v3549
        %v5174 = vpack.c.b16 %v3558, %v3550
        %v5175 = vpack.c.b16 %v3559, %v3551
        %v5176 = vpack.c.b16 %v3560, %v3552
        %v5177 = vpack.c.b16 %v3561, %v3553
        %v5178 = vpack.c.b16 %v3562, %v3554
        %v5179 = vpack.c.b16 %v3571, %v3563
        %v5180 = vpack.c.b16 %v3572, %v3564
        %v5181 = vpack.c.b16 %v3573, %v3565
        %v5182 = vpack.c.b16 %v3574, %v3566
        %v5183 = vpack.c.b16 %v3575, %v3567
        %v5184 = vpack.c.b16 %v3576, %v3568
        %v5185 = vpack.c.b16 %v3577, %v3569
        %v5186 = vpack.c.b16 %v3578, %v3570
        %v5187 = vpack.c.b16 %v3587, %v3579
        %v5188 = vpack.c.b16 %v3588, %v3580
        %v5189 = vpack.c.b16 %v3589, %v3581
        %v5190 = vpack.c.b16 %v3590, %v3582
        %v5191 = vpack.c.b16 %v3591, %v3583
        %v5192 = vpack.c.b16 %v3592, %v3584
        %v5193 = vpack.c.b16 %v3593, %v3585
        %v5194 = vpack.c.b16 %v3594, %v3586
        %v5195 = vpack.c.b16 %v3603, %v3595
        %v5196 = vpack.c.b16 %v3604, %v3596
        %v5197 = vpack.c.b16 %v3605, %v3597
        %v5198 = vpack.c.b16 %v3606, %v3598
        %v5199 = vpack.c.b16 %v3607, %v3599
        %v5200 = vpack.c.b16 %v3608, %v3600
        %v5201 = vpack.c.b16 %v3609, %v3601
        %v5202 = vpack.c.b16 %v3610, %v3602
        %v5203 = vpack.c.b16 %v3619, %v3611
        %v5204 = vpack.c.b16 %v3620, %v3612
        %v5205 = vpack.c.b16 %v3621, %v3613
        %v5206 = vpack.c.b16 %v3622, %v3614
        %v5207 = vpack.c.b16 %v3623, %v3615
        %v5208 = vpack.c.b16 %v3624, %v3616
        %v5209 = vpack.c.b16 %v3625, %v3617
        %v5210 = vpack.c.b16 %v3626, %v3618
        %v5211 = vpack.c.b16 %v3635, %v3627
        %v5212 = vpack.c.b16 %v3636, %v3628
        %v5213 = vpack.c.b16 %v3637, %v3629
        %v5214 = vpack.c.b16 %v3638, %v3630
        %v5215 = vpack.c.b16 %v3639, %v3631
        %v5216 = vpack.c.b16 %v3640, %v3632
        %v5217 = vpack.c.b16 %v3641, %v3633
        %v5218 = vpack.c.b16 %v3642, %v3634
        %v5219 = vpack.c.b16 %v3651, %v3643
        %v5220 = vpack.c.b16 %v3652, %v3644
        %v5221 = vpack.c.b16 %v3653, %v3645
        %v5222 = vpack.c.b16 %v3654, %v3646
        %v5223 = vpack.c.b16 %v3655, %v3647
        %v5224 = vpack.c.b16 %v3656, %v3648
        %v5225 = vpack.c.b16 %v3657, %v3649
        %v5226 = vpack.c.b16 %v3658, %v3650
        %v5227 = vpack.c.b16 %v3667, %v3659
        %v5228 = vpack.c.b16 %v3668, %v3660
        %v5229 = vpack.c.b16 %v3669, %v3661
        %v5230 = vpack.c.b16 %v3670, %v3662
        %v5231 = vpack.c.b16 %v3671, %v3663
        %v5232 = vpack.c.b16 %v3672, %v3664
        %v5233 = vpack.c.b16 %v3673, %v3665
        %v5234 = vpack.c.b16 %v3674, %v3666
        %v5235 = vpack.c.b16 %v3683, %v3675
        %v5236 = vpack.c.b16 %v3684, %v3676
        %v5237 = vpack.c.b16 %v3685, %v3677
        %v5238 = vpack.c.b16 %v3686, %v3678
        %v5239 = vpack.c.b16 %v3687, %v3679
        %v5240 = vpack.c.b16 %v3688, %v3680
        %v5241 = vpack.c.b16 %v3689, %v3681
        %v5242 = vpack.c.b16 %v3690, %v3682
        %v5243 = vpack.c.b16 %v3699, %v3691
        %v5244 = vpack.c.b16 %v3700, %v3692
        %v5245 = vpack.c.b16 %v3701, %v3693
        %v5246 = vpack.c.b16 %v3702, %v3694
        %v5247 = vpack.c.b16 %v3703, %v3695
        %v5248 = vpack.c.b16 %v3704, %v3696
        %v5249 = vpack.c.b16 %v3705, %v3697
        %v5250 = vpack.c.b16 %v3706, %v3698
        %v5251 = vpack.c.b16 %v3715, %v3707
        %v5252 = vpack.c.b16 %v3716, %v3708
        %v5253 = vpack.c.b16 %v3717, %v3709
        %v5254 = vpack.c.b16 %v3718, %v3710
        %v5255 = vpack.c.b16 %v3719, %v3711
        %v5256 = vpack.c.b16 %v3720, %v3712
        %v5257 = vpack.c.b16 %v3721, %v3713
        %v5258 = vpack.c.b16 %v3722, %v3714
        %v5259 = vpack.c.b16 %v3731, %v3723
        %v5260 = vpack.c.b16 %v3732, %v3724
        %v5261 = vpack.c.b16 %v3733, %v3725
        %v5262 = vpack.c.b16 %v3734, %v3726
        %v5263 = vpack.c.b16 %v3735, %v3727
        %v5264 = vpack.c.b16 %v3736, %v3728
        %v5265 = vpack.c.b16 %v3737, %v3729
        %v5266 = vpack.c.b16 %v3738, %v3730
        %v5267 = vpack.c.b16 %v3747, %v3739
        %v5268 = vpack.c.b16 %v3748, %v3740
        %v5269 = vpack.c.b16 %v3749, %v3741
        %v5270 = vpack.c.b16 %v3750, %v3742
        %v5271 = vpack.c.b16 %v3751, %v3743
        %v5272 = vpack.c.b16 %v3752, %v3744
        %v5273 = vpack.c.b16 %v3753, %v3745
        %v5274 = vpack.c.b16 %v3754, %v3746
        %v5275 = vpack.c.b16 %v3763, %v3755
        %v5276 = vpack.c.b16 %v3764, %v3756
        %v5277 = vpack.c.b16 %v3765, %v3757
        %v5278 = vpack.c.b16 %v3766, %v3758
        %v5279 = vpack.c.b16 %v3767, %v3759
        %v5280 = vpack.c.b16 %v3768, %v3760
        %v5281 = vpack.c.b16 %v3769, %v3761
        %v5282 = vpack.c.b16 %v3770, %v3762
        %v5283 = vpack.c.b16 %v3779, %v3771
        %v5284 = vpack.c.b16 %v3780, %v3772
        %v5285 = vpack.c.b16 %v3781, %v3773
        %v5286 = vpack.c.b16 %v3782, %v3774
        %v5287 = vpack.c.b16 %v3783, %v3775
        %v5288 = vpack.c.b16 %v3784, %v3776
        %v5289 = vpack.c.b16 %v3785, %v3777
        %v5290 = vpack.c.b16 %v3786, %v3778
        %v5291 = vpack.c.b16 %v3795, %v3787
        %v5292 = vpack.c.b16 %v3796, %v3788
        %v5293 = vpack.c.b16 %v3797, %v3789
        %v5294 = vpack.c.b16 %v3798, %v3790
        %v5295 = vpack.c.b16 %v3799, %v3791
        %v5296 = vpack.c.b16 %v3800, %v3792
        %v5297 = vpack.c.b16 %v3801, %v3793
        %v5298 = vpack.c.b16 %v3802, %v3794
        %v5299 = vpack.c.b16 %v3811, %v3803
        %v5300 = vpack.c.b16 %v3812, %v3804
        %v5301 = vpack.c.b16 %v3813, %v3805
        %v5302 = vpack.c.b16 %v3814, %v3806
        %v5303 = vpack.c.b16 %v3815, %v3807
        %v5304 = vpack.c.b16 %v3816, %v3808
        %v5305 = vpack.c.b16 %v3817, %v3809
        %v5306 = vpack.c.b16 %v3818, %v3810
        %v5307 = vpack.c.b16 %v3827, %v3819
        %v5308 = vpack.c.b16 %v3828, %v3820
        %v5309 = vpack.c.b16 %v3829, %v3821
        %v5310 = vpack.c.b16 %v3830, %v3822
        %v5311 = vpack.c.b16 %v3831, %v3823
        %v5312 = vpack.c.b16 %v3832, %v3824
        %v5313 = vpack.c.b16 %v3833, %v3825
        %v5314 = vpack.c.b16 %v3834, %v3826
        %v5315 = vpack.c.b16 %v3843, %v3835
        %v5316 = vpack.c.b16 %v3844, %v3836
        %v5317 = vpack.c.b16 %v3845, %v3837
        %v5318 = vpack.c.b16 %v3846, %v3838
        %v5319 = vpack.c.b16 %v3847, %v3839
        %v5320 = vpack.c.b16 %v3848, %v3840
        %v5321 = vpack.c.b16 %v3849, %v3841
        %v5322 = vpack.c.b16 %v3850, %v3842
        %v5323 = vpack.c.b16 %v3859, %v3851
        %v5324 = vpack.c.b16 %v3860, %v3852
        %v5325 = vpack.c.b16 %v3861, %v3853
        %v5326 = vpack.c.b16 %v3862, %v3854
        %v5327 = vpack.c.b16 %v3863, %v3855
        %v5328 = vpack.c.b16 %v3864, %v3856
        %v5329 = vpack.c.b16 %v3865, %v3857
        %v5330 = vpack.c.b16 %v3866, %v3858
        %v5331 = vpack.c.b16 %v3875, %v3867
        %v5332 = vpack.c.b16 %v3876, %v3868
        %v5333 = vpack.c.b16 %v3877, %v3869
        %v5334 = vpack.c.b16 %v3878, %v3870
        %v5335 = vpack.c.b16 %v3879, %v3871
        %v5336 = vpack.c.b16 %v3880, %v3872
        %v5337 = vpack.c.b16 %v3881, %v3873
        %v5338 = vpack.c.b16 %v3882, %v3874
        %v5339 = vpack.c.b16 %v3891, %v3883
        %v5340 = vpack.c.b16 %v3892, %v3884
        %v5341 = vpack.c.b16 %v3893, %v3885
        %v5342 = vpack.c.b16 %v3894, %v3886
        %v5343 = vpack.c.b16 %v3895, %v3887
        %v5344 = vpack.c.b16 %v3896, %v3888
        %v5345 = vpack.c.b16 %v3897, %v3889
        %v5346 = vpack.c.b16 %v3898, %v3890
        %v5347 = vpack.c.b16 %v3907, %v3899
        %v5348 = vpack.c.b16 %v3908, %v3900
        %v5349 = vpack.c.b16 %v3909, %v3901
        %v5350 = vpack.c.b16 %v3910, %v3902
        %v5351 = vpack.c.b16 %v3911, %v3903
        %v5352 = vpack.c.b16 %v3912, %v3904
        %v5353 = vpack.c.b16 %v3913, %v3905
        %v5354 = vpack.c.b16 %v3914, %v3906
        %v5355 = vpack.c.b16 %v3923, %v3915
        %v5356 = vpack.c.b16 %v3924, %v3916
        %v5357 = vpack.c.b16 %v3925, %v3917
        %v5358 = vpack.c.b16 %v3926, %v3918
        %v5359 = vpack.c.b16 %v3927, %v3919
        %v5360 = vpack.c.b16 %v3928, %v3920
        %v5361 = vpack.c.b16 %v3929, %v3921
        %v5362 = vpack.c.b16 %v3930, %v3922
        %v5363 = vpack.c.b16 %v3939, %v3931
        %v5364 = vpack.c.b16 %v3940, %v3932
        %v5365 = vpack.c.b16 %v3941, %v3933
        %v5366 = vpack.c.b16 %v3942, %v3934
        %v5367 = vpack.c.b16 %v3943, %v3935
        %v5368 = vpack.c.b16 %v3944, %v3936
        %v5369 = vpack.c.b16 %v3945, %v3937
        %v5370 = vpack.c.b16 %v3946, %v3938
        %v5371 = vpack.c.b16 %v3955, %v3947
        %v5372 = vpack.c.b16 %v3956, %v3948
        %v5373 = vpack.c.b16 %v3957, %v3949
        %v5374 = vpack.c.b16 %v3958, %v3950
        %v5375 = vpack.c.b16 %v3959, %v3951
        %v5376 = vpack.c.b16 %v3960, %v3952
        %v5377 = vpack.c.b16 %v3961, %v3953
        %v5378 = vpack.c.b16 %v3962, %v3954
        %v5379 = vpack.c.b16 %v3971, %v3963
        %v5380 = vpack.c.b16 %v3972, %v3964
        %v5381 = vpack.c.b16 %v3973, %v3965
        %v5382 = vpack.c.b16 %v3974, %v3966
        %v5383 = vpack.c.b16 %v3975, %v3967
        %v5384 = vpack.c.b16 %v3976, %v3968
        %v5385 = vpack.c.b16 %v3977, %v3969
        %v5386 = vpack.c.b16 %v3978, %v3970
        %v5387 = vpack.c.b16 %v3987, %v3979
        %v5388 = vpack.c.b16 %v3988, %v3980
        %v5389 = vpack.c.b16 %v3989, %v3981
        %v5390 = vpack.c.b16 %v3990, %v3982
        %v5391 = vpack.c.b16 %v3991, %v3983
        %v5392 = vpack.c.b16 %v3992, %v3984
        %v5393 = vpack.c.b16 %v3993, %v3985
        %v5394 = vpack.c.b16 %v3994, %v3986
        %v5395 = vpack.c.b16 %v4003, %v3995
        %v5396 = vpack.c.b16 %v4004, %v3996
        %v5397 = vpack.c.b16 %v4005, %v3997
        %v5398 = vpack.c.b16 %v4006, %v3998
        %v5399 = vpack.c.b16 %v4007, %v3999
        %v5400 = vpack.c.b16 %v4008, %v4000
        %v5401 = vpack.c.b16 %v4009, %v4001
        %v5402 = vpack.c.b16 %v4010, %v4002
        %v5403 = vpack.c.b16 %v4019, %v4011
        %v5404 = vpack.c.b16 %v4020, %v4012
        %v5405 = vpack.c.b16 %v4021, %v4013
        %v5406 = vpack.c.b16 %v4022, %v4014
        %v5407 = vpack.c.b16 %v4023, %v4015
        %v5408 = vpack.c.b16 %v4024, %v4016
        %v5409 = vpack.c.b16 %v4025, %v4017
        %v5410 = vpack.c.b16 %v4026, %v4018
        %v5411 = vpack.c.b16 %v4035, %v4027
        %v5412 = vpack.c.b16 %v4036, %v4028
        %v5413 = vpack.c.b16 %v4037, %v4029
        %v5414 = vpack.c.b16 %v4038, %v4030
        %v5415 = vpack.c.b16 %v4039, %v4031
        %v5416 = vpack.c.b16 %v4040, %v4032
        %v5417 = vpack.c.b16 %v4041, %v4033
        %v5418 = vpack.c.b16 %v4042, %v4034
        %v5419 = vpack.c.b16 %v4051, %v4043
        %v5420 = vpack.c.b16 %v4052, %v4044
        %v5421 = vpack.c.b16 %v4053, %v4045
        %v5422 = vpack.c.b16 %v4054, %v4046
        %v5423 = vpack.c.b16 %v4055, %v4047
        %v5424 = vpack.c.b16 %v4056, %v4048
        %v5425 = vpack.c.b16 %v4057, %v4049
        %v5426 = vpack.c.b16 %v4058, %v4050
        %v5427 = vpack.c.b16 %v4067, %v4059
        %v5428 = vpack.c.b16 %v4068, %v4060
        %v5429 = vpack.c.b16 %v4069, %v4061
        %v5430 = vpack.c.b16 %v4070, %v4062
        %v5431 = vpack.c.b16 %v4071, %v4063
        %v5432 = vpack.c.b16 %v4072, %v4064
        %v5433 = vpack.c.b16 %v4073, %v4065
        %v5434 = vpack.c.b16 %v4074, %v4066
        %v5435 = vpack.c.b16 %v4083, %v4075
        %v5436 = vpack.c.b16 %v4084, %v4076
        %v5437 = vpack.c.b16 %v4085, %v4077
        %v5438 = vpack.c.b16 %v4086, %v4078
        %v5439 = vpack.c.b16 %v4087, %v4079
        %v5440 = vpack.c.b16 %v4088, %v4080
        %v5441 = vpack.c.b16 %v4089, %v4081
        %v5442 = vpack.c.b16 %v4090, %v4082
        %v5443 = vpack.c.b16 %v4099, %v4091
        %v5444 = vpack.c.b16 %v4100, %v4092
        %v5445 = vpack.c.b16 %v4101, %v4093
        %v5446 = vpack.c.b16 %v4102, %v4094
        %v5447 = vpack.c.b16 %v4103, %v4095
        %v5448 = vpack.c.b16 %v4104, %v4096
        %v5449 = vpack.c.b16 %v4105, %v4097
        %v5450 = vpack.c.b16 %v4106, %v4098
        %v5451 = vpack.c.b16 %v4115, %v4107
        %v5452 = vpack.c.b16 %v4116, %v4108
        %v5453 = vpack.c.b16 %v4117, %v4109
        %v5454 = vpack.c.b16 %v4118, %v4110
        %v5455 = vpack.c.b16 %v4119, %v4111
        %v5456 = vpack.c.b16 %v4120, %v4112
        %v5457 = vpack.c.b16 %v4121, %v4113
        %v5458 = vpack.c.b16 %v4122, %v4114
        %v5459 = vpack.c.b16 %v4131, %v4123
        %v5460 = vpack.c.b16 %v4132, %v4124
        %v5461 = vpack.c.b16 %v4133, %v4125
        %v5462 = vpack.c.b16 %v4134, %v4126
        %v5463 = vpack.c.b16 %v4135, %v4127
        %v5464 = vpack.c.b16 %v4136, %v4128
        %v5465 = vpack.c.b16 %v4137, %v4129
        %v5466 = vpack.c.b16 %v4138, %v4130
        %v5467 = vpack.c.b16 %v4147, %v4139
        %v5468 = vpack.c.b16 %v4148, %v4140
        %v5469 = vpack.c.b16 %v4149, %v4141
        %v5470 = vpack.c.b16 %v4150, %v4142
        %v5471 = vpack.c.b16 %v4151, %v4143
        %v5472 = vpack.c.b16 %v4152, %v4144
        %v5473 = vpack.c.b16 %v4153, %v4145
        %v5474 = vpack.c.b16 %v4154, %v4146
        %v5475 = vpack.c.b16 %v4163, %v4155
        %v5476 = vpack.c.b16 %v4164, %v4156
        %v5477 = vpack.c.b16 %v4165, %v4157
        %v5478 = vpack.c.b16 %v4166, %v4158
        %v5479 = vpack.c.b16 %v4167, %v4159
        %v5480 = vpack.c.b16 %v4168, %v4160
        %v5481 = vpack.c.b16 %v4169, %v4161
        %v5482 = vpack.c.b16 %v4170, %v4162
        %v5483 = vpack.c.b16 %v4179, %v4171
        %v5484 = vpack.c.b16 %v4180, %v4172
        %v5485 = vpack.c.b16 %v4181, %v4173
        %v5486 = vpack.c.b16 %v4182, %v4174
        %v5487 = vpack.c.b16 %v4183, %v4175
        %v5488 = vpack.c.b16 %v4184, %v4176
        %v5489 = vpack.c.b16 %v4185, %v4177
        %v5490 = vpack.c.b16 %v4186, %v4178
        %v5491 = vpack.c.b16 %v4195, %v4187
        %v5492 = vpack.c.b16 %v4196, %v4188
        %v5493 = vpack.c.b16 %v4197, %v4189
        %v5494 = vpack.c.b16 %v4198, %v4190
        %v5495 = vpack.c.b16 %v4199, %v4191
        %v5496 = vpack.c.b16 %v4200, %v4192
        %v5497 = vpack.c.b16 %v4201, %v4193
        %v5498 = vpack.c.b16 %v4202, %v4194
        %v5499 = vpack.c.b16 %v4211, %v4203
        %v5500 = vpack.c.b16 %v4212, %v4204
        %v5501 = vpack.c.b16 %v4213, %v4205
        %v5502 = vpack.c.b16 %v4214, %v4206
        %v5503 = vpack.c.b16 %v4215, %v4207
        %v5504 = vpack.c.b16 %v4216, %v4208
        %v5505 = vpack.c.b16 %v4217, %v4209
        %v5506 = vpack.c.b16 %v4218, %v4210
        %v5507 = vpack.c.b16 %v4227, %v4219
        %v5508 = vpack.c.b16 %v4228, %v4220
        %v5509 = vpack.c.b16 %v4229, %v4221
        %v5510 = vpack.c.b16 %v4230, %v4222
        %v5511 = vpack.c.b16 %v4231, %v4223
        %v5512 = vpack.c.b16 %v4232, %v4224
        %v5513 = vpack.c.b16 %v4233, %v4225
        %v5514 = vpack.c.b16 %v4234, %v4226
        %v5515 = vpack.c.b16 %v4243, %v4235
        %v5516 = vpack.c.b16 %v4244, %v4236
        %v5517 = vpack.c.b16 %v4245, %v4237
        %v5518 = vpack.c.b16 %v4246, %v4238
        %v5519 = vpack.c.b16 %v4247, %v4239
        %v5520 = vpack.c.b16 %v4248, %v4240
        %v5521 = vpack.c.b16 %v4249, %v4241
        %v5522 = vpack.c.b16 %v4250, %v4242
        %v5523 = vpack.c.b16 %v4259, %v4251
        %v5524 = vpack.c.b16 %v4260, %v4252
        %v5525 = vpack.c.b16 %v4261, %v4253
        %v5526 = vpack.c.b16 %v4262, %v4254
        %v5527 = vpack.c.b16 %v4263, %v4255
        %v5528 = vpack.c.b16 %v4264, %v4256
        %v5529 = vpack.c.b16 %v4265, %v4257
        %v5530 = vpack.c.b16 %v4266, %v4258
        %v5531 = vpack.c.b16 %v4275, %v4267
        %v5532 = vpack.c.b16 %v4276, %v4268
        %v5533 = vpack.c.b16 %v4277, %v4269
        %v5534 = vpack.c.b16 %v4278, %v4270
        %v5535 = vpack.c.b16 %v4279, %v4271
        %v5536 = vpack.c.b16 %v4280, %v4272
        %v5537 = vpack.c.b16 %v4281, %v4273
        %v5538 = vpack.c.b16 %v4282, %v4274
        %v5539 = vpack.c.b16 %v4291, %v4283
        %v5540 = vpack.c.b16 %v4292, %v4284
        %v5541 = vpack.c.b16 %v4293, %v4285
        %v5542 = vpack.c.b16 %v4294, %v4286
        %v5543 = vpack.c.b16 %v4295, %v4287
        %v5544 = vpack.c.b16 %v4296, %v4288
        %v5545 = vpack.c.b16 %v4297, %v4289
        %v5546 = vpack.c.b16 %v4298, %v4290
        %v5547 = vpack.c.b16 %v4307, %v4299
        %v5548 = vpack.c.b16 %v4308, %v4300
        %v5549 = vpack.c.b16 %v4309, %v4301
        %v5550 = vpack.c.b16 %v4310, %v4302
        %v5551 = vpack.c.b16 %v4311, %v4303
        %v5552 = vpack.c.b16 %v4312, %v4304
        %v5553 = vpack.c.b16 %v4313, %v4305
        %v5554 = vpack.c.b16 %v4314, %v4306
        %v5555 = vpack.c.b16 %v4323, %v4315
        %v5556 = vpack.c.b16 %v4324, %v4316
        %v5557 = vpack.c.b16 %v4325, %v4317
        %v5558 = vpack.c.b16 %v4326, %v4318
        %v5559 = vpack.c.b16 %v4327, %v4319
        %v5560 = vpack.c.b16 %v4328, %v4320
        %v5561 = vpack.c.b16 %v4329, %v4321
        %v5562 = vpack.c.b16 %v4330, %v4322
        %v5563 = vpack.c.b16 %v4339, %v4331
        %v5564 = vpack.c.b16 %v4340, %v4332
        %v5565 = vpack.c.b16 %v4341, %v4333
        %v5566 = vpack.c.b16 %v4342, %v4334
        %v5567 = vpack.c.b16 %v4343, %v4335
        %v5568 = vpack.c.b16 %v4344, %v4336
        %v5569 = vpack.c.b16 %v4345, %v4337
        %v5570 = vpack.c.b16 %v4346, %v4338
        %v5571 = vpack.c.b16 %v4355, %v4347
        %v5572 = vpack.c.b16 %v4356, %v4348
        %v5573 = vpack.c.b16 %v4357, %v4349
        %v5574 = vpack.c.b16 %v4358, %v4350
        %v5575 = vpack.c.b16 %v4359, %v4351
        %v5576 = vpack.c.b16 %v4360, %v4352
        %v5577 = vpack.c.b16 %v4361, %v4353
        %v5578 = vpack.c.b16 %v4362, %v4354
        %v5579 = vpack.c.b16 %v4371, %v4363
        %v5580 = vpack.c.b16 %v4372, %v4364
        %v5581 = vpack.c.b16 %v4373, %v4365
        %v5582 = vpack.c.b16 %v4374, %v4366
        %v5583 = vpack.c.b16 %v4375, %v4367
        %v5584 = vpack.c.b16 %v4376, %v4368
        %v5585 = vpack.c.b16 %v4377, %v4369
        %v5586 = vpack.c.b16 %v4378, %v4370
        %v5587 = vpack.c.b16 %v4387, %v4379
        %v5588 = vpack.c.b16 %v4388, %v4380
        %v5589 = vpack.c.b16 %v4389, %v4381
        %v5590 = vpack.c.b16 %v4390, %v4382
        %v5591 = vpack.c.b16 %v4391, %v4383
        %v5592 = vpack.c.b16 %v4392, %v4384
        %v5593 = vpack.c.b16 %v4393, %v4385
        %v5594 = vpack.c.b16 %v4394, %v4386
        %v5595 = vpack.c.b16 %v4403, %v4395
        %v5596 = vpack.c.b16 %v4404, %v4396
        %v5597 = vpack.c.b16 %v4405, %v4397
        %v5598 = vpack.c.b16 %v4406, %v4398
        %v5599 = vpack.c.b16 %v4407, %v4399
        %v5600 = vpack.c.b16 %v4408, %v4400
        %v5601 = vpack.c.b16 %v4409, %v4401
        %v5602 = vpack.c.b16 %v4410, %v4402
        %v5603 = vpack.c.b16 %v4419, %v4411
        %v5604 = vpack.c.b16 %v4420, %v4412
        %v5605 = vpack.c.b16 %v4421, %v4413
        %v5606 = vpack.c.b16 %v4422, %v4414
        %v5607 = vpack.c.b16 %v4423, %v4415
        %v5608 = vpack.c.b16 %v4424, %v4416
        %v5609 = vpack.c.b16 %v4425, %v4417
        %v5610 = vpack.c.b16 %v4426, %v4418
        %v5611 = vpack.c.b16 %v4435, %v4427
        %v5612 = vpack.c.b16 %v4436, %v4428
        %v5613 = vpack.c.b16 %v4437, %v4429
        %v5614 = vpack.c.b16 %v4438, %v4430
        %v5615 = vpack.c.b16 %v4439, %v4431
        %v5616 = vpack.c.b16 %v4440, %v4432
        %v5617 = vpack.c.b16 %v4441, %v4433
        %v5618 = vpack.c.b16 %v4442, %v4434
        %v5619 = vpack.c.b16 %v4451, %v4443
        %v5620 = vpack.c.b16 %v4452, %v4444
        %v5621 = vpack.c.b16 %v4453, %v4445
        %v5622 = vpack.c.b16 %v4454, %v4446
        %v5623 = vpack.c.b16 %v4455, %v4447
        %v5624 = vpack.c.b16 %v4456, %v4448
        %v5625 = vpack.c.b16 %v4457, %v4449
        %v5626 = vpack.c.b16 %v4458, %v4450
        %v5627 = vpack.c.b16 %v4467, %v4459
        %v5628 = vpack.c.b16 %v4468, %v4460
        %v5629 = vpack.c.b16 %v4469, %v4461
        %v5630 = vpack.c.b16 %v4470, %v4462
        %v5631 = vpack.c.b16 %v4471, %v4463
        %v5632 = vpack.c.b16 %v4472, %v4464
        %v5633 = vpack.c.b16 %v4473, %v4465
        %v5634 = vpack.c.b16 %v4474, %v4466
        %v5635 = vpack.c.b16 %v4483, %v4475
        %v5636 = vpack.c.b16 %v4484, %v4476
        %v5637 = vpack.c.b16 %v4485, %v4477
        %v5638 = vpack.c.b16 %v4486, %v4478
        %v5639 = vpack.c.b16 %v4487, %v4479
        %v5640 = vpack.c.b16 %v4488, %v4480
        %v5641 = vpack.c.b16 %v4489, %v4481
        %v5642 = vpack.c.b16 %v4490, %v4482
        %v5643 = vpack.c.b16 %v4499, %v4491
        %v5644 = vpack.c.b16 %v4500, %v4492
        %v5645 = vpack.c.b16 %v4501, %v4493
        %v5646 = vpack.c.b16 %v4502, %v4494
        %v5647 = vpack.c.b16 %v4503, %v4495
        %v5648 = vpack.c.b16 %v4504, %v4496
        %v5649 = vpack.c.b16 %v4505, %v4497
        %v5650 = vpack.c.b16 %v4506, %v4498
        %v5651 = vpack.c.b16 %v4515, %v4507
        %v5652 = vpack.c.b16 %v4516, %v4508
        %v5653 = vpack.c.b16 %v4517, %v4509
        %v5654 = vpack.c.b16 %v4518, %v4510
        %v5655 = vpack.c.b16 %v4519, %v4511
        %v5656 = vpack.c.b16 %v4520, %v4512
        %v5657 = vpack.c.b16 %v4521, %v4513
        %v5658 = vpack.c.b16 %v4522, %v4514
        %v5659 = vpack.c.b16 %v4531, %v4523
        %v5660 = vpack.c.b16 %v4532, %v4524
        %v5661 = vpack.c.b16 %v4533, %v4525
        %v5662 = vpack.c.b16 %v4534, %v4526
        %v5663 = vpack.c.b16 %v4535, %v4527
        %v5664 = vpack.c.b16 %v4536, %v4528
        %v5665 = vpack.c.b16 %v4537, %v4529
        %v5666 = vpack.c.b16 %v4538, %v4530
        %v5667 = vpack.c.b16 %v4547, %v4539
        %v5668 = vpack.c.b16 %v4548, %v4540
        %v5669 = vpack.c.b16 %v4549, %v4541
        %v5670 = vpack.c.b16 %v4550, %v4542
        %v5671 = vpack.c.b16 %v4551, %v4543
        %v5672 = vpack.c.b16 %v4552, %v4544
        %v5673 = vpack.c.b16 %v4553, %v4545
        %v5674 = vpack.c.b16 %v4554, %v4546
        %v5675 = vpack.c.b16 %v4563, %v4555
        %v5676 = vpack.c.b16 %v4564, %v4556
        %v5677 = vpack.c.b16 %v4565, %v4557
        %v5678 = vpack.c.b16 %v4566, %v4558
        %v5679 = vpack.c.b16 %v4567, %v4559
        %v5680 = vpack.c.b16 %v4568, %v4560
        %v5681 = vpack.c.b16 %v4569, %v4561
        %v5682 = vpack.c.b16 %v4570, %v4562
        %v5683 = vpack.c.b16 %v4579, %v4571
        %v5684 = vpack.c.b16 %v4580, %v4572
        %v5685 = vpack.c.b16 %v4581, %v4573
        %v5686 = vpack.c.b16 %v4582, %v4574
        %v5687 = vpack.c.b16 %v4583, %v4575
        %v5688 = vpack.c.b16 %v4584, %v4576
        %v5689 = vpack.c.b16 %v4585, %v4577
        %v5690 = vpack.c.b16 %v4586, %v4578
        %v5691 = vpack.c.b16 %v4595, %v4587
        %v5692 = vpack.c.b16 %v4596, %v4588
        %v5693 = vpack.c.b16 %v4597, %v4589
        %v5694 = vpack.c.b16 %v4598, %v4590
        %v5695 = vpack.c.b16 %v4599, %v4591
        %v5696 = vpack.c.b16 %v4600, %v4592
        %v5697 = vpack.c.b16 %v4601, %v4593
        %v5698 = vpack.c.b16 %v4602, %v4594
        %v5699 = vpack.c.b16 %v4611, %v4603
        %v5700 = vpack.c.b16 %v4612, %v4604
        %v5701 = vpack.c.b16 %v4613, %v4605
        %v5702 = vpack.c.b16 %v4614, %v4606
        %v5703 = vpack.c.b16 %v4615, %v4607
        %v5704 = vpack.c.b16 %v4616, %v4608
        %v5705 = vpack.c.b16 %v4617, %v4609
        %v5706 = vpack.c.b16 %v4618, %v4610
        %v5707 = vpack.c.b16 %v4627, %v4619
        %v5708 = vpack.c.b16 %v4628, %v4620
        %v5709 = vpack.c.b16 %v4629, %v4621
        %v5710 = vpack.c.b16 %v4630, %v4622
        %v5711 = vpack.c.b16 %v4631, %v4623
        %v5712 = vpack.c.b16 %v4632, %v4624
        %v5713 = vpack.c.b16 %v4633, %v4625
        %v5714 = vpack.c.b16 %v4634, %v4626
        %v5715 = vpack.c.b16 %v4643, %v4635
        %v5716 = vpack.c.b16 %v4644, %v4636
        %v5717 = vpack.c.b16 %v4645, %v4637
        %v5718 = vpack.c.b16 %v4646, %v4638
        %v5719 = vpack.c.b16 %v4647, %v4639
        %v5720 = vpack.c.b16 %v4648, %v4640
        %v5721 = vpack.c.b16 %v4649, %v4641
        %v5722 = vpack.c.b16 %v4650, %v4642
        %v5723 = vpack.c.b16 %v4659, %v4651
        %v5724 = vpack.c.b16 %v4660, %v4652
        %v5725 = vpack.c.b16 %v4661, %v4653
        %v5726 = vpack.c.b16 %v4662, %v4654
        %v5727 = vpack.c.b16 %v4663, %v4655
        %v5728 = vpack.c.b16 %v4664, %v4656
        %v5729 = vpack.c.b16 %v4665, %v4657
        %v5730 = vpack.c.b16 %v4666, %v4658
        %v5731 = vpack.c.b16 %v4675, %v4667
        %v5732 = vpack.c.b16 %v4676, %v4668
        %v5733 = vpack.c.b16 %v4677, %v4669
        %v5734 = vpack.c.b16 %v4678, %v4670
        %v5735 = vpack.c.b16 %v4679, %v4671
        %v5736 = vpack.c.b16 %v4680, %v4672
        %v5737 = vpack.c.b16 %v4681, %v4673
        %v5738 = vpack.c.b16 %v4682, %v4674
        %v5739 = vpack.c.b16 %v4691, %v4683
        %v5740 = vpack.c.b16 %v4692, %v4684
        %v5741 = vpack.c.b16 %v4693, %v4685
        %v5742 = vpack.c.b16 %v4694, %v4686
        %v5743 = vpack.c.b16 %v4695, %v4687
        %v5744 = vpack.c.b16 %v4696, %v4688
        %v5745 = vpack.c.b16 %v4697, %v4689
        %v5746 = vpack.c.b16 %v4698, %v4690
        %v5747 = vpack.c.b16 %v4707, %v4699
        %v5748 = vpack.c.b16 %v4708, %v4700
        %v5749 = vpack.c.b16 %v4709, %v4701
        %v5750 = vpack.c.b16 %v4710, %v4702
        %v5751 = vpack.c.b16 %v4711, %v4703
        %v5752 = vpack.c.b16 %v4712, %v4704
        %v5753 = vpack.c.b16 %v4713, %v4705
        %v5754 = vpack.c.b16 %v4714, %v4706
        %v5755 = vpack.c.b16 %v4723, %v4715
        %v5756 = vpack.c.b16 %v4724, %v4716
        %v5757 = vpack.c.b16 %v4725, %v4717
        %v5758 = vpack.c.b16 %v4726, %v4718
        %v5759 = vpack.c.b16 %v4727, %v4719
        %v5760 = vpack.c.b16 %v4728, %v4720
        %v5761 = vpack.c.b16 %v4729, %v4721
        %v5762 = vpack.c.b16 %v4730, %v4722
        %v5763 = vpack.c.b16 %v4739, %v4731
        %v5764 = vpack.c.b16 %v4740, %v4732
        %v5765 = vpack.c.b16 %v4741, %v4733
        %v5766 = vpack.c.b16 %v4742, %v4734
        %v5767 = vpack.c.b16 %v4743, %v4735
        %v5768 = vpack.c.b16 %v4744, %v4736
        %v5769 = vpack.c.b16 %v4745, %v4737
        %v5770 = vpack.c.b16 %v4746, %v4738
        %6795 = vmatprep.subr.bf16.mxu0 %v4748
        %6796 = vmatpush1.bf16.msra.mxu0 %v4747
        %6797 = vmatprep.subr.bf16.mxu0 %v4756
        %6798 = vmatpush1.bf16.msra.mxu0 %v4755
        %6799 = vmatprep.subr.bf16.mxu0 %v4764
        %6800 = vmatpush1.bf16.msra.mxu0 %v4763
        %6801 = vmatprep.subr.bf16.mxu0 %v4772
        %6802 = vmatpush1.bf16.msra.mxu0 %v4771
        %6803 = vmatprep.subr.bf16.mxu0 %v4780
        %6804 = vmatpush1.bf16.msra.mxu0 %v4779
        %6805 = vmatprep.subr.bf16.mxu0 %v4788
        %6806 = vmatpush1.bf16.msra.mxu0 %v4787
        %6807 = vmatprep.subr.bf16.mxu0 %v4796
        %6808 = vmatpush1.bf16.msra.mxu0 %v4795
        %6809 = vmatprep.subr.bf16.mxu0 %v4804
        %6810 = vmatpush1.bf16.msra.mxu0 %v4803
        %6811 = vmatprep.subr.bf16.mxu0 %v4812
        %6812 = vmatpush1.bf16.msra.mxu0 %v4811
        %6813 = vmatprep.subr.bf16.mxu0 %v4820
        %6814 = vmatpush1.bf16.msra.mxu0 %v4819
        %6815 = vmatprep.subr.bf16.mxu0 %v4828
        %6816 = vmatpush1.bf16.msra.mxu0 %v4827
        %6817 = vmatprep.subr.bf16.mxu0 %v4836
        %6818 = vmatpush1.bf16.msra.mxu0 %v4835
        %6819 = vmatprep.subr.bf16.mxu0 %v4844
        %6820 = vmatpush1.bf16.msra.mxu0 %v4843
        %6821 = vmatprep.subr.bf16.mxu0 %v4852
        %6822 = vmatpush1.bf16.msra.mxu0 %v4851
        %6823 = vmatprep.subr.bf16.mxu0 %v4860
        %6824 = vmatpush1.bf16.msra.mxu0 %v4859
        %6825 = vmatprep.subr.bf16.mxu0 %v4868
        %6826 = vmatpush1.bf16.msra.mxu0 %v4867
        %6827 = vmatprep.mubr.bf16.mxu0 %v1598
        %6828 = vmatmul.mubr.bf16.gmra.mrb[0].mxu0 %v1584
        %v6829 = vpop.f32.mrb[0].mxu0
        %v6830 = vadd.f32 0.0, %v6829
        %v6831 = vpop.f32.mrb[0].mxu0
        %v6832 = vadd.f32 0.0, %v6831
        %v6833 = vpop.f32.mrb[0].mxu0
        %v6834 = vpop.f32.mrb[0].mxu0
        %6835 = vdwg.mxu0
        %6836 = vmatprep.subr.bf16.mxu0 %v4876
        %6837 = vmatpush1.bf16.msra.mxu0 %v4875
        %6838 = vmatprep.subr.bf16.mxu0 %v4884
        %6839 = vmatpush1.bf16.msra.mxu0 %v4883
        %6840 = vmatprep.subr.bf16.mxu0 %v4892
        %6841 = vmatpush1.bf16.msra.mxu0 %v4891
        %6842 = vmatprep.subr.bf16.mxu0 %v4900
        %6843 = vmatpush1.bf16.msra.mxu0 %v4899
        %6844 = vmatprep.subr.bf16.mxu0 %v4908
        %6845 = vmatpush1.bf16.msra.mxu0 %v4907
        %6846 = vmatprep.subr.bf16.mxu0 %v4916
        %6847 = vmatpush1.bf16.msra.mxu0 %v4915
        %6848 = vmatprep.subr.bf16.mxu0 %v4924
        %6849 = vmatpush1.bf16.msra.mxu0 %v4923
        %6850 = vmatprep.subr.bf16.mxu0 %v4932
        %6851 = vmatpush1.bf16.msra.mxu0 %v4931
        %6852 = vmatprep.subr.bf16.mxu0 %v4940
        %6853 = vmatpush1.bf16.msra.mxu0 %v4939
        %6854 = vmatprep.subr.bf16.mxu0 %v4948
        %6855 = vmatpush1.bf16.msra.mxu0 %v4947
        %6856 = vmatprep.subr.bf16.mxu0 %v4956
        %6857 = vmatpush1.bf16.msra.mxu0 %v4955
        %6858 = vmatprep.subr.bf16.mxu0 %v4964
        %6859 = vmatpush1.bf16.msra.mxu0 %v4963
        %6860 = vmatprep.subr.bf16.mxu0 %v4972
        %6861 = vmatpush1.bf16.msra.mxu0 %v4971
        %6862 = vmatprep.subr.bf16.mxu0 %v4980
        %6863 = vmatpush1.bf16.msra.mxu0 %v4979
        %6864 = vmatprep.subr.bf16.mxu0 %v4988
        %6865 = vmatpush1.bf16.msra.mxu0 %v4987
        %6866 = vmatprep.subr.bf16.mxu0 %v4996
        %6867 = vmatpush1.bf16.msra.mxu0 %v4995
        %6868 = vmatprep.mubr.bf16.mxu0 %v1608
        %6869 = vmatmul.mubr.bf16.gmra.mrb[0].mxu0 %v1606
        %v6870 = vpop.f32.mrb[0].mxu0
        %v6871 = vadd.f32 %v6830, %v6870
        %v6872 = vpop.f32.mrb[0].mxu0
        %v6873 = vadd.f32 %v6832, %v6872
        %v6874 = vpop.f32.mrb[0].mxu0
        %v6875 = vpop.f32.mrb[0].mxu0
        %6876 = vdwg.mxu0
        %6877 = vmatprep.subr.bf16.mxu0 %v5004
        %6878 = vmatpush1.bf16.msra.mxu0 %v5003
        %6879 = vmatprep.subr.bf16.mxu0 %v5012
        %6880 = vmatpush1.bf16.msra.mxu0 %v5011
        %6881 = vmatprep.subr.bf16.mxu0 %v5020
        %6882 = vmatpush1.bf16.msra.mxu0 %v5019
        %6883 = vmatprep.subr.bf16.mxu0 %v5028
        %6884 = vmatpush1.bf16.msra.mxu0 %v5027
        %6885 = vmatprep.subr.bf16.mxu0 %v5036
        %6886 = vmatpush1.bf16.msra.mxu0 %v5035
        %6887 = vmatprep.subr.bf16.mxu0 %v5044
        %6888 = vmatpush1.bf16.msra.mxu0 %v5043
        %6889 = vmatprep.subr.bf16.mxu0 %v5052
        %6890 = vmatpush1.bf16.msra.mxu0 %v5051
        %6891 = vmatprep.subr.bf16.mxu0 %v5060
        %6892 = vmatpush1.bf16.msra.mxu0 %v5059
        %6893 = vmatprep.subr.bf16.mxu0 %v5068
        %6894 = vmatpush1.bf16.msra.mxu0 %v5067
        %6895 = vmatprep.subr.bf16.mxu0 %v5076
        %6896 = vmatpush1.bf16.msra.mxu0 %v5075
        %6897 = vmatprep.subr.bf16.mxu0 %v5084
        %6898 = vmatpush1.bf16.msra.mxu0 %v5083
        %6899 = vmatprep.subr.bf16.mxu0 %v5092
        %6900 = vmatpush1.bf16.msra.mxu0 %v5091
        %6901 = vmatprep.subr.bf16.mxu0 %v5100
        %6902 = vmatpush1.bf16.msra.mxu0 %v5099
        %6903 = vmatprep.subr.bf16.mxu0 %v5108
        %6904 = vmatpush1.bf16.msra.mxu0 %v5107
        %6905 = vmatprep.subr.bf16.mxu0 %v5116
        %6906 = vmatpush1.bf16.msra.mxu0 %v5115
        %6907 = vmatprep.subr.bf16.mxu0 %v5124
        %6908 = vmatpush1.bf16.msra.mxu0 %v5123
        %6909 = vmatprep.mubr.bf16.mxu0 %v1605
        %6910 = vmatmul.mubr.bf16.gmra.mrb[0].mxu0 %v1591
        %v6911 = vpop.f32.mrb[0].mxu0
        %v6912 = vadd.f32 %v6871, %v6911
        %v6913 = vpop.f32.mrb[0].mxu0
        %v6914 = vadd.f32 %v6873, %v6913
        %v6915 = vpop.f32.mrb[0].mxu0
        %v6916 = vpop.f32.mrb[0].mxu0
        %6917 = vdwg.mxu0
        %6918 = vmatprep.subr.bf16.mxu0 %v5132
        %6919 = vmatpush1.bf16.msra.mxu0 %v5131
        %6920 = vmatprep.subr.bf16.mxu0 %v5140
        %6921 = vmatpush1.bf16.msra.mxu0 %v5139
        %6922 = vmatprep.subr.bf16.mxu0 %v5148
        %6923 = vmatpush1.bf16.msra.mxu0 %v5147
        %6924 = vmatprep.subr.bf16.mxu0 %v5156
        %6925 = vmatpush1.bf16.msra.mxu0 %v5155
        %6926 = vmatprep.subr.bf16.mxu0 %v5164
        %6927 = vmatpush1.bf16.msra.mxu0 %v5163
        %6928 = vmatprep.subr.bf16.mxu0 %v5172
        %6929 = vmatpush1.bf16.msra.mxu0 %v5171
        %6930 = vmatprep.subr.bf16.mxu0 %v5180
        %6931 = vmatpush1.bf16.msra.mxu0 %v5179
        %6932 = vmatprep.subr.bf16.mxu0 %v5188
        %6933 = vmatpush1.bf16.msra.mxu0 %v5187
        %6934 = vmatprep.subr.bf16.mxu0 %v5196
        %6935 = vmatpush1.bf16.msra.mxu0 %v5195
        %6936 = vmatprep.subr.bf16.mxu0 %v5204
        %6937 = vmatpush1.bf16.msra.mxu0 %v5203
        %6938 = vmatprep.subr.bf16.mxu0 %v5212
        %6939 = vmatpush1.bf16.msra.mxu0 %v5211
        %6940 = vmatprep.subr.bf16.mxu0 %v5220
        %6941 = vmatpush1.bf16.msra.mxu0 %v5219
        %6942 = vmatprep.subr.bf16.mxu0 %v5228
        %6943 = vmatpush1.bf16.msra.mxu0 %v5227
        %6944 = vmatprep.subr.bf16.mxu0 %v5236
        %6945 = vmatpush1.bf16.msra.mxu0 %v5235
        %6946 = vmatprep.subr.bf16.mxu0 %v5244
        %6947 = vmatpush1.bf16.msra.mxu0 %v5243
        %6948 = vmatprep.subr.bf16.mxu0 %v5252
        %6949 = vmatpush1.bf16.msra.mxu0 %v5251
        %6950 = vmatprep.mubr.bf16.mxu0 %v1609
        %6951 = vmatmul.mubr.bf16.gmra.mrb[0].mxu0 %v1607
        %v6952 = vpop.f32.mrb[0].mxu0
        %v6953 = vadd.f32 %v6912, %v6952
        %v6954 = vpop.f32.mrb[0].mxu0
        %v6955 = vadd.f32 %v6914, %v6954
        %v6956 = vpop.f32.mrb[0].mxu0
        %v6957 = vpop.f32.mrb[0].mxu0
        %6958 = vdwg.mxu0
        %6959 = vmatprep.subr.bf16.mxu0 %v5260
        %6960 = vmatpush1.bf16.msra.mxu0 %v5259
        %6961 = vmatprep.subr.bf16.mxu0 %v5268
        %6962 = vmatpush1.bf16.msra.mxu0 %v5267
        %6963 = vmatprep.subr.bf16.mxu0 %v5276
        %6964 = vmatpush1.bf16.msra.mxu0 %v5275
        %6965 = vmatprep.subr.bf16.mxu0 %v5284
        %6966 = vmatpush1.bf16.msra.mxu0 %v5283
        %6967 = vmatprep.subr.bf16.mxu0 %v5292
        %6968 = vmatpush1.bf16.msra.mxu0 %v5291
        %6969 = vmatprep.subr.bf16.mxu0 %v5300
        %6970 = vmatpush1.bf16.msra.mxu0 %v5299
        %6971 = vmatprep.subr.bf16.mxu0 %v5308
        %6972 = vmatpush1.bf16.msra.mxu0 %v5307
        %6973 = vmatprep.subr.bf16.mxu0 %v5316
        %6974 = vmatpush1.bf16.msra.mxu0 %v5315
        %6975 = vmatprep.subr.bf16.mxu0 %v5324
        %6976 = vmatpush1.bf16.msra.mxu0 %v5323
        %6977 = vmatprep.subr.bf16.mxu0 %v5332
        %6978 = vmatpush1.bf16.msra.mxu0 %v5331
        %6979 = vmatprep.subr.bf16.mxu0 %v5340
        %6980 = vmatpush1.bf16.msra.mxu0 %v5339
        %6981 = vmatprep.subr.bf16.mxu0 %v5348
        %6982 = vmatpush1.bf16.msra.mxu0 %v5347
        %6983 = vmatprep.subr.bf16.mxu0 %v5356
        %6984 = vmatpush1.bf16.msra.mxu0 %v5355
        %6985 = vmatprep.subr.bf16.mxu0 %v5364
        %6986 = vmatpush1.bf16.msra.mxu0 %v5363
        %6987 = vmatprep.subr.bf16.mxu0 %v5372
        %6988 = vmatpush1.bf16.msra.mxu0 %v5371
        %6989 = vmatprep.subr.bf16.mxu0 %v5380
        %6990 = vmatpush1.bf16.msra.mxu0 %v5379
        %6991 = vmatprep.mubr.bf16.mxu0 %v1647
        %6992 = vmatmul.mubr.bf16.gmra.mrb[0].mxu0 %v1633
        %v6993 = vpop.f32.mrb[0].mxu0
        %v6994 = vadd.f32 %v6953, %v6993
        %v6995 = vpop.f32.mrb[0].mxu0
        %v6996 = vadd.f32 %v6955, %v6995
        %v6997 = vpop.f32.mrb[0].mxu0
        %v6998 = vpop.f32.mrb[0].mxu0
        %6999 = vdwg.mxu0
        %7000 = vmatprep.subr.bf16.mxu0 %v5388
        %7001 = vmatpush1.bf16.msra.mxu0 %v5387
        %7002 = vmatprep.subr.bf16.mxu0 %v5396
        %7003 = vmatpush1.bf16.msra.mxu0 %v5395
        %7004 = vmatprep.subr.bf16.mxu0 %v5404
        %7005 = vmatpush1.bf16.msra.mxu0 %v5403
        %7006 = vmatprep.subr.bf16.mxu0 %v5412
        %7007 = vmatpush1.bf16.msra.mxu0 %v5411
        %7008 = vmatprep.subr.bf16.mxu0 %v5420
        %7009 = vmatpush1.bf16.msra.mxu0 %v5419
        %7010 = vmatprep.subr.bf16.mxu0 %v5428
        %7011 = vmatpush1.bf16.msra.mxu0 %v5427
        %7012 = vmatprep.subr.bf16.mxu0 %v5436
        %7013 = vmatpush1.bf16.msra.mxu0 %v5435
        %7014 = vmatprep.subr.bf16.mxu0 %v5444
        %7015 = vmatpush1.bf16.msra.mxu0 %v5443
        %7016 = vmatprep.subr.bf16.mxu0 %v5452
        %7017 = vmatpush1.bf16.msra.mxu0 %v5451
        %7018 = vmatprep.subr.bf16.mxu0 %v5460
        %7019 = vmatpush1.bf16.msra.mxu0 %v5459
        %7020 = vmatprep.subr.bf16.mxu0 %v5468
        %7021 = vmatpush1.bf16.msra.mxu0 %v5467
        %7022 = vmatprep.subr.bf16.mxu0 %v5476
        %7023 = vmatpush1.bf16.msra.mxu0 %v5475
        %7024 = vmatprep.subr.bf16.mxu0 %v5484
        %7025 = vmatpush1.bf16.msra.mxu0 %v5483
        %7026 = vmatprep.subr.bf16.mxu0 %v5492
        %7027 = vmatpush1.bf16.msra.mxu0 %v5491
        %7028 = vmatprep.subr.bf16.mxu0 %v5500
        %7029 = vmatpush1.bf16.msra.mxu0 %v5499
        %7030 = vmatprep.subr.bf16.mxu0 %v5508
        %7031 = vmatpush1.bf16.msra.mxu0 %v5507
        %7032 = vmatprep.mubr.bf16.mxu0 %v1657
        %7033 = vmatmul.mubr.bf16.gmra.mrb[0].mxu0 %v1655
        %v7034 = vpop.f32.mrb[0].mxu0
        %v7035 = vadd.f32 %v6994, %v7034
        %v7036 = vpop.f32.mrb[0].mxu0
        %v7037 = vadd.f32 %v6996, %v7036
        %v7038 = vpop.f32.mrb[0].mxu0
        %v7039 = vpop.f32.mrb[0].mxu0
        %7040 = vdwg.mxu0
        %7041 = vmatprep.subr.bf16.mxu0 %v5516
        %7042 = vmatpush1.bf16.msra.mxu0 %v5515
        %7043 = vmatprep.subr.bf16.mxu0 %v5524
        %7044 = vmatpush1.bf16.msra.mxu0 %v5523
        %7045 = vmatprep.subr.bf16.mxu0 %v5532
        %7046 = vmatpush1.bf16.msra.mxu0 %v5531
        %7047 = vmatprep.subr.bf16.mxu0 %v5540
        %7048 = vmatpush1.bf16.msra.mxu0 %v5539
        %7049 = vmatprep.subr.bf16.mxu0 %v5548
        %7050 = vmatpush1.bf16.msra.mxu0 %v5547
        %7051 = vmatprep.subr.bf16.mxu0 %v5556
        %7052 = vmatpush1.bf16.msra.mxu0 %v5555
        %7053 = vmatprep.subr.bf16.mxu0 %v5564
        %7054 = vmatpush1.bf16.msra.mxu0 %v5563
        %7055 = vmatprep.subr.bf16.mxu0 %v5572
        %7056 = vmatpush1.bf16.msra.mxu0 %v5571
        %7057 = vmatprep.subr.bf16.mxu0 %v5580
        %7058 = vmatpush1.bf16.msra.mxu0 %v5579
        %7059 = vmatprep.subr.bf16.mxu0 %v5588
        %7060 = vmatpush1.bf16.msra.mxu0 %v5587
        %7061 = vmatprep.subr.bf16.mxu0 %v5596
        %7062 = vmatpush1.bf16.msra.mxu0 %v5595
        %7063 = vmatprep.subr.bf16.mxu0 %v5604
        %7064 = vmatpush1.bf16.msra.mxu0 %v5603
        %7065 = vmatprep.subr.bf16.mxu0 %v5612
        %7066 = vmatpush1.bf16.msra.mxu0 %v5611
        %7067 = vmatprep.subr.bf16.mxu0 %v5620
        %7068 = vmatpush1.bf16.msra.mxu0 %v5619
        %7069 = vmatprep.subr.bf16.mxu0 %v5628
        %7070 = vmatpush1.bf16.msra.mxu0 %v5627
        %7071 = vmatprep.subr.bf16.mxu0 %v5636
        %7072 = vmatpush1.bf16.msra.mxu0 %v5635
        %7073 = vmatprep.mubr.bf16.mxu0 %v1654
        %7074 = vmatmul.mubr.bf16.gmra.mrb[0].mxu0 %v1640
        %v7075 = vpop.f32.mrb[0].mxu0
        %v7076 = vadd.f32 %v7035, %v7075
        %v7077 = vpop.f32.mrb[0].mxu0
        %v7078 = vadd.f32 %v7037, %v7077
        %v7079 = vpop.f32.mrb[0].mxu0
        %v7080 = vpop.f32.mrb[0].mxu0
        %7081 = vdwg.mxu0
        %7082 = vmatprep.subr.bf16.mxu0 %v5644
        %7083 = vmatpush1.bf16.msra.mxu0 %v5643
        %7084 = vmatprep.subr.bf16.mxu0 %v5652
        %7085 = vmatpush1.bf16.msra.mxu0 %v5651
        %7086 = vmatprep.subr.bf16.mxu0 %v5660
        %7087 = vmatpush1.bf16.msra.mxu0 %v5659
        %7088 = vmatprep.subr.bf16.mxu0 %v5668
        %7089 = vmatpush1.bf16.msra.mxu0 %v5667
        %7090 = vmatprep.subr.bf16.mxu0 %v5676
        %7091 = vmatpush1.bf16.msra.mxu0 %v5675
        %7092 = vmatprep.subr.bf16.mxu0 %v5684
        %7093 = vmatpush1.bf16.msra.mxu0 %v5683
        %7094 = vmatprep.subr.bf16.mxu0 %v5692
        %7095 = vmatpush1.bf16.msra.mxu0 %v5691
        %7096 = vmatprep.subr.bf16.mxu0 %v5700
        %7097 = vmatpush1.bf16.msra.mxu0 %v5699
        %7098 = vmatprep.subr.bf16.mxu0 %v5708
        %7099 = vmatpush1.bf16.msra.mxu0 %v5707
        %7100 = vmatprep.subr.bf16.mxu0 %v5716
        %7101 = vmatpush1.bf16.msra.mxu0 %v5715
        %7102 = vmatprep.subr.bf16.mxu0 %v5724
        %7103 = vmatpush1.bf16.msra.mxu0 %v5723
        %7104 = vmatprep.subr.bf16.mxu0 %v5732
        %7105 = vmatpush1.bf16.msra.mxu0 %v5731
        %7106 = vmatprep.subr.bf16.mxu0 %v5740
        %7107 = vmatpush1.bf16.msra.mxu0 %v5739
        %7108 = vmatprep.subr.bf16.mxu0 %v5748
        %7109 = vmatpush1.bf16.msra.mxu0 %v5747
        %7110 = vmatprep.subr.bf16.mxu0 %v5756
        %7111 = vmatpush1.bf16.msra.mxu0 %v5755
        %7112 = vmatprep.subr.bf16.mxu0 %v5764
        %7113 = vmatpush1.bf16.msra.mxu0 %v5763
        %7114 = vmatprep.mubr.bf16.mxu0 %v1658
        %7115 = vmatmul.mubr.bf16.gmra.mrb[0].mxu0 %v1656
        %v7116 = vpop.f32.mrb[0].mxu0
        %v7117 = vadd.f32 %v7076, %v7116
        %v7118 = vpop.f32.mrb[0].mxu0
        %v7119 = vadd.f32 %v7078, %v7118
        %v7120 = vpop.f32.mrb[0].mxu0
        %v7121 = vpop.f32.mrb[0].mxu0
        %7122 = vdwg.mxu0
        %7123 = vmatprep.subr.bf16.mxu0 %v4750
        %7124 = vmatpush1.bf16.msra.mxu0 %v4749
        %7125 = vmatprep.subr.bf16.mxu0 %v4758
        %7126 = vmatpush1.bf16.msra.mxu0 %v4757
        %7127 = vmatprep.subr.bf16.mxu0 %v4766
        %7128 = vmatpush1.bf16.msra.mxu0 %v4765
        %7129 = vmatprep.subr.bf16.mxu0 %v4774
        %7130 = vmatpush1.bf16.msra.mxu0 %v4773
        %7131 = vmatprep.subr.bf16.mxu0 %v4782
        %7132 = vmatpush1.bf16.msra.mxu0 %v4781
        %7133 = vmatprep.subr.bf16.mxu0 %v4790
        %7134 = vmatpush1.bf16.msra.mxu0 %v4789
        %7135 = vmatprep.subr.bf16.mxu0 %v4798
        %7136 = vmatpush1.bf16.msra.mxu0 %v4797
        %7137 = vmatprep.subr.bf16.mxu0 %v4806
        %7138 = vmatpush1.bf16.msra.mxu0 %v4805
        %7139 = vmatprep.subr.bf16.mxu0 %v4814
        %7140 = vmatpush1.bf16.msra.mxu0 %v4813
        %7141 = vmatprep.subr.bf16.mxu0 %v4822
        %7142 = vmatpush1.bf16.msra.mxu0 %v4821
        %7143 = vmatprep.subr.bf16.mxu0 %v4830
        %7144 = vmatpush1.bf16.msra.mxu0 %v4829
        %7145 = vmatprep.subr.bf16.mxu0 %v4838
        %7146 = vmatpush1.bf16.msra.mxu0 %v4837
        %7147 = vmatprep.subr.bf16.mxu0 %v4846
        %7148 = vmatpush1.bf16.msra.mxu0 %v4845
        %7149 = vmatprep.subr.bf16.mxu0 %v4854
        %7150 = vmatpush1.bf16.msra.mxu0 %v4853
        %7151 = vmatprep.subr.bf16.mxu0 %v4862
        %7152 = vmatpush1.bf16.msra.mxu0 %v4861
        %7153 = vmatprep.subr.bf16.mxu0 %v4870
        %7154 = vmatpush1.bf16.msra.mxu0 %v4869
        %7155 = vmatprep.mubr.bf16.mxu0 %v1598
        %7156 = vmatmul.mubr.bf16.gmra.mrb[0].mxu0 %v1584
        %v7157 = vpop.f32.mrb[0].mxu0
        %v7158 = vadd.f32 0.0, %v7157
        %v7159 = vpop.f32.mrb[0].mxu0
        %v7160 = vadd.f32 0.0, %v7159
        %v7161 = vpop.f32.mrb[0].mxu0
        %v7162 = vpop.f32.mrb[0].mxu0
        %7163 = vdwg.mxu0
        %7164 = vmatprep.subr.bf16.mxu0 %v4878
        %7165 = vmatpush1.bf16.msra.mxu0 %v4877
        %7166 = vmatprep.subr.bf16.mxu0 %v4886
        %7167 = vmatpush1.bf16.msra.mxu0 %v4885
        %7168 = vmatprep.subr.bf16.mxu0 %v4894
        %7169 = vmatpush1.bf16.msra.mxu0 %v4893
        %7170 = vmatprep.subr.bf16.mxu0 %v4902
        %7171 = vmatpush1.bf16.msra.mxu0 %v4901
        %7172 = vmatprep.subr.bf16.mxu0 %v4910
        %7173 = vmatpush1.bf16.msra.mxu0 %v4909
        %7174 = vmatprep.subr.bf16.mxu0 %v4918
        %7175 = vmatpush1.bf16.msra.mxu0 %v4917
        %7176 = vmatprep.subr.bf16.mxu0 %v4926
        %7177 = vmatpush1.bf16.msra.mxu0 %v4925
        %7178 = vmatprep.subr.bf16.mxu0 %v4934
        %7179 = vmatpush1.bf16.msra.mxu0 %v4933
        %7180 = vmatprep.subr.bf16.mxu0 %v4942
        %7181 = vmatpush1.bf16.msra.mxu0 %v4941
        %7182 = vmatprep.subr.bf16.mxu0 %v4950
        %7183 = vmatpush1.bf16.msra.mxu0 %v4949
        %7184 = vmatprep.subr.bf16.mxu0 %v4958
        %7185 = vmatpush1.bf16.msra.mxu0 %v4957
        %7186 = vmatprep.subr.bf16.mxu0 %v4966
        %7187 = vmatpush1.bf16.msra.mxu0 %v4965
        %7188 = vmatprep.subr.bf16.mxu0 %v4974
        %7189 = vmatpush1.bf16.msra.mxu0 %v4973
        %7190 = vmatprep.subr.bf16.mxu0 %v4982
        %7191 = vmatpush1.bf16.msra.mxu0 %v4981
        %7192 = vmatprep.subr.bf16.mxu0 %v4990
        %7193 = vmatpush1.bf16.msra.mxu0 %v4989
        %7194 = vmatprep.subr.bf16.mxu0 %v4998
        %7195 = vmatpush1.bf16.msra.mxu0 %v4997
        %7196 = vmatprep.mubr.bf16.mxu0 %v1608
        %7197 = vmatmul.mubr.bf16.gmra.mrb[0].mxu0 %v1606
        %v7198 = vpop.f32.mrb[0].mxu0
        %v7199 = vadd.f32 %v7158, %v7198
        %v7200 = vpop.f32.mrb[0].mxu0
        %v7201 = vadd.f32 %v7160, %v7200
        %v7202 = vpop.f32.mrb[0].mxu0
        %v7203 = vpop.f32.mrb[0].mxu0
        %7204 = vdwg.mxu0
        %7205 = vmatprep.subr.bf16.mxu0 %v5006
        %7206 = vmatpush1.bf16.msra.mxu0 %v5005
        %7207 = vmatprep.subr.bf16.mxu0 %v5014
        %7208 = vmatpush1.bf16.msra.mxu0 %v5013
        %7209 = vmatprep.subr.bf16.mxu0 %v5022
        %7210 = vmatpush1.bf16.msra.mxu0 %v5021
        %7211 = vmatprep.subr.bf16.mxu0 %v5030
        %7212 = vmatpush1.bf16.msra.mxu0 %v5029
        %7213 = vmatprep.subr.bf16.mxu0 %v5038
        %7214 = vmatpush1.bf16.msra.mxu0 %v5037
        %7215 = vmatprep.subr.bf16.mxu0 %v5046
        %7216 = vmatpush1.bf16.msra.mxu0 %v5045
        %7217 = vmatprep.subr.bf16.mxu0 %v5054
        %7218 = vmatpush1.bf16.msra.mxu0 %v5053
        %7219 = vmatprep.subr.bf16.mxu0 %v5062
        %7220 = vmatpush1.bf16.msra.mxu0 %v5061
        %7221 = vmatprep.subr.bf16.mxu0 %v5070
        %7222 = vmatpush1.bf16.msra.mxu0 %v5069
        %7223 = vmatprep.subr.bf16.mxu0 %v5078
        %7224 = vmatpush1.bf16.msra.mxu0 %v5077
        %7225 = vmatprep.subr.bf16.mxu0 %v5086
        %7226 = vmatpush1.bf16.msra.mxu0 %v5085
        %7227 = vmatprep.subr.bf16.mxu0 %v5094
        %7228 = vmatpush1.bf16.msra.mxu0 %v5093
        %7229 = vmatprep.subr.bf16.mxu0 %v5102
        %7230 = vmatpush1.bf16.msra.mxu0 %v5101
        %7231 = vmatprep.subr.bf16.mxu0 %v5110
        %7232 = vmatpush1.bf16.msra.mxu0 %v5109
        %7233 = vmatprep.subr.bf16.mxu0 %v5118
        %7234 = vmatpush1.bf16.msra.mxu0 %v5117
        %7235 = vmatprep.subr.bf16.mxu0 %v5126
        %7236 = vmatpush1.bf16.msra.mxu0 %v5125
        %7237 = vmatprep.mubr.bf16.mxu0 %v1605
        %7238 = vmatmul.mubr.bf16.gmra.mrb[0].mxu0 %v1591
        %v7239 = vpop.f32.mrb[0].mxu0
        %v7240 = vadd.f32 %v7199, %v7239
        %v7241 = vpop.f32.mrb[0].mxu0
        %v7242 = vadd.f32 %v7201, %v7241
        %v7243 = vpop.f32.mrb[0].mxu0
        %v7244 = vpop.f32.mrb[0].mxu0
        %7245 = vdwg.mxu0
        %7246 = vmatprep.subr.bf16.mxu0 %v5134
        %7247 = vmatpush1.bf16.msra.mxu0 %v5133
        %7248 = vmatprep.subr.bf16.mxu0 %v5142
        %7249 = vmatpush1.bf16.msra.mxu0 %v5141
        %7250 = vmatprep.subr.bf16.mxu0 %v5150
        %7251 = vmatpush1.bf16.msra.mxu0 %v5149
        %7252 = vmatprep.subr.bf16.mxu0 %v5158
        %7253 = vmatpush1.bf16.msra.mxu0 %v5157
        %7254 = vmatprep.subr.bf16.mxu0 %v5166
        %7255 = vmatpush1.bf16.msra.mxu0 %v5165
        %7256 = vmatprep.subr.bf16.mxu0 %v5174
        %7257 = vmatpush1.bf16.msra.mxu0 %v5173
        %7258 = vmatprep.subr.bf16.mxu0 %v5182
        %7259 = vmatpush1.bf16.msra.mxu0 %v5181
        %7260 = vmatprep.subr.bf16.mxu0 %v5190
        %7261 = vmatpush1.bf16.msra.mxu0 %v5189
        %7262 = vmatprep.subr.bf16.mxu0 %v5198
        %7263 = vmatpush1.bf16.msra.mxu0 %v5197
        %7264 = vmatprep.subr.bf16.mxu0 %v5206
        %7265 = vmatpush1.bf16.msra.mxu0 %v5205
        %7266 = vmatprep.subr.bf16.mxu0 %v5214
        %7267 = vmatpush1.bf16.msra.mxu0 %v5213
        %7268 = vmatprep.subr.bf16.mxu0 %v5222
        %7269 = vmatpush1.bf16.msra.mxu0 %v5221
        %7270 = vmatprep.subr.bf16.mxu0 %v5230
        %7271 = vmatpush1.bf16.msra.mxu0 %v5229
        %7272 = vmatprep.subr.bf16.mxu0 %v5238
        %7273 = vmatpush1.bf16.msra.mxu0 %v5237
        %7274 = vmatprep.subr.bf16.mxu0 %v5246
        %7275 = vmatpush1.bf16.msra.mxu0 %v5245
        %7276 = vmatprep.subr.bf16.mxu0 %v5254
        %7277 = vmatpush1.bf16.msra.mxu0 %v5253
        %7278 = vmatprep.mubr.bf16.mxu0 %v1609
        %7279 = vmatmul.mubr.bf16.gmra.mrb[0].mxu0 %v1607
        %v7280 = vpop.f32.mrb[0].mxu0
        %v7281 = vadd.f32 %v7240, %v7280
        %v7282 = vpop.f32.mrb[0].mxu0
        %v7283 = vadd.f32 %v7242, %v7282
        %v7284 = vpop.f32.mrb[0].mxu0
        %v7285 = vpop.f32.mrb[0].mxu0
        %7286 = vdwg.mxu0
        %7287 = vmatprep.subr.bf16.mxu0 %v5262
        %7288 = vmatpush1.bf16.msra.mxu0 %v5261
        %7289 = vmatprep.subr.bf16.mxu0 %v5270
        %7290 = vmatpush1.bf16.msra.mxu0 %v5269
        %7291 = vmatprep.subr.bf16.mxu0 %v5278
        %7292 = vmatpush1.bf16.msra.mxu0 %v5277
        %7293 = vmatprep.subr.bf16.mxu0 %v5286
        %7294 = vmatpush1.bf16.msra.mxu0 %v5285
        %7295 = vmatprep.subr.bf16.mxu0 %v5294
        %7296 = vmatpush1.bf16.msra.mxu0 %v5293
        %7297 = vmatprep.subr.bf16.mxu0 %v5302
        %7298 = vmatpush1.bf16.msra.mxu0 %v5301
        %7299 = vmatprep.subr.bf16.mxu0 %v5310
        %7300 = vmatpush1.bf16.msra.mxu0 %v5309
        %7301 = vmatprep.subr.bf16.mxu0 %v5318
        %7302 = vmatpush1.bf16.msra.mxu0 %v5317
        %7303 = vmatprep.subr.bf16.mxu0 %v5326
        %7304 = vmatpush1.bf16.msra.mxu0 %v5325
        %7305 = vmatprep.subr.bf16.mxu0 %v5334
        %7306 = vmatpush1.bf16.msra.mxu0 %v5333
        %7307 = vmatprep.subr.bf16.mxu0 %v5342
        %7308 = vmatpush1.bf16.msra.mxu0 %v5341
        %7309 = vmatprep.subr.bf16.mxu0 %v5350
        %7310 = vmatpush1.bf16.msra.mxu0 %v5349
        %7311 = vmatprep.subr.bf16.mxu0 %v5358
        %7312 = vmatpush1.bf16.msra.mxu0 %v5357
        %7313 = vmatprep.subr.bf16.mxu0 %v5366
        %7314 = vmatpush1.bf16.msra.mxu0 %v5365
        %7315 = vmatprep.subr.bf16.mxu0 %v5374
        %7316 = vmatpush1.bf16.msra.mxu0 %v5373
        %7317 = vmatprep.subr.bf16.mxu0 %v5382
        %7318 = vmatpush1.bf16.msra.mxu0 %v5381
        %7319 = vmatprep.mubr.bf16.mxu0 %v1647
        %7320 = vmatmul.mubr.bf16.gmra.mrb[0].mxu0 %v1633
        %v7321 = vpop.f32.mrb[0].mxu0
        %v7322 = vadd.f32 %v7281, %v7321
        %v7323 = vpop.f32.mrb[0].mxu0
        %v7324 = vadd.f32 %v7283, %v7323
        %v7325 = vpop.f32.mrb[0].mxu0
        %v7326 = vpop.f32.mrb[0].mxu0
        %7327 = vdwg.mxu0
        %7328 = vmatprep.subr.bf16.mxu0 %v5390
        %7329 = vmatpush1.bf16.msra.mxu0 %v5389
        %7330 = vmatprep.subr.bf16.mxu0 %v5398
        %7331 = vmatpush1.bf16.msra.mxu0 %v5397
        %7332 = vmatprep.subr.bf16.mxu0 %v5406
        %7333 = vmatpush1.bf16.msra.mxu0 %v5405
        %7334 = vmatprep.subr.bf16.mxu0 %v5414
        %7335 = vmatpush1.bf16.msra.mxu0 %v5413
        %7336 = vmatprep.subr.bf16.mxu0 %v5422
        %7337 = vmatpush1.bf16.msra.mxu0 %v5421
        %7338 = vmatprep.subr.bf16.mxu0 %v5430
        %7339 = vmatpush1.bf16.msra.mxu0 %v5429
        %7340 = vmatprep.subr.bf16.mxu0 %v5438
        %7341 = vmatpush1.bf16.msra.mxu0 %v5437
        %7342 = vmatprep.subr.bf16.mxu0 %v5446
        %7343 = vmatpush1.bf16.msra.mxu0 %v5445
        %7344 = vmatprep.subr.bf16.mxu0 %v5454
        %7345 = vmatpush1.bf16.msra.mxu0 %v5453
        %7346 = vmatprep.subr.bf16.mxu0 %v5462
        %7347 = vmatpush1.bf16.msra.mxu0 %v5461
        %7348 = vmatprep.subr.bf16.mxu0 %v5470
        %7349 = vmatpush1.bf16.msra.mxu0 %v5469
        %7350 = vmatprep.subr.bf16.mxu0 %v5478
        %7351 = vmatpush1.bf16.msra.mxu0 %v5477
        %7352 = vmatprep.subr.bf16.mxu0 %v5486
        %7353 = vmatpush1.bf16.msra.mxu0 %v5485
        %7354 = vmatprep.subr.bf16.mxu0 %v5494
        %7355 = vmatpush1.bf16.msra.mxu0 %v5493
        %7356 = vmatprep.subr.bf16.mxu0 %v5502
        %7357 = vmatpush1.bf16.msra.mxu0 %v5501
        %7358 = vmatprep.subr.bf16.mxu0 %v5510
        %7359 = vmatpush1.bf16.msra.mxu0 %v5509
        %7360 = vmatprep.mubr.bf16.mxu0 %v1657
        %7361 = vmatmul.mubr.bf16.gmra.mrb[0].mxu0 %v1655
        %v7362 = vpop.f32.mrb[0].mxu0
        %v7363 = vadd.f32 %v7322, %v7362
        %v7364 = vpop.f32.mrb[0].mxu0
        %v7365 = vadd.f32 %v7324, %v7364
        %v7366 = vpop.f32.mrb[0].mxu0
        %v7367 = vpop.f32.mrb[0].mxu0
        %7368 = vdwg.mxu0
        %7369 = vmatprep.subr.bf16.mxu0 %v5518
        %7370 = vmatpush1.bf16.msra.mxu0 %v5517
        %7371 = vmatprep.subr.bf16.mxu0 %v5526
        %7372 = vmatpush1.bf16.msra.mxu0 %v5525
        %7373 = vmatprep.subr.bf16.mxu0 %v5534
        %7374 = vmatpush1.bf16.msra.mxu0 %v5533
        %7375 = vmatprep.subr.bf16.mxu0 %v5542
        %7376 = vmatpush1.bf16.msra.mxu0 %v5541
        %7377 = vmatprep.subr.bf16.mxu0 %v5550
        %7378 = vmatpush1.bf16.msra.mxu0 %v5549
        %7379 = vmatprep.subr.bf16.mxu0 %v5558
        %7380 = vmatpush1.bf16.msra.mxu0 %v5557
        %7381 = vmatprep.subr.bf16.mxu0 %v5566
        %7382 = vmatpush1.bf16.msra.mxu0 %v5565
        %7383 = vmatprep.subr.bf16.mxu0 %v5574
        %7384 = vmatpush1.bf16.msra.mxu0 %v5573
        %7385 = vmatprep.subr.bf16.mxu0 %v5582
        %7386 = vmatpush1.bf16.msra.mxu0 %v5581
        %7387 = vmatprep.subr.bf16.mxu0 %v5590
        %7388 = vmatpush1.bf16.msra.mxu0 %v5589
        %7389 = vmatprep.subr.bf16.mxu0 %v5598
        %7390 = vmatpush1.bf16.msra.mxu0 %v5597
        %7391 = vmatprep.subr.bf16.mxu0 %v5606
        %7392 = vmatpush1.bf16.msra.mxu0 %v5605
        %7393 = vmatprep.subr.bf16.mxu0 %v5614
        %7394 = vmatpush1.bf16.msra.mxu0 %v5613
        %7395 = vmatprep.subr.bf16.mxu0 %v5622
        %7396 = vmatpush1.bf16.msra.mxu0 %v5621
        %7397 = vmatprep.subr.bf16.mxu0 %v5630
        %7398 = vmatpush1.bf16.msra.mxu0 %v5629
        %7399 = vmatprep.subr.bf16.mxu0 %v5638
        %7400 = vmatpush1.bf16.msra.mxu0 %v5637
        %7401 = vmatprep.mubr.bf16.mxu0 %v1654
        %7402 = vmatmul.mubr.bf16.gmra.mrb[0].mxu0 %v1640
        %v7403 = vpop.f32.mrb[0].mxu0
        %v7404 = vadd.f32 %v7363, %v7403
        %v7405 = vpop.f32.mrb[0].mxu0
        %v7406 = vadd.f32 %v7365, %v7405
        %v7407 = vpop.f32.mrb[0].mxu0
        %v7408 = vpop.f32.mrb[0].mxu0
        %7409 = vdwg.mxu0
        %7410 = vmatprep.subr.bf16.mxu0 %v5646
        %7411 = vmatpush1.bf16.msra.mxu0 %v5645
        %7412 = vmatprep.subr.bf16.mxu0 %v5654
        %7413 = vmatpush1.bf16.msra.mxu0 %v5653
        %7414 = vmatprep.subr.bf16.mxu0 %v5662
        %7415 = vmatpush1.bf16.msra.mxu0 %v5661
        %7416 = vmatprep.subr.bf16.mxu0 %v5670
        %7417 = vmatpush1.bf16.msra.mxu0 %v5669
        %7418 = vmatprep.subr.bf16.mxu0 %v5678
        %7419 = vmatpush1.bf16.msra.mxu0 %v5677
        %7420 = vmatprep.subr.bf16.mxu0 %v5686
        %7421 = vmatpush1.bf16.msra.mxu0 %v5685
        %7422 = vmatprep.subr.bf16.mxu0 %v5694
        %7423 = vmatpush1.bf16.msra.mxu0 %v5693
        %7424 = vmatprep.subr.bf16.mxu0 %v5702
        %7425 = vmatpush1.bf16.msra.mxu0 %v5701
        %7426 = vmatprep.subr.bf16.mxu0 %v5710
        %7427 = vmatpush1.bf16.msra.mxu0 %v5709
        %7428 = vmatprep.subr.bf16.mxu0 %v5718
        %7429 = vmatpush1.bf16.msra.mxu0 %v5717
        %7430 = vmatprep.subr.bf16.mxu0 %v5726
        %7431 = vmatpush1.bf16.msra.mxu0 %v5725
        %7432 = vmatprep.subr.bf16.mxu0 %v5734
        %7433 = vmatpush1.bf16.msra.mxu0 %v5733
        %7434 = vmatprep.subr.bf16.mxu0 %v5742
        %7435 = vmatpush1.bf16.msra.mxu0 %v5741
        %7436 = vmatprep.subr.bf16.mxu0 %v5750
        %7437 = vmatpush1.bf16.msra.mxu0 %v5749
        %7438 = vmatprep.subr.bf16.mxu0 %v5758
        %7439 = vmatpush1.bf16.msra.mxu0 %v5757
        %7440 = vmatprep.subr.bf16.mxu0 %v5766
        %7441 = vmatpush1.bf16.msra.mxu0 %v5765
        %7442 = vmatprep.mubr.bf16.mxu0 %v1658
        %7443 = vmatmul.mubr.bf16.gmra.mrb[0].mxu0 %v1656
        %v7444 = vpop.f32.mrb[0].mxu0
        %v7445 = vadd.f32 %v7404, %v7444
        %v7446 = vpop.f32.mrb[0].mxu0
        %v7447 = vadd.f32 %v7406, %v7446
        %v7448 = vpop.f32.mrb[0].mxu0
        %v7449 = vpop.f32.mrb[0].mxu0
        %7450 = vdwg.mxu0
        %7451 = vmatprep.subr.bf16.mxu0 %v4752
        %7452 = vmatpush1.bf16.msra.mxu0 %v4751
        %7453 = vmatprep.subr.bf16.mxu0 %v4760
        %7454 = vmatpush1.bf16.msra.mxu0 %v4759
        %7455 = vmatprep.subr.bf16.mxu0 %v4768
        %7456 = vmatpush1.bf16.msra.mxu0 %v4767
        %7457 = vmatprep.subr.bf16.mxu0 %v4776
        %7458 = vmatpush1.bf16.msra.mxu0 %v4775
        %7459 = vmatprep.subr.bf16.mxu0 %v4784
        %7460 = vmatpush1.bf16.msra.mxu0 %v4783
        %7461 = vmatprep.subr.bf16.mxu0 %v4792
        %7462 = vmatpush1.bf16.msra.mxu0 %v4791
        %7463 = vmatprep.subr.bf16.mxu0 %v4800
        %7464 = vmatpush1.bf16.msra.mxu0 %v4799
        %7465 = vmatprep.subr.bf16.mxu0 %v4808
        %7466 = vmatpush1.bf16.msra.mxu0 %v4807
        %7467 = vmatprep.subr.bf16.mxu0 %v4816
        %7468 = vmatpush1.bf16.msra.mxu0 %v4815
        %7469 = vmatprep.subr.bf16.mxu0 %v4824
        %7470 = vmatpush1.bf16.msra.mxu0 %v4823
        %7471 = vmatprep.subr.bf16.mxu0 %v4832
        %7472 = vmatpush1.bf16.msra.mxu0 %v4831
        %7473 = vmatprep.subr.bf16.mxu0 %v4840
        %7474 = vmatpush1.bf16.msra.mxu0 %v4839
        %7475 = vmatprep.subr.bf16.mxu0 %v4848
        %7476 = vmatpush1.bf16.msra.mxu0 %v4847
        %7477 = vmatprep.subr.bf16.mxu0 %v4856
        %7478 = vmatpush1.bf16.msra.mxu0 %v4855
        %7479 = vmatprep.subr.bf16.mxu0 %v4864
        %7480 = vmatpush1.bf16.msra.mxu0 %v4863
        %7481 = vmatprep.subr.bf16.mxu0 %v4872
        %7482 = vmatpush1.bf16.msra.mxu0 %v4871
        %7483 = vmatprep.mubr.bf16.mxu0 %v1598
        %7484 = vmatmul.mubr.bf16.gmra.mrb[0].mxu0 %v1584
        %v7485 = vpop.f32.mrb[0].mxu0
        %v7486 = vadd.f32 0.0, %v7485
        %v7487 = vpop.f32.mrb[0].mxu0
        %v7488 = vadd.f32 0.0, %v7487
        %v7489 = vpop.f32.mrb[0].mxu0
        %v7490 = vpop.f32.mrb[0].mxu0
        %7491 = vdwg.mxu0
        %7492 = vmatprep.subr.bf16.mxu0 %v4880
        %7493 = vmatpush1.bf16.msra.mxu0 %v4879
        %7494 = vmatprep.subr.bf16.mxu0 %v4888
        %7495 = vmatpush1.bf16.msra.mxu0 %v4887
        %7496 = vmatprep.subr.bf16.mxu0 %v4896
        %7497 = vmatpush1.bf16.msra.mxu0 %v4895
        %7498 = vmatprep.subr.bf16.mxu0 %v4904
        %7499 = vmatpush1.bf16.msra.mxu0 %v4903
        %7500 = vmatprep.subr.bf16.mxu0 %v4912
        %7501 = vmatpush1.bf16.msra.mxu0 %v4911
        %7502 = vmatprep.subr.bf16.mxu0 %v4920
        %7503 = vmatpush1.bf16.msra.mxu0 %v4919
        %7504 = vmatprep.subr.bf16.mxu0 %v4928
        %7505 = vmatpush1.bf16.msra.mxu0 %v4927
        %7506 = vmatprep.subr.bf16.mxu0 %v4936
        %7507 = vmatpush1.bf16.msra.mxu0 %v4935
        %7508 = vmatprep.subr.bf16.mxu0 %v4944
        %7509 = vmatpush1.bf16.msra.mxu0 %v4943
        %7510 = vmatprep.subr.bf16.mxu0 %v4952
        %7511 = vmatpush1.bf16.msra.mxu0 %v4951
        %7512 = vmatprep.subr.bf16.mxu0 %v4960
        %7513 = vmatpush1.bf16.msra.mxu0 %v4959
        %7514 = vmatprep.subr.bf16.mxu0 %v4968
        %7515 = vmatpush1.bf16.msra.mxu0 %v4967
        %7516 = vmatprep.subr.bf16.mxu0 %v4976
        %7517 = vmatpush1.bf16.msra.mxu0 %v4975
        %7518 = vmatprep.subr.bf16.mxu0 %v4984
        %7519 = vmatpush1.bf16.msra.mxu0 %v4983
        %7520 = vmatprep.subr.bf16.mxu0 %v4992
        %7521 = vmatpush1.bf16.msra.mxu0 %v4991
        %7522 = vmatprep.subr.bf16.mxu0 %v5000
        %7523 = vmatpush1.bf16.msra.mxu0 %v4999
        %7524 = vmatprep.mubr.bf16.mxu0 %v1608
        %7525 = vmatmul.mubr.bf16.gmra.mrb[0].mxu0 %v1606
        %v7526 = vpop.f32.mrb[0].mxu0
        %v7527 = vadd.f32 %v7486, %v7526
        %v7528 = vpop.f32.mrb[0].mxu0
        %v7529 = vadd.f32 %v7488, %v7528
        %v7530 = vpop.f32.mrb[0].mxu0
        %v7531 = vpop.f32.mrb[0].mxu0
        %7532 = vdwg.mxu0
        %7533 = vmatprep.subr.bf16.mxu0 %v5008
        %7534 = vmatpush1.bf16.msra.mxu0 %v5007
        %7535 = vmatprep.subr.bf16.mxu0 %v5016
        %7536 = vmatpush1.bf16.msra.mxu0 %v5015
        %7537 = vmatprep.subr.bf16.mxu0 %v5024
        %7538 = vmatpush1.bf16.msra.mxu0 %v5023
        %7539 = vmatprep.subr.bf16.mxu0 %v5032
        %7540 = vmatpush1.bf16.msra.mxu0 %v5031
        %7541 = vmatprep.subr.bf16.mxu0 %v5040
        %7542 = vmatpush1.bf16.msra.mxu0 %v5039
        %7543 = vmatprep.subr.bf16.mxu0 %v5048
        %7544 = vmatpush1.bf16.msra.mxu0 %v5047
        %7545 = vmatprep.subr.bf16.mxu0 %v5056
        %7546 = vmatpush1.bf16.msra.mxu0 %v5055
        %7547 = vmatprep.subr.bf16.mxu0 %v5064
        %7548 = vmatpush1.bf16.msra.mxu0 %v5063
        %7549 = vmatprep.subr.bf16.mxu0 %v5072
        %7550 = vmatpush1.bf16.msra.mxu0 %v5071
        %7551 = vmatprep.subr.bf16.mxu0 %v5080
        %7552 = vmatpush1.bf16.msra.mxu0 %v5079
        %7553 = vmatprep.subr.bf16.mxu0 %v5088
        %7554 = vmatpush1.bf16.msra.mxu0 %v5087
        %7555 = vmatprep.subr.bf16.mxu0 %v5096
        %7556 = vmatpush1.bf16.msra.mxu0 %v5095
        %7557 = vmatprep.subr.bf16.mxu0 %v5104
        %7558 = vmatpush1.bf16.msra.mxu0 %v5103
        %7559 = vmatprep.subr.bf16.mxu0 %v5112
        %7560 = vmatpush1.bf16.msra.mxu0 %v5111
        %7561 = vmatprep.subr.bf16.mxu0 %v5120
        %7562 = vmatpush1.bf16.msra.mxu0 %v5119
        %7563 = vmatprep.subr.bf16.mxu0 %v5128
        %7564 = vmatpush1.bf16.msra.mxu0 %v5127
        %7565 = vmatprep.mubr.bf16.mxu0 %v1605
        %7566 = vmatmul.mubr.bf16.gmra.mrb[0].mxu0 %v1591
        %v7567 = vpop.f32.mrb[0].mxu0
        %v7568 = vadd.f32 %v7527, %v7567
        %v7569 = vpop.f32.mrb[0].mxu0
        %v7570 = vadd.f32 %v7529, %v7569
        %v7571 = vpop.f32.mrb[0].mxu0
        %v7572 = vpop.f32.mrb[0].mxu0
        %7573 = vdwg.mxu0
        %7574 = vmatprep.subr.bf16.mxu0 %v5136
        %7575 = vmatpush1.bf16.msra.mxu0 %v5135
        %7576 = vmatprep.subr.bf16.mxu0 %v5144
        %7577 = vmatpush1.bf16.msra.mxu0 %v5143
        %7578 = vmatprep.subr.bf16.mxu0 %v5152
        %7579 = vmatpush1.bf16.msra.mxu0 %v5151
        %7580 = vmatprep.subr.bf16.mxu0 %v5160
        %7581 = vmatpush1.bf16.msra.mxu0 %v5159
        %7582 = vmatprep.subr.bf16.mxu0 %v5168
        %7583 = vmatpush1.bf16.msra.mxu0 %v5167
        %7584 = vmatprep.subr.bf16.mxu0 %v5176
        %7585 = vmatpush1.bf16.msra.mxu0 %v5175
        %7586 = vmatprep.subr.bf16.mxu0 %v5184
        %7587 = vmatpush1.bf16.msra.mxu0 %v5183
        %7588 = vmatprep.subr.bf16.mxu0 %v5192
        %7589 = vmatpush1.bf16.msra.mxu0 %v5191
        %7590 = vmatprep.subr.bf16.mxu0 %v5200
        %7591 = vmatpush1.bf16.msra.mxu0 %v5199
        %7592 = vmatprep.subr.bf16.mxu0 %v5208
        %7593 = vmatpush1.bf16.msra.mxu0 %v5207
        %7594 = vmatprep.subr.bf16.mxu0 %v5216
        %7595 = vmatpush1.bf16.msra.mxu0 %v5215
        %7596 = vmatprep.subr.bf16.mxu0 %v5224
        %7597 = vmatpush1.bf16.msra.mxu0 %v5223
        %7598 = vmatprep.subr.bf16.mxu0 %v5232
        %7599 = vmatpush1.bf16.msra.mxu0 %v5231
        %7600 = vmatprep.subr.bf16.mxu0 %v5240
        %7601 = vmatpush1.bf16.msra.mxu0 %v5239
        %7602 = vmatprep.subr.bf16.mxu0 %v5248
        %7603 = vmatpush1.bf16.msra.mxu0 %v5247
        %7604 = vmatprep.subr.bf16.mxu0 %v5256
        %7605 = vmatpush1.bf16.msra.mxu0 %v5255
        %7606 = vmatprep.mubr.bf16.mxu0 %v1609
        %7607 = vmatmul.mubr.bf16.gmra.mrb[0].mxu0 %v1607
        %v7608 = vpop.f32.mrb[0].mxu0
        %v7609 = vadd.f32 %v7568, %v7608
        %v7610 = vpop.f32.mrb[0].mxu0
        %v7611 = vadd.f32 %v7570, %v7610
        %v7612 = vpop.f32.mrb[0].mxu0
        %v7613 = vpop.f32.mrb[0].mxu0
        %7614 = vdwg.mxu0
        %7615 = vmatprep.subr.bf16.mxu0 %v5264
        %7616 = vmatpush1.bf16.msra.mxu0 %v5263
        %7617 = vmatprep.subr.bf16.mxu0 %v5272
        %7618 = vmatpush1.bf16.msra.mxu0 %v5271
        %7619 = vmatprep.subr.bf16.mxu0 %v5280
        %7620 = vmatpush1.bf16.msra.mxu0 %v5279
        %7621 = vmatprep.subr.bf16.mxu0 %v5288
        %7622 = vmatpush1.bf16.msra.mxu0 %v5287
        %7623 = vmatprep.subr.bf16.mxu0 %v5296
        %7624 = vmatpush1.bf16.msra.mxu0 %v5295
        %7625 = vmatprep.subr.bf16.mxu0 %v5304
        %7626 = vmatpush1.bf16.msra.mxu0 %v5303
        %7627 = vmatprep.subr.bf16.mxu0 %v5312
        %7628 = vmatpush1.bf16.msra.mxu0 %v5311
        %7629 = vmatprep.subr.bf16.mxu0 %v5320
        %7630 = vmatpush1.bf16.msra.mxu0 %v5319
        %7631 = vmatprep.subr.bf16.mxu0 %v5328
        %7632 = vmatpush1.bf16.msra.mxu0 %v5327
        %7633 = vmatprep.subr.bf16.mxu0 %v5336
        %7634 = vmatpush1.bf16.msra.mxu0 %v5335
        %7635 = vmatprep.subr.bf16.mxu0 %v5344
        %7636 = vmatpush1.bf16.msra.mxu0 %v5343
        %7637 = vmatprep.subr.bf16.mxu0 %v5352
        %7638 = vmatpush1.bf16.msra.mxu0 %v5351
        %7639 = vmatprep.subr.bf16.mxu0 %v5360
        %7640 = vmatpush1.bf16.msra.mxu0 %v5359
        %7641 = vmatprep.subr.bf16.mxu0 %v5368
        %7642 = vmatpush1.bf16.msra.mxu0 %v5367
        %7643 = vmatprep.subr.bf16.mxu0 %v5376
        %7644 = vmatpush1.bf16.msra.mxu0 %v5375
        %7645 = vmatprep.subr.bf16.mxu0 %v5384
        %7646 = vmatpush1.bf16.msra.mxu0 %v5383
        %7647 = vmatprep.mubr.bf16.mxu0 %v1647
        %7648 = vmatmul.mubr.bf16.gmra.mrb[0].mxu0 %v1633
        %v7649 = vpop.f32.mrb[0].mxu0
        %v7650 = vadd.f32 %v7609, %v7649
        %v7651 = vpop.f32.mrb[0].mxu0
        %v7652 = vadd.f32 %v7611, %v7651
        %v7653 = vpop.f32.mrb[0].mxu0
        %v7654 = vpop.f32.mrb[0].mxu0
        %7655 = vdwg.mxu0
        %7656 = vmatprep.subr.bf16.mxu0 %v5392
        %7657 = vmatpush1.bf16.msra.mxu0 %v5391
        %7658 = vmatprep.subr.bf16.mxu0 %v5400
        %7659 = vmatpush1.bf16.msra.mxu0 %v5399
        %7660 = vmatprep.subr.bf16.mxu0 %v5408
        %7661 = vmatpush1.bf16.msra.mxu0 %v5407
        %7662 = vmatprep.subr.bf16.mxu0 %v5416
        %7663 = vmatpush1.bf16.msra.mxu0 %v5415
        %7664 = vmatprep.subr.bf16.mxu0 %v5424
        %7665 = vmatpush1.bf16.msra.mxu0 %v5423
        %7666 = vmatprep.subr.bf16.mxu0 %v5432
        %7667 = vmatpush1.bf16.msra.mxu0 %v5431
        %7668 = vmatprep.subr.bf16.mxu0 %v5440
        %7669 = vmatpush1.bf16.msra.mxu0 %v5439
        %7670 = vmatprep.subr.bf16.mxu0 %v5448
        %7671 = vmatpush1.bf16.msra.mxu0 %v5447
        %7672 = vmatprep.subr.bf16.mxu0 %v5456
        %7673 = vmatpush1.bf16.msra.mxu0 %v5455
        %7674 = vmatprep.subr.bf16.mxu0 %v5464
        %7675 = vmatpush1.bf16.msra.mxu0 %v5463
        %7676 = vmatprep.subr.bf16.mxu0 %v5472
        %7677 = vmatpush1.bf16.msra.mxu0 %v5471
        %7678 = vmatprep.subr.bf16.mxu0 %v5480
        %7679 = vmatpush1.bf16.msra.mxu0 %v5479
        %7680 = vmatprep.subr.bf16.mxu0 %v5488
        %7681 = vmatpush1.bf16.msra.mxu0 %v5487
        %7682 = vmatprep.subr.bf16.mxu0 %v5496
        %7683 = vmatpush1.bf16.msra.mxu0 %v5495
        %7684 = vmatprep.subr.bf16.mxu0 %v5504
        %7685 = vmatpush1.bf16.msra.mxu0 %v5503
        %7686 = vmatprep.subr.bf16.mxu0 %v5512
        %7687 = vmatpush1.bf16.msra.mxu0 %v5511
        %7688 = vmatprep.mubr.bf16.mxu0 %v1657
        %7689 = vmatmul.mubr.bf16.gmra.mrb[0].mxu0 %v1655
        %v7690 = vpop.f32.mrb[0].mxu0
        %v7691 = vadd.f32 %v7650, %v7690
        %v7692 = vpop.f32.mrb[0].mxu0
        %v7693 = vadd.f32 %v7652, %v7692
        %v7694 = vpop.f32.mrb[0].mxu0
        %v7695 = vpop.f32.mrb[0].mxu0
        %7696 = vdwg.mxu0
        %7697 = vmatprep.subr.bf16.mxu0 %v5520
        %7698 = vmatpush1.bf16.msra.mxu0 %v5519
        %7699 = vmatprep.subr.bf16.mxu0 %v5528
        %7700 = vmatpush1.bf16.msra.mxu0 %v5527
        %7701 = vmatprep.subr.bf16.mxu0 %v5536
        %7702 = vmatpush1.bf16.msra.mxu0 %v5535
        %7703 = vmatprep.subr.bf16.mxu0 %v5544
        %7704 = vmatpush1.bf16.msra.mxu0 %v5543
        %7705 = vmatprep.subr.bf16.mxu0 %v5552
        %7706 = vmatpush1.bf16.msra.mxu0 %v5551
        %7707 = vmatprep.subr.bf16.mxu0 %v5560
        %7708 = vmatpush1.bf16.msra.mxu0 %v5559
        %7709 = vmatprep.subr.bf16.mxu0 %v5568
        %7710 = vmatpush1.bf16.msra.mxu0 %v5567
        %7711 = vmatprep.subr.bf16.mxu0 %v5576
        %7712 = vmatpush1.bf16.msra.mxu0 %v5575
        %7713 = vmatprep.subr.bf16.mxu0 %v5584
        %7714 = vmatpush1.bf16.msra.mxu0 %v5583
        %7715 = vmatprep.subr.bf16.mxu0 %v5592
        %7716 = vmatpush1.bf16.msra.mxu0 %v5591
        %7717 = vmatprep.subr.bf16.mxu0 %v5600
        %7718 = vmatpush1.bf16.msra.mxu0 %v5599
        %7719 = vmatprep.subr.bf16.mxu0 %v5608
        %7720 = vmatpush1.bf16.msra.mxu0 %v5607
        %7721 = vmatprep.subr.bf16.mxu0 %v5616
        %7722 = vmatpush1.bf16.msra.mxu0 %v5615
        %7723 = vmatprep.subr.bf16.mxu0 %v5624
        %7724 = vmatpush1.bf16.msra.mxu0 %v5623
        %7725 = vmatprep.subr.bf16.mxu0 %v5632
        %7726 = vmatpush1.bf16.msra.mxu0 %v5631
        %7727 = vmatprep.subr.bf16.mxu0 %v5640
        %7728 = vmatpush1.bf16.msra.mxu0 %v5639
        %7729 = vmatprep.mubr.bf16.mxu0 %v1654
        %7730 = vmatmul.mubr.bf16.gmra.mrb[0].mxu0 %v1640
        %v7731 = vpop.f32.mrb[0].mxu0
        %v7732 = vadd.f32 %v7691, %v7731
        %v7733 = vpop.f32.mrb[0].mxu0
        %v7734 = vadd.f32 %v7693, %v7733
        %v7735 = vpop.f32.mrb[0].mxu0
        %v7736 = vpop.f32.mrb[0].mxu0
        %7737 = vdwg.mxu0
        %7738 = vmatprep.subr.bf16.mxu0 %v5648
        %7739 = vmatpush1.bf16.msra.mxu0 %v5647
        %7740 = vmatprep.subr.bf16.mxu0 %v5656
        %7741 = vmatpush1.bf16.msra.mxu0 %v5655
        %7742 = vmatprep.subr.bf16.mxu0 %v5664
        %7743 = vmatpush1.bf16.msra.mxu0 %v5663
        %7744 = vmatprep.subr.bf16.mxu0 %v5672
        %7745 = vmatpush1.bf16.msra.mxu0 %v5671
        %7746 = vmatprep.subr.bf16.mxu0 %v5680
        %7747 = vmatpush1.bf16.msra.mxu0 %v5679
        %7748 = vmatprep.subr.bf16.mxu0 %v5688
        %7749 = vmatpush1.bf16.msra.mxu0 %v5687
        %7750 = vmatprep.subr.bf16.mxu0 %v5696
        %7751 = vmatpush1.bf16.msra.mxu0 %v5695
        %7752 = vmatprep.subr.bf16.mxu0 %v5704
        %7753 = vmatpush1.bf16.msra.mxu0 %v5703
        %7754 = vmatprep.subr.bf16.mxu0 %v5712
        %7755 = vmatpush1.bf16.msra.mxu0 %v5711
        %7756 = vmatprep.subr.bf16.mxu0 %v5720
        %7757 = vmatpush1.bf16.msra.mxu0 %v5719
        %7758 = vmatprep.subr.bf16.mxu0 %v5728
        %7759 = vmatpush1.bf16.msra.mxu0 %v5727
        %7760 = vmatprep.subr.bf16.mxu0 %v5736
        %7761 = vmatpush1.bf16.msra.mxu0 %v5735
        %7762 = vmatprep.subr.bf16.mxu0 %v5744
        %7763 = vmatpush1.bf16.msra.mxu0 %v5743
        %7764 = vmatprep.subr.bf16.mxu0 %v5752
        %7765 = vmatpush1.bf16.msra.mxu0 %v5751
        %7766 = vmatprep.subr.bf16.mxu0 %v5760
        %7767 = vmatpush1.bf16.msra.mxu0 %v5759
        %7768 = vmatprep.subr.bf16.mxu0 %v5768
        %7769 = vmatpush1.bf16.msra.mxu0 %v5767
        %7770 = vmatprep.mubr.bf16.mxu0 %v1658
        %7771 = vmatmul.mubr.bf16.gmra.mrb[0].mxu0 %v1656
        %v7772 = vpop.f32.mrb[0].mxu0
        %v7773 = vadd.f32 %v7732, %v7772
        %v7774 = vpop.f32.mrb[0].mxu0
        %v7775 = vadd.f32 %v7734, %v7774
        %v7776 = vpop.f32.mrb[0].mxu0
        %v7777 = vpop.f32.mrb[0].mxu0
        %7778 = vdwg.mxu0
        %7779 = vmatprep.subr.bf16.mxu0 %v4754
        %7780 = vmatpush1.bf16.msra.mxu0 %v4753
        %7781 = vmatprep.subr.bf16.mxu0 %v4762
        %7782 = vmatpush1.bf16.msra.mxu0 %v4761
        %7783 = vmatprep.subr.bf16.mxu0 %v4770
        %7784 = vmatpush1.bf16.msra.mxu0 %v4769
        %7785 = vmatprep.subr.bf16.mxu0 %v4778
        %7786 = vmatpush1.bf16.msra.mxu0 %v4777
        %7787 = vmatprep.subr.bf16.mxu0 %v4786
        %7788 = vmatpush1.bf16.msra.mxu0 %v4785
        %7789 = vmatprep.subr.bf16.mxu0 %v4794
        %7790 = vmatpush1.bf16.msra.mxu0 %v4793
        %7791 = vmatprep.subr.bf16.mxu0 %v4802
        %7792 = vmatpush1.bf16.msra.mxu0 %v4801
        %7793 = vmatprep.subr.bf16.mxu0 %v4810
        %7794 = vmatpush1.bf16.msra.mxu0 %v4809
        %7795 = vmatprep.subr.bf16.mxu0 %v4818
        %7796 = vmatpush1.bf16.msra.mxu0 %v4817
        %7797 = vmatprep.subr.bf16.mxu0 %v4826
        %7798 = vmatpush1.bf16.msra.mxu0 %v4825
        %7799 = vmatprep.subr.bf16.mxu0 %v4834
        %7800 = vmatpush1.bf16.msra.mxu0 %v4833
        %7801 = vmatprep.subr.bf16.mxu0 %v4842
        %7802 = vmatpush1.bf16.msra.mxu0 %v4841
        %7803 = vmatprep.subr.bf16.mxu0 %v4850
        %7804 = vmatpush1.bf16.msra.mxu0 %v4849
        %7805 = vmatprep.subr.bf16.mxu0 %v4858
        %7806 = vmatpush1.bf16.msra.mxu0 %v4857
        %7807 = vmatprep.subr.bf16.mxu0 %v4866
        %7808 = vmatpush1.bf16.msra.mxu0 %v4865
        %7809 = vmatprep.subr.bf16.mxu0 %v4874
        %7810 = vmatpush1.bf16.msra.mxu0 %v4873
        %7811 = vmatprep.mubr.bf16.mxu0 %v1598
        %7812 = vmatmul.mubr.bf16.gmra.mrb[0].mxu0 %v1584
        %v7813 = vpop.f32.mrb[0].mxu0
        %v7814 = vadd.f32 0.0, %v7813
        %v7815 = vpop.f32.mrb[0].mxu0
        %v7816 = vadd.f32 0.0, %v7815
        %v7817 = vpop.f32.mrb[0].mxu0
        %v7818 = vpop.f32.mrb[0].mxu0
        %7819 = vdwg.mxu0
        %7820 = vmatprep.subr.bf16.mxu0 %v4882
        %7821 = vmatpush1.bf16.msra.mxu0 %v4881
        %7822 = vmatprep.subr.bf16.mxu0 %v4890
        %7823 = vmatpush1.bf16.msra.mxu0 %v4889
        %7824 = vmatprep.subr.bf16.mxu0 %v4898
        %7825 = vmatpush1.bf16.msra.mxu0 %v4897
        %7826 = vmatprep.subr.bf16.mxu0 %v4906
        %7827 = vmatpush1.bf16.msra.mxu0 %v4905
        %7828 = vmatprep.subr.bf16.mxu0 %v4914
        %7829 = vmatpush1.bf16.msra.mxu0 %v4913
        %7830 = vmatprep.subr.bf16.mxu0 %v4922
        %7831 = vmatpush1.bf16.msra.mxu0 %v4921
        %7832 = vmatprep.subr.bf16.mxu0 %v4930
        %7833 = vmatpush1.bf16.msra.mxu0 %v4929
        %7834 = vmatprep.subr.bf16.mxu0 %v4938
        %7835 = vmatpush1.bf16.msra.mxu0 %v4937
        %7836 = vmatprep.subr.bf16.mxu0 %v4946
        %7837 = vmatpush1.bf16.msra.mxu0 %v4945
        %7838 = vmatprep.subr.bf16.mxu0 %v4954
        %7839 = vmatpush1.bf16.msra.mxu0 %v4953
        %7840 = vmatprep.subr.bf16.mxu0 %v4962
        %7841 = vmatpush1.bf16.msra.mxu0 %v4961
        %7842 = vmatprep.subr.bf16.mxu0 %v4970
        %7843 = vmatpush1.bf16.msra.mxu0 %v4969
        %7844 = vmatprep.subr.bf16.mxu0 %v4978
        %7845 = vmatpush1.bf16.msra.mxu0 %v4977
        %7846 = vmatprep.subr.bf16.mxu0 %v4986
        %7847 = vmatpush1.bf16.msra.mxu0 %v4985
        %7848 = vmatprep.subr.bf16.mxu0 %v4994
        %7849 = vmatpush1.bf16.msra.mxu0 %v4993
        %7850 = vmatprep.subr.bf16.mxu0 %v5002
        %7851 = vmatpush1.bf16.msra.mxu0 %v5001
        %7852 = vmatprep.mubr.bf16.mxu0 %v1608
        %7853 = vmatmul.mubr.bf16.gmra.mrb[0].mxu0 %v1606
        %v7854 = vpop.f32.mrb[0].mxu0
        %v7855 = vadd.f32 %v7814, %v7854
        %v7856 = vpop.f32.mrb[0].mxu0
        %v7857 = vadd.f32 %v7816, %v7856
        %v7858 = vpop.f32.mrb[0].mxu0
        %v7859 = vpop.f32.mrb[0].mxu0
        %7860 = vdwg.mxu0
        %7861 = vmatprep.subr.bf16.mxu0 %v5010
        %7862 = vmatpush1.bf16.msra.mxu0 %v5009
        %7863 = vmatprep.subr.bf16.mxu0 %v5018
        %7864 = vmatpush1.bf16.msra.mxu0 %v5017
        %7865 = vmatprep.subr.bf16.mxu0 %v5026
        %7866 = vmatpush1.bf16.msra.mxu0 %v5025
        %7867 = vmatprep.subr.bf16.mxu0 %v5034
        %7868 = vmatpush1.bf16.msra.mxu0 %v5033
        %7869 = vmatprep.subr.bf16.mxu0 %v5042
        %7870 = vmatpush1.bf16.msra.mxu0 %v5041
        %7871 = vmatprep.subr.bf16.mxu0 %v5050
        %7872 = vmatpush1.bf16.msra.mxu0 %v5049
        %7873 = vmatprep.subr.bf16.mxu0 %v5058
        %7874 = vmatpush1.bf16.msra.mxu0 %v5057
        %7875 = vmatprep.subr.bf16.mxu0 %v5066
        %7876 = vmatpush1.bf16.msra.mxu0 %v5065
        %7877 = vmatprep.subr.bf16.mxu0 %v5074
        %7878 = vmatpush1.bf16.msra.mxu0 %v5073
        %7879 = vmatprep.subr.bf16.mxu0 %v5082
        %7880 = vmatpush1.bf16.msra.mxu0 %v5081
        %7881 = vmatprep.subr.bf16.mxu0 %v5090
        %7882 = vmatpush1.bf16.msra.mxu0 %v5089
        %7883 = vmatprep.subr.bf16.mxu0 %v5098
        %7884 = vmatpush1.bf16.msra.mxu0 %v5097
        %7885 = vmatprep.subr.bf16.mxu0 %v5106
        %7886 = vmatpush1.bf16.msra.mxu0 %v5105
        %7887 = vmatprep.subr.bf16.mxu0 %v5114
        %7888 = vmatpush1.bf16.msra.mxu0 %v5113
        %7889 = vmatprep.subr.bf16.mxu0 %v5122
        %7890 = vmatpush1.bf16.msra.mxu0 %v5121
        %7891 = vmatprep.subr.bf16.mxu0 %v5130
        %7892 = vmatpush1.bf16.msra.mxu0 %v5129
        %7893 = vmatprep.mubr.bf16.mxu0 %v1605
        %7894 = vmatmul.mubr.bf16.gmra.mrb[0].mxu0 %v1591
        %v7895 = vpop.f32.mrb[0].mxu0
        %v7896 = vadd.f32 %v7855, %v7895
        %v7897 = vpop.f32.mrb[0].mxu0
        %v7898 = vadd.f32 %v7857, %v7897
        %v7899 = vpop.f32.mrb[0].mxu0
        %v7900 = vpop.f32.mrb[0].mxu0
        %7901 = vdwg.mxu0
        %7902 = vmatprep.subr.bf16.mxu0 %v5138
        %7903 = vmatpush1.bf16.msra.mxu0 %v5137
        %7904 = vmatprep.subr.bf16.mxu0 %v5146
        %7905 = vmatpush1.bf16.msra.mxu0 %v5145
        %7906 = vmatprep.subr.bf16.mxu0 %v5154
        %7907 = vmatpush1.bf16.msra.mxu0 %v5153
        %7908 = vmatprep.subr.bf16.mxu0 %v5162
        %7909 = vmatpush1.bf16.msra.mxu0 %v5161
        %7910 = vmatprep.subr.bf16.mxu0 %v5170
        %7911 = vmatpush1.bf16.msra.mxu0 %v5169
        %7912 = vmatprep.subr.bf16.mxu0 %v5178
        %7913 = vmatpush1.bf16.msra.mxu0 %v5177
        %7914 = vmatprep.subr.bf16.mxu0 %v5186
        %7915 = vmatpush1.bf16.msra.mxu0 %v5185
        %7916 = vmatprep.subr.bf16.mxu0 %v5194
        %7917 = vmatpush1.bf16.msra.mxu0 %v5193
        %7918 = vmatprep.subr.bf16.mxu0 %v5202
        %7919 = vmatpush1.bf16.msra.mxu0 %v5201
        %7920 = vmatprep.subr.bf16.mxu0 %v5210
        %7921 = vmatpush1.bf16.msra.mxu0 %v5209
        %7922 = vmatprep.subr.bf16.mxu0 %v5218
        %7923 = vmatpush1.bf16.msra.mxu0 %v5217
        %7924 = vmatprep.subr.bf16.mxu0 %v5226
        %7925 = vmatpush1.bf16.msra.mxu0 %v5225
        %7926 = vmatprep.subr.bf16.mxu0 %v5234
        %7927 = vmatpush1.bf16.msra.mxu0 %v5233
        %7928 = vmatprep.subr.bf16.mxu0 %v5242
        %7929 = vmatpush1.bf16.msra.mxu0 %v5241
        %7930 = vmatprep.subr.bf16.mxu0 %v5250
        %7931 = vmatpush1.bf16.msra.mxu0 %v5249
        %7932 = vmatprep.subr.bf16.mxu0 %v5258
        %7933 = vmatpush1.bf16.msra.mxu0 %v5257
        %7934 = vmatprep.mubr.bf16.mxu0 %v1609
        %7935 = vmatmul.mubr.bf16.gmra.mrb[0].mxu0 %v1607
        %v7936 = vpop.f32.mrb[0].mxu0
        %v7937 = vadd.f32 %v7896, %v7936
        %v7938 = vpop.f32.mrb[0].mxu0
        %v7939 = vadd.f32 %v7898, %v7938
        %v7940 = vpop.f32.mrb[0].mxu0
        %v7941 = vpop.f32.mrb[0].mxu0
        %7942 = vdwg.mxu0
        %7943 = vmatprep.subr.bf16.mxu0 %v5266
        %7944 = vmatpush1.bf16.msra.mxu0 %v5265
        %7945 = vmatprep.subr.bf16.mxu0 %v5274
        %7946 = vmatpush1.bf16.msra.mxu0 %v5273
        %7947 = vmatprep.subr.bf16.mxu0 %v5282
        %7948 = vmatpush1.bf16.msra.mxu0 %v5281
        %7949 = vmatprep.subr.bf16.mxu0 %v5290
        %7950 = vmatpush1.bf16.msra.mxu0 %v5289
        %7951 = vmatprep.subr.bf16.mxu0 %v5298
        %7952 = vmatpush1.bf16.msra.mxu0 %v5297
        %7953 = vmatprep.subr.bf16.mxu0 %v5306
        %7954 = vmatpush1.bf16.msra.mxu0 %v5305
        %7955 = vmatprep.subr.bf16.mxu0 %v5314
        %7956 = vmatpush1.bf16.msra.mxu0 %v5313
        %7957 = vmatprep.subr.bf16.mxu0 %v5322
        %7958 = vmatpush1.bf16.msra.mxu0 %v5321
        %7959 = vmatprep.subr.bf16.mxu0 %v5330
        %7960 = vmatpush1.bf16.msra.mxu0 %v5329
        %7961 = vmatprep.subr.bf16.mxu0 %v5338
        %7962 = vmatpush1.bf16.msra.mxu0 %v5337
        %7963 = vmatprep.subr.bf16.mxu0 %v5346
        %7964 = vmatpush1.bf16.msra.mxu0 %v5345
        %7965 = vmatprep.subr.bf16.mxu0 %v5354
        %7966 = vmatpush1.bf16.msra.mxu0 %v5353
        %7967 = vmatprep.subr.bf16.mxu0 %v5362
        %7968 = vmatpush1.bf16.msra.mxu0 %v5361
        %7969 = vmatprep.subr.bf16.mxu0 %v5370
        %7970 = vmatpush1.bf16.msra.mxu0 %v5369
        %7971 = vmatprep.subr.bf16.mxu0 %v5378
        %7972 = vmatpush1.bf16.msra.mxu0 %v5377
        %7973 = vmatprep.subr.bf16.mxu0 %v5386
        %7974 = vmatpush1.bf16.msra.mxu0 %v5385
        %7975 = vmatprep.mubr.bf16.mxu0 %v1647
        %7976 = vmatmul.mubr.bf16.gmra.mrb[0].mxu0 %v1633
        %v7977 = vpop.f32.mrb[0].mxu0
        %v7978 = vadd.f32 %v7937, %v7977
        %v7979 = vpop.f32.mrb[0].mxu0
        %v7980 = vadd.f32 %v7939, %v7979
        %v7981 = vpop.f32.mrb[0].mxu0
        %v7982 = vpop.f32.mrb[0].mxu0
        %7983 = vdwg.mxu0
        %7984 = vmatprep.subr.bf16.mxu0 %v5394
        %7985 = vmatpush1.bf16.msra.mxu0 %v5393
        %7986 = vmatprep.subr.bf16.mxu0 %v5402
        %7987 = vmatpush1.bf16.msra.mxu0 %v5401
        %7988 = vmatprep.subr.bf16.mxu0 %v5410
        %7989 = vmatpush1.bf16.msra.mxu0 %v5409
        %7990 = vmatprep.subr.bf16.mxu0 %v5418
        %7991 = vmatpush1.bf16.msra.mxu0 %v5417
        %7992 = vmatprep.subr.bf16.mxu0 %v5426
        %7993 = vmatpush1.bf16.msra.mxu0 %v5425
        %7994 = vmatprep.subr.bf16.mxu0 %v5434
        %7995 = vmatpush1.bf16.msra.mxu0 %v5433
        %7996 = vmatprep.subr.bf16.mxu0 %v5442
        %7997 = vmatpush1.bf16.msra.mxu0 %v5441
        %7998 = vmatprep.subr.bf16.mxu0 %v5450
        %7999 = vmatpush1.bf16.msra.mxu0 %v5449
        %8000 = vmatprep.subr.bf16.mxu0 %v5458
        %8001 = vmatpush1.bf16.msra.mxu0 %v5457
        %8002 = vmatprep.subr.bf16.mxu0 %v5466
        %8003 = vmatpush1.bf16.msra.mxu0 %v5465
        %8004 = vmatprep.subr.bf16.mxu0 %v5474
        %8005 = vmatpush1.bf16.msra.mxu0 %v5473
        %8006 = vmatprep.subr.bf16.mxu0 %v5482
        %8007 = vmatpush1.bf16.msra.mxu0 %v5481
        %8008 = vmatprep.subr.bf16.mxu0 %v5490
        %8009 = vmatpush1.bf16.msra.mxu0 %v5489
        %8010 = vmatprep.subr.bf16.mxu0 %v5498
        %8011 = vmatpush1.bf16.msra.mxu0 %v5497
        %8012 = vmatprep.subr.bf16.mxu0 %v5506
        %8013 = vmatpush1.bf16.msra.mxu0 %v5505
        %8014 = vmatprep.subr.bf16.mxu0 %v5514
        %8015 = vmatpush1.bf16.msra.mxu0 %v5513
        %8016 = vmatprep.mubr.bf16.mxu0 %v1657
        %8017 = vmatmul.mubr.bf16.gmra.mrb[0].mxu0 %v1655
        %v8018 = vpop.f32.mrb[0].mxu0
        %v8019 = vadd.f32 %v7978, %v8018
        %v8020 = vpop.f32.mrb[0].mxu0
        %v8021 = vadd.f32 %v7980, %v8020
        %v8022 = vpop.f32.mrb[0].mxu0
        %v8023 = vpop.f32.mrb[0].mxu0
        %8024 = vdwg.mxu0
        %8025 = vmatprep.subr.bf16.mxu0 %v5522
        %8026 = vmatpush1.bf16.msra.mxu0 %v5521
        %8027 = vmatprep.subr.bf16.mxu0 %v5530
        %8028 = vmatpush1.bf16.msra.mxu0 %v5529
        %8029 = vmatprep.subr.bf16.mxu0 %v5538
        %8030 = vmatpush1.bf16.msra.mxu0 %v5537
        %8031 = vmatprep.subr.bf16.mxu0 %v5546
        %8032 = vmatpush1.bf16.msra.mxu0 %v5545
        %8033 = vmatprep.subr.bf16.mxu0 %v5554
        %8034 = vmatpush1.bf16.msra.mxu0 %v5553
        %8035 = vmatprep.subr.bf16.mxu0 %v5562
        %8036 = vmatpush1.bf16.msra.mxu0 %v5561
        %8037 = vmatprep.subr.bf16.mxu0 %v5570
        %8038 = vmatpush1.bf16.msra.mxu0 %v5569
        %8039 = vmatprep.subr.bf16.mxu0 %v5578
        %8040 = vmatpush1.bf16.msra.mxu0 %v5577
        %8041 = vmatprep.subr.bf16.mxu0 %v5586
        %8042 = vmatpush1.bf16.msra.mxu0 %v5585
        %8043 = vmatprep.subr.bf16.mxu0 %v5594
        %8044 = vmatpush1.bf16.msra.mxu0 %v5593
        %8045 = vmatprep.subr.bf16.mxu0 %v5602
        %8046 = vmatpush1.bf16.msra.mxu0 %v5601
        %8047 = vmatprep.subr.bf16.mxu0 %v5610
        %8048 = vmatpush1.bf16.msra.mxu0 %v5609
        %8049 = vmatprep.subr.bf16.mxu0 %v5618
        %8050 = vmatpush1.bf16.msra.mxu0 %v5617
        %8051 = vmatprep.subr.bf16.mxu0 %v5626
        %8052 = vmatpush1.bf16.msra.mxu0 %v5625
        %8053 = vmatprep.subr.bf16.mxu0 %v5634
        %8054 = vmatpush1.bf16.msra.mxu0 %v5633
        %8055 = vmatprep.subr.bf16.mxu0 %v5642
        %8056 = vmatpush1.bf16.msra.mxu0 %v5641
        %8057 = vmatprep.mubr.bf16.mxu0 %v1654
        %8058 = vmatmul.mubr.bf16.gmra.mrb[0].mxu0 %v1640
        %v8059 = vpop.f32.mrb[0].mxu0
        %v8060 = vadd.f32 %v8019, %v8059
        %v8061 = vpop.f32.mrb[0].mxu0
        %v8062 = vadd.f32 %v8021, %v8061
        %v8063 = vpop.f32.mrb[0].mxu0
        %v8064 = vpop.f32.mrb[0].mxu0
        %8065 = vdwg.mxu0
        %8066 = vmatprep.subr.bf16.mxu0 %v5650
        %8067 = vmatpush1.bf16.msra.mxu0 %v5649
        %8068 = vmatprep.subr.bf16.mxu0 %v5658
        %8069 = vmatpush1.bf16.msra.mxu0 %v5657
        %8070 = vmatprep.subr.bf16.mxu0 %v5666
        %8071 = vmatpush1.bf16.msra.mxu0 %v5665
        %8072 = vmatprep.subr.bf16.mxu0 %v5674
        %8073 = vmatpush1.bf16.msra.mxu0 %v5673
        %8074 = vmatprep.subr.bf16.mxu0 %v5682
        %8075 = vmatpush1.bf16.msra.mxu0 %v5681
        %8076 = vmatprep.subr.bf16.mxu0 %v5690
        %8077 = vmatpush1.bf16.msra.mxu0 %v5689
        %8078 = vmatprep.subr.bf16.mxu0 %v5698
        %8079 = vmatpush1.bf16.msra.mxu0 %v5697
        %8080 = vmatprep.subr.bf16.mxu0 %v5706
        %8081 = vmatpush1.bf16.msra.mxu0 %v5705
        %8082 = vmatprep.subr.bf16.mxu0 %v5714
        %8083 = vmatpush1.bf16.msra.mxu0 %v5713
        %8084 = vmatprep.subr.bf16.mxu0 %v5722
        %8085 = vmatpush1.bf16.msra.mxu0 %v5721
        %8086 = vmatprep.subr.bf16.mxu0 %v5730
        %8087 = vmatpush1.bf16.msra.mxu0 %v5729
        %8088 = vmatprep.subr.bf16.mxu0 %v5738
        %8089 = vmatpush1.bf16.msra.mxu0 %v5737
        %8090 = vmatprep.subr.bf16.mxu0 %v5746
        %8091 = vmatpush1.bf16.msra.mxu0 %v5745
        %8092 = vmatprep.subr.bf16.mxu0 %v5754
        %8093 = vmatpush1.bf16.msra.mxu0 %v5753
        %8094 = vmatprep.subr.bf16.mxu0 %v5762
        %8095 = vmatpush1.bf16.msra.mxu0 %v5761
        %8096 = vmatprep.subr.bf16.mxu0 %v5770
        %8097 = vmatpush1.bf16.msra.mxu0 %v5769
        %8098 = vmatprep.mubr.bf16.mxu0 %v1658
        %8099 = vmatmul.mubr.bf16.gmra.mrb[0].mxu0 %v1656
        %v8100 = vpop.f32.mrb[0].mxu0
        %v8101 = vadd.f32 %v8060, %v8100
        %v8102 = vpop.f32.mrb[0].mxu0
        %v8103 = vadd.f32 %v8062, %v8102
        %v8104 = vpop.f32.mrb[0].mxu0
        %v8105 = vpop.f32.mrb[0].mxu0
        %8106 = vdwg.mxu0
        %v8115 = vcombine.low %v7117, %v7119
        %v8116 = vcombine.low %v7445, %v7447
        %v8118 = vunpack.c.l.s4 1983009808
        %v8119 = vunpack.c.0.s8 %v8118
        %v8120 = vlaneseq
        %v8121 = vshrl.u32 %v8120, 7
        %v8122 = vsub.s32 %v8119, %v8121
        %v8123 = vrot.slane %v8115, %v8122
        %v8125 = vunpack.c.l.s4 1983009808
        %v8126 = vunpack.c.0.s8 %v8125
        %v8127 = vlaneseq
        %v8128 = vshrl.u32 %v8127, 7
        %v8129 = vsub.s32 %v8126, %v8128
        %v8130 = vrot.slane %v8116, %v8129
        %v8131 = vcombine.low %v8123, %v8130
        %v8132 = vcombine.low %v7773, %v7775
        %v8133 = vcombine.low %v8101, %v8103
        %v8135 = vunpack.c.l.s4 1983009808
        %v8136 = vunpack.c.0.s8 %v8135
        %v8137 = vlaneseq
        %v8138 = vshrl.u32 %v8137, 7
        %v8139 = vsub.s32 %v8136, %v8138
        %v8140 = vrot.slane %v8132, %v8139
        %v8142 = vunpack.c.l.s4 1983009808
        %v8143 = vunpack.c.0.s8 %v8142
        %v8144 = vlaneseq
        %v8145 = vshrl.u32 %v8144, 7
        %v8146 = vsub.s32 %v8143, %v8145
        %v8147 = vrot.slane %v8133, %v8146
        %v8148 = vcombine.low %v8140, %v8147
        %v8151 = vadd.f32 %v531, %v8131
        %v8152 = vadd.f32 %v532, %v8148
        %8153 = vst [vmem:[#allocation2] sm:$0xff] %v8151
        %8154 = vst [vmem:[#allocation2 + $0x8] sm:$0xff] %v8152
        %p8155 = scmp.eq.s32.totalorder %s28, 1
        // Predicated region
        $region93: #{cifar_server2_forward.3} parent=55 // pred_check
          %p8156 = pneg %p8155
        $region94: #{cifar_server2_forward.3} parent=55 // pred_check_branch
          %8158 = sbr.rel (%p8156) target = $region96
        $region95: #{cifar_server2_forward.3} parent=55 // pred_region
          %v8159 = vld [vmem:[#allocation2] sm:$0xff]
          %v8160 = vld [vmem:[#allocation2 + $0x8] sm:$0xff]
          %v8161 = vmax.f32 %v8159, 0.0
          %v8162 = vmax.f32 %v8160, 0.0
          %v8165 = vcombine.high %v8161, %v8161
          %v8167 = vunpack.c.l.s4 1983009808
          %v8168 = vunpack.c.0.s8 %v8167
          %v8169 = vlaneseq
          %v8170 = vshrl.u32 %v8169, 7
          %v8171 = vsub.s32 %v8168, %v8170
          %v8172 = vrot.slane %v8161, %v8171
          %v8174 = vunpack.c.l.s4 1983009808
          %v8175 = vunpack.c.0.s8 %v8174
          %v8176 = vlaneseq
          %v8177 = vshrl.u32 %v8176, 7
          %v8178 = vsub.s32 %v8175, %v8177
          %v8179 = vrot.slane %v8165, %v8178
          %v8180 = vcombine.high %v8172, %v8172
          %v8181 = vcombine.high %v8179, %v8179
          %v8182 = vcombine.high %v8162, %v8162
          %v8184 = vunpack.c.l.s4 1983009808
          %v8185 = vunpack.c.0.s8 %v8184
          %v8186 = vlaneseq
          %v8187 = vshrl.u32 %v8186, 7
          %v8188 = vsub.s32 %v8185, %v8187
          %v8189 = vrot.slane %v8162, %v8188
          %v8191 = vunpack.c.l.s4 1983009808
          %v8192 = vunpack.c.0.s8 %v8191
          %v8193 = vlaneseq
          %v8194 = vshrl.u32 %v8193, 7
          %v8195 = vsub.s32 %v8192, %v8194
          %v8196 = vrot.slane %v8182, %v8195
          %v8197 = vcombine.high %v8189, %v8189
          %v8198 = vcombine.high %v8196, %v8196
          %v8207 = vpack.c.bf16 %v8172, %v8172
          %v8208 = vpack.c.bf16 %v8180, %v8180
          %v8209 = vpack.c.bf16 %v8179, %v8179
          %v8210 = vpack.c.bf16 %v8181, %v8181
          %v8211 = vpack.c.bf16 %v8189, %v8189
          %v8212 = vpack.c.bf16 %v8197, %v8197
          %v8213 = vpack.c.bf16 %v8196, %v8196
          %v8214 = vpack.c.bf16 %v8198, %v8198
          %v8215 = vld [vmem:[#allocation8] sm:$0xff]
          %v8216 = vld [vmem:[#allocation8 + $0x8] sm:$0xff]
          %v8217 = vld [vmem:[#allocation8 + $0x10] sm:$0xff]
          %v8218 = vld [vmem:[#allocation8 + $0x18] sm:$0xff]
          %v8219 = vld [vmem:[#allocation8 + $0x20] sm:$0xff]
          %v8220 = vld [vmem:[#allocation8 + $0x28] sm:$0xff]
          %v8221 = vld [vmem:[#allocation8 + $0x30] sm:$0xff]
          %v8222 = vld [vmem:[#allocation8 + $0x38] sm:$0xff]
          %v8223 = vld [vmem:[#allocation8 + $0x40] sm:$0xff]
          %v8224 = vld [vmem:[#allocation8 + $0x48] sm:$0xff]
          %v8225 = vld [vmem:[#allocation8 + $0x50] sm:$0xff]
          %v8226 = vld [vmem:[#allocation8 + $0x58] sm:$0xff]
          %v8227 = vld [vmem:[#allocation8 + $0x60] sm:$0xff]
          %v8228 = vld [vmem:[#allocation8 + $0x68] sm:$0xff]
          %v8229 = vld [vmem:[#allocation8 + $0x70] sm:$0xff]
          %v8230 = vld [vmem:[#allocation8 + $0x78] sm:$0xff]
          %v8231 = vld [vmem:[#allocation8 + $0x80] sm:$0xff]
          %v8232 = vld [vmem:[#allocation8 + $0x88] sm:$0xff]
          %v8233 = vld [vmem:[#allocation8 + $0x90] sm:$0xff]
          %v8234 = vld [vmem:[#allocation8 + $0x98] sm:$0xff]
          %v8235 = vld [vmem:[#allocation8 + $0xa0] sm:$0xff]
          %v8236 = vld [vmem:[#allocation8 + $0xa8] sm:$0xff]
          %v8237 = vld [vmem:[#allocation8 + $0xb0] sm:$0xff]
          %v8238 = vld [vmem:[#allocation8 + $0xb8] sm:$0xff]
          %v8239 = vld [vmem:[#allocation8 + $0xc0] sm:$0xff]
          %v8240 = vld [vmem:[#allocation8 + $0xc8] sm:$0xff]
          %v8241 = vld [vmem:[#allocation8 + $0xd0] sm:$0xff]
          %v8242 = vld [vmem:[#allocation8 + $0xd8] sm:$0xff]
          %v8243 = vld [vmem:[#allocation8 + $0xe0] sm:$0xff]
          %v8244 = vld [vmem:[#allocation8 + $0xe8] sm:$0xff]
          %v8245 = vld [vmem:[#allocation8 + $0xf0] sm:$0xff]
          %v8246 = vld [vmem:[#allocation8 + $0xf8] sm:$0xff]
          %v8247 = vld [vmem:[#allocation8 + $0x100] sm:$0xff]
          %v8248 = vld [vmem:[#allocation8 + $0x108] sm:$0xff]
          %v8249 = vld [vmem:[#allocation8 + $0x110] sm:$0xff]
          %v8250 = vld [vmem:[#allocation8 + $0x118] sm:$0xff]
          %v8251 = vld [vmem:[#allocation8 + $0x120] sm:$0xff]
          %v8252 = vld [vmem:[#allocation8 + $0x128] sm:$0xff]
          %v8253 = vld [vmem:[#allocation8 + $0x130] sm:$0xff]
          %v8254 = vld [vmem:[#allocation8 + $0x138] sm:$0xff]
          %v8255 = vld [vmem:[#allocation8 + $0x140] sm:$0xff]
          %v8256 = vld [vmem:[#allocation8 + $0x148] sm:$0xff]
          %v8257 = vld [vmem:[#allocation8 + $0x150] sm:$0xff]
          %v8258 = vld [vmem:[#allocation8 + $0x158] sm:$0xff]
          %v8259 = vld [vmem:[#allocation8 + $0x160] sm:$0xff]
          %v8260 = vld [vmem:[#allocation8 + $0x168] sm:$0xff]
          %v8261 = vld [vmem:[#allocation8 + $0x170] sm:$0xff]
          %v8262 = vld [vmem:[#allocation8 + $0x178] sm:$0xff]
          %v8263 = vld [vmem:[#allocation8 + $0x180] sm:$0xff]
          %v8264 = vld [vmem:[#allocation8 + $0x188] sm:$0xff]
          %v8265 = vld [vmem:[#allocation8 + $0x190] sm:$0xff]
          %v8266 = vld [vmem:[#allocation8 + $0x198] sm:$0xff]
          %v8267 = vld [vmem:[#allocation8 + $0x1a0] sm:$0xff]
          %v8268 = vld [vmem:[#allocation8 + $0x1a8] sm:$0xff]
          %v8269 = vld [vmem:[#allocation8 + $0x1b0] sm:$0xff]
          %v8270 = vld [vmem:[#allocation8 + $0x1b8] sm:$0xff]
          %v8271 = vld [vmem:[#allocation8 + $0x1c0] sm:$0xff]
          %v8272 = vld [vmem:[#allocation8 + $0x1c8] sm:$0xff]
          %v8273 = vld [vmem:[#allocation8 + $0x1d0] sm:$0xff]
          %v8274 = vld [vmem:[#allocation8 + $0x1d8] sm:$0xff]
          %v8275 = vld [vmem:[#allocation8 + $0x1e0] sm:$0xff]
          %v8276 = vld [vmem:[#allocation8 + $0x1e8] sm:$0xff]
          %v8277 = vld [vmem:[#allocation8 + $0x1f0] sm:$0xff]
          %v8278 = vld [vmem:[#allocation8 + $0x1f8] sm:$0xff]
          %v8279 = vld [vmem:[#allocation8 + $0x200] sm:$0xff]
          %v8280 = vld [vmem:[#allocation8 + $0x208] sm:$0xff]
          %v8281 = vld [vmem:[#allocation8 + $0x210] sm:$0xff]
          %v8282 = vld [vmem:[#allocation8 + $0x218] sm:$0xff]
          %v8283 = vld [vmem:[#allocation8 + $0x220] sm:$0xff]
          %v8284 = vld [vmem:[#allocation8 + $0x228] sm:$0xff]
          %v8285 = vld [vmem:[#allocation8 + $0x230] sm:$0xff]
          %v8286 = vld [vmem:[#allocation8 + $0x238] sm:$0xff]
          %v8287 = vld [vmem:[#allocation8 + $0x240] sm:$0xff]
          %v8288 = vld [vmem:[#allocation8 + $0x248] sm:$0xff]
          %v8289 = vld [vmem:[#allocation8 + $0x250] sm:$0xff]
          %v8290 = vld [vmem:[#allocation8 + $0x258] sm:$0xff]
          %v8291 = vld [vmem:[#allocation8 + $0x260] sm:$0xff]
          %v8292 = vld [vmem:[#allocation8 + $0x268] sm:$0xff]
          %v8293 = vld [vmem:[#allocation8 + $0x270] sm:$0xff]
          %v8294 = vld [vmem:[#allocation8 + $0x278] sm:$0xff]
          %v8295 = vld [vmem:[#allocation8 + $0x280] sm:$0xff]
          %v8296 = vld [vmem:[#allocation8 + $0x288] sm:$0xff]
          %v8297 = vld [vmem:[#allocation8 + $0x290] sm:$0xff]
          %v8298 = vld [vmem:[#allocation8 + $0x298] sm:$0xff]
          %v8299 = vld [vmem:[#allocation8 + $0x2a0] sm:$0xff]
          %v8300 = vld [vmem:[#allocation8 + $0x2a8] sm:$0xff]
          %v8301 = vld [vmem:[#allocation8 + $0x2b0] sm:$0xff]
          %v8302 = vld [vmem:[#allocation8 + $0x2b8] sm:$0xff]
          %v8303 = vld [vmem:[#allocation8 + $0x2c0] sm:$0xff]
          %v8304 = vld [vmem:[#allocation8 + $0x2c8] sm:$0xff]
          %v8305 = vld [vmem:[#allocation8 + $0x2d0] sm:$0xff]
          %v8306 = vld [vmem:[#allocation8 + $0x2d8] sm:$0xff]
          %v8307 = vld [vmem:[#allocation8 + $0x2e0] sm:$0xff]
          %v8308 = vld [vmem:[#allocation8 + $0x2e8] sm:$0xff]
          %v8309 = vld [vmem:[#allocation8 + $0x2f0] sm:$0xff]
          %v8310 = vld [vmem:[#allocation8 + $0x2f8] sm:$0xff]
          %v8311 = vld [vmem:[#allocation8 + $0x300] sm:$0xff]
          %v8312 = vld [vmem:[#allocation8 + $0x308] sm:$0xff]
          %v8313 = vld [vmem:[#allocation8 + $0x310] sm:$0xff]
          %v8314 = vld [vmem:[#allocation8 + $0x318] sm:$0xff]
          %v8315 = vld [vmem:[#allocation8 + $0x320] sm:$0xff]
          %v8316 = vld [vmem:[#allocation8 + $0x328] sm:$0xff]
          %v8317 = vld [vmem:[#allocation8 + $0x330] sm:$0xff]
          %v8318 = vld [vmem:[#allocation8 + $0x338] sm:$0xff]
          %v8319 = vld [vmem:[#allocation8 + $0x340] sm:$0xff]
          %v8320 = vld [vmem:[#allocation8 + $0x348] sm:$0xff]
          %v8321 = vld [vmem:[#allocation8 + $0x350] sm:$0xff]
          %v8322 = vld [vmem:[#allocation8 + $0x358] sm:$0xff]
          %v8323 = vld [vmem:[#allocation8 + $0x360] sm:$0xff]
          %v8324 = vld [vmem:[#allocation8 + $0x368] sm:$0xff]
          %v8325 = vld [vmem:[#allocation8 + $0x370] sm:$0xff]
          %v8326 = vld [vmem:[#allocation8 + $0x378] sm:$0xff]
          %v8327 = vld [vmem:[#allocation8 + $0x380] sm:$0xff]
          %v8328 = vld [vmem:[#allocation8 + $0x388] sm:$0xff]
          %v8329 = vld [vmem:[#allocation8 + $0x390] sm:$0xff]
          %v8330 = vld [vmem:[#allocation8 + $0x398] sm:$0xff]
          %v8331 = vld [vmem:[#allocation8 + $0x3a0] sm:$0xff]
          %v8332 = vld [vmem:[#allocation8 + $0x3a8] sm:$0xff]
          %v8333 = vld [vmem:[#allocation8 + $0x3b0] sm:$0xff]
          %v8334 = vld [vmem:[#allocation8 + $0x3b8] sm:$0xff]
          %v8335 = vld [vmem:[#allocation8 + $0x3c0] sm:$0xff]
          %v8336 = vld [vmem:[#allocation8 + $0x3c8] sm:$0xff]
          %v8337 = vld [vmem:[#allocation8 + $0x3d0] sm:$0xff]
          %v8338 = vld [vmem:[#allocation8 + $0x3d8] sm:$0xff]
          %v8339 = vld [vmem:[#allocation8 + $0x3e0] sm:$0xff]
          %v8340 = vld [vmem:[#allocation8 + $0x3e8] sm:$0xff]
          %v8341 = vld [vmem:[#allocation8 + $0x3f0] sm:$0xff]
          %v8342 = vld [vmem:[#allocation8 + $0x3f8] sm:$0xff]
          %v8343 = vld [vmem:[#allocation8 + $0x400] sm:$0xff]
          %v8344 = vld [vmem:[#allocation8 + $0x408] sm:$0xff]
          %v8345 = vld [vmem:[#allocation8 + $0x410] sm:$0xff]
          %v8346 = vld [vmem:[#allocation8 + $0x418] sm:$0xff]
          %v8347 = vld [vmem:[#allocation8 + $0x420] sm:$0xff]
          %v8348 = vld [vmem:[#allocation8 + $0x428] sm:$0xff]
          %v8349 = vld [vmem:[#allocation8 + $0x430] sm:$0xff]
          %v8350 = vld [vmem:[#allocation8 + $0x438] sm:$0xff]
          %v8351 = vld [vmem:[#allocation8 + $0x440] sm:$0xff]
          %v8352 = vld [vmem:[#allocation8 + $0x448] sm:$0xff]
          %v8353 = vld [vmem:[#allocation8 + $0x450] sm:$0xff]
          %v8354 = vld [vmem:[#allocation8 + $0x458] sm:$0xff]
          %v8355 = vld [vmem:[#allocation8 + $0x460] sm:$0xff]
          %v8356 = vld [vmem:[#allocation8 + $0x468] sm:$0xff]
          %v8357 = vld [vmem:[#allocation8 + $0x470] sm:$0xff]
          %v8358 = vld [vmem:[#allocation8 + $0x478] sm:$0xff]
          %v8359 = vld [vmem:[#allocation8 + $0x480] sm:$0xff]
          %v8360 = vld [vmem:[#allocation8 + $0x488] sm:$0xff]
          %v8361 = vld [vmem:[#allocation8 + $0x490] sm:$0xff]
          %v8362 = vld [vmem:[#allocation8 + $0x498] sm:$0xff]
          %v8363 = vld [vmem:[#allocation8 + $0x4a0] sm:$0xff]
          %v8364 = vld [vmem:[#allocation8 + $0x4a8] sm:$0xff]
          %v8365 = vld [vmem:[#allocation8 + $0x4b0] sm:$0xff]
          %v8366 = vld [vmem:[#allocation8 + $0x4b8] sm:$0xff]
          %v8367 = vld [vmem:[#allocation8 + $0x4c0] sm:$0xff]
          %v8368 = vld [vmem:[#allocation8 + $0x4c8] sm:$0xff]
          %v8369 = vld [vmem:[#allocation8 + $0x4d0] sm:$0xff]
          %v8370 = vld [vmem:[#allocation8 + $0x4d8] sm:$0xff]
          %v8371 = vld [vmem:[#allocation8 + $0x4e0] sm:$0xff]
          %v8372 = vld [vmem:[#allocation8 + $0x4e8] sm:$0xff]
          %v8373 = vld [vmem:[#allocation8 + $0x4f0] sm:$0xff]
          %v8374 = vld [vmem:[#allocation8 + $0x4f8] sm:$0xff]
          %v8375 = vld [vmem:[#allocation8 + $0x500] sm:$0xff]
          %v8376 = vld [vmem:[#allocation8 + $0x508] sm:$0xff]
          %v8377 = vld [vmem:[#allocation8 + $0x510] sm:$0xff]
          %v8378 = vld [vmem:[#allocation8 + $0x518] sm:$0xff]
          %v8379 = vld [vmem:[#allocation8 + $0x520] sm:$0xff]
          %v8380 = vld [vmem:[#allocation8 + $0x528] sm:$0xff]
          %v8381 = vld [vmem:[#allocation8 + $0x530] sm:$0xff]
          %v8382 = vld [vmem:[#allocation8 + $0x538] sm:$0xff]
          %v8383 = vld [vmem:[#allocation8 + $0x540] sm:$0xff]
          %v8384 = vld [vmem:[#allocation8 + $0x548] sm:$0xff]
          %v8385 = vld [vmem:[#allocation8 + $0x550] sm:$0xff]
          %v8386 = vld [vmem:[#allocation8 + $0x558] sm:$0xff]
          %v8387 = vld [vmem:[#allocation8 + $0x560] sm:$0xff]
          %v8388 = vld [vmem:[#allocation8 + $0x568] sm:$0xff]
          %v8389 = vld [vmem:[#allocation8 + $0x570] sm:$0xff]
          %v8390 = vld [vmem:[#allocation8 + $0x578] sm:$0xff]
          %v8391 = vld [vmem:[#allocation8 + $0x580] sm:$0xff]
          %v8392 = vld [vmem:[#allocation8 + $0x588] sm:$0xff]
          %v8393 = vld [vmem:[#allocation8 + $0x590] sm:$0xff]
          %v8394 = vld [vmem:[#allocation8 + $0x598] sm:$0xff]
          %v8395 = vld [vmem:[#allocation8 + $0x5a0] sm:$0xff]
          %v8396 = vld [vmem:[#allocation8 + $0x5a8] sm:$0xff]
          %v8397 = vld [vmem:[#allocation8 + $0x5b0] sm:$0xff]
          %v8398 = vld [vmem:[#allocation8 + $0x5b8] sm:$0xff]
          %v8399 = vld [vmem:[#allocation8 + $0x5c0] sm:$0xff]
          %v8400 = vld [vmem:[#allocation8 + $0x5c8] sm:$0xff]
          %v8401 = vld [vmem:[#allocation8 + $0x5d0] sm:$0xff]
          %v8402 = vld [vmem:[#allocation8 + $0x5d8] sm:$0xff]
          %v8403 = vld [vmem:[#allocation8 + $0x5e0] sm:$0xff]
          %v8404 = vld [vmem:[#allocation8 + $0x5e8] sm:$0xff]
          %v8405 = vld [vmem:[#allocation8 + $0x5f0] sm:$0xff]
          %v8406 = vld [vmem:[#allocation8 + $0x5f8] sm:$0xff]
          %v8407 = vld [vmem:[#allocation8 + $0x600] sm:$0xff]
          %v8408 = vld [vmem:[#allocation8 + $0x608] sm:$0xff]
          %v8409 = vld [vmem:[#allocation8 + $0x610] sm:$0xff]
          %v8410 = vld [vmem:[#allocation8 + $0x618] sm:$0xff]
          %v8411 = vld [vmem:[#allocation8 + $0x620] sm:$0xff]
          %v8412 = vld [vmem:[#allocation8 + $0x628] sm:$0xff]
          %v8413 = vld [vmem:[#allocation8 + $0x630] sm:$0xff]
          %v8414 = vld [vmem:[#allocation8 + $0x638] sm:$0xff]
          %v8415 = vld [vmem:[#allocation8 + $0x640] sm:$0xff]
          %v8416 = vld [vmem:[#allocation8 + $0x648] sm:$0xff]
          %v8417 = vld [vmem:[#allocation8 + $0x650] sm:$0xff]
          %v8418 = vld [vmem:[#allocation8 + $0x658] sm:$0xff]
          %v8419 = vld [vmem:[#allocation8 + $0x660] sm:$0xff]
          %v8420 = vld [vmem:[#allocation8 + $0x668] sm:$0xff]
          %v8421 = vld [vmem:[#allocation8 + $0x670] sm:$0xff]
          %v8422 = vld [vmem:[#allocation8 + $0x678] sm:$0xff]
          %v8423 = vld [vmem:[#allocation8 + $0x680] sm:$0xff]
          %v8424 = vld [vmem:[#allocation8 + $0x688] sm:$0xff]
          %v8425 = vld [vmem:[#allocation8 + $0x690] sm:$0xff]
          %v8426 = vld [vmem:[#allocation8 + $0x698] sm:$0xff]
          %v8427 = vld [vmem:[#allocation8 + $0x6a0] sm:$0xff]
          %v8428 = vld [vmem:[#allocation8 + $0x6a8] sm:$0xff]
          %v8429 = vld [vmem:[#allocation8 + $0x6b0] sm:$0xff]
          %v8430 = vld [vmem:[#allocation8 + $0x6b8] sm:$0xff]
          %v8431 = vld [vmem:[#allocation8 + $0x6c0] sm:$0xff]
          %v8432 = vld [vmem:[#allocation8 + $0x6c8] sm:$0xff]
          %v8433 = vld [vmem:[#allocation8 + $0x6d0] sm:$0xff]
          %v8434 = vld [vmem:[#allocation8 + $0x6d8] sm:$0xff]
          %v8435 = vld [vmem:[#allocation8 + $0x6e0] sm:$0xff]
          %v8436 = vld [vmem:[#allocation8 + $0x6e8] sm:$0xff]
          %v8437 = vld [vmem:[#allocation8 + $0x6f0] sm:$0xff]
          %v8438 = vld [vmem:[#allocation8 + $0x6f8] sm:$0xff]
          %v8439 = vld [vmem:[#allocation8 + $0x700] sm:$0xff]
          %v8440 = vld [vmem:[#allocation8 + $0x708] sm:$0xff]
          %v8441 = vld [vmem:[#allocation8 + $0x710] sm:$0xff]
          %v8442 = vld [vmem:[#allocation8 + $0x718] sm:$0xff]
          %v8443 = vld [vmem:[#allocation8 + $0x720] sm:$0xff]
          %v8444 = vld [vmem:[#allocation8 + $0x728] sm:$0xff]
          %v8445 = vld [vmem:[#allocation8 + $0x730] sm:$0xff]
          %v8446 = vld [vmem:[#allocation8 + $0x738] sm:$0xff]
          %v8447 = vld [vmem:[#allocation8 + $0x740] sm:$0xff]
          %v8448 = vld [vmem:[#allocation8 + $0x748] sm:$0xff]
          %v8449 = vld [vmem:[#allocation8 + $0x750] sm:$0xff]
          %v8450 = vld [vmem:[#allocation8 + $0x758] sm:$0xff]
          %v8451 = vld [vmem:[#allocation8 + $0x760] sm:$0xff]
          %v8452 = vld [vmem:[#allocation8 + $0x768] sm:$0xff]
          %v8453 = vld [vmem:[#allocation8 + $0x770] sm:$0xff]
          %v8454 = vld [vmem:[#allocation8 + $0x778] sm:$0xff]
          %v8455 = vld [vmem:[#allocation8 + $0x780] sm:$0xff]
          %v8456 = vld [vmem:[#allocation8 + $0x788] sm:$0xff]
          %v8457 = vld [vmem:[#allocation8 + $0x790] sm:$0xff]
          %v8458 = vld [vmem:[#allocation8 + $0x798] sm:$0xff]
          %v8459 = vld [vmem:[#allocation8 + $0x7a0] sm:$0xff]
          %v8460 = vld [vmem:[#allocation8 + $0x7a8] sm:$0xff]
          %v8461 = vld [vmem:[#allocation8 + $0x7b0] sm:$0xff]
          %v8462 = vld [vmem:[#allocation8 + $0x7b8] sm:$0xff]
          %v8463 = vld [vmem:[#allocation8 + $0x7c0] sm:$0xff]
          %v8464 = vld [vmem:[#allocation8 + $0x7c8] sm:$0xff]
          %v8465 = vld [vmem:[#allocation8 + $0x7d0] sm:$0xff]
          %v8466 = vld [vmem:[#allocation8 + $0x7d8] sm:$0xff]
          %v8467 = vld [vmem:[#allocation8 + $0x7e0] sm:$0xff]
          %v8468 = vld [vmem:[#allocation8 + $0x7e8] sm:$0xff]
          %v8469 = vld [vmem:[#allocation8 + $0x7f0] sm:$0xff]
          %v8470 = vld [vmem:[#allocation8 + $0x7f8] sm:$0xff]
          %v8471 = vld [vmem:[#allocation9] sm:$0xf]
          %v8473 = vlaneseq
          %v8474 = vshrl.u32 %v8473, 7
          %v8475 = vsub.s32 0, %v8474
          %v8476 = vrot.slane %v8471, %v8475
          %v8477 = vlaneseq
          %v8478 = vshrl.u32 %v8477, 7
          %v8479 = vsub.s32 1, %v8478
          %v8480 = vrot.slane %v8471, %v8479
          %v8481 = vlaneseq
          %v8482 = vshrl.u32 %v8481, 7
          %v8483 = vsub.s32 2, %v8482
          %v8484 = vrot.slane %v8471, %v8483
          %v8485 = vlaneseq
          %v8486 = vshrl.u32 %v8485, 7
          %v8487 = vsub.s32 3, %v8486
          %v8488 = vrot.slane %v8471, %v8487
          %v8749 = vunpack.c.l.b16 %v8215
          %v8750 = vunpack.c.h.b16 %v8215
          %v8751 = vunpack.c.l.b16 %v8216
          %v8752 = vunpack.c.h.b16 %v8216
          %v8753 = vunpack.c.l.b16 %v8217
          %v8754 = vunpack.c.h.b16 %v8217
          %v8755 = vunpack.c.l.b16 %v8218
          %v8756 = vunpack.c.h.b16 %v8218
          %v8757 = vunpack.c.l.b16 %v8219
          %v8758 = vunpack.c.h.b16 %v8219
          %v8759 = vunpack.c.l.b16 %v8220
          %v8760 = vunpack.c.h.b16 %v8220
          %v8761 = vunpack.c.l.b16 %v8221
          %v8762 = vunpack.c.h.b16 %v8221
          %v8763 = vunpack.c.l.b16 %v8222
          %v8764 = vunpack.c.h.b16 %v8222
          %v8765 = vunpack.c.l.b16 %v8223
          %v8766 = vunpack.c.h.b16 %v8223
          %v8767 = vunpack.c.l.b16 %v8224
          %v8768 = vunpack.c.h.b16 %v8224
          %v8769 = vunpack.c.l.b16 %v8225
          %v8770 = vunpack.c.h.b16 %v8225
          %v8771 = vunpack.c.l.b16 %v8226
          %v8772 = vunpack.c.h.b16 %v8226
          %v8773 = vunpack.c.l.b16 %v8227
          %v8774 = vunpack.c.h.b16 %v8227
          %v8775 = vunpack.c.l.b16 %v8228
          %v8776 = vunpack.c.h.b16 %v8228
          %v8777 = vunpack.c.l.b16 %v8229
          %v8778 = vunpack.c.h.b16 %v8229
          %v8779 = vunpack.c.l.b16 %v8230
          %v8780 = vunpack.c.h.b16 %v8230
          %v8781 = vunpack.c.l.b16 %v8231
          %v8782 = vunpack.c.h.b16 %v8231
          %v8783 = vunpack.c.l.b16 %v8232
          %v8784 = vunpack.c.h.b16 %v8232
          %v8785 = vunpack.c.l.b16 %v8233
          %v8786 = vunpack.c.h.b16 %v8233
          %v8787 = vunpack.c.l.b16 %v8234
          %v8788 = vunpack.c.h.b16 %v8234
          %v8789 = vunpack.c.l.b16 %v8235
          %v8790 = vunpack.c.h.b16 %v8235
          %v8791 = vunpack.c.l.b16 %v8236
          %v8792 = vunpack.c.h.b16 %v8236
          %v8793 = vunpack.c.l.b16 %v8237
          %v8794 = vunpack.c.h.b16 %v8237
          %v8795 = vunpack.c.l.b16 %v8238
          %v8796 = vunpack.c.h.b16 %v8238
          %v8797 = vunpack.c.l.b16 %v8239
          %v8798 = vunpack.c.h.b16 %v8239
          %v8799 = vunpack.c.l.b16 %v8240
          %v8800 = vunpack.c.h.b16 %v8240
          %v8801 = vunpack.c.l.b16 %v8241
          %v8802 = vunpack.c.h.b16 %v8241
          %v8803 = vunpack.c.l.b16 %v8242
          %v8804 = vunpack.c.h.b16 %v8242
          %v8805 = vunpack.c.l.b16 %v8243
          %v8806 = vunpack.c.h.b16 %v8243
          %v8807 = vunpack.c.l.b16 %v8244
          %v8808 = vunpack.c.h.b16 %v8244
          %v8809 = vunpack.c.l.b16 %v8245
          %v8810 = vunpack.c.h.b16 %v8245
          %v8811 = vunpack.c.l.b16 %v8246
          %v8812 = vunpack.c.h.b16 %v8246
          %v8813 = vunpack.c.l.b16 %v8247
          %v8814 = vunpack.c.h.b16 %v8247
          %v8815 = vunpack.c.l.b16 %v8248
          %v8816 = vunpack.c.h.b16 %v8248
          %v8817 = vunpack.c.l.b16 %v8249
          %v8818 = vunpack.c.h.b16 %v8249
          %v8819 = vunpack.c.l.b16 %v8250
          %v8820 = vunpack.c.h.b16 %v8250
          %v8821 = vunpack.c.l.b16 %v8251
          %v8822 = vunpack.c.h.b16 %v8251
          %v8823 = vunpack.c.l.b16 %v8252
          %v8824 = vunpack.c.h.b16 %v8252
          %v8825 = vunpack.c.l.b16 %v8253
          %v8826 = vunpack.c.h.b16 %v8253
          %v8827 = vunpack.c.l.b16 %v8254
          %v8828 = vunpack.c.h.b16 %v8254
          %v8829 = vunpack.c.l.b16 %v8255
          %v8830 = vunpack.c.h.b16 %v8255
          %v8831 = vunpack.c.l.b16 %v8256
          %v8832 = vunpack.c.h.b16 %v8256
          %v8833 = vunpack.c.l.b16 %v8257
          %v8834 = vunpack.c.h.b16 %v8257
          %v8835 = vunpack.c.l.b16 %v8258
          %v8836 = vunpack.c.h.b16 %v8258
          %v8837 = vunpack.c.l.b16 %v8259
          %v8838 = vunpack.c.h.b16 %v8259
          %v8839 = vunpack.c.l.b16 %v8260
          %v8840 = vunpack.c.h.b16 %v8260
          %v8841 = vunpack.c.l.b16 %v8261
          %v8842 = vunpack.c.h.b16 %v8261
          %v8843 = vunpack.c.l.b16 %v8262
          %v8844 = vunpack.c.h.b16 %v8262
          %v8845 = vunpack.c.l.b16 %v8263
          %v8846 = vunpack.c.h.b16 %v8263
          %v8847 = vunpack.c.l.b16 %v8264
          %v8848 = vunpack.c.h.b16 %v8264
          %v8849 = vunpack.c.l.b16 %v8265
          %v8850 = vunpack.c.h.b16 %v8265
          %v8851 = vunpack.c.l.b16 %v8266
          %v8852 = vunpack.c.h.b16 %v8266
          %v8853 = vunpack.c.l.b16 %v8267
          %v8854 = vunpack.c.h.b16 %v8267
          %v8855 = vunpack.c.l.b16 %v8268
          %v8856 = vunpack.c.h.b16 %v8268
          %v8857 = vunpack.c.l.b16 %v8269
          %v8858 = vunpack.c.h.b16 %v8269
          %v8859 = vunpack.c.l.b16 %v8270
          %v8860 = vunpack.c.h.b16 %v8270
          %v8861 = vunpack.c.l.b16 %v8271
          %v8862 = vunpack.c.h.b16 %v8271
          %v8863 = vunpack.c.l.b16 %v8272
          %v8864 = vunpack.c.h.b16 %v8272
          %v8865 = vunpack.c.l.b16 %v8273
          %v8866 = vunpack.c.h.b16 %v8273
          %v8867 = vunpack.c.l.b16 %v8274
          %v8868 = vunpack.c.h.b16 %v8274
          %v8869 = vunpack.c.l.b16 %v8275
          %v8870 = vunpack.c.h.b16 %v8275
          %v8871 = vunpack.c.l.b16 %v8276
          %v8872 = vunpack.c.h.b16 %v8276
          %v8873 = vunpack.c.l.b16 %v8277
          %v8874 = vunpack.c.h.b16 %v8277
          %v8875 = vunpack.c.l.b16 %v8278
          %v8876 = vunpack.c.h.b16 %v8278
          %v8877 = vunpack.c.l.b16 %v8279
          %v8878 = vunpack.c.h.b16 %v8279
          %v8879 = vunpack.c.l.b16 %v8280
          %v8880 = vunpack.c.h.b16 %v8280
          %v8881 = vunpack.c.l.b16 %v8281
          %v8882 = vunpack.c.h.b16 %v8281
          %v8883 = vunpack.c.l.b16 %v8282
          %v8884 = vunpack.c.h.b16 %v8282
          %v8885 = vunpack.c.l.b16 %v8283
          %v8886 = vunpack.c.h.b16 %v8283
          %v8887 = vunpack.c.l.b16 %v8284
          %v8888 = vunpack.c.h.b16 %v8284
          %v8889 = vunpack.c.l.b16 %v8285
          %v8890 = vunpack.c.h.b16 %v8285
          %v8891 = vunpack.c.l.b16 %v8286
          %v8892 = vunpack.c.h.b16 %v8286
          %v8893 = vunpack.c.l.b16 %v8287
          %v8894 = vunpack.c.h.b16 %v8287
          %v8895 = vunpack.c.l.b16 %v8288
          %v8896 = vunpack.c.h.b16 %v8288
          %v8897 = vunpack.c.l.b16 %v8289
          %v8898 = vunpack.c.h.b16 %v8289
          %v8899 = vunpack.c.l.b16 %v8290
          %v8900 = vunpack.c.h.b16 %v8290
          %v8901 = vunpack.c.l.b16 %v8291
          %v8902 = vunpack.c.h.b16 %v8291
          %v8903 = vunpack.c.l.b16 %v8292
          %v8904 = vunpack.c.h.b16 %v8292
          %v8905 = vunpack.c.l.b16 %v8293
          %v8906 = vunpack.c.h.b16 %v8293
          %v8907 = vunpack.c.l.b16 %v8294
          %v8908 = vunpack.c.h.b16 %v8294
          %v8909 = vunpack.c.l.b16 %v8295
          %v8910 = vunpack.c.h.b16 %v8295
          %v8911 = vunpack.c.l.b16 %v8296
          %v8912 = vunpack.c.h.b16 %v8296
          %v8913 = vunpack.c.l.b16 %v8297
          %v8914 = vunpack.c.h.b16 %v8297
          %v8915 = vunpack.c.l.b16 %v8298
          %v8916 = vunpack.c.h.b16 %v8298
          %v8917 = vunpack.c.l.b16 %v8299
          %v8918 = vunpack.c.h.b16 %v8299
          %v8919 = vunpack.c.l.b16 %v8300
          %v8920 = vunpack.c.h.b16 %v8300
          %v8921 = vunpack.c.l.b16 %v8301
          %v8922 = vunpack.c.h.b16 %v8301
          %v8923 = vunpack.c.l.b16 %v8302
          %v8924 = vunpack.c.h.b16 %v8302
          %v8925 = vunpack.c.l.b16 %v8303
          %v8926 = vunpack.c.h.b16 %v8303
          %v8927 = vunpack.c.l.b16 %v8304
          %v8928 = vunpack.c.h.b16 %v8304
          %v8929 = vunpack.c.l.b16 %v8305
          %v8930 = vunpack.c.h.b16 %v8305
          %v8931 = vunpack.c.l.b16 %v8306
          %v8932 = vunpack.c.h.b16 %v8306
          %v8933 = vunpack.c.l.b16 %v8307
          %v8934 = vunpack.c.h.b16 %v8307
          %v8935 = vunpack.c.l.b16 %v8308
          %v8936 = vunpack.c.h.b16 %v8308
          %v8937 = vunpack.c.l.b16 %v8309
          %v8938 = vunpack.c.h.b16 %v8309
          %v8939 = vunpack.c.l.b16 %v8310
          %v8940 = vunpack.c.h.b16 %v8310
          %v8941 = vunpack.c.l.b16 %v8311
          %v8942 = vunpack.c.h.b16 %v8311
          %v8943 = vunpack.c.l.b16 %v8312
          %v8944 = vunpack.c.h.b16 %v8312
          %v8945 = vunpack.c.l.b16 %v8313
          %v8946 = vunpack.c.h.b16 %v8313
          %v8947 = vunpack.c.l.b16 %v8314
          %v8948 = vunpack.c.h.b16 %v8314
          %v8949 = vunpack.c.l.b16 %v8315
          %v8950 = vunpack.c.h.b16 %v8315
          %v8951 = vunpack.c.l.b16 %v8316
          %v8952 = vunpack.c.h.b16 %v8316
          %v8953 = vunpack.c.l.b16 %v8317
          %v8954 = vunpack.c.h.b16 %v8317
          %v8955 = vunpack.c.l.b16 %v8318
          %v8956 = vunpack.c.h.b16 %v8318
          %v8957 = vunpack.c.l.b16 %v8319
          %v8958 = vunpack.c.h.b16 %v8319
          %v8959 = vunpack.c.l.b16 %v8320
          %v8960 = vunpack.c.h.b16 %v8320
          %v8961 = vunpack.c.l.b16 %v8321
          %v8962 = vunpack.c.h.b16 %v8321
          %v8963 = vunpack.c.l.b16 %v8322
          %v8964 = vunpack.c.h.b16 %v8322
          %v8965 = vunpack.c.l.b16 %v8323
          %v8966 = vunpack.c.h.b16 %v8323
          %v8967 = vunpack.c.l.b16 %v8324
          %v8968 = vunpack.c.h.b16 %v8324
          %v8969 = vunpack.c.l.b16 %v8325
          %v8970 = vunpack.c.h.b16 %v8325
          %v8971 = vunpack.c.l.b16 %v8326
          %v8972 = vunpack.c.h.b16 %v8326
          %v8973 = vunpack.c.l.b16 %v8327
          %v8974 = vunpack.c.h.b16 %v8327
          %v8975 = vunpack.c.l.b16 %v8328
          %v8976 = vunpack.c.h.b16 %v8328
          %v8977 = vunpack.c.l.b16 %v8329
          %v8978 = vunpack.c.h.b16 %v8329
          %v8979 = vunpack.c.l.b16 %v8330
          %v8980 = vunpack.c.h.b16 %v8330
          %v8981 = vunpack.c.l.b16 %v8331
          %v8982 = vunpack.c.h.b16 %v8331
          %v8983 = vunpack.c.l.b16 %v8332
          %v8984 = vunpack.c.h.b16 %v8332
          %v8985 = vunpack.c.l.b16 %v8333
          %v8986 = vunpack.c.h.b16 %v8333
          %v8987 = vunpack.c.l.b16 %v8334
          %v8988 = vunpack.c.h.b16 %v8334
          %v8989 = vunpack.c.l.b16 %v8335
          %v8990 = vunpack.c.h.b16 %v8335
          %v8991 = vunpack.c.l.b16 %v8336
          %v8992 = vunpack.c.h.b16 %v8336
          %v8993 = vunpack.c.l.b16 %v8337
          %v8994 = vunpack.c.h.b16 %v8337
          %v8995 = vunpack.c.l.b16 %v8338
          %v8996 = vunpack.c.h.b16 %v8338
          %v8997 = vunpack.c.l.b16 %v8339
          %v8998 = vunpack.c.h.b16 %v8339
          %v8999 = vunpack.c.l.b16 %v8340
          %v9000 = vunpack.c.h.b16 %v8340
          %v9001 = vunpack.c.l.b16 %v8341
          %v9002 = vunpack.c.h.b16 %v8341
          %v9003 = vunpack.c.l.b16 %v8342
          %v9004 = vunpack.c.h.b16 %v8342
          %v9005 = vunpack.c.l.b16 %v8343
          %v9006 = vunpack.c.h.b16 %v8343
          %v9007 = vunpack.c.l.b16 %v8344
          %v9008 = vunpack.c.h.b16 %v8344
          %v9009 = vunpack.c.l.b16 %v8345
          %v9010 = vunpack.c.h.b16 %v8345
          %v9011 = vunpack.c.l.b16 %v8346
          %v9012 = vunpack.c.h.b16 %v8346
          %v9013 = vunpack.c.l.b16 %v8347
          %v9014 = vunpack.c.h.b16 %v8347
          %v9015 = vunpack.c.l.b16 %v8348
          %v9016 = vunpack.c.h.b16 %v8348
          %v9017 = vunpack.c.l.b16 %v8349
          %v9018 = vunpack.c.h.b16 %v8349
          %v9019 = vunpack.c.l.b16 %v8350
          %v9020 = vunpack.c.h.b16 %v8350
          %v9021 = vunpack.c.l.b16 %v8351
          %v9022 = vunpack.c.h.b16 %v8351
          %v9023 = vunpack.c.l.b16 %v8352
          %v9024 = vunpack.c.h.b16 %v8352
          %v9025 = vunpack.c.l.b16 %v8353
          %v9026 = vunpack.c.h.b16 %v8353
          %v9027 = vunpack.c.l.b16 %v8354
          %v9028 = vunpack.c.h.b16 %v8354
          %v9029 = vunpack.c.l.b16 %v8355
          %v9030 = vunpack.c.h.b16 %v8355
          %v9031 = vunpack.c.l.b16 %v8356
          %v9032 = vunpack.c.h.b16 %v8356
          %v9033 = vunpack.c.l.b16 %v8357
          %v9034 = vunpack.c.h.b16 %v8357
          %v9035 = vunpack.c.l.b16 %v8358
          %v9036 = vunpack.c.h.b16 %v8358
          %v9037 = vunpack.c.l.b16 %v8359
          %v9038 = vunpack.c.h.b16 %v8359
          %v9039 = vunpack.c.l.b16 %v8360
          %v9040 = vunpack.c.h.b16 %v8360
          %v9041 = vunpack.c.l.b16 %v8361
          %v9042 = vunpack.c.h.b16 %v8361
          %v9043 = vunpack.c.l.b16 %v8362
          %v9044 = vunpack.c.h.b16 %v8362
          %v9045 = vunpack.c.l.b16 %v8363
          %v9046 = vunpack.c.h.b16 %v8363
          %v9047 = vunpack.c.l.b16 %v8364
          %v9048 = vunpack.c.h.b16 %v8364
          %v9049 = vunpack.c.l.b16 %v8365
          %v9050 = vunpack.c.h.b16 %v8365
          %v9051 = vunpack.c.l.b16 %v8366
          %v9052 = vunpack.c.h.b16 %v8366
          %v9053 = vunpack.c.l.b16 %v8367
          %v9054 = vunpack.c.h.b16 %v8367
          %v9055 = vunpack.c.l.b16 %v8368
          %v9056 = vunpack.c.h.b16 %v8368
          %v9057 = vunpack.c.l.b16 %v8369
          %v9058 = vunpack.c.h.b16 %v8369
          %v9059 = vunpack.c.l.b16 %v8370
          %v9060 = vunpack.c.h.b16 %v8370
          %v9061 = vunpack.c.l.b16 %v8371
          %v9062 = vunpack.c.h.b16 %v8371
          %v9063 = vunpack.c.l.b16 %v8372
          %v9064 = vunpack.c.h.b16 %v8372
          %v9065 = vunpack.c.l.b16 %v8373
          %v9066 = vunpack.c.h.b16 %v8373
          %v9067 = vunpack.c.l.b16 %v8374
          %v9068 = vunpack.c.h.b16 %v8374
          %v9069 = vunpack.c.l.b16 %v8375
          %v9070 = vunpack.c.h.b16 %v8375
          %v9071 = vunpack.c.l.b16 %v8376
          %v9072 = vunpack.c.h.b16 %v8376
          %v9073 = vunpack.c.l.b16 %v8377
          %v9074 = vunpack.c.h.b16 %v8377
          %v9075 = vunpack.c.l.b16 %v8378
          %v9076 = vunpack.c.h.b16 %v8378
          %v9077 = vunpack.c.l.b16 %v8379
          %v9078 = vunpack.c.h.b16 %v8379
          %v9079 = vunpack.c.l.b16 %v8380
          %v9080 = vunpack.c.h.b16 %v8380
          %v9081 = vunpack.c.l.b16 %v8381
          %v9082 = vunpack.c.h.b16 %v8381
          %v9083 = vunpack.c.l.b16 %v8382
          %v9084 = vunpack.c.h.b16 %v8382
          %v9085 = vunpack.c.l.b16 %v8383
          %v9086 = vunpack.c.h.b16 %v8383
          %v9087 = vunpack.c.l.b16 %v8384
          %v9088 = vunpack.c.h.b16 %v8384
          %v9089 = vunpack.c.l.b16 %v8385
          %v9090 = vunpack.c.h.b16 %v8385
          %v9091 = vunpack.c.l.b16 %v8386
          %v9092 = vunpack.c.h.b16 %v8386
          %v9093 = vunpack.c.l.b16 %v8387
          %v9094 = vunpack.c.h.b16 %v8387
          %v9095 = vunpack.c.l.b16 %v8388
          %v9096 = vunpack.c.h.b16 %v8388
          %v9097 = vunpack.c.l.b16 %v8389
          %v9098 = vunpack.c.h.b16 %v8389
          %v9099 = vunpack.c.l.b16 %v8390
          %v9100 = vunpack.c.h.b16 %v8390
          %v9101 = vunpack.c.l.b16 %v8391
          %v9102 = vunpack.c.h.b16 %v8391
          %v9103 = vunpack.c.l.b16 %v8392
          %v9104 = vunpack.c.h.b16 %v8392
          %v9105 = vunpack.c.l.b16 %v8393
          %v9106 = vunpack.c.h.b16 %v8393
          %v9107 = vunpack.c.l.b16 %v8394
          %v9108 = vunpack.c.h.b16 %v8394
          %v9109 = vunpack.c.l.b16 %v8395
          %v9110 = vunpack.c.h.b16 %v8395
          %v9111 = vunpack.c.l.b16 %v8396
          %v9112 = vunpack.c.h.b16 %v8396
          %v9113 = vunpack.c.l.b16 %v8397
          %v9114 = vunpack.c.h.b16 %v8397
          %v9115 = vunpack.c.l.b16 %v8398
          %v9116 = vunpack.c.h.b16 %v8398
          %v9117 = vunpack.c.l.b16 %v8399
          %v9118 = vunpack.c.h.b16 %v8399
          %v9119 = vunpack.c.l.b16 %v8400
          %v9120 = vunpack.c.h.b16 %v8400
          %v9121 = vunpack.c.l.b16 %v8401
          %v9122 = vunpack.c.h.b16 %v8401
          %v9123 = vunpack.c.l.b16 %v8402
          %v9124 = vunpack.c.h.b16 %v8402
          %v9125 = vunpack.c.l.b16 %v8403
          %v9126 = vunpack.c.h.b16 %v8403
          %v9127 = vunpack.c.l.b16 %v8404
          %v9128 = vunpack.c.h.b16 %v8404
          %v9129 = vunpack.c.l.b16 %v8405
          %v9130 = vunpack.c.h.b16 %v8405
          %v9131 = vunpack.c.l.b16 %v8406
          %v9132 = vunpack.c.h.b16 %v8406
          %v9133 = vunpack.c.l.b16 %v8407
          %v9134 = vunpack.c.h.b16 %v8407
          %v9135 = vunpack.c.l.b16 %v8408
          %v9136 = vunpack.c.h.b16 %v8408
          %v9137 = vunpack.c.l.b16 %v8409
          %v9138 = vunpack.c.h.b16 %v8409
          %v9139 = vunpack.c.l.b16 %v8410
          %v9140 = vunpack.c.h.b16 %v8410
          %v9141 = vunpack.c.l.b16 %v8411
          %v9142 = vunpack.c.h.b16 %v8411
          %v9143 = vunpack.c.l.b16 %v8412
          %v9144 = vunpack.c.h.b16 %v8412
          %v9145 = vunpack.c.l.b16 %v8413
          %v9146 = vunpack.c.h.b16 %v8413
          %v9147 = vunpack.c.l.b16 %v8414
          %v9148 = vunpack.c.h.b16 %v8414
          %v9149 = vunpack.c.l.b16 %v8415
          %v9150 = vunpack.c.h.b16 %v8415
          %v9151 = vunpack.c.l.b16 %v8416
          %v9152 = vunpack.c.h.b16 %v8416
          %v9153 = vunpack.c.l.b16 %v8417
          %v9154 = vunpack.c.h.b16 %v8417
          %v9155 = vunpack.c.l.b16 %v8418
          %v9156 = vunpack.c.h.b16 %v8418
          %v9157 = vunpack.c.l.b16 %v8419
          %v9158 = vunpack.c.h.b16 %v8419
          %v9159 = vunpack.c.l.b16 %v8420
          %v9160 = vunpack.c.h.b16 %v8420
          %v9161 = vunpack.c.l.b16 %v8421
          %v9162 = vunpack.c.h.b16 %v8421
          %v9163 = vunpack.c.l.b16 %v8422
          %v9164 = vunpack.c.h.b16 %v8422
          %v9165 = vunpack.c.l.b16 %v8423
          %v9166 = vunpack.c.h.b16 %v8423
          %v9167 = vunpack.c.l.b16 %v8424
          %v9168 = vunpack.c.h.b16 %v8424
          %v9169 = vunpack.c.l.b16 %v8425
          %v9170 = vunpack.c.h.b16 %v8425
          %v9171 = vunpack.c.l.b16 %v8426
          %v9172 = vunpack.c.h.b16 %v8426
          %v9173 = vunpack.c.l.b16 %v8427
          %v9174 = vunpack.c.h.b16 %v8427
          %v9175 = vunpack.c.l.b16 %v8428
          %v9176 = vunpack.c.h.b16 %v8428
          %v9177 = vunpack.c.l.b16 %v8429
          %v9178 = vunpack.c.h.b16 %v8429
          %v9179 = vunpack.c.l.b16 %v8430
          %v9180 = vunpack.c.h.b16 %v8430
          %v9181 = vunpack.c.l.b16 %v8431
          %v9182 = vunpack.c.h.b16 %v8431
          %v9183 = vunpack.c.l.b16 %v8432
          %v9184 = vunpack.c.h.b16 %v8432
          %v9185 = vunpack.c.l.b16 %v8433
          %v9186 = vunpack.c.h.b16 %v8433
          %v9187 = vunpack.c.l.b16 %v8434
          %v9188 = vunpack.c.h.b16 %v8434
          %v9189 = vunpack.c.l.b16 %v8435
          %v9190 = vunpack.c.h.b16 %v8435
          %v9191 = vunpack.c.l.b16 %v8436
          %v9192 = vunpack.c.h.b16 %v8436
          %v9193 = vunpack.c.l.b16 %v8437
          %v9194 = vunpack.c.h.b16 %v8437
          %v9195 = vunpack.c.l.b16 %v8438
          %v9196 = vunpack.c.h.b16 %v8438
          %v9197 = vunpack.c.l.b16 %v8439
          %v9198 = vunpack.c.h.b16 %v8439
          %v9199 = vunpack.c.l.b16 %v8440
          %v9200 = vunpack.c.h.b16 %v8440
          %v9201 = vunpack.c.l.b16 %v8441
          %v9202 = vunpack.c.h.b16 %v8441
          %v9203 = vunpack.c.l.b16 %v8442
          %v9204 = vunpack.c.h.b16 %v8442
          %v9205 = vunpack.c.l.b16 %v8443
          %v9206 = vunpack.c.h.b16 %v8443
          %v9207 = vunpack.c.l.b16 %v8444
          %v9208 = vunpack.c.h.b16 %v8444
          %v9209 = vunpack.c.l.b16 %v8445
          %v9210 = vunpack.c.h.b16 %v8445
          %v9211 = vunpack.c.l.b16 %v8446
          %v9212 = vunpack.c.h.b16 %v8446
          %v9213 = vunpack.c.l.b16 %v8447
          %v9214 = vunpack.c.h.b16 %v8447
          %v9215 = vunpack.c.l.b16 %v8448
          %v9216 = vunpack.c.h.b16 %v8448
          %v9217 = vunpack.c.l.b16 %v8449
          %v9218 = vunpack.c.h.b16 %v8449
          %v9219 = vunpack.c.l.b16 %v8450
          %v9220 = vunpack.c.h.b16 %v8450
          %v9221 = vunpack.c.l.b16 %v8451
          %v9222 = vunpack.c.h.b16 %v8451
          %v9223 = vunpack.c.l.b16 %v8452
          %v9224 = vunpack.c.h.b16 %v8452
          %v9225 = vunpack.c.l.b16 %v8453
          %v9226 = vunpack.c.h.b16 %v8453
          %v9227 = vunpack.c.l.b16 %v8454
          %v9228 = vunpack.c.h.b16 %v8454
          %v9229 = vunpack.c.l.b16 %v8455
          %v9230 = vunpack.c.h.b16 %v8455
          %v9231 = vunpack.c.l.b16 %v8456
          %v9232 = vunpack.c.h.b16 %v8456
          %v9233 = vunpack.c.l.b16 %v8457
          %v9234 = vunpack.c.h.b16 %v8457
          %v9235 = vunpack.c.l.b16 %v8458
          %v9236 = vunpack.c.h.b16 %v8458
          %v9237 = vunpack.c.l.b16 %v8459
          %v9238 = vunpack.c.h.b16 %v8459
          %v9239 = vunpack.c.l.b16 %v8460
          %v9240 = vunpack.c.h.b16 %v8460
          %v9241 = vunpack.c.l.b16 %v8461
          %v9242 = vunpack.c.h.b16 %v8461
          %v9243 = vunpack.c.l.b16 %v8462
          %v9244 = vunpack.c.h.b16 %v8462
          %v9245 = vunpack.c.l.b16 %v8463
          %v9246 = vunpack.c.h.b16 %v8463
          %v9247 = vunpack.c.l.b16 %v8464
          %v9248 = vunpack.c.h.b16 %v8464
          %v9249 = vunpack.c.l.b16 %v8465
          %v9250 = vunpack.c.h.b16 %v8465
          %v9251 = vunpack.c.l.b16 %v8466
          %v9252 = vunpack.c.h.b16 %v8466
          %v9253 = vunpack.c.l.b16 %v8467
          %v9254 = vunpack.c.h.b16 %v8467
          %v9255 = vunpack.c.l.b16 %v8468
          %v9256 = vunpack.c.h.b16 %v8468
          %v9257 = vunpack.c.l.b16 %v8469
          %v9258 = vunpack.c.h.b16 %v8469
          %v9259 = vunpack.c.l.b16 %v8470
          %v9260 = vunpack.c.h.b16 %v8470
          %v9261 = vpack.c.b16 %v8753, %v8749
          %v9262 = vpack.c.b16 %v8754, %v8750
          %v9263 = vpack.c.b16 %v8755, %v8751
          %v9264 = vpack.c.b16 %v8756, %v8752
          %v9265 = vpack.c.b16 %v8761, %v8757
          %v9266 = vpack.c.b16 %v8762, %v8758
          %v9267 = vpack.c.b16 %v8763, %v8759
          %v9268 = vpack.c.b16 %v8764, %v8760
          %v9269 = vpack.c.b16 %v8769, %v8765
          %v9270 = vpack.c.b16 %v8770, %v8766
          %v9271 = vpack.c.b16 %v8771, %v8767
          %v9272 = vpack.c.b16 %v8772, %v8768
          %v9273 = vpack.c.b16 %v8777, %v8773
          %v9274 = vpack.c.b16 %v8778, %v8774
          %v9275 = vpack.c.b16 %v8779, %v8775
          %v9276 = vpack.c.b16 %v8780, %v8776
          %v9277 = vpack.c.b16 %v8785, %v8781
          %v9278 = vpack.c.b16 %v8786, %v8782
          %v9279 = vpack.c.b16 %v8787, %v8783
          %v9280 = vpack.c.b16 %v8788, %v8784
          %v9281 = vpack.c.b16 %v8793, %v8789
          %v9282 = vpack.c.b16 %v8794, %v8790
          %v9283 = vpack.c.b16 %v8795, %v8791
          %v9284 = vpack.c.b16 %v8796, %v8792
          %v9285 = vpack.c.b16 %v8801, %v8797
          %v9286 = vpack.c.b16 %v8802, %v8798
          %v9287 = vpack.c.b16 %v8803, %v8799
          %v9288 = vpack.c.b16 %v8804, %v8800
          %v9289 = vpack.c.b16 %v8809, %v8805
          %v9290 = vpack.c.b16 %v8810, %v8806
          %v9291 = vpack.c.b16 %v8811, %v8807
          %v9292 = vpack.c.b16 %v8812, %v8808
          %v9293 = vpack.c.b16 %v8817, %v8813
          %v9294 = vpack.c.b16 %v8818, %v8814
          %v9295 = vpack.c.b16 %v8819, %v8815
          %v9296 = vpack.c.b16 %v8820, %v8816
          %v9297 = vpack.c.b16 %v8825, %v8821
          %v9298 = vpack.c.b16 %v8826, %v8822
          %v9299 = vpack.c.b16 %v8827, %v8823
          %v9300 = vpack.c.b16 %v8828, %v8824
          %v9301 = vpack.c.b16 %v8833, %v8829
          %v9302 = vpack.c.b16 %v8834, %v8830
          %v9303 = vpack.c.b16 %v8835, %v8831
          %v9304 = vpack.c.b16 %v8836, %v8832
          %v9305 = vpack.c.b16 %v8841, %v8837
          %v9306 = vpack.c.b16 %v8842, %v8838
          %v9307 = vpack.c.b16 %v8843, %v8839
          %v9308 = vpack.c.b16 %v8844, %v8840
          %v9309 = vpack.c.b16 %v8849, %v8845
          %v9310 = vpack.c.b16 %v8850, %v8846
          %v9311 = vpack.c.b16 %v8851, %v8847
          %v9312 = vpack.c.b16 %v8852, %v8848
          %v9313 = vpack.c.b16 %v8857, %v8853
          %v9314 = vpack.c.b16 %v8858, %v8854
          %v9315 = vpack.c.b16 %v8859, %v8855
          %v9316 = vpack.c.b16 %v8860, %v8856
          %v9317 = vpack.c.b16 %v8865, %v8861
          %v9318 = vpack.c.b16 %v8866, %v8862
          %v9319 = vpack.c.b16 %v8867, %v8863
          %v9320 = vpack.c.b16 %v8868, %v8864
          %v9321 = vpack.c.b16 %v8873, %v8869
          %v9322 = vpack.c.b16 %v8874, %v8870
          %v9323 = vpack.c.b16 %v8875, %v8871
          %v9324 = vpack.c.b16 %v8876, %v8872
          %v9325 = vpack.c.b16 %v8881, %v8877
          %v9326 = vpack.c.b16 %v8882, %v8878
          %v9327 = vpack.c.b16 %v8883, %v8879
          %v9328 = vpack.c.b16 %v8884, %v8880
          %v9329 = vpack.c.b16 %v8889, %v8885
          %v9330 = vpack.c.b16 %v8890, %v8886
          %v9331 = vpack.c.b16 %v8891, %v8887
          %v9332 = vpack.c.b16 %v8892, %v8888
          %v9333 = vpack.c.b16 %v8897, %v8893
          %v9334 = vpack.c.b16 %v8898, %v8894
          %v9335 = vpack.c.b16 %v8899, %v8895
          %v9336 = vpack.c.b16 %v8900, %v8896
          %v9337 = vpack.c.b16 %v8905, %v8901
          %v9338 = vpack.c.b16 %v8906, %v8902
          %v9339 = vpack.c.b16 %v8907, %v8903
          %v9340 = vpack.c.b16 %v8908, %v8904
          %v9341 = vpack.c.b16 %v8913, %v8909
          %v9342 = vpack.c.b16 %v8914, %v8910
          %v9343 = vpack.c.b16 %v8915, %v8911
          %v9344 = vpack.c.b16 %v8916, %v8912
          %v9345 = vpack.c.b16 %v8921, %v8917
          %v9346 = vpack.c.b16 %v8922, %v8918
          %v9347 = vpack.c.b16 %v8923, %v8919
          %v9348 = vpack.c.b16 %v8924, %v8920
          %v9349 = vpack.c.b16 %v8929, %v8925
          %v9350 = vpack.c.b16 %v8930, %v8926
          %v9351 = vpack.c.b16 %v8931, %v8927
          %v9352 = vpack.c.b16 %v8932, %v8928
          %v9353 = vpack.c.b16 %v8937, %v8933
          %v9354 = vpack.c.b16 %v8938, %v8934
          %v9355 = vpack.c.b16 %v8939, %v8935
          %v9356 = vpack.c.b16 %v8940, %v8936
          %v9357 = vpack.c.b16 %v8945, %v8941
          %v9358 = vpack.c.b16 %v8946, %v8942
          %v9359 = vpack.c.b16 %v8947, %v8943
          %v9360 = vpack.c.b16 %v8948, %v8944
          %v9361 = vpack.c.b16 %v8953, %v8949
          %v9362 = vpack.c.b16 %v8954, %v8950
          %v9363 = vpack.c.b16 %v8955, %v8951
          %v9364 = vpack.c.b16 %v8956, %v8952
          %v9365 = vpack.c.b16 %v8961, %v8957
          %v9366 = vpack.c.b16 %v8962, %v8958
          %v9367 = vpack.c.b16 %v8963, %v8959
          %v9368 = vpack.c.b16 %v8964, %v8960
          %v9369 = vpack.c.b16 %v8969, %v8965
          %v9370 = vpack.c.b16 %v8970, %v8966
          %v9371 = vpack.c.b16 %v8971, %v8967
          %v9372 = vpack.c.b16 %v8972, %v8968
          %v9373 = vpack.c.b16 %v8977, %v8973
          %v9374 = vpack.c.b16 %v8978, %v8974
          %v9375 = vpack.c.b16 %v8979, %v8975
          %v9376 = vpack.c.b16 %v8980, %v8976
          %v9377 = vpack.c.b16 %v8985, %v8981
          %v9378 = vpack.c.b16 %v8986, %v8982
          %v9379 = vpack.c.b16 %v8987, %v8983
          %v9380 = vpack.c.b16 %v8988, %v8984
          %v9381 = vpack.c.b16 %v8993, %v8989
          %v9382 = vpack.c.b16 %v8994, %v8990
          %v9383 = vpack.c.b16 %v8995, %v8991
          %v9384 = vpack.c.b16 %v8996, %v8992
          %v9385 = vpack.c.b16 %v9001, %v8997
          %v9386 = vpack.c.b16 %v9002, %v8998
          %v9387 = vpack.c.b16 %v9003, %v8999
          %v9388 = vpack.c.b16 %v9004, %v9000
          %v9389 = vpack.c.b16 %v9009, %v9005
          %v9390 = vpack.c.b16 %v9010, %v9006
          %v9391 = vpack.c.b16 %v9011, %v9007
          %v9392 = vpack.c.b16 %v9012, %v9008
          %v9393 = vpack.c.b16 %v9017, %v9013
          %v9394 = vpack.c.b16 %v9018, %v9014
          %v9395 = vpack.c.b16 %v9019, %v9015
          %v9396 = vpack.c.b16 %v9020, %v9016
          %v9397 = vpack.c.b16 %v9025, %v9021
          %v9398 = vpack.c.b16 %v9026, %v9022
          %v9399 = vpack.c.b16 %v9027, %v9023
          %v9400 = vpack.c.b16 %v9028, %v9024
          %v9401 = vpack.c.b16 %v9033, %v9029
          %v9402 = vpack.c.b16 %v9034, %v9030
          %v9403 = vpack.c.b16 %v9035, %v9031
          %v9404 = vpack.c.b16 %v9036, %v9032
          %v9405 = vpack.c.b16 %v9041, %v9037
          %v9406 = vpack.c.b16 %v9042, %v9038
          %v9407 = vpack.c.b16 %v9043, %v9039
          %v9408 = vpack.c.b16 %v9044, %v9040
          %v9409 = vpack.c.b16 %v9049, %v9045
          %v9410 = vpack.c.b16 %v9050, %v9046
          %v9411 = vpack.c.b16 %v9051, %v9047
          %v9412 = vpack.c.b16 %v9052, %v9048
          %v9413 = vpack.c.b16 %v9057, %v9053
          %v9414 = vpack.c.b16 %v9058, %v9054
          %v9415 = vpack.c.b16 %v9059, %v9055
          %v9416 = vpack.c.b16 %v9060, %v9056
          %v9417 = vpack.c.b16 %v9065, %v9061
          %v9418 = vpack.c.b16 %v9066, %v9062
          %v9419 = vpack.c.b16 %v9067, %v9063
          %v9420 = vpack.c.b16 %v9068, %v9064
          %v9421 = vpack.c.b16 %v9073, %v9069
          %v9422 = vpack.c.b16 %v9074, %v9070
          %v9423 = vpack.c.b16 %v9075, %v9071
          %v9424 = vpack.c.b16 %v9076, %v9072
          %v9425 = vpack.c.b16 %v9081, %v9077
          %v9426 = vpack.c.b16 %v9082, %v9078
          %v9427 = vpack.c.b16 %v9083, %v9079
          %v9428 = vpack.c.b16 %v9084, %v9080
          %v9429 = vpack.c.b16 %v9089, %v9085
          %v9430 = vpack.c.b16 %v9090, %v9086
          %v9431 = vpack.c.b16 %v9091, %v9087
          %v9432 = vpack.c.b16 %v9092, %v9088
          %v9433 = vpack.c.b16 %v9097, %v9093
          %v9434 = vpack.c.b16 %v9098, %v9094
          %v9435 = vpack.c.b16 %v9099, %v9095
          %v9436 = vpack.c.b16 %v9100, %v9096
          %v9437 = vpack.c.b16 %v9105, %v9101
          %v9438 = vpack.c.b16 %v9106, %v9102
          %v9439 = vpack.c.b16 %v9107, %v9103
          %v9440 = vpack.c.b16 %v9108, %v9104
          %v9441 = vpack.c.b16 %v9113, %v9109
          %v9442 = vpack.c.b16 %v9114, %v9110
          %v9443 = vpack.c.b16 %v9115, %v9111
          %v9444 = vpack.c.b16 %v9116, %v9112
          %v9445 = vpack.c.b16 %v9121, %v9117
          %v9446 = vpack.c.b16 %v9122, %v9118
          %v9447 = vpack.c.b16 %v9123, %v9119
          %v9448 = vpack.c.b16 %v9124, %v9120
          %v9449 = vpack.c.b16 %v9129, %v9125
          %v9450 = vpack.c.b16 %v9130, %v9126
          %v9451 = vpack.c.b16 %v9131, %v9127
          %v9452 = vpack.c.b16 %v9132, %v9128
          %v9453 = vpack.c.b16 %v9137, %v9133
          %v9454 = vpack.c.b16 %v9138, %v9134
          %v9455 = vpack.c.b16 %v9139, %v9135
          %v9456 = vpack.c.b16 %v9140, %v9136
          %v9457 = vpack.c.b16 %v9145, %v9141
          %v9458 = vpack.c.b16 %v9146, %v9142
          %v9459 = vpack.c.b16 %v9147, %v9143
          %v9460 = vpack.c.b16 %v9148, %v9144
          %v9461 = vpack.c.b16 %v9153, %v9149
          %v9462 = vpack.c.b16 %v9154, %v9150
          %v9463 = vpack.c.b16 %v9155, %v9151
          %v9464 = vpack.c.b16 %v9156, %v9152
          %v9465 = vpack.c.b16 %v9161, %v9157
          %v9466 = vpack.c.b16 %v9162, %v9158
          %v9467 = vpack.c.b16 %v9163, %v9159
          %v9468 = vpack.c.b16 %v9164, %v9160
          %v9469 = vpack.c.b16 %v9169, %v9165
          %v9470 = vpack.c.b16 %v9170, %v9166
          %v9471 = vpack.c.b16 %v9171, %v9167
          %v9472 = vpack.c.b16 %v9172, %v9168
          %v9473 = vpack.c.b16 %v9177, %v9173
          %v9474 = vpack.c.b16 %v9178, %v9174
          %v9475 = vpack.c.b16 %v9179, %v9175
          %v9476 = vpack.c.b16 %v9180, %v9176
          %v9477 = vpack.c.b16 %v9185, %v9181
          %v9478 = vpack.c.b16 %v9186, %v9182
          %v9479 = vpack.c.b16 %v9187, %v9183
          %v9480 = vpack.c.b16 %v9188, %v9184
          %v9481 = vpack.c.b16 %v9193, %v9189
          %v9482 = vpack.c.b16 %v9194, %v9190
          %v9483 = vpack.c.b16 %v9195, %v9191
          %v9484 = vpack.c.b16 %v9196, %v9192
          %v9485 = vpack.c.b16 %v9201, %v9197
          %v9486 = vpack.c.b16 %v9202, %v9198
          %v9487 = vpack.c.b16 %v9203, %v9199
          %v9488 = vpack.c.b16 %v9204, %v9200
          %v9489 = vpack.c.b16 %v9209, %v9205
          %v9490 = vpack.c.b16 %v9210, %v9206
          %v9491 = vpack.c.b16 %v9211, %v9207
          %v9492 = vpack.c.b16 %v9212, %v9208
          %v9493 = vpack.c.b16 %v9217, %v9213
          %v9494 = vpack.c.b16 %v9218, %v9214
          %v9495 = vpack.c.b16 %v9219, %v9215
          %v9496 = vpack.c.b16 %v9220, %v9216
          %v9497 = vpack.c.b16 %v9225, %v9221
          %v9498 = vpack.c.b16 %v9226, %v9222
          %v9499 = vpack.c.b16 %v9227, %v9223
          %v9500 = vpack.c.b16 %v9228, %v9224
          %v9501 = vpack.c.b16 %v9233, %v9229
          %v9502 = vpack.c.b16 %v9234, %v9230
          %v9503 = vpack.c.b16 %v9235, %v9231
          %v9504 = vpack.c.b16 %v9236, %v9232
          %v9505 = vpack.c.b16 %v9241, %v9237
          %v9506 = vpack.c.b16 %v9242, %v9238
          %v9507 = vpack.c.b16 %v9243, %v9239
          %v9508 = vpack.c.b16 %v9244, %v9240
          %v9509 = vpack.c.b16 %v9249, %v9245
          %v9510 = vpack.c.b16 %v9250, %v9246
          %v9511 = vpack.c.b16 %v9251, %v9247
          %v9512 = vpack.c.b16 %v9252, %v9248
          %v9513 = vpack.c.b16 %v9257, %v9253
          %v9514 = vpack.c.b16 %v9258, %v9254
          %v9515 = vpack.c.b16 %v9259, %v9255
          %v9516 = vpack.c.b16 %v9260, %v9256
          %9773 = vmatprep.subr.bf16.mxu0 %v9262
          %9774 = vmatpush1.bf16.msra.mxu0 %v9261
          %9775 = vmatprep.subr.bf16.mxu0 %v9266
          %9776 = vmatpush1.bf16.msra.mxu0 %v9265
          %9777 = vmatprep.subr.bf16.mxu0 %v9270
          %9778 = vmatpush1.bf16.msra.mxu0 %v9269
          %9779 = vmatprep.subr.bf16.mxu0 %v9274
          %9780 = vmatpush1.bf16.msra.mxu0 %v9273
          %9781 = vmatprep.subr.bf16.mxu0 %v9278
          %9782 = vmatpush1.bf16.msra.mxu0 %v9277
          %9783 = vmatprep.subr.bf16.mxu0 %v9282
          %9784 = vmatpush1.bf16.msra.mxu0 %v9281
          %9785 = vmatprep.subr.bf16.mxu0 %v9286
          %9786 = vmatpush1.bf16.msra.mxu0 %v9285
          %9787 = vmatprep.subr.bf16.mxu0 %v9290
          %9788 = vmatpush1.bf16.msra.mxu0 %v9289
          %9789 = vmatprep.subr.bf16.mxu0 %v9294
          %9790 = vmatpush1.bf16.msra.mxu0 %v9293
          %9791 = vmatprep.subr.bf16.mxu0 %v9298
          %9792 = vmatpush1.bf16.msra.mxu0 %v9297
          %9793 = vmatprep.subr.bf16.mxu0 %v9302
          %9794 = vmatpush1.bf16.msra.mxu0 %v9301
          %9795 = vmatprep.subr.bf16.mxu0 %v9306
          %9796 = vmatpush1.bf16.msra.mxu0 %v9305
          %9797 = vmatprep.subr.bf16.mxu0 %v9310
          %9798 = vmatpush1.bf16.msra.mxu0 %v9309
          %9799 = vmatprep.subr.bf16.mxu0 %v9314
          %9800 = vmatpush1.bf16.msra.mxu0 %v9313
          %9801 = vmatprep.subr.bf16.mxu0 %v9318
          %9802 = vmatpush1.bf16.msra.mxu0 %v9317
          %9803 = vmatprep.subr.bf16.mxu0 %v9322
          %9804 = vmatpush1.bf16.msra.mxu0 %v9321
          %9805 = vmatprep.mubr.bf16.mxu0 %v8208
          %9806 = vmatmul.mubr.bf16.gmra.mrb[0].mxu0 %v8207
          %v9807 = vpop.f32.mrb[0].mxu0
          %v9808 = vadd.f32 %v8476, %v9807
          %v9809 = vpop.f32.mrb[0].mxu0
          %v9810 = vadd.f32 %v8480, %v9809
          %v9811 = vpop.f32.mrb[0].mxu0
          %v9812 = vpop.f32.mrb[0].mxu0
          %9813 = vdwg.mxu0
          %9814 = vmatprep.subr.bf16.mxu0 %v9326
          %9815 = vmatpush1.bf16.msra.mxu0 %v9325
          %9816 = vmatprep.subr.bf16.mxu0 %v9330
          %9817 = vmatpush1.bf16.msra.mxu0 %v9329
          %9818 = vmatprep.subr.bf16.mxu0 %v9334
          %9819 = vmatpush1.bf16.msra.mxu0 %v9333
          %9820 = vmatprep.subr.bf16.mxu0 %v9338
          %9821 = vmatpush1.bf16.msra.mxu0 %v9337
          %9822 = vmatprep.subr.bf16.mxu0 %v9342
          %9823 = vmatpush1.bf16.msra.mxu0 %v9341
          %9824 = vmatprep.subr.bf16.mxu0 %v9346
          %9825 = vmatpush1.bf16.msra.mxu0 %v9345
          %9826 = vmatprep.subr.bf16.mxu0 %v9350
          %9827 = vmatpush1.bf16.msra.mxu0 %v9349
          %9828 = vmatprep.subr.bf16.mxu0 %v9354
          %9829 = vmatpush1.bf16.msra.mxu0 %v9353
          %9830 = vmatprep.subr.bf16.mxu0 %v9358
          %9831 = vmatpush1.bf16.msra.mxu0 %v9357
          %9832 = vmatprep.subr.bf16.mxu0 %v9362
          %9833 = vmatpush1.bf16.msra.mxu0 %v9361
          %9834 = vmatprep.subr.bf16.mxu0 %v9366
          %9835 = vmatpush1.bf16.msra.mxu0 %v9365
          %9836 = vmatprep.subr.bf16.mxu0 %v9370
          %9837 = vmatpush1.bf16.msra.mxu0 %v9369
          %9838 = vmatprep.subr.bf16.mxu0 %v9374
          %9839 = vmatpush1.bf16.msra.mxu0 %v9373
          %9840 = vmatprep.subr.bf16.mxu0 %v9378
          %9841 = vmatpush1.bf16.msra.mxu0 %v9377
          %9842 = vmatprep.subr.bf16.mxu0 %v9382
          %9843 = vmatpush1.bf16.msra.mxu0 %v9381
          %9844 = vmatprep.subr.bf16.mxu0 %v9386
          %9845 = vmatpush1.bf16.msra.mxu0 %v9385
          %9846 = vmatprep.mubr.bf16.mxu0 %v8210
          %9847 = vmatmul.mubr.bf16.gmra.mrb[0].mxu0 %v8209
          %v9848 = vpop.f32.mrb[0].mxu0
          %v9849 = vadd.f32 %v9808, %v9848
          %v9850 = vpop.f32.mrb[0].mxu0
          %v9851 = vadd.f32 %v9810, %v9850
          %v9852 = vpop.f32.mrb[0].mxu0
          %v9853 = vpop.f32.mrb[0].mxu0
          %9854 = vdwg.mxu0
          %9855 = vmatprep.subr.bf16.mxu0 %v9390
          %9856 = vmatpush1.bf16.msra.mxu0 %v9389
          %9857 = vmatprep.subr.bf16.mxu0 %v9394
          %9858 = vmatpush1.bf16.msra.mxu0 %v9393
          %9859 = vmatprep.subr.bf16.mxu0 %v9398
          %9860 = vmatpush1.bf16.msra.mxu0 %v9397
          %9861 = vmatprep.subr.bf16.mxu0 %v9402
          %9862 = vmatpush1.bf16.msra.mxu0 %v9401
          %9863 = vmatprep.subr.bf16.mxu0 %v9406
          %9864 = vmatpush1.bf16.msra.mxu0 %v9405
          %9865 = vmatprep.subr.bf16.mxu0 %v9410
          %9866 = vmatpush1.bf16.msra.mxu0 %v9409
          %9867 = vmatprep.subr.bf16.mxu0 %v9414
          %9868 = vmatpush1.bf16.msra.mxu0 %v9413
          %9869 = vmatprep.subr.bf16.mxu0 %v9418
          %9870 = vmatpush1.bf16.msra.mxu0 %v9417
          %9871 = vmatprep.subr.bf16.mxu0 %v9422
          %9872 = vmatpush1.bf16.msra.mxu0 %v9421
          %9873 = vmatprep.subr.bf16.mxu0 %v9426
          %9874 = vmatpush1.bf16.msra.mxu0 %v9425
          %9875 = vmatprep.subr.bf16.mxu0 %v9430
          %9876 = vmatpush1.bf16.msra.mxu0 %v9429
          %9877 = vmatprep.subr.bf16.mxu0 %v9434
          %9878 = vmatpush1.bf16.msra.mxu0 %v9433
          %9879 = vmatprep.subr.bf16.mxu0 %v9438
          %9880 = vmatpush1.bf16.msra.mxu0 %v9437
          %9881 = vmatprep.subr.bf16.mxu0 %v9442
          %9882 = vmatpush1.bf16.msra.mxu0 %v9441
          %9883 = vmatprep.subr.bf16.mxu0 %v9446
          %9884 = vmatpush1.bf16.msra.mxu0 %v9445
          %9885 = vmatprep.subr.bf16.mxu0 %v9450
          %9886 = vmatpush1.bf16.msra.mxu0 %v9449
          %9887 = vmatprep.mubr.bf16.mxu0 %v8212
          %9888 = vmatmul.mubr.bf16.gmra.mrb[0].mxu0 %v8211
          %v9889 = vpop.f32.mrb[0].mxu0
          %v9890 = vadd.f32 %v9849, %v9889
          %v9891 = vpop.f32.mrb[0].mxu0
          %v9892 = vadd.f32 %v9851, %v9891
          %v9893 = vpop.f32.mrb[0].mxu0
          %v9894 = vpop.f32.mrb[0].mxu0
          %9895 = vdwg.mxu0
          %9896 = vmatprep.subr.bf16.mxu0 %v9454
          %9897 = vmatpush1.bf16.msra.mxu0 %v9453
          %9898 = vmatprep.subr.bf16.mxu0 %v9458
          %9899 = vmatpush1.bf16.msra.mxu0 %v9457
          %9900 = vmatprep.subr.bf16.mxu0 %v9462
          %9901 = vmatpush1.bf16.msra.mxu0 %v9461
          %9902 = vmatprep.subr.bf16.mxu0 %v9466
          %9903 = vmatpush1.bf16.msra.mxu0 %v9465
          %9904 = vmatprep.subr.bf16.mxu0 %v9470
          %9905 = vmatpush1.bf16.msra.mxu0 %v9469
          %9906 = vmatprep.subr.bf16.mxu0 %v9474
          %9907 = vmatpush1.bf16.msra.mxu0 %v9473
          %9908 = vmatprep.subr.bf16.mxu0 %v9478
          %9909 = vmatpush1.bf16.msra.mxu0 %v9477
          %9910 = vmatprep.subr.bf16.mxu0 %v9482
          %9911 = vmatpush1.bf16.msra.mxu0 %v9481
          %9912 = vmatprep.subr.bf16.mxu0 %v9486
          %9913 = vmatpush1.bf16.msra.mxu0 %v9485
          %9914 = vmatprep.subr.bf16.mxu0 %v9490
          %9915 = vmatpush1.bf16.msra.mxu0 %v9489
          %9916 = vmatprep.subr.bf16.mxu0 %v9494
          %9917 = vmatpush1.bf16.msra.mxu0 %v9493
          %9918 = vmatprep.subr.bf16.mxu0 %v9498
          %9919 = vmatpush1.bf16.msra.mxu0 %v9497
          %9920 = vmatprep.subr.bf16.mxu0 %v9502
          %9921 = vmatpush1.bf16.msra.mxu0 %v9501
          %9922 = vmatprep.subr.bf16.mxu0 %v9506
          %9923 = vmatpush1.bf16.msra.mxu0 %v9505
          %9924 = vmatprep.subr.bf16.mxu0 %v9510
          %9925 = vmatpush1.bf16.msra.mxu0 %v9509
          %9926 = vmatprep.subr.bf16.mxu0 %v9514
          %9927 = vmatpush1.bf16.msra.mxu0 %v9513
          %9928 = vmatprep.mubr.bf16.mxu0 %v8214
          %9929 = vmatmul.mubr.bf16.gmra.mrb[0].mxu0 %v8213
          %v9930 = vpop.f32.mrb[0].mxu0
          %v9931 = vadd.f32 %v9890, %v9930
          %v9932 = vpop.f32.mrb[0].mxu0
          %v9933 = vadd.f32 %v9892, %v9932
          %v9934 = vpop.f32.mrb[0].mxu0
          %v9935 = vpop.f32.mrb[0].mxu0
          %9936 = vdwg.mxu0
          %9937 = vmatprep.subr.bf16.mxu0 %v9264
          %9938 = vmatpush1.bf16.msra.mxu0 %v9263
          %9939 = vmatprep.subr.bf16.mxu0 %v9268
          %9940 = vmatpush1.bf16.msra.mxu0 %v9267
          %9941 = vmatprep.subr.bf16.mxu0 %v9272
          %9942 = vmatpush1.bf16.msra.mxu0 %v9271
          %9943 = vmatprep.subr.bf16.mxu0 %v9276
          %9944 = vmatpush1.bf16.msra.mxu0 %v9275
          %9945 = vmatprep.subr.bf16.mxu0 %v9280
          %9946 = vmatpush1.bf16.msra.mxu0 %v9279
          %9947 = vmatprep.subr.bf16.mxu0 %v9284
          %9948 = vmatpush1.bf16.msra.mxu0 %v9283
          %9949 = vmatprep.subr.bf16.mxu0 %v9288
          %9950 = vmatpush1.bf16.msra.mxu0 %v9287
          %9951 = vmatprep.subr.bf16.mxu0 %v9292
          %9952 = vmatpush1.bf16.msra.mxu0 %v9291
          %9953 = vmatprep.subr.bf16.mxu0 %v9296
          %9954 = vmatpush1.bf16.msra.mxu0 %v9295
          %9955 = vmatprep.subr.bf16.mxu0 %v9300
          %9956 = vmatpush1.bf16.msra.mxu0 %v9299
          %9957 = vmatprep.subr.bf16.mxu0 %v9304
          %9958 = vmatpush1.bf16.msra.mxu0 %v9303
          %9959 = vmatprep.subr.bf16.mxu0 %v9308
          %9960 = vmatpush1.bf16.msra.mxu0 %v9307
          %9961 = vmatprep.subr.bf16.mxu0 %v9312
          %9962 = vmatpush1.bf16.msra.mxu0 %v9311
          %9963 = vmatprep.subr.bf16.mxu0 %v9316
          %9964 = vmatpush1.bf16.msra.mxu0 %v9315
          %9965 = vmatprep.subr.bf16.mxu0 %v9320
          %9966 = vmatpush1.bf16.msra.mxu0 %v9319
          %9967 = vmatprep.subr.bf16.mxu0 %v9324
          %9968 = vmatpush1.bf16.msra.mxu0 %v9323
          %9969 = vmatprep.mubr.bf16.mxu0 %v8208
          %9970 = vmatmul.mubr.bf16.gmra.mrb[0].mxu0 %v8207
          %v9971 = vpop.f32.mrb[0].mxu0
          %v9972 = vadd.f32 %v8484, %v9971
          %v9973 = vpop.f32.mrb[0].mxu0
          %v9974 = vadd.f32 %v8488, %v9973
          %v9975 = vpop.f32.mrb[0].mxu0
          %v9976 = vpop.f32.mrb[0].mxu0
          %9977 = vdwg.mxu0
          %9978 = vmatprep.subr.bf16.mxu0 %v9328
          %9979 = vmatpush1.bf16.msra.mxu0 %v9327
          %9980 = vmatprep.subr.bf16.mxu0 %v9332
          %9981 = vmatpush1.bf16.msra.mxu0 %v9331
          %9982 = vmatprep.subr.bf16.mxu0 %v9336
          %9983 = vmatpush1.bf16.msra.mxu0 %v9335
          %9984 = vmatprep.subr.bf16.mxu0 %v9340
          %9985 = vmatpush1.bf16.msra.mxu0 %v9339
          %9986 = vmatprep.subr.bf16.mxu0 %v9344
          %9987 = vmatpush1.bf16.msra.mxu0 %v9343
          %9988 = vmatprep.subr.bf16.mxu0 %v9348
          %9989 = vmatpush1.bf16.msra.mxu0 %v9347
          %9990 = vmatprep.subr.bf16.mxu0 %v9352
          %9991 = vmatpush1.bf16.msra.mxu0 %v9351
          %9992 = vmatprep.subr.bf16.mxu0 %v9356
          %9993 = vmatpush1.bf16.msra.mxu0 %v9355
          %9994 = vmatprep.subr.bf16.mxu0 %v9360
          %9995 = vmatpush1.bf16.msra.mxu0 %v9359
          %9996 = vmatprep.subr.bf16.mxu0 %v9364
          %9997 = vmatpush1.bf16.msra.mxu0 %v9363
          %9998 = vmatprep.subr.bf16.mxu0 %v9368
          %9999 = vmatpush1.bf16.msra.mxu0 %v9367
          %10000 = vmatprep.subr.bf16.mxu0 %v9372
          %10001 = vmatpush1.bf16.msra.mxu0 %v9371
          %10002 = vmatprep.subr.bf16.mxu0 %v9376
          %10003 = vmatpush1.bf16.msra.mxu0 %v9375
          %10004 = vmatprep.subr.bf16.mxu0 %v9380
          %10005 = vmatpush1.bf16.msra.mxu0 %v9379
          %10006 = vmatprep.subr.bf16.mxu0 %v9384
          %10007 = vmatpush1.bf16.msra.mxu0 %v9383
          %10008 = vmatprep.subr.bf16.mxu0 %v9388
          %10009 = vmatpush1.bf16.msra.mxu0 %v9387
          %10010 = vmatprep.mubr.bf16.mxu0 %v8210
          %10011 = vmatmul.mubr.bf16.gmra.mrb[0].mxu0 %v8209
          %v10012 = vpop.f32.mrb[0].mxu0
          %v10013 = vadd.f32 %v9972, %v10012
          %v10014 = vpop.f32.mrb[0].mxu0
          %v10015 = vadd.f32 %v9974, %v10014
          %v10016 = vpop.f32.mrb[0].mxu0
          %v10017 = vpop.f32.mrb[0].mxu0
          %10018 = vdwg.mxu0
          %10019 = vmatprep.subr.bf16.mxu0 %v9392
          %10020 = vmatpush1.bf16.msra.mxu0 %v9391
          %10021 = vmatprep.subr.bf16.mxu0 %v9396
          %10022 = vmatpush1.bf16.msra.mxu0 %v9395
          %10023 = vmatprep.subr.bf16.mxu0 %v9400
          %10024 = vmatpush1.bf16.msra.mxu0 %v9399
          %10025 = vmatprep.subr.bf16.mxu0 %v9404
          %10026 = vmatpush1.bf16.msra.mxu0 %v9403
          %10027 = vmatprep.subr.bf16.mxu0 %v9408
          %10028 = vmatpush1.bf16.msra.mxu0 %v9407
          %10029 = vmatprep.subr.bf16.mxu0 %v9412
          %10030 = vmatpush1.bf16.msra.mxu0 %v9411
          %10031 = vmatprep.subr.bf16.mxu0 %v9416
          %10032 = vmatpush1.bf16.msra.mxu0 %v9415
          %10033 = vmatprep.subr.bf16.mxu0 %v9420
          %10034 = vmatpush1.bf16.msra.mxu0 %v9419
          %10035 = vmatprep.subr.bf16.mxu0 %v9424
          %10036 = vmatpush1.bf16.msra.mxu0 %v9423
          %10037 = vmatprep.subr.bf16.mxu0 %v9428
          %10038 = vmatpush1.bf16.msra.mxu0 %v9427
          %10039 = vmatprep.subr.bf16.mxu0 %v9432
          %10040 = vmatpush1.bf16.msra.mxu0 %v9431
          %10041 = vmatprep.subr.bf16.mxu0 %v9436
          %10042 = vmatpush1.bf16.msra.mxu0 %v9435
          %10043 = vmatprep.subr.bf16.mxu0 %v9440
          %10044 = vmatpush1.bf16.msra.mxu0 %v9439
          %10045 = vmatprep.subr.bf16.mxu0 %v9444
          %10046 = vmatpush1.bf16.msra.mxu0 %v9443
          %10047 = vmatprep.subr.bf16.mxu0 %v9448
          %10048 = vmatpush1.bf16.msra.mxu0 %v9447
          %10049 = vmatprep.subr.bf16.mxu0 %v9452
          %10050 = vmatpush1.bf16.msra.mxu0 %v9451
          %10051 = vmatprep.mubr.bf16.mxu0 %v8212
          %10052 = vmatmul.mubr.bf16.gmra.mrb[0].mxu0 %v8211
          %v10053 = vpop.f32.mrb[0].mxu0
          %v10054 = vadd.f32 %v10013, %v10053
          %v10055 = vpop.f32.mrb[0].mxu0
          %v10056 = vadd.f32 %v10015, %v10055
          %v10057 = vpop.f32.mrb[0].mxu0
          %v10058 = vpop.f32.mrb[0].mxu0
          %10059 = vdwg.mxu0
          %10060 = vmatprep.subr.bf16.mxu0 %v9456
          %10061 = vmatpush1.bf16.msra.mxu0 %v9455
          %10062 = vmatprep.subr.bf16.mxu0 %v9460
          %10063 = vmatpush1.bf16.msra.mxu0 %v9459
          %10064 = vmatprep.subr.bf16.mxu0 %v9464
          %10065 = vmatpush1.bf16.msra.mxu0 %v9463
          %10066 = vmatprep.subr.bf16.mxu0 %v9468
          %10067 = vmatpush1.bf16.msra.mxu0 %v9467
          %10068 = vmatprep.subr.bf16.mxu0 %v9472
          %10069 = vmatpush1.bf16.msra.mxu0 %v9471
          %10070 = vmatprep.subr.bf16.mxu0 %v9476
          %10071 = vmatpush1.bf16.msra.mxu0 %v9475
          %10072 = vmatprep.subr.bf16.mxu0 %v9480
          %10073 = vmatpush1.bf16.msra.mxu0 %v9479
          %10074 = vmatprep.subr.bf16.mxu0 %v9484
          %10075 = vmatpush1.bf16.msra.mxu0 %v9483
          %10076 = vmatprep.subr.bf16.mxu0 %v9488
          %10077 = vmatpush1.bf16.msra.mxu0 %v9487
          %10078 = vmatprep.subr.bf16.mxu0 %v9492
          %10079 = vmatpush1.bf16.msra.mxu0 %v9491
          %10080 = vmatprep.subr.bf16.mxu0 %v9496
          %10081 = vmatpush1.bf16.msra.mxu0 %v9495
          %10082 = vmatprep.subr.bf16.mxu0 %v9500
          %10083 = vmatpush1.bf16.msra.mxu0 %v9499
          %10084 = vmatprep.subr.bf16.mxu0 %v9504
          %10085 = vmatpush1.bf16.msra.mxu0 %v9503
          %10086 = vmatprep.subr.bf16.mxu0 %v9508
          %10087 = vmatpush1.bf16.msra.mxu0 %v9507
          %10088 = vmatprep.subr.bf16.mxu0 %v9512
          %10089 = vmatpush1.bf16.msra.mxu0 %v9511
          %10090 = vmatprep.subr.bf16.mxu0 %v9516
          %10091 = vmatpush1.bf16.msra.mxu0 %v9515
          %10092 = vmatprep.mubr.bf16.mxu0 %v8214
          %10093 = vmatmul.mubr.bf16.gmra.mrb[0].mxu0 %v8213
          %v10094 = vpop.f32.mrb[0].mxu0
          %v10095 = vadd.f32 %v10054, %v10094
          %v10096 = vpop.f32.mrb[0].mxu0
          %v10097 = vadd.f32 %v10056, %v10096
          %v10098 = vpop.f32.mrb[0].mxu0
          %v10099 = vpop.f32.mrb[0].mxu0
          %10100 = vdwg.mxu0
          %v10101 = vmax.f32 %v9931, 0.0
          %v10102 = vmax.f32 %v9933, 0.0
          %v10103 = vmax.f32 %v10095, 0.0
          %v10104 = vmax.f32 %v10097, 0.0
          %v10105 = vpack.c.bf16 %v10101, %v10101
          %v10106 = vpack.c.bf16 %v10102, %v10102
          %v10107 = vpack.c.bf16 %v10103, %v10103
          %v10108 = vpack.c.bf16 %v10104, %v10104
          %v10109 = vld [vmem:[#allocation11] sm:$0xff]
          %v10110 = vld [vmem:[#allocation11 + $0x8] sm:$0xff]
          %v10111 = vld [vmem:[#allocation11 + $0x10] sm:$0xff]
          %v10112 = vld [vmem:[#allocation11 + $0x18] sm:$0xff]
          %v10113 = vld [vmem:[#allocation11 + $0x20] sm:$0xff]
          %v10114 = vld [vmem:[#allocation11 + $0x28] sm:$0xff]
          %v10115 = vld [vmem:[#allocation11 + $0x30] sm:$0xff]
          %v10116 = vld [vmem:[#allocation11 + $0x38] sm:$0xff]
          %v10117 = vld [vmem:[#allocation11 + $0x40] sm:$0xff]
          %v10118 = vld [vmem:[#allocation11 + $0x48] sm:$0xff]
          %v10119 = vld [vmem:[#allocation11 + $0x50] sm:$0xff]
          %v10120 = vld [vmem:[#allocation11 + $0x58] sm:$0xff]
          %v10121 = vld [vmem:[#allocation11 + $0x60] sm:$0xff]
          %v10122 = vld [vmem:[#allocation11 + $0x68] sm:$0xff]
          %v10123 = vld [vmem:[#allocation11 + $0x70] sm:$0xff]
          %v10124 = vld [vmem:[#allocation11 + $0x78] sm:$0xff]
          %v10125 = vld [vmem:[#allocation11 + $0x80] sm:$0xff]
          %v10126 = vld [vmem:[#allocation11 + $0x88] sm:$0xff]
          %v10127 = vld [vmem:[#allocation11 + $0x90] sm:$0xff]
          %v10128 = vld [vmem:[#allocation11 + $0x98] sm:$0xff]
          %v10129 = vld [vmem:[#allocation11 + $0xa0] sm:$0xff]
          %v10130 = vld [vmem:[#allocation11 + $0xa8] sm:$0xff]
          %v10131 = vld [vmem:[#allocation11 + $0xb0] sm:$0xff]
          %v10132 = vld [vmem:[#allocation11 + $0xb8] sm:$0xff]
          %v10133 = vld [vmem:[#allocation11 + $0xc0] sm:$0xff]
          %v10134 = vld [vmem:[#allocation11 + $0xc8] sm:$0xff]
          %v10135 = vld [vmem:[#allocation11 + $0xd0] sm:$0xff]
          %v10136 = vld [vmem:[#allocation11 + $0xd8] sm:$0xff]
          %v10137 = vld [vmem:[#allocation11 + $0xe0] sm:$0xff]
          %v10138 = vld [vmem:[#allocation11 + $0xe8] sm:$0xff]
          %v10139 = vld [vmem:[#allocation11 + $0xf0] sm:$0xff]
          %v10140 = vld [vmem:[#allocation11 + $0xf8] sm:$0xff]
          %v10141 = vld [vmem:[#allocation11 + $0x100] sm:$0xff]
          %v10142 = vld [vmem:[#allocation11 + $0x108] sm:$0xff]
          %v10143 = vld [vmem:[#allocation11 + $0x110] sm:$0xff]
          %v10144 = vld [vmem:[#allocation11 + $0x118] sm:$0xff]
          %v10145 = vld [vmem:[#allocation11 + $0x120] sm:$0xff]
          %v10146 = vld [vmem:[#allocation11 + $0x128] sm:$0xff]
          %v10147 = vld [vmem:[#allocation11 + $0x130] sm:$0xff]
          %v10148 = vld [vmem:[#allocation11 + $0x138] sm:$0xff]
          %v10149 = vld [vmem:[#allocation11 + $0x140] sm:$0xff]
          %v10150 = vld [vmem:[#allocation11 + $0x148] sm:$0xff]
          %v10151 = vld [vmem:[#allocation11 + $0x150] sm:$0xff]
          %v10152 = vld [vmem:[#allocation11 + $0x158] sm:$0xff]
          %v10153 = vld [vmem:[#allocation11 + $0x160] sm:$0xff]
          %v10154 = vld [vmem:[#allocation11 + $0x168] sm:$0xff]
          %v10155 = vld [vmem:[#allocation11 + $0x170] sm:$0xff]
          %v10156 = vld [vmem:[#allocation11 + $0x178] sm:$0xff]
          %v10157 = vld [vmem:[#allocation11 + $0x180] sm:$0xff]
          %v10158 = vld [vmem:[#allocation11 + $0x188] sm:$0xff]
          %v10159 = vld [vmem:[#allocation11 + $0x190] sm:$0xff]
          %v10160 = vld [vmem:[#allocation11 + $0x198] sm:$0xff]
          %v10161 = vld [vmem:[#allocation11 + $0x1a0] sm:$0xff]
          %v10162 = vld [vmem:[#allocation11 + $0x1a8] sm:$0xff]
          %v10163 = vld [vmem:[#allocation11 + $0x1b0] sm:$0xff]
          %v10164 = vld [vmem:[#allocation11 + $0x1b8] sm:$0xff]
          %v10165 = vld [vmem:[#allocation11 + $0x1c0] sm:$0xff]
          %v10166 = vld [vmem:[#allocation11 + $0x1c8] sm:$0xff]
          %v10167 = vld [vmem:[#allocation11 + $0x1d0] sm:$0xff]
          %v10168 = vld [vmem:[#allocation11 + $0x1d8] sm:$0xff]
          %v10169 = vld [vmem:[#allocation11 + $0x1e0] sm:$0xff]
          %v10170 = vld [vmem:[#allocation11 + $0x1e8] sm:$0xff]
          %v10171 = vld [vmem:[#allocation11 + $0x1f0] sm:$0xff]
          %v10172 = vld [vmem:[#allocation11 + $0x1f8] sm:$0xff]
          %v10173 = vld [vmem:[#allocation12] sm:$0x3]
          %v10175 = vlaneseq
          %v10176 = vshrl.u32 %v10175, 7
          %v10177 = vsub.s32 0, %v10176
          %v10178 = vrot.slane %v10173, %v10177
          %v10179 = vlaneseq
          %v10180 = vshrl.u32 %v10179, 7
          %v10181 = vsub.s32 1, %v10180
          %v10182 = vrot.slane %v10173, %v10181
          %v10249 = vunpack.c.l.b16 %v10109
          %v10250 = vunpack.c.h.b16 %v10109
          %v10251 = vunpack.c.l.b16 %v10110
          %v10252 = vunpack.c.h.b16 %v10110
          %v10253 = vunpack.c.l.b16 %v10111
          %v10254 = vunpack.c.h.b16 %v10111
          %v10255 = vunpack.c.l.b16 %v10112
          %v10256 = vunpack.c.h.b16 %v10112
          %v10257 = vunpack.c.l.b16 %v10113
          %v10258 = vunpack.c.h.b16 %v10113
          %v10259 = vunpack.c.l.b16 %v10114
          %v10260 = vunpack.c.h.b16 %v10114
          %v10261 = vunpack.c.l.b16 %v10115
          %v10262 = vunpack.c.h.b16 %v10115
          %v10263 = vunpack.c.l.b16 %v10116
          %v10264 = vunpack.c.h.b16 %v10116
          %v10265 = vunpack.c.l.b16 %v10117
          %v10266 = vunpack.c.h.b16 %v10117
          %v10267 = vunpack.c.l.b16 %v10118
          %v10268 = vunpack.c.h.b16 %v10118
          %v10269 = vunpack.c.l.b16 %v10119
          %v10270 = vunpack.c.h.b16 %v10119
          %v10271 = vunpack.c.l.b16 %v10120
          %v10272 = vunpack.c.h.b16 %v10120
          %v10273 = vunpack.c.l.b16 %v10121
          %v10274 = vunpack.c.h.b16 %v10121
          %v10275 = vunpack.c.l.b16 %v10122
          %v10276 = vunpack.c.h.b16 %v10122
          %v10277 = vunpack.c.l.b16 %v10123
          %v10278 = vunpack.c.h.b16 %v10123
          %v10279 = vunpack.c.l.b16 %v10124
          %v10280 = vunpack.c.h.b16 %v10124
          %v10281 = vunpack.c.l.b16 %v10125
          %v10282 = vunpack.c.h.b16 %v10125
          %v10283 = vunpack.c.l.b16 %v10126
          %v10284 = vunpack.c.h.b16 %v10126
          %v10285 = vunpack.c.l.b16 %v10127
          %v10286 = vunpack.c.h.b16 %v10127
          %v10287 = vunpack.c.l.b16 %v10128
          %v10288 = vunpack.c.h.b16 %v10128
          %v10289 = vunpack.c.l.b16 %v10129
          %v10290 = vunpack.c.h.b16 %v10129
          %v10291 = vunpack.c.l.b16 %v10130
          %v10292 = vunpack.c.h.b16 %v10130
          %v10293 = vunpack.c.l.b16 %v10131
          %v10294 = vunpack.c.h.b16 %v10131
          %v10295 = vunpack.c.l.b16 %v10132
          %v10296 = vunpack.c.h.b16 %v10132
          %v10297 = vunpack.c.l.b16 %v10133
          %v10298 = vunpack.c.h.b16 %v10133
          %v10299 = vunpack.c.l.b16 %v10134
          %v10300 = vunpack.c.h.b16 %v10134
          %v10301 = vunpack.c.l.b16 %v10135
          %v10302 = vunpack.c.h.b16 %v10135
          %v10303 = vunpack.c.l.b16 %v10136
          %v10304 = vunpack.c.h.b16 %v10136
          %v10305 = vunpack.c.l.b16 %v10137
          %v10306 = vunpack.c.h.b16 %v10137
          %v10307 = vunpack.c.l.b16 %v10138
          %v10308 = vunpack.c.h.b16 %v10138
          %v10309 = vunpack.c.l.b16 %v10139
          %v10310 = vunpack.c.h.b16 %v10139
          %v10311 = vunpack.c.l.b16 %v10140
          %v10312 = vunpack.c.h.b16 %v10140
          %v10313 = vunpack.c.l.b16 %v10141
          %v10314 = vunpack.c.h.b16 %v10141
          %v10315 = vunpack.c.l.b16 %v10142
          %v10316 = vunpack.c.h.b16 %v10142
          %v10317 = vunpack.c.l.b16 %v10143
          %v10318 = vunpack.c.h.b16 %v10143
          %v10319 = vunpack.c.l.b16 %v10144
          %v10320 = vunpack.c.h.b16 %v10144
          %v10321 = vunpack.c.l.b16 %v10145
          %v10322 = vunpack.c.h.b16 %v10145
          %v10323 = vunpack.c.l.b16 %v10146
          %v10324 = vunpack.c.h.b16 %v10146
          %v10325 = vunpack.c.l.b16 %v10147
          %v10326 = vunpack.c.h.b16 %v10147
          %v10327 = vunpack.c.l.b16 %v10148
          %v10328 = vunpack.c.h.b16 %v10148
          %v10329 = vunpack.c.l.b16 %v10149
          %v10330 = vunpack.c.h.b16 %v10149
          %v10331 = vunpack.c.l.b16 %v10150
          %v10332 = vunpack.c.h.b16 %v10150
          %v10333 = vunpack.c.l.b16 %v10151
          %v10334 = vunpack.c.h.b16 %v10151
          %v10335 = vunpack.c.l.b16 %v10152
          %v10336 = vunpack.c.h.b16 %v10152
          %v10337 = vunpack.c.l.b16 %v10153
          %v10338 = vunpack.c.h.b16 %v10153
          %v10339 = vunpack.c.l.b16 %v10154
          %v10340 = vunpack.c.h.b16 %v10154
          %v10341 = vunpack.c.l.b16 %v10155
          %v10342 = vunpack.c.h.b16 %v10155
          %v10343 = vunpack.c.l.b16 %v10156
          %v10344 = vunpack.c.h.b16 %v10156
          %v10345 = vunpack.c.l.b16 %v10157
          %v10346 = vunpack.c.h.b16 %v10157
          %v10347 = vunpack.c.l.b16 %v10158
          %v10348 = vunpack.c.h.b16 %v10158
          %v10349 = vunpack.c.l.b16 %v10159
          %v10350 = vunpack.c.h.b16 %v10159
          %v10351 = vunpack.c.l.b16 %v10160
          %v10352 = vunpack.c.h.b16 %v10160
          %v10353 = vunpack.c.l.b16 %v10161
          %v10354 = vunpack.c.h.b16 %v10161
          %v10355 = vunpack.c.l.b16 %v10162
          %v10356 = vunpack.c.h.b16 %v10162
          %v10357 = vunpack.c.l.b16 %v10163
          %v10358 = vunpack.c.h.b16 %v10163
          %v10359 = vunpack.c.l.b16 %v10164
          %v10360 = vunpack.c.h.b16 %v10164
          %v10361 = vunpack.c.l.b16 %v10165
          %v10362 = vunpack.c.h.b16 %v10165
          %v10363 = vunpack.c.l.b16 %v10166
          %v10364 = vunpack.c.h.b16 %v10166
          %v10365 = vunpack.c.l.b16 %v10167
          %v10366 = vunpack.c.h.b16 %v10167
          %v10367 = vunpack.c.l.b16 %v10168
          %v10368 = vunpack.c.h.b16 %v10168
          %v10369 = vunpack.c.l.b16 %v10169
          %v10370 = vunpack.c.h.b16 %v10169
          %v10371 = vunpack.c.l.b16 %v10170
          %v10372 = vunpack.c.h.b16 %v10170
          %v10373 = vunpack.c.l.b16 %v10171
          %v10374 = vunpack.c.h.b16 %v10171
          %v10375 = vunpack.c.l.b16 %v10172
          %v10376 = vunpack.c.h.b16 %v10172
          %v10377 = vpack.c.b16 %v10251, %v10249
          %v10378 = vpack.c.b16 %v10252, %v10250
          %v10379 = vpack.c.b16 %v10255, %v10253
          %v10380 = vpack.c.b16 %v10256, %v10254
          %v10381 = vpack.c.b16 %v10259, %v10257
          %v10382 = vpack.c.b16 %v10260, %v10258
          %v10383 = vpack.c.b16 %v10263, %v10261
          %v10384 = vpack.c.b16 %v10264, %v10262
          %v10385 = vpack.c.b16 %v10267, %v10265
          %v10386 = vpack.c.b16 %v10268, %v10266
          %v10387 = vpack.c.b16 %v10271, %v10269
          %v10388 = vpack.c.b16 %v10272, %v10270
          %v10389 = vpack.c.b16 %v10275, %v10273
          %v10390 = vpack.c.b16 %v10276, %v10274
          %v10391 = vpack.c.b16 %v10279, %v10277
          %v10392 = vpack.c.b16 %v10280, %v10278
          %v10393 = vpack.c.b16 %v10283, %v10281
          %v10394 = vpack.c.b16 %v10284, %v10282
          %v10395 = vpack.c.b16 %v10287, %v10285
          %v10396 = vpack.c.b16 %v10288, %v10286
          %v10397 = vpack.c.b16 %v10291, %v10289
          %v10398 = vpack.c.b16 %v10292, %v10290
          %v10399 = vpack.c.b16 %v10295, %v10293
          %v10400 = vpack.c.b16 %v10296, %v10294
          %v10401 = vpack.c.b16 %v10299, %v10297
          %v10402 = vpack.c.b16 %v10300, %v10298
          %v10403 = vpack.c.b16 %v10303, %v10301
          %v10404 = vpack.c.b16 %v10304, %v10302
          %v10405 = vpack.c.b16 %v10307, %v10305
          %v10406 = vpack.c.b16 %v10308, %v10306
          %v10407 = vpack.c.b16 %v10311, %v10309
          %v10408 = vpack.c.b16 %v10312, %v10310
          %v10409 = vpack.c.b16 %v10315, %v10313
          %v10410 = vpack.c.b16 %v10316, %v10314
          %v10411 = vpack.c.b16 %v10319, %v10317
          %v10412 = vpack.c.b16 %v10320, %v10318
          %v10413 = vpack.c.b16 %v10323, %v10321
          %v10414 = vpack.c.b16 %v10324, %v10322
          %v10415 = vpack.c.b16 %v10327, %v10325
          %v10416 = vpack.c.b16 %v10328, %v10326
          %v10417 = vpack.c.b16 %v10331, %v10329
          %v10418 = vpack.c.b16 %v10332, %v10330
          %v10419 = vpack.c.b16 %v10335, %v10333
          %v10420 = vpack.c.b16 %v10336, %v10334
          %v10421 = vpack.c.b16 %v10339, %v10337
          %v10422 = vpack.c.b16 %v10340, %v10338
          %v10423 = vpack.c.b16 %v10343, %v10341
          %v10424 = vpack.c.b16 %v10344, %v10342
          %v10425 = vpack.c.b16 %v10347, %v10345
          %v10426 = vpack.c.b16 %v10348, %v10346
          %v10427 = vpack.c.b16 %v10351, %v10349
          %v10428 = vpack.c.b16 %v10352, %v10350
          %v10429 = vpack.c.b16 %v10355, %v10353
          %v10430 = vpack.c.b16 %v10356, %v10354
          %v10431 = vpack.c.b16 %v10359, %v10357
          %v10432 = vpack.c.b16 %v10360, %v10358
          %v10433 = vpack.c.b16 %v10363, %v10361
          %v10434 = vpack.c.b16 %v10364, %v10362
          %v10435 = vpack.c.b16 %v10367, %v10365
          %v10436 = vpack.c.b16 %v10368, %v10366
          %v10437 = vpack.c.b16 %v10371, %v10369
          %v10438 = vpack.c.b16 %v10372, %v10370
          %v10439 = vpack.c.b16 %v10375, %v10373
          %v10440 = vpack.c.b16 %v10376, %v10374
          %10505 = vmatprep.subr.bf16.mxu0 %v10378
          %10506 = vmatpush1.bf16.msra.mxu0 %v10377
          %10507 = vmatprep.subr.bf16.mxu0 %v10380
          %10508 = vmatpush1.bf16.msra.mxu0 %v10379
          %10509 = vmatprep.subr.bf16.mxu0 %v10382
          %10510 = vmatpush1.bf16.msra.mxu0 %v10381
          %10511 = vmatprep.subr.bf16.mxu0 %v10384
          %10512 = vmatpush1.bf16.msra.mxu0 %v10383
          %10513 = vmatprep.subr.bf16.mxu0 %v10386
          %10514 = vmatpush1.bf16.msra.mxu0 %v10385
          %10515 = vmatprep.subr.bf16.mxu0 %v10388
          %10516 = vmatpush1.bf16.msra.mxu0 %v10387
          %10517 = vmatprep.subr.bf16.mxu0 %v10390
          %10518 = vmatpush1.bf16.msra.mxu0 %v10389
          %10519 = vmatprep.subr.bf16.mxu0 %v10392
          %10520 = vmatpush1.bf16.msra.mxu0 %v10391
          %10521 = vmatprep.subr.bf16.mxu0 %v10394
          %10522 = vmatpush1.bf16.msra.mxu0 %v10393
          %10523 = vmatprep.subr.bf16.mxu0 %v10396
          %10524 = vmatpush1.bf16.msra.mxu0 %v10395
          %10525 = vmatprep.subr.bf16.mxu0 %v10398
          %10526 = vmatpush1.bf16.msra.mxu0 %v10397
          %10527 = vmatprep.subr.bf16.mxu0 %v10400
          %10528 = vmatpush1.bf16.msra.mxu0 %v10399
          %10529 = vmatprep.subr.bf16.mxu0 %v10402
          %10530 = vmatpush1.bf16.msra.mxu0 %v10401
          %10531 = vmatprep.subr.bf16.mxu0 %v10404
          %10532 = vmatpush1.bf16.msra.mxu0 %v10403
          %10533 = vmatprep.subr.bf16.mxu0 %v10406
          %10534 = vmatpush1.bf16.msra.mxu0 %v10405
          %10535 = vmatprep.subr.bf16.mxu0 %v10408
          %10536 = vmatpush1.bf16.msra.mxu0 %v10407
          %10537 = vmatprep.mubr.bf16.mxu0 %v10106
          %10538 = vmatmul.mubr.bf16.gmra.mrb[0].mxu0 %v10105
          %v10539 = vpop.f32.mrb[0].mxu0
          %v10540 = vadd.f32 %v10178, %v10539
          %v10541 = vpop.f32.mrb[0].mxu0
          %v10542 = vadd.f32 %v10182, %v10541
          %v10543 = vpop.f32.mrb[0].mxu0
          %v10544 = vpop.f32.mrb[0].mxu0
          %10545 = vdwg.mxu0
          %10546 = vmatprep.subr.bf16.mxu0 %v10410
          %10547 = vmatpush1.bf16.msra.mxu0 %v10409
          %10548 = vmatprep.subr.bf16.mxu0 %v10412
          %10549 = vmatpush1.bf16.msra.mxu0 %v10411
          %10550 = vmatprep.subr.bf16.mxu0 %v10414
          %10551 = vmatpush1.bf16.msra.mxu0 %v10413
          %10552 = vmatprep.subr.bf16.mxu0 %v10416
          %10553 = vmatpush1.bf16.msra.mxu0 %v10415
          %10554 = vmatprep.subr.bf16.mxu0 %v10418
          %10555 = vmatpush1.bf16.msra.mxu0 %v10417
          %10556 = vmatprep.subr.bf16.mxu0 %v10420
          %10557 = vmatpush1.bf16.msra.mxu0 %v10419
          %10558 = vmatprep.subr.bf16.mxu0 %v10422
          %10559 = vmatpush1.bf16.msra.mxu0 %v10421
          %10560 = vmatprep.subr.bf16.mxu0 %v10424
          %10561 = vmatpush1.bf16.msra.mxu0 %v10423
          %10562 = vmatprep.subr.bf16.mxu0 %v10426
          %10563 = vmatpush1.bf16.msra.mxu0 %v10425
          %10564 = vmatprep.subr.bf16.mxu0 %v10428
          %10565 = vmatpush1.bf16.msra.mxu0 %v10427
          %10566 = vmatprep.subr.bf16.mxu0 %v10430
          %10567 = vmatpush1.bf16.msra.mxu0 %v10429
          %10568 = vmatprep.subr.bf16.mxu0 %v10432
          %10569 = vmatpush1.bf16.msra.mxu0 %v10431
          %10570 = vmatprep.subr.bf16.mxu0 %v10434
          %10571 = vmatpush1.bf16.msra.mxu0 %v10433
          %10572 = vmatprep.subr.bf16.mxu0 %v10436
          %10573 = vmatpush1.bf16.msra.mxu0 %v10435
          %10574 = vmatprep.subr.bf16.mxu0 %v10438
          %10575 = vmatpush1.bf16.msra.mxu0 %v10437
          %10576 = vmatprep.subr.bf16.mxu0 %v10440
          %10577 = vmatpush1.bf16.msra.mxu0 %v10439
          %10578 = vmatprep.mubr.bf16.mxu0 %v10108
          %10579 = vmatmul.mubr.bf16.gmra.mrb[0].mxu0 %v10107
          %v10580 = vpop.f32.mrb[0].mxu0
          %v10581 = vadd.f32 %v10540, %v10580
          %v10582 = vpop.f32.mrb[0].mxu0
          %v10583 = vadd.f32 %v10542, %v10582
          %v10584 = vpop.f32.mrb[0].mxu0
          %v10585 = vpop.f32.mrb[0].mxu0
          %10586 = vdwg.mxu0
          %v10587 = vmax.f32 %v10581, 0.0
          %v10588 = vmax.f32 %v10583, 0.0
          %v10589 = vpack.c.bf16 %v10587, %v10587
          %v10590 = vpack.c.bf16 %v10588, %v10588
          %v10591 = vld [vmem:[#allocation14] sm:$0xf]
          %v10592 = vld [vmem:[#allocation14 + $0x4] sm:$0xf]
          %v10593 = vld [vmem:[#allocation14 + $0x8] sm:$0xf]
          %v10594 = vld [vmem:[#allocation14 + $0xc] sm:$0xf]
          %v10595 = vld [vmem:[#allocation14 + $0x10] sm:$0xf]
          %v10596 = vld [vmem:[#allocation14 + $0x14] sm:$0xf]
          %v10597 = vld [vmem:[#allocation14 + $0x18] sm:$0xf]
          %v10598 = vld [vmem:[#allocation14 + $0x1c] sm:$0xf]
          %v10599 = vld [vmem:[#allocation14 + $0x20] sm:$0xf]
          %v10600 = vld [vmem:[#allocation14 + $0x24] sm:$0xf]
          %v10601 = vld [vmem:[#allocation14 + $0x28] sm:$0xf]
          %v10602 = vld [vmem:[#allocation14 + $0x2c] sm:$0xf]
          %v10603 = vld [vmem:[#allocation14 + $0x30] sm:$0xf]
          %v10604 = vld [vmem:[#allocation14 + $0x34] sm:$0xf]
          %v10605 = vld [vmem:[#allocation14 + $0x38] sm:$0xf]
          %v10606 = vld [vmem:[#allocation14 + $0x3c] sm:$0xf]
          %v10607 = vld [vmem:[#allocation14 + $0x40] sm:$0xf]
          %v10608 = vld [vmem:[#allocation14 + $0x44] sm:$0xf]
          %v10609 = vld [vmem:[#allocation14 + $0x48] sm:$0xf]
          %v10610 = vld [vmem:[#allocation14 + $0x4c] sm:$0xf]
          %v10611 = vld [vmem:[#allocation14 + $0x50] sm:$0xf]
          %v10612 = vld [vmem:[#allocation14 + $0x54] sm:$0xf]
          %v10613 = vld [vmem:[#allocation14 + $0x58] sm:$0xf]
          %v10614 = vld [vmem:[#allocation14 + $0x5c] sm:$0xf]
          %v10615 = vld [vmem:[#allocation14 + $0x60] sm:$0xf]
          %v10616 = vld [vmem:[#allocation14 + $0x64] sm:$0xf]
          %v10617 = vld [vmem:[#allocation14 + $0x68] sm:$0xf]
          %v10618 = vld [vmem:[#allocation14 + $0x6c] sm:$0xf]
          %v10619 = vld [vmem:[#allocation14 + $0x70] sm:$0xf]
          %v10620 = vld [vmem:[#allocation14 + $0x74] sm:$0xf]
          %v10621 = vld [vmem:[#allocation14 + $0x78] sm:$0xf]
          %v10622 = vld [vmem:[#allocation14 + $0x7c] sm:$0xf]
          %v10623 = vld [vmem:[#allocation15] sm:$0x1]
          %v10625 = vlaneseq
          %v10626 = vshrl.u32 %v10625, 7
          %v10627 = vsub.s32 0, %v10626
          %v10628 = vrot.slane %v10623, %v10627
          %v10662 = vunpack.c.l.b16 %v10591
          %v10663 = vunpack.c.l.b16 %v10592
          %v10664 = vunpack.c.l.b16 %v10593
          %v10665 = vunpack.c.l.b16 %v10594
          %v10666 = vunpack.c.l.b16 %v10595
          %v10667 = vunpack.c.l.b16 %v10596
          %v10668 = vunpack.c.l.b16 %v10597
          %v10669 = vunpack.c.l.b16 %v10598
          %v10670 = vunpack.c.l.b16 %v10599
          %v10671 = vunpack.c.l.b16 %v10600
          %v10672 = vunpack.c.l.b16 %v10601
          %v10673 = vunpack.c.l.b16 %v10602
          %v10674 = vunpack.c.l.b16 %v10603
          %v10675 = vunpack.c.l.b16 %v10604
          %v10676 = vunpack.c.l.b16 %v10605
          %v10677 = vunpack.c.l.b16 %v10606
          %v10678 = vunpack.c.l.b16 %v10607
          %v10679 = vunpack.c.l.b16 %v10608
          %v10680 = vunpack.c.l.b16 %v10609
          %v10681 = vunpack.c.l.b16 %v10610
          %v10682 = vunpack.c.l.b16 %v10611
          %v10683 = vunpack.c.l.b16 %v10612
          %v10684 = vunpack.c.l.b16 %v10613
          %v10685 = vunpack.c.l.b16 %v10614
          %v10686 = vunpack.c.l.b16 %v10615
          %v10687 = vunpack.c.l.b16 %v10616
          %v10688 = vunpack.c.l.b16 %v10617
          %v10689 = vunpack.c.l.b16 %v10618
          %v10690 = vunpack.c.l.b16 %v10619
          %v10691 = vunpack.c.l.b16 %v10620
          %v10692 = vunpack.c.l.b16 %v10621
          %v10693 = vunpack.c.l.b16 %v10622
          %v10694 = vpack.c.b16 %v10663, %v10662
          %v10695 = vpack.c.b16 %v10665, %v10664
          %v10696 = vpack.c.b16 %v10667, %v10666
          %v10697 = vpack.c.b16 %v10669, %v10668
          %v10698 = vpack.c.b16 %v10671, %v10670
          %v10699 = vpack.c.b16 %v10673, %v10672
          %v10700 = vpack.c.b16 %v10675, %v10674
          %v10701 = vpack.c.b16 %v10677, %v10676
          %v10702 = vpack.c.b16 %v10679, %v10678
          %v10703 = vpack.c.b16 %v10681, %v10680
          %v10704 = vpack.c.b16 %v10683, %v10682
          %v10705 = vpack.c.b16 %v10685, %v10684
          %v10706 = vpack.c.b16 %v10687, %v10686
          %v10707 = vpack.c.b16 %v10689, %v10688
          %v10708 = vpack.c.b16 %v10691, %v10690
          %v10709 = vpack.c.b16 %v10693, %v10692
          %10726 = vmatprep.subr.bf16.mxu0 0
          %10727 = vmatpush1.bf16.msra.mxu0 %v10694
          %10728 = vmatprep.subr.bf16.mxu0 0
          %10729 = vmatpush1.bf16.msra.mxu0 %v10695
          %10730 = vmatprep.subr.bf16.mxu0 0
          %10731 = vmatpush1.bf16.msra.mxu0 %v10696
          %10732 = vmatprep.subr.bf16.mxu0 0
          %10733 = vmatpush1.bf16.msra.mxu0 %v10697
          %10734 = vmatprep.subr.bf16.mxu0 0
          %10735 = vmatpush1.bf16.msra.mxu0 %v10698
          %10736 = vmatprep.subr.bf16.mxu0 0
          %10737 = vmatpush1.bf16.msra.mxu0 %v10699
          %10738 = vmatprep.subr.bf16.mxu0 0
          %10739 = vmatpush1.bf16.msra.mxu0 %v10700
          %10740 = vmatprep.subr.bf16.mxu0 0
          %10741 = vmatpush1.bf16.msra.mxu0 %v10701
          %10742 = vmatprep.subr.bf16.mxu0 0
          %10743 = vmatpush1.bf16.msra.mxu0 %v10702
          %10744 = vmatprep.subr.bf16.mxu0 0
          %10745 = vmatpush1.bf16.msra.mxu0 %v10703
          %10746 = vmatprep.subr.bf16.mxu0 0
          %10747 = vmatpush1.bf16.msra.mxu0 %v10704
          %10748 = vmatprep.subr.bf16.mxu0 0
          %10749 = vmatpush1.bf16.msra.mxu0 %v10705
          %10750 = vmatprep.subr.bf16.mxu0 0
          %10751 = vmatpush1.bf16.msra.mxu0 %v10706
          %10752 = vmatprep.subr.bf16.mxu0 0
          %10753 = vmatpush1.bf16.msra.mxu0 %v10707
          %10754 = vmatprep.subr.bf16.mxu0 0
          %10755 = vmatpush1.bf16.msra.mxu0 %v10708
          %10756 = vmatprep.subr.bf16.mxu0 0
          %10757 = vmatpush1.bf16.msra.mxu0 %v10709
          %10758 = vmatprep.mubr.bf16.mxu0 %v10590
          %10759 = vmatmul.mubr.bf16.gmra.mrb[0].mxu0 %v10589
          %v10760 = vpop.f32.mrb[0].mxu0
          %v10761 = vadd.f32 %v10628, %v10760
          %v10762 = vpop.f32.mrb[0].mxu0
          %v10763 = vpop.f32.mrb[0].mxu0
          %v10764 = vpop.f32.mrb[0].mxu0
          %10765 = vdwg.mxu0
          %10766 = vst [vmem:[#allocation17] sm:$0x3] %v10761
        $region96: #{cifar_server2_forward.3} parent=55 // pred_fallthru
          _
        // Predicated region
        $region97: #{cifar_server2_forward.3} parent=55 // pred_check
          %p10767 = pneg %p240
        $region98: #{cifar_server2_forward.3} parent=55 // pred_check_branch
          %10769 = sbr.rel (%p10767) target = $region100
        $region99: #{cifar_server2_forward.3} parent=55 // pred_region
          %s10771 = ssub.s32 32, 32
          %10772 = vsyncadd [#allocation5], %s10771
          %s10774 = sshll.u32 [#allocation17], 4
          %s10775 = int_to_ptr.vmem [resolvable:$true] %s10774
          %10777 = dma.vmem_to_hbm [thread:$0]  %s10775, 32, %s9, [#allocation5]
        $region100: #{cifar_server2_forward.3} parent=55 // pred_fallthru
          _
        // Predicated region
        $region101: #{cifar_server2_forward.3} parent=55 // pred_check
          %p10778 = pneg %p240
        $region102: #{cifar_server2_forward.3} parent=55 // pred_check_branch
          %10780 = sbr.rel (%p10778) target = $region104
        $region103: #{cifar_server2_forward.3} parent=55 // pred_region
          %10781 = dma.done [#allocation5], 32
        $region104: #{cifar_server2_forward.3} parent=55 // pred_fallthru
          _
      $region56: #{cifar_server2_forward.3} parent=5 // pred_fallthru
        _
      %p10782 = scmp.le.s32.totalorder 2, %s23
      // Predicated region
      $region105: #{cifar_server2_forward.3} parent=5 // pred_check
        %p10783 = pneg %p10782
      $region106: #{cifar_server2_forward.3} parent=5 // pred_check_branch
        %10785 = sbr.rel (%p10783) target = $region108
      $region107: #{cifar_server2_forward.3} parent=5 // pred_region
        %s10786 = ssub.s32 %s23, 2
      $region108: #{cifar_server2_forward.3} parent=5 // pred_fallthru
        _
    $region6: #{cifar_server2_forward.3} parent=1 // loop_footer
      %s27 = sadd.s32 1, %s23
    $region7: #{cifar_server2_forward.3} parent=1 // loop_footer_branch
      %22 = sbr.rel target = $region3
    $region8: #{cifar_server2_forward.3} parent=1 // loop_exit
      _
    %10787 = vsyncpa [#allocation4], 1
    %s10788 = scalar_lea.sflag [#allocation4], 1
    %10789 = vsyncpa %s10788, 1
    %10790 = vsyncpa [#allocation7], 1
    %10791 = vsyncpa [#allocation10], 1
    %10792 = vsyncpa [#allocation13], 1
    %10793 = vsyncpa [#allocation16], 1
    %10794 = vsyncpa [#allocation5], 1
    %s10795 = scalar_lea.sflag [#allocation5], 1
    %10796 = vsyncpa %s10795, 1

</llo_original>
